<compile_context>
chip_gen: v7x
topology: tpu7x:2x2x1
jax: 0.10.0
libtpu: 0.0.40
codegen_flags: <defaults>
</compile_context>

<pallas_src>
import functools

import jax
import jax.numpy as jnp
from jax.experimental import pallas as pl
from jax.experimental.pallas import tpu as pltpu

# -------------------- synthetic configuration -------------------------------
NUM_BODY_JOINTS = 23
JOINT_REP_DIM = 6                        # '6d'
NPOSE = JOINT_REP_DIM * NUM_BODY_JOINTS  # 138
DIM = 1024                               # transformer token dim (hard-coded in module)
CONTEXT_DIM = 128                        # backbone channels == transformer context_dim
HEADS = 1
DIM_HEAD = 64
INNER = HEADS * DIM_HEAD
MLP_DIM = 256
FH, FW = 16, 12                          # 'vit' backbone feature map -> AvgPool2d((16, 12))
N_VIEWS = 2
BATCH = 2
N_SAMPLE = N_VIEWS * BATCH
IEF_ITERS = 1
LN_EPS = 1e-5

TOK_OUT = 256                            # packed lane-dense [pose(138) | betas(10) | pad]
XF_OUT = 128                             # packed lane-dense [glob(6)   | cam(3)    | pad]

# f32 "rows" slab layout (each row lane-padded to DIM)
ROW_XSA, ROW_LN3W, ROW_LN3B, ROW_CAOB, ROW_FF1B, ROW_FF2B, ROW_FC1B, ROW_FC2B, \
    ROW_QK0, ROW_TOKC, ROW_XFC = range(11)
N_ROWS = 11

# bf16 K=1024 weight slab lane offsets (all multiples of 128)
FF1_OFF = 0
TOK_OFF = FF1_OFF + MLP_DIM              # 256
FC2_OFF = TOK_OFF + TOK_OUT              # 512
XF_OFF = FC2_OFF + DIM                   # 1536
WK1024_COLS = XF_OFF + XF_OUT            # 1664

# bf16 K=128 weight slab lane offsets
FC1_OFF = 0
CAVO_OFF = DIM                           # 1024
WK128_COLS = CAVO_OFF + DIM              # 2048

VMEM = pl.BlockSpec(memory_space=pltpu.MemorySpace.VMEM)


# ------------------------------ fused Pallas kernel ---------------------------
def _fused_head_kernel(
    featT_ref,        # (C, n_sample*HW) bf16   channel-major features, all samples
    rows_ref,         # (N_ROWS, DIM)    f32    packed 1-row constants / biases / LN params
    wk1024_ref,       # (DIM, 1664)      bf16   [ff1 | head_tok | fc2 | head_xf]
    wk128_ref,        # (C, 2048)        bf16   [fc1 | ca_v@ca_out fused]
    wff2_ref,         # (MLP_DIM, DIM)   bf16
    out_tok_ref,      # (batch, TOK_OUT) f32
    out_xf_ref,       # (n_sample, XF_OUT) f32
    *, batch, n_views, hw):
  f32, bf16 = jnp.float32, jnp.bfloat16
  n_sample = batch * n_views
  C = featT_ref.shape[0]
  SHW = featT_ref.shape[1]

  featT = featT_ref[...]                                        # (C, SHW) bf16

  # ---- cross-attention scores over all keys at once (qk0 is batch-invariant) ----
  qk0 = rows_ref[ROW_QK0:ROW_QK0 + 1, 0:C].astype(bf16)         # (1, C), scale pre-folded
  s_all = jnp.dot(qk0, featT, preferred_element_type=f32)       # (1, SHW)

  col = jax.lax.broadcasted_iota(jnp.int32, (1, SHW), 1)

  def sample_mask(s):                                            # keys of sample s
    return (col >= s * hw) & (col < (s + 1) * hw)

  neg = jnp.float32(-1e30)
  w_rows = []
  # segmented softmax: batch element b attends over samples {n*batch+b}, n=0..n_views-1
  for b in range(batch):                                         # batch is tiny -> static unroll
    m = sample_mask(b)
    for n in range(1, n_views):
      m = m | sample_mask(n * batch + b)
    s_b = jnp.where(m, s_all, neg)
    m_b = jnp.max(s_b, axis=-1, keepdims=True)                   # (1, 1)
    e_b = jnp.exp(s_b - m_b)                                     # masked lanes underflow to 0
    l_b = jnp.sum(e_b, axis=-1, keepdims=True)
    w_rows.append(e_b * pl.reciprocal(l_b, approx=True))         # normalized attn row for b
  # avg-pool selection rows (value 1, scaled by 1/HW after the matmul)
  for s in range(n_sample):
    w_rows.append(jnp.where(sample_mask(s), 1.0, 0.0).astype(f32))
  wmat = jnp.concatenate(w_rows, axis=0).astype(bf16)            # (batch + n_sample, SHW)

  # single MXU call: rows [0,batch) -> attn-weighted context, rest -> HW * pooled features
  mixed = jax.lax.dot_general(wmat, featT, (((1,), (1,)), ((), ())),
                              preferred_element_type=f32)        # (batch + n_sample, C)
  ctxw = mixed[0:batch, :]                                       # (batch, C)
  pooled = mixed[batch:batch + n_sample, :] * (1.0 / hw)         # (n_sample, C) f32 sum * 1/HW

  # ---- token path: cross-attn output + residual, LN3, FFN, pose/shape heads ----
  ca_vo = wk128_ref[:, CAVO_OFF:CAVO_OFF + DIM]                  # fused (to_v @ to_out) weight
  x = (rows_ref[ROW_XSA:ROW_XSA + 1, :]                          # post-self-attn constant row
       + jnp.dot(ctxw.astype(bf16), ca_vo, preferred_element_type=f32)
       + rows_ref[ROW_CAOB:ROW_CAOB + 1, :])                     # (batch, DIM)

  mu = jnp.mean(x, axis=-1, keepdims=True)
  var = jnp.mean((x - mu) ** 2, axis=-1, keepdims=True)
  xn = ((x - mu) * jax.lax.rsqrt(var + LN_EPS)
        * rows_ref[ROW_LN3W:ROW_LN3W + 1, :]
        + rows_ref[ROW_LN3B:ROW_LN3B + 1, :])

  h = (jnp.dot(xn.astype(bf16), wk1024_ref[:, FF1_OFF:FF1_OFF + MLP_DIM],
               preferred_element_type=f32)
       + rows_ref[ROW_FF1B:ROW_FF1B + 1, 0:MLP_DIM])
  # TODO(synk): PyTorch nn.GELU() default is the exact erf form; tanh approximation used here.
  h = jax.nn.gelu(h, approximate=True)
  x = (x + jnp.dot(h.astype(bf16), wff2_ref[...], preferred_element_type=f32)
       + rows_ref[ROW_FF2B:ROW_FF2B + 1, :])                     # (batch, DIM)

  # pred = init + IEF_ITERS * (x @ W + b); IEF_ITERS folded into packed W and constant row.
  out_tok_ref[...] = (rows_ref[ROW_TOKC:ROW_TOKC + 1, 0:TOK_OUT]
                      + jnp.dot(x.astype(bf16),
                                wk1024_ref[:, TOK_OFF:TOK_OFF + TOK_OUT],
                                preferred_element_type=f32))

  # ---- pooled-feature path: fc1 -> fc2 -> glob|cam heads (dropout = identity in eval) ----
  xf = (jnp.dot(pooled.astype(bf16), wk128_ref[:, FC1_OFF:FC1_OFF + DIM],
                preferred_element_type=f32)
        + rows_ref[ROW_FC1B:ROW_FC1B + 1, :])
  xf = (jnp.dot(xf.astype(bf16), wk1024_ref[:, FC2_OFF:FC2_OFF + DIM],
                preferred_element_type=f32)
        + rows_ref[ROW_FC2B:ROW_FC2B + 1, :])
  out_xf_ref[...] = (rows_ref[ROW_XFC:ROW_XFC + 1, 0:XF_OUT]
                     + jnp.dot(xf.astype(bf16),
                               wk1024_ref[:, XF_OFF:XF_OFF + XF_OUT],
                               preferred_element_type=f32))


# ------------------------------ plain-JAX glue -------------------------------
def rot6d_to_rotmat(x):
  x = x.reshape(-1, 2, 3)
  a1, a2 = x[:, 0], x[:, 1]
  b1 = a1 / jnp.maximum(jnp.linalg.norm(a1, axis=-1, keepdims=True), 1e-8)
  a2p = a2 - jnp.sum(b1 * a2, axis=-1, keepdims=True) * b1
  b2 = a2p / jnp.maximum(jnp.linalg.norm(a2p, axis=-1, keepdims=True), 1e-8)
  b3 = jnp.cross(b1, b2)
  return jnp.stack([b1, b2, b3], axis=-1)


# ------------------------------ parameters -----------------------------------
def init_params(key):
  ks = jax.random.split(key, 16)

  def w(k, shape, scale=0.02):
    return (scale * jax.random.normal(k, shape)).astype(jnp.float32)

  z = lambda *s: jnp.zeros(s, jnp.float32)
  one = lambda *s: jnp.ones(s, jnp.float32)

  # deterministic "mean params": identity rotations in 6d, zero betas, mean cam
  mean_pose6d = jnp.tile(jnp.array([1., 0., 0., 0., 1., 0.], jnp.float32),
                         NUM_BODY_JOINTS + 1)                       # (144,)
  return dict(
      tok_w=w(ks[0], (1, DIM)), tok_b=z(DIM),
      pos_emb=w(ks[1], (DIM,)),
      ln1_w=one(DIM), ln1_b=z(DIM),
      sa_qkv_w=w(ks[2], (DIM, 3 * INNER)),
      sa_out_w=w(ks[3], (INNER, DIM)), sa_out_b=z(DIM),
      ln2_w=one(DIM), ln2_b=z(DIM),
      ca_q_w=w(ks[4], (DIM, INNER)),
      ca_k_w=w(ks[5], (CONTEXT_DIM, INNER)),
      ca_v_w=w(ks[6], (CONTEXT_DIM, INNER)),
      ca_out_w=w(ks[7], (INNER, DIM)), ca_out_b=z(DIM),
      ln3_w=one(DIM), ln3_b=z(DIM),
      ff1_w=w(ks[8], (DIM, MLP_DIM)), ff1_b=z(MLP_DIM),
      ff2_w=w(ks[9], (MLP_DIM, DIM)), ff2_b=z(DIM),
      decpose_w=w(ks[10], (DIM, NPOSE), 0.01), decpose_b=z(NPOSE),
      decshape_w=w(ks[11], (DIM, 10), 0.01), decshape_b=z(10),
      fc1_w=w(ks[12], (CONTEXT_DIM, DIM)), fc1_b=z(DIM),
      fc2_w=w(ks[13], (DIM, DIM)), fc2_b=z(DIM),
      decglob_w=w(ks[14], (DIM, 6), 0.01), decglob_b=z(6),
      deccam_w=w(ks[15], (DIM, 3), 0.01), deccam_b=z(3),
      init_global_orientation=mean_pose6d[:6],
      init_body_pose=mean_pose6d[6:],
      init_betas=z(10),
      init_cam=jnp.array([0.9, 0.0, 0.0], jnp.float32),
  )


def prepare_params(params):
  """One-time host-side preprocessing of the torch-style parameters into kernel slabs."""
  f32 = jnp.float32
  bf = lambda a: a.astype(jnp.bfloat16)
  ief = float(IEF_ITERS)

  def layernorm(v, w, b):
    mu = jnp.mean(v)
    var = jnp.mean((v - mu) ** 2)
    return (v - mu) * jax.lax.rsqrt(var + LN_EPS) * w + b

  # ---- constant-fold the batch-invariant token prefix (token is all zeros) ----
  # x0 = token embedding of zeros + pos_emb (tok_w is dead), self-attn over a single
  # token collapses to its V projection (softmax over one key == 1).
  x0 = params['tok_b'] + params['pos_emb']                              # (DIM,)
  xn1 = layernorm(x0, params['ln1_w'], params['ln1_b'])
  v_sa = xn1 @ params['sa_qkv_w'][:, 2 * INNER:]                        # (INNER,)
  x_sa = x0 + v_sa @ params['sa_out_w'] + params['sa_out_b']            # (DIM,)
  xn2 = layernorm(x_sa, params['ln2_w'], params['ln2_b'])
  q = (xn2 @ params['ca_q_w']) * (DIM_HEAD ** -0.5)                     # scale folded in
  qk0 = q @ params['ca_k_w'].T                                          # (CONTEXT_DIM,)

  # ---- packed decoder-head weights/constants; IEF iterations folded in ----
  head_tok_w = ief * jnp.concatenate(
      [params['decpose_w'], params['decshape_w'],
       jnp.zeros((DIM, TOK_OUT - NPOSE - 10), f32)], axis=1)            # (DIM, 256)
  head_tok_c = jnp.concatenate(
      [params['init_body_pose'] + ief * params['decpose_b'],
       params['init_betas'] + ief * params['decshape_b'],
       jnp.zeros((TOK_OUT - NPOSE - 10,), f32)])                        # (256,)
  head_xf_w = ief * jnp.concatenate(
      [params['decglob_w'], params['deccam_w'],
       jnp.zeros((DIM, XF_OUT - 6 - 3), f32)], axis=1)                  # (DIM, 128)
  head_xf_c = jnp.concatenate(
      [params['init_global_orientation'] + ief * params['decglob_b'],
       params['init_cam'] + ief * params['deccam_b'],
       jnp.zeros((XF_OUT - 6 - 3,), f32)])                              # (128,)

  pad_row = lambda v: jnp.pad(v.astype(f32), (0, DIM - v.shape[0]))

  rows = jnp.stack([
      x_sa,                       # ROW_XSA
      params['ln3_w'],            # ROW_LN3W
      params['ln3_b'],            # ROW_LN3B
      params['ca_out_b'],         # ROW_CAOB
      pad_row(params['ff1_b']),   # ROW_FF1B
      params['ff2_b'],            # ROW_FF2B
      params['fc1_b'],            # ROW_FC1B
      params['fc2_b'],            # ROW_FC2B
      pad_row(qk0),               # ROW_QK0
      pad_row(head_tok_c),        # ROW_TOKC
      pad_row(head_xf_c),         # ROW_XFC
  ], axis=0).astype(f32)                                                # (11, DIM)

  # bf16 weight slabs (all lane offsets multiples of 128)
  w_k1024 = bf(jnp.concatenate(
      [params['ff1_w'], head_tok_w, params['fc2_w'], head_xf_w], axis=1))   # (1024, 1664)
  ca_vo = params['ca_v_w'] @ params['ca_out_w']                             # fused to_v @ to_out
  w_k128 = bf(jnp.concatenate([params['fc1_w'], ca_vo], axis=1))            # (128, 2048)
  w_ff2 = bf(params['ff2_w'])                                               # (256, 1024)

  return dict(rows=rows, w_k1024=w_k1024, w_k128=w_k128, w_ff2=w_ff2)


# ------------------------------ forward pass ----------------------------------
@functools.partial(jax.jit, static_argnums=(2,))
def forward(prep, features, n_views):
  n_sample, c, h, w = features.shape
  batch = n_sample // n_views
  hw = h * w
  # channel-major bf16 layout (C, n_sample*HW); sample order s = n*batch + b, keys (h,w)
  featT = jnp.transpose(features.reshape(n_sample, c, hw), (1, 0, 2)) \
             .reshape(c, n_sample * hw).astype(jnp.bfloat16)

  kernel = functools.partial(_fused_head_kernel, batch=batch, n_views=n_views, hw=hw)

  out_tok, out_xf = pl.pallas_call(
      kernel,
      out_shape=(jax.ShapeDtypeStruct((batch, TOK_OUT), jnp.float32),
                 jax.ShapeDtypeStruct((n_sample, XF_OUT), jnp.float32)),
      in_specs=[VMEM] * 5,
      out_specs=(VMEM, VMEM),
  )(featT, prep['rows'], prep['w_k1024'], prep['w_k128'], prep['w_ff2'])

  pred_body_pose6d = out_tok[:, :NPOSE]
  pred_betas = out_tok[:, NPOSE:NPOSE + 10]
  pred_glob6d = out_xf[:, :6]
  pred_cam = out_xf[:, 6:9]

  body_rotmat = rot6d_to_rotmat(pred_body_pose6d).reshape(batch, NUM_BODY_JOINTS, 3, 3)
  glob_rotmat = rot6d_to_rotmat(pred_glob6d).reshape(n_sample, 1, 3, 3)
  return body_rotmat, pred_betas, glob_rotmat, pred_cam

# TODO(synk): SinePositionalEncoding3D branch not implemented (cfg chooses it off here).


if __name__ == "__main__":
  key = jax.random.PRNGKey(0)
  pkey, fkey = jax.random.split(key)
  params = init_params(pkey)
  prep = prepare_params(params)
  features = jax.random.normal(fkey, (N_SAMPLE, CONTEXT_DIM, FH, FW), dtype=jnp.float32)

  outs = forward(prep, features, N_VIEWS)
  outs = jax.block_until_ready(outs)

  pred_body_pose, pred_betas, pred_global_orientation, pred_cam = outs
  assert pred_body_pose.shape == (BATCH, NUM_BODY_JOINTS, 3, 3)
  assert pred_betas.shape == (BATCH, 10)
  assert pred_global_orientation.shape == (N_SAMPLE, 1, 3, 3)
  assert pred_cam.shape == (N_SAMPLE, 3)
  assert all(bool(jnp.isfinite(o).all()) for o in outs)
  print("KERNEL_OK")
</pallas_src>

<mosaic_0001>
module attributes {stable_mosaic.version = 11 : i64} {
  func.func @_fused_head_kernel(%arg0: memref<128x768xbf16, #tpu.memory_space<vmem>>, %arg1: memref<11x1024xf32, #tpu.memory_space<vmem>>, %arg2: memref<1024x1664xbf16, #tpu.memory_space<vmem>>, %arg3: memref<128x2048xbf16, #tpu.memory_space<vmem>>, %arg4: memref<256x1024xbf16, #tpu.memory_space<vmem>>, %arg5: memref<2x256xf32, #tpu.memory_space<vmem>>, %arg6: memref<4x128xf32, #tpu.memory_space<vmem>>) attributes {dimension_semantics = [], scalar_prefetch = 0 : i64, scratch_operands = 0 : i64, tpu.core_type = #tpu.core_type<tc>} {
    %c0 = arith.constant 0 : index
    %c0_0 = arith.constant 0 : index
    %0 = vector.load %arg0[%c0, %c0_0] : memref<128x768xbf16, #tpu.memory_space<vmem>>, vector<128x768xbf16>
    %c8 = arith.constant 8 : index
    %c0_1 = arith.constant 0 : index
    %1 = vector.load %arg1[%c8, %c0_1] : memref<11x1024xf32, #tpu.memory_space<vmem>>, vector<1x128xf32>
    %2 = arith.truncf %1 : vector<1x128xf32> to vector<1x128xbf16>
    %cst = arith.constant dense<0.000000e+00> : vector<1x768xf32>
    %3 = tpu.matmul %2, %0, %cst {dimension_numbers = #tpu.dot_dimension_numbers<[1], [0], [0], [1], [0, 0, 1, 1], [], []>} : vector<1x128xbf16>, vector<128x768xbf16>, vector<1x768xf32> -> vector<1x768xf32>
    %4 = tpu.iota {dimensions = array<i32: 1>} : vector<1x768xi32>
    %c0_i32 = arith.constant 0 : i32
    %5 = vector.broadcast %c0_i32 : i32 to vector<1x768xi32>
    %6 = arith.cmpi sge, %4, %5 : vector<1x768xi32>
    %c192_i32 = arith.constant 192 : i32
    %7 = vector.broadcast %c192_i32 : i32 to vector<1x768xi32>
    %8 = arith.cmpi slt, %4, %7 : vector<1x768xi32>
    %9 = arith.andi %6, %8 : vector<1x768xi1>
    %c384_i32 = arith.constant 384 : i32
    %10 = vector.broadcast %c384_i32 : i32 to vector<1x768xi32>
    %11 = arith.cmpi sge, %4, %10 : vector<1x768xi32>
    %c576_i32 = arith.constant 576 : i32
    %12 = vector.broadcast %c576_i32 : i32 to vector<1x768xi32>
    %13 = arith.cmpi slt, %4, %12 : vector<1x768xi32>
    %14 = arith.andi %11, %13 : vector<1x768xi1>
    %15 = arith.ori %9, %14 : vector<1x768xi1>
    %cst_2 = arith.constant -1.000000e+30 : f32
    %16 = vector.broadcast %cst_2 : f32 to vector<1x768xf32>
    %17 = arith.select %15, %3, %16 : vector<1x768xi1>, vector<1x768xf32>
    %cst_3 = arith.constant dense<0xFF800000> : vector<1xf32>
    %18 = vector.multi_reduction <maximumf>, %17, %cst_3 [1] : vector<1x768xf32> to vector<1xf32>
    %19 = vector.shape_cast %18 : vector<1xf32> to vector<1x1xf32>
    %20 = vector.broadcast %19 : vector<1x1xf32> to vector<1x768xf32>
    %21 = arith.subf %17, %20 : vector<1x768xf32>
    %22 = math.exp %21 : vector<1x768xf32>
    %cst_4 = arith.constant dense<0.000000e+00> : vector<1xf32>
    %23 = vector.multi_reduction <add>, %22, %cst_4 [1] : vector<1x768xf32> to vector<1xf32>
    %24 = vector.shape_cast %23 : vector<1xf32> to vector<1x1xf32>
    %25 = tpu.reciprocal %24 {approx = true} : vector<1x1xf32> -> vector<1x1xf32>
    %26 = vector.broadcast %25 : vector<1x1xf32> to vector<1x768xf32>
    %27 = arith.mulf %22, %26 : vector<1x768xf32>
    %c192_i32_5 = arith.constant 192 : i32
    %28 = vector.broadcast %c192_i32_5 : i32 to vector<1x768xi32>
    %29 = arith.cmpi sge, %4, %28 : vector<1x768xi32>
    %c384_i32_6 = arith.constant 384 : i32
    %30 = vector.broadcast %c384_i32_6 : i32 to vector<1x768xi32>
    %31 = arith.cmpi slt, %4, %30 : vector<1x768xi32>
    %32 = arith.andi %29, %31 : vector<1x768xi1>
    %c576_i32_7 = arith.constant 576 : i32
    %33 = vector.broadcast %c576_i32_7 : i32 to vector<1x768xi32>
    %34 = arith.cmpi sge, %4, %33 : vector<1x768xi32>
    %c768_i32 = arith.constant 768 : i32
    %35 = vector.broadcast %c768_i32 : i32 to vector<1x768xi32>
    %36 = arith.cmpi slt, %4, %35 : vector<1x768xi32>
    %37 = arith.andi %34, %36 : vector<1x768xi1>
    %38 = arith.ori %32, %37 : vector<1x768xi1>
    %cst_8 = arith.constant -1.000000e+30 : f32
    %39 = vector.broadcast %cst_8 : f32 to vector<1x768xf32>
    %40 = arith.select %38, %3, %39 : vector<1x768xi1>, vector<1x768xf32>
    %cst_9 = arith.constant dense<0xFF800000> : vector<1xf32>
    %41 = vector.multi_reduction <maximumf>, %40, %cst_9 [1] : vector<1x768xf32> to vector<1xf32>
    %42 = vector.shape_cast %41 : vector<1xf32> to vector<1x1xf32>
    %43 = vector.broadcast %42 : vector<1x1xf32> to vector<1x768xf32>
    %44 = arith.subf %40, %43 : vector<1x768xf32>
    %45 = math.exp %44 : vector<1x768xf32>
    %cst_10 = arith.constant dense<0.000000e+00> : vector<1xf32>
    %46 = vector.multi_reduction <add>, %45, %cst_10 [1] : vector<1x768xf32> to vector<1xf32>
    %47 = vector.shape_cast %46 : vector<1xf32> to vector<1x1xf32>
    %48 = tpu.reciprocal %47 {approx = true} : vector<1x1xf32> -> vector<1x1xf32>
    %49 = vector.broadcast %48 : vector<1x1xf32> to vector<1x768xf32>
    %50 = arith.mulf %45, %49 : vector<1x768xf32>
    %c0_i32_11 = arith.constant 0 : i32
    %51 = vector.broadcast %c0_i32_11 : i32 to vector<1x768xi32>
    %52 = arith.cmpi sge, %4, %51 : vector<1x768xi32>
    %c192_i32_12 = arith.constant 192 : i32
    %53 = vector.broadcast %c192_i32_12 : i32 to vector<1x768xi32>
    %54 = arith.cmpi slt, %4, %53 : vector<1x768xi32>
    %55 = arith.andi %52, %54 : vector<1x768xi1>
    %cst_13 = arith.constant 1.000000e+00 : f32
    %cst_14 = arith.constant 0.000000e+00 : f32
    %56 = vector.broadcast %cst_13 : f32 to vector<1x768xf32>
    %57 = vector.broadcast %cst_14 : f32 to vector<1x768xf32>
    %58 = arith.select %55, %56, %57 : vector<1x768xi1>, vector<1x768xf32>
    %c192_i32_15 = arith.constant 192 : i32
    %59 = vector.broadcast %c192_i32_15 : i32 to vector<1x768xi32>
    %60 = arith.cmpi sge, %4, %59 : vector<1x768xi32>
    %c384_i32_16 = arith.constant 384 : i32
    %61 = vector.broadcast %c384_i32_16 : i32 to vector<1x768xi32>
    %62 = arith.cmpi slt, %4, %61 : vector<1x768xi32>
    %63 = arith.andi %60, %62 : vector<1x768xi1>
    %cst_17 = arith.constant 1.000000e+00 : f32
    %cst_18 = arith.constant 0.000000e+00 : f32
    %64 = vector.broadcast %cst_17 : f32 to vector<1x768xf32>
    %65 = vector.broadcast %cst_18 : f32 to vector<1x768xf32>
    %66 = arith.select %63, %64, %65 : vector<1x768xi1>, vector<1x768xf32>
    %c384_i32_19 = arith.constant 384 : i32
    %67 = vector.broadcast %c384_i32_19 : i32 to vector<1x768xi32>
    %68 = arith.cmpi sge, %4, %67 : vector<1x768xi32>
    %c576_i32_20 = arith.constant 576 : i32
    %69 = vector.broadcast %c576_i32_20 : i32 to vector<1x768xi32>
    %70 = arith.cmpi slt, %4, %69 : vector<1x768xi32>
    %71 = arith.andi %68, %70 : vector<1x768xi1>
    %cst_21 = arith.constant 1.000000e+00 : f32
    %cst_22 = arith.constant 0.000000e+00 : f32
    %72 = vector.broadcast %cst_21 : f32 to vector<1x768xf32>
    %73 = vector.broadcast %cst_22 : f32 to vector<1x768xf32>
    %74 = arith.select %71, %72, %73 : vector<1x768xi1>, vector<1x768xf32>
    %c576_i32_23 = arith.constant 576 : i32
    %75 = vector.broadcast %c576_i32_23 : i32 to vector<1x768xi32>
    %76 = arith.cmpi sge, %4, %75 : vector<1x768xi32>
    %c768_i32_24 = arith.constant 768 : i32
    %77 = vector.broadcast %c768_i32_24 : i32 to vector<1x768xi32>
    %78 = arith.cmpi slt, %4, %77 : vector<1x768xi32>
    %79 = arith.andi %76, %78 : vector<1x768xi1>
    %cst_25 = arith.constant 1.000000e+00 : f32
    %cst_26 = arith.constant 0.000000e+00 : f32
    %80 = vector.broadcast %cst_25 : f32 to vector<1x768xf32>
    %81 = vector.broadcast %cst_26 : f32 to vector<1x768xf32>
    %82 = arith.select %79, %80, %81 : vector<1x768xi1>, vector<1x768xf32>
    %83 = tpu.concatenate %27, %50, %58, %66, %74, %82 in 0 : vector<1x768xf32>, vector<1x768xf32>, vector<1x768xf32>, vector<1x768xf32>, vector<1x768xf32>, vector<1x768xf32> -> vector<6x768xf32>
    %84 = arith.truncf %83 : vector<6x768xf32> to vector<6x768xbf16>
    %cst_27 = arith.constant dense<0.000000e+00> : vector<6x128xf32>
    %85 = tpu.matmul %84, %0, %cst_27 {dimension_numbers = #tpu.dot_dimension_numbers<[1], [1], [0], [0], [0, 0, 1, 0], [], []>} : vector<6x768xbf16>, vector<128x768xbf16>, vector<6x128xf32> -> vector<6x128xf32>
    %86 = vector.extract_strided_slice %85 {offsets = [0, 0], sizes = [2, 128], strides = [1, 1]} : vector<6x128xf32> to vector<2x128xf32>
    %87 = vector.extract_strided_slice %85 {offsets = [2, 0], sizes = [4, 128], strides = [1, 1]} : vector<6x128xf32> to vector<4x128xf32>
    %cst_28 = arith.constant 0.00520833349 : f32
    %88 = vector.broadcast %cst_28 : f32 to vector<4x128xf32>
    %89 = arith.mulf %87, %88 : vector<4x128xf32>
    %c0_29 = arith.constant 0 : index
    %c1024 = arith.constant 1024 : index
    %90 = vector.load %arg3[%c0_29, %c1024] : memref<128x2048xbf16, #tpu.memory_space<vmem>>, vector<128x1024xbf16>
    %c0_30 = arith.constant 0 : index
    %c0_31 = arith.constant 0 : index
    %91 = vector.load %arg1[%c0_30, %c0_31] : memref<11x1024xf32, #tpu.memory_space<vmem>>, vector<1x1024xf32>
    %92 = arith.truncf %86 : vector<2x128xf32> to vector<2x128xbf16>
    %cst_32 = arith.constant dense<0.000000e+00> : vector<2x1024xf32>
    %93 = tpu.matmul %92, %90, %cst_32 {dimension_numbers = #tpu.dot_dimension_numbers<[1], [0], [0], [1], [0, 0, 1, 1], [], []>} : vector<2x128xbf16>, vector<128x1024xbf16>, vector<2x1024xf32> -> vector<2x1024xf32>
    %94 = vector.broadcast %91 : vector<1x1024xf32> to vector<2x1024xf32>
    %95 = arith.addf %94, %93 : vector<2x1024xf32>
    %c3 = arith.constant 3 : index
    %c0_33 = arith.constant 0 : index
    %96 = vector.load %arg1[%c3, %c0_33] : memref<11x1024xf32, #tpu.memory_space<vmem>>, vector<1x1024xf32>
    %97 = vector.broadcast %96 : vector<1x1024xf32> to vector<2x1024xf32>
    %98 = arith.addf %95, %97 : vector<2x1024xf32>
    %cst_34 = arith.constant dense<0.000000e+00> : vector<2xf32>
    %99 = vector.multi_reduction <add>, %98, %cst_34 [1] : vector<2x1024xf32> to vector<2xf32>
    %100 = vector.shape_cast %99 : vector<2xf32> to vector<2x1xf32>
    %cst_35 = arith.constant 1.024000e+03 : f32
    %101 = vector.broadcast %cst_35 : f32 to vector<2x1xf32>
    %102 = arith.divf %100, %101 : vector<2x1xf32>
    %103 = vector.broadcast %102 : vector<2x1xf32> to vector<2x1024xf32>
    %104 = arith.subf %98, %103 : vector<2x1024xf32>
    %105 = arith.mulf %104, %104 : vector<2x1024xf32>
    %cst_36 = arith.constant dense<0.000000e+00> : vector<2xf32>
    %106 = vector.multi_reduction <add>, %105, %cst_36 [1] : vector<2x1024xf32> to vector<2xf32>
    %107 = vector.shape_cast %106 : vector<2xf32> to vector<2x1xf32>
    %cst_37 = arith.constant 1.024000e+03 : f32
    %108 = vector.broadcast %cst_37 : f32 to vector<2x1xf32>
    %109 = arith.divf %107, %108 : vector<2x1xf32>
    %110 = vector.broadcast %102 : vector<2x1xf32> to vector<2x1024xf32>
    %111 = arith.subf %98, %110 : vector<2x1024xf32>
    %cst_38 = arith.constant 9.99999974E-6 : f32
    %112 = vector.broadcast %cst_38 : f32 to vector<2x1xf32>
    %113 = arith.addf %109, %112 : vector<2x1xf32>
    %114 = math.rsqrt %113 : vector<2x1xf32>
    %115 = vector.broadcast %114 : vector<2x1xf32> to vector<2x1024xf32>
    %116 = arith.mulf %111, %115 : vector<2x1024xf32>
    %c1 = arith.constant 1 : index
    %c0_39 = arith.constant 0 : index
    %117 = vector.load %arg1[%c1, %c0_39] : memref<11x1024xf32, #tpu.memory_space<vmem>>, vector<1x1024xf32>
    %118 = vector.broadcast %117 : vector<1x1024xf32> to vector<2x1024xf32>
    %119 = arith.mulf %116, %118 : vector<2x1024xf32>
    %c2 = arith.constant 2 : index
    %c0_40 = arith.constant 0 : index
    %120 = vector.load %arg1[%c2, %c0_40] : memref<11x1024xf32, #tpu.memory_space<vmem>>, vector<1x1024xf32>
    %121 = vector.broadcast %120 : vector<1x1024xf32> to vector<2x1024xf32>
    %122 = arith.addf %119, %121 : vector<2x1024xf32>
    %123 = arith.truncf %122 : vector<2x1024xf32> to vector<2x1024xbf16>
    %c0_41 = arith.constant 0 : index
    %c0_42 = arith.constant 0 : index
    %124 = vector.load %arg2[%c0_41, %c0_42] : memref<1024x1664xbf16, #tpu.memory_space<vmem>>, vector<1024x256xbf16>
    %cst_43 = arith.constant dense<0.000000e+00> : vector<2x256xf32>
    %125 = tpu.matmul %123, %124, %cst_43 {dimension_numbers = #tpu.dot_dimension_numbers<[1], [0], [0], [1], [0, 0, 1, 1], [], []>} : vector<2x1024xbf16>, vector<1024x256xbf16>, vector<2x256xf32> -> vector<2x256xf32>
    %c4 = arith.constant 4 : index
    %c0_44 = arith.constant 0 : index
    %126 = vector.load %arg1[%c4, %c0_44] : memref<11x1024xf32, #tpu.memory_space<vmem>>, vector<1x256xf32>
    %127 = vector.broadcast %126 : vector<1x256xf32> to vector<2x256xf32>
    %128 = arith.addf %125, %127 : vector<2x256xf32>
    %129 = arith.mulf %128, %128 : vector<2x256xf32>
    %130 = arith.mulf %128, %129 : vector<2x256xf32>
    %cst_45 = arith.constant 4.471500e-02 : f32
    %131 = vector.broadcast %cst_45 : f32 to vector<2x256xf32>
    %132 = arith.mulf %131, %130 : vector<2x256xf32>
    %133 = arith.addf %128, %132 : vector<2x256xf32>
    %cst_46 = arith.constant 0.797884583 : f32
    %134 = vector.broadcast %cst_46 : f32 to vector<2x256xf32>
    %135 = arith.mulf %134, %133 : vector<2x256xf32>
    %136 = math.tanh %135 : vector<2x256xf32>
    %cst_47 = arith.constant 1.000000e+00 : f32
    %137 = vector.broadcast %cst_47 : f32 to vector<2x256xf32>
    %138 = arith.addf %137, %136 : vector<2x256xf32>
    %cst_48 = arith.constant 5.000000e-01 : f32
    %139 = vector.broadcast %cst_48 : f32 to vector<2x256xf32>
    %140 = arith.mulf %139, %138 : vector<2x256xf32>
    %141 = arith.mulf %128, %140 : vector<2x256xf32>
    %142 = arith.truncf %141 : vector<2x256xf32> to vector<2x256xbf16>
    %c0_49 = arith.constant 0 : index
    %c0_50 = arith.constant 0 : index
    %143 = vector.load %arg4[%c0_49, %c0_50] : memref<256x1024xbf16, #tpu.memory_space<vmem>>, vector<256x1024xbf16>
    %cst_51 = arith.constant dense<0.000000e+00> : vector<2x1024xf32>
    %144 = tpu.matmul %142, %143, %cst_51 {dimension_numbers = #tpu.dot_dimension_numbers<[1], [0], [0], [1], [0, 0, 1, 1], [], []>} : vector<2x256xbf16>, vector<256x1024xbf16>, vector<2x1024xf32> -> vector<2x1024xf32>
    %145 = arith.addf %98, %144 : vector<2x1024xf32>
    %c5 = arith.constant 5 : index
    %c0_52 = arith.constant 0 : index
    %146 = vector.load %arg1[%c5, %c0_52] : memref<11x1024xf32, #tpu.memory_space<vmem>>, vector<1x1024xf32>
    %147 = vector.broadcast %146 : vector<1x1024xf32> to vector<2x1024xf32>
    %148 = arith.addf %145, %147 : vector<2x1024xf32>
    %c9 = arith.constant 9 : index
    %c0_53 = arith.constant 0 : index
    %149 = vector.load %arg1[%c9, %c0_53] : memref<11x1024xf32, #tpu.memory_space<vmem>>, vector<1x256xf32>
    %150 = arith.truncf %148 : vector<2x1024xf32> to vector<2x1024xbf16>
    %c0_54 = arith.constant 0 : index
    %c256 = arith.constant 256 : index
    %151 = vector.load %arg2[%c0_54, %c256] : memref<1024x1664xbf16, #tpu.memory_space<vmem>>, vector<1024x256xbf16>
    %cst_55 = arith.constant dense<0.000000e+00> : vector<2x256xf32>
    %152 = tpu.matmul %150, %151, %cst_55 {dimension_numbers = #tpu.dot_dimension_numbers<[1], [0], [0], [1], [0, 0, 1, 1], [], []>} : vector<2x1024xbf16>, vector<1024x256xbf16>, vector<2x256xf32> -> vector<2x256xf32>
    %153 = vector.broadcast %149 : vector<1x256xf32> to vector<2x256xf32>
    %154 = arith.addf %153, %152 : vector<2x256xf32>
    %c0_56 = arith.constant 0 : index
    %c0_57 = arith.constant 0 : index
    %155 = vector.load %arg5[%c0_56, %c0_57] : memref<2x256xf32, #tpu.memory_space<vmem>>, vector<2x256xf32>
    tpu.vector_store %arg5[%c0_56, %c0_57], %154 {strides = array<i32>} : memref<2x256xf32, #tpu.memory_space<vmem>>, vector<2x256xf32>,
    %156 = arith.truncf %89 : vector<4x128xf32> to vector<4x128xbf16>
    %c0_58 = arith.constant 0 : index
    %c0_59 = arith.constant 0 : index
    %157 = vector.load %arg3[%c0_58, %c0_59] : memref<128x2048xbf16, #tpu.memory_space<vmem>>, vector<128x1024xbf16>
    %cst_60 = arith.constant dense<0.000000e+00> : vector<4x1024xf32>
    %158 = tpu.matmul %156, %157, %cst_60 {dimension_numbers = #tpu.dot_dimension_numbers<[1], [0], [0], [1], [0, 0, 1, 1], [], []>} : vector<4x128xbf16>, vector<128x1024xbf16>, vector<4x1024xf32> -> vector<4x1024xf32>
    %c6 = arith.constant 6 : index
    %c0_61 = arith.constant 0 : index
    %159 = vector.load %arg1[%c6, %c0_61] : memref<11x1024xf32, #tpu.memory_space<vmem>>, vector<1x1024xf32>
    %160 = vector.broadcast %159 : vector<1x1024xf32> to vector<4x1024xf32>
    %161 = arith.addf %158, %160 : vector<4x1024xf32>
    %162 = arith.truncf %161 : vector<4x1024xf32> to vector<4x1024xbf16>
    %c0_62 = arith.constant 0 : index
    %c512 = arith.constant 512 : index
    %163 = vector.load %arg2[%c0_62, %c512] : memref<1024x1664xbf16, #tpu.memory_space<vmem>>, vector<1024x1024xbf16>
    %cst_63 = arith.constant dense<0.000000e+00> : vector<4x1024xf32>
    %164 = tpu.matmul %162, %163, %cst_63 {dimension_numbers = #tpu.dot_dimension_numbers<[1], [0], [0], [1], [0, 0, 1, 1], [], []>} : vector<4x1024xbf16>, vector<1024x1024xbf16>, vector<4x1024xf32> -> vector<4x1024xf32>
    %c7 = arith.constant 7 : index
    %c0_64 = arith.constant 0 : index
    %165 = vector.load %arg1[%c7, %c0_64] : memref<11x1024xf32, #tpu.memory_space<vmem>>, vector<1x1024xf32>
    %166 = vector.broadcast %165 : vector<1x1024xf32> to vector<4x1024xf32>
    %167 = arith.addf %164, %166 : vector<4x1024xf32>
    %c10 = arith.constant 10 : index
    %c0_65 = arith.constant 0 : index
    %168 = vector.load %arg1[%c10, %c0_65] : memref<11x1024xf32, #tpu.memory_space<vmem>>, vector<1x128xf32>
    %169 = arith.truncf %167 : vector<4x1024xf32> to vector<4x1024xbf16>
    %c0_66 = arith.constant 0 : index
    %c1536 = arith.constant 1536 : index
    %170 = vector.load %arg2[%c0_66, %c1536] : memref<1024x1664xbf16, #tpu.memory_space<vmem>>, vector<1024x128xbf16>
    %cst_67 = arith.constant dense<0.000000e+00> : vector<4x128xf32>
    %171 = tpu.matmul %169, %170, %cst_67 {dimension_numbers = #tpu.dot_dimension_numbers<[1], [0], [0], [1], [0, 0, 1, 1], [], []>} : vector<4x1024xbf16>, vector<1024x128xbf16>, vector<4x128xf32> -> vector<4x128xf32>
    %172 = vector.broadcast %168 : vector<1x128xf32> to vector<4x128xf32>
    %173 = arith.addf %172, %171 : vector<4x128xf32>
    %c0_68 = arith.constant 0 : index
    %c0_69 = arith.constant 0 : index
    %174 = vector.load %arg6[%c0_68, %c0_69] : memref<4x128xf32, #tpu.memory_space<vmem>>, vector<4x128xf32>
    tpu.vector_store %arg6[%c0_68, %c0_69], %173 {strides = array<i32>} : memref<4x128xf32, #tpu.memory_space<vmem>>, vector<4x128xf32>,
    return
  }
}

</mosaic_0001>

<llo_original>
// kernel: forward.1
$region0: #{forward.1}
  #allocation0 [shape = 'u32[]', space=smem, size = 0x4, offset = 0x4, fixed_abs, tag = 'smem constant byte address 0x4 - core index']
  #allocation1 [shape = 'u32[144,128]{1,0:T(1,128)}', space=vmem, size = 0x12000, scoped, tag = 'internal scratch']
  %s0 = inlined_call_operand.vmem [shape: bf16[128,768], index: 0, kind: input, shape index: {}]
  %s1 = inlined_call_operand.hbm [shape: f32[11,1024], index: 1, kind: input, shape index: {}]
  %s2 = inlined_call_operand.hbm [shape: bf16[1024,1664], index: 2, kind: input, shape index: {}]
  %s3 = inlined_call_operand.hbm [shape: bf16[128,2048], index: 3, kind: input, shape index: {}]
  %s4 = inlined_call_operand.hbm [shape: bf16[256,1024], index: 4, kind: input, shape index: {}]
  %s5 = inlined_call_operand.vmem [shape: f32[2,256], index: 5, kind: output, shape index: {0}]
  %s6 = inlined_call_operand.vmem [shape: f32[4,128], index: 6, kind: output, shape index: {1}]
  %7 = xla_tuple %s5, %s6
  %s8 = sld [smem:[#allocation0]]
  $region54: #{forward.1} parent=0
    _
  %s10 = ssub.s32 1, %s8
  %s11 = scalar_select 0, %s10, %s8
  $region1: #{forward.1} parent=0
    #allocation2 [shape = 'u8[65536]{0}', space=vmem, size = 0x10000, scoped, tag = 'input window, operand 1, single buffered']
    #allocation3 [shape = 's32[1]{0}', space=sflag, size = 0x4, scoped, tag = 'scoped memory for forward.1']
    #allocation4 [shape = 'u8[3407872]{0}', space=vmem, size = 0x340000, scoped, tag = 'input window, operand 2, single buffered']
    #allocation5 [shape = 's32[1]{0}', space=sflag, size = 0x4, scoped, tag = 'scoped memory for forward.1']
    #allocation6 [shape = 'u8[524288]{0}', space=vmem, size = 0x80000, scoped, tag = 'input window, operand 3, single buffered']
    #allocation7 [shape = 'u8[524288]{0}', space=vmem, size = 0x80000, scoped, tag = 'input window, operand 4, single buffered']
    #allocation8 [shape = 's32[1]{0}', space=sflag, size = 0x4, scoped, tag = 'scoped memory for forward.1']
    %12 = vsyncpa [#allocation3], 0
    %13 = vsyncpa [#allocation5], 0
    %14 = vsyncpa [#allocation8], 0
    // Predicated region
    $region2: #{forward.1} parent=1 // pred_check
      _
    $region3: #{forward.1} parent=1 // pred_check_branch
      %16 = sbr.rel (0) target = $region5
    $region4: #{forward.1} parent=1 // pred_region
      _
    $region5: #{forward.1} parent=1 // pred_fallthru
      _
    // Predicated region
    $region6: #{forward.1} parent=1 // pred_check
      _
    $region7: #{forward.1} parent=1 // pred_check_branch
      %18 = sbr.rel (0) target = $region9
    $region8: #{forward.1} parent=1 // pred_region
      %s20 = ssub.s32 2048, 2048
      %21 = vsyncadd [#allocation3], %s20
      %s22 = sshll.u32 [#allocation2], 4
      %s23 = int_to_ptr.vmem [resolvable:$true] %s22
      %28 = dma.hbm_to_vmem [thread:$0]  %s1, 2048, %s23, [#allocation3], 1024, 1024, 64
    $region9: #{forward.1} parent=1 // pred_fallthru
      _
    // Predicated region
    $region10: #{forward.1} parent=1 // pred_check
      _
    $region11: #{forward.1} parent=1 // pred_check_branch
      %30 = sbr.rel (0) target = $region13
    $region12: #{forward.1} parent=1 // pred_region
      %s32 = ssub.s32 106496, 106496
      %33 = vsyncadd [#allocation5], %s32
      %s34 = sshll.u32 [#allocation4], 4
      %s35 = int_to_ptr.vmem [resolvable:$true] %s34
      %40 = dma.hbm_to_vmem [thread:$0]  %s2, 106496, %s35, [#allocation5], 832, 832, 52
    $region13: #{forward.1} parent=1 // pred_fallthru
      _
    // Predicated region
    $region14: #{forward.1} parent=1 // pred_check
      _
    $region15: #{forward.1} parent=1 // pred_check_branch
      %42 = sbr.rel (0) target = $region17
    $region16: #{forward.1} parent=1 // pred_region
      %s44 = ssub.s32 16384, 16384
      %45 = vsyncadd [#allocation5], %s44
      %s46 = sshll.u32 [#allocation6], 4
      %s47 = int_to_ptr.vmem [resolvable:$true] %s46
      %52 = dma.hbm_to_vmem [thread:$0]  %s3, 16384, %s47, [#allocation5], 1024, 1024, 64
    $region17: #{forward.1} parent=1 // pred_fallthru
      _
    // Predicated region
    $region18: #{forward.1} parent=1 // pred_check
      _
    $region19: #{forward.1} parent=1 // pred_check_branch
      %54 = sbr.rel (0) target = $region21
    $region20: #{forward.1} parent=1 // pred_region
      %s56 = ssub.s32 16384, 16384
      %57 = vsyncadd [#allocation8], %s56
      %s58 = sshll.u32 [#allocation7], 4
      %s59 = int_to_ptr.vmem [resolvable:$true] %s58
      %64 = dma.hbm_to_vmem [thread:$0]  %s4, 16384, %s59, [#allocation8], 512, 512, 32
    $region21: #{forward.1} parent=1 // pred_fallthru
      _
    // Predicated region
    $region22: #{forward.1} parent=1 // pred_check
      _
    $region23: #{forward.1} parent=1 // pred_check_branch
      %66 = sbr.rel (0) target = $region25
    $region24: #{forward.1} parent=1 // pred_region
      %67 = dma.done [#allocation3], 2048
    $region25: #{forward.1} parent=1 // pred_fallthru
      _
    // Predicated region
    $region26: #{forward.1} parent=1 // pred_check
      _
    $region27: #{forward.1} parent=1 // pred_check_branch
      %69 = sbr.rel (0) target = $region29
    $region28: #{forward.1} parent=1 // pred_region
      %70 = dma.done [#allocation5], 106496
    $region29: #{forward.1} parent=1 // pred_fallthru
      _
    // Predicated region
    $region30: #{forward.1} parent=1 // pred_check
      _
    $region31: #{forward.1} parent=1 // pred_check_branch
      %72 = sbr.rel (0) target = $region33
    $region32: #{forward.1} parent=1 // pred_region
      %73 = dma.done [#allocation5], 16384
    $region33: #{forward.1} parent=1 // pred_fallthru
      _
    // Predicated region
    $region34: #{forward.1} parent=1 // pred_check
      _
    $region35: #{forward.1} parent=1 // pred_check_branch
      %75 = sbr.rel (0) target = $region37
    $region36: #{forward.1} parent=1 // pred_region
      %76 = dma.done [#allocation8], 16384
    $region37: #{forward.1} parent=1 // pred_fallthru
      _
    %v78 = vld [vmem:[%s0] sm:$0xff]
    %v79 = vld [vmem:[%s0 + $0x8] sm:$0xff]
    %v80 = vld [vmem:[%s0 + $0x10] sm:$0xff]
    %v81 = vld [vmem:[%s0 + $0x18] sm:$0xff]
    %v82 = vld [vmem:[%s0 + $0x20] sm:$0xff]
    %v83 = vld [vmem:[%s0 + $0x28] sm:$0xff]
    %v84 = vld [vmem:[%s0 + $0x30] sm:$0xff]
    %v85 = vld [vmem:[%s0 + $0x38] sm:$0xff]
    %v86 = vld [vmem:[%s0 + $0x40] sm:$0xff]
    %v87 = vld [vmem:[%s0 + $0x48] sm:$0xff]
    %v88 = vld [vmem:[%s0 + $0x50] sm:$0xff]
    %v89 = vld [vmem:[%s0 + $0x58] sm:$0xff]
    %v90 = vld [vmem:[%s0 + $0x60] sm:$0xff]
    %v91 = vld [vmem:[%s0 + $0x68] sm:$0xff]
    %v92 = vld [vmem:[%s0 + $0x70] sm:$0xff]
    %v93 = vld [vmem:[%s0 + $0x78] sm:$0xff]
    %v94 = vld [vmem:[%s0 + $0x80] sm:$0xff]
    %v95 = vld [vmem:[%s0 + $0x88] sm:$0xff]
    %v96 = vld [vmem:[%s0 + $0x90] sm:$0xff]
    %v97 = vld [vmem:[%s0 + $0x98] sm:$0xff]
    %v98 = vld [vmem:[%s0 + $0xa0] sm:$0xff]
    %v99 = vld [vmem:[%s0 + $0xa8] sm:$0xff]
    %v100 = vld [vmem:[%s0 + $0xb0] sm:$0xff]
    %v101 = vld [vmem:[%s0 + $0xb8] sm:$0xff]
    %v102 = vld [vmem:[%s0 + $0xc0] sm:$0xff]
    %v103 = vld [vmem:[%s0 + $0xc8] sm:$0xff]
    %v104 = vld [vmem:[%s0 + $0xd0] sm:$0xff]
    %v105 = vld [vmem:[%s0 + $0xd8] sm:$0xff]
    %v106 = vld [vmem:[%s0 + $0xe0] sm:$0xff]
    %v107 = vld [vmem:[%s0 + $0xe8] sm:$0xff]
    %v108 = vld [vmem:[%s0 + $0xf0] sm:$0xff]
    %v109 = vld [vmem:[%s0 + $0xf8] sm:$0xff]
    %v110 = vld [vmem:[%s0 + $0x100] sm:$0xff]
    %v111 = vld [vmem:[%s0 + $0x108] sm:$0xff]
    %v112 = vld [vmem:[%s0 + $0x110] sm:$0xff]
    %v113 = vld [vmem:[%s0 + $0x118] sm:$0xff]
    %v114 = vld [vmem:[%s0 + $0x120] sm:$0xff]
    %v115 = vld [vmem:[%s0 + $0x128] sm:$0xff]
    %v116 = vld [vmem:[%s0 + $0x130] sm:$0xff]
    %v117 = vld [vmem:[%s0 + $0x138] sm:$0xff]
    %v118 = vld [vmem:[%s0 + $0x140] sm:$0xff]
    %v119 = vld [vmem:[%s0 + $0x148] sm:$0xff]
    %v120 = vld [vmem:[%s0 + $0x150] sm:$0xff]
    %v121 = vld [vmem:[%s0 + $0x158] sm:$0xff]
    %v122 = vld [vmem:[%s0 + $0x160] sm:$0xff]
    %v123 = vld [vmem:[%s0 + $0x168] sm:$0xff]
    %v124 = vld [vmem:[%s0 + $0x170] sm:$0xff]
    %v125 = vld [vmem:[%s0 + $0x178] sm:$0xff]
    %v126 = vld [vmem:[#allocation2 + $0x40] ss:$0 sm:$0xff]
    %v127 = vpack.c.bf16 %v126, %v126
    %v176 = vunpack.c.l.b16 %v78
    %v177 = vunpack.c.h.b16 %v78
    %v178 = vunpack.c.l.b16 %v79
    %v179 = vunpack.c.h.b16 %v79
    %v180 = vunpack.c.l.b16 %v80
    %v181 = vunpack.c.h.b16 %v80
    %v182 = vunpack.c.l.b16 %v81
    %v183 = vunpack.c.h.b16 %v81
    %v184 = vunpack.c.l.b16 %v82
    %v185 = vunpack.c.h.b16 %v82
    %v186 = vunpack.c.l.b16 %v83
    %v187 = vunpack.c.h.b16 %v83
    %v188 = vunpack.c.l.b16 %v84
    %v189 = vunpack.c.h.b16 %v84
    %v190 = vunpack.c.l.b16 %v85
    %v191 = vunpack.c.h.b16 %v85
    %v192 = vunpack.c.l.b16 %v86
    %v193 = vunpack.c.h.b16 %v86
    %v194 = vunpack.c.l.b16 %v87
    %v195 = vunpack.c.h.b16 %v87
    %v196 = vunpack.c.l.b16 %v88
    %v197 = vunpack.c.h.b16 %v88
    %v198 = vunpack.c.l.b16 %v89
    %v199 = vunpack.c.h.b16 %v89
    %v200 = vunpack.c.l.b16 %v90
    %v201 = vunpack.c.h.b16 %v90
    %v202 = vunpack.c.l.b16 %v91
    %v203 = vunpack.c.h.b16 %v91
    %v204 = vunpack.c.l.b16 %v92
    %v205 = vunpack.c.h.b16 %v92
    %v206 = vunpack.c.l.b16 %v93
    %v207 = vunpack.c.h.b16 %v93
    %v208 = vunpack.c.l.b16 %v94
    %v209 = vunpack.c.h.b16 %v94
    %v210 = vunpack.c.l.b16 %v95
    %v211 = vunpack.c.h.b16 %v95
    %v212 = vunpack.c.l.b16 %v96
    %v213 = vunpack.c.h.b16 %v96
    %v214 = vunpack.c.l.b16 %v97
    %v215 = vunpack.c.h.b16 %v97
    %v216 = vunpack.c.l.b16 %v98
    %v217 = vunpack.c.h.b16 %v98
    %v218 = vunpack.c.l.b16 %v99
    %v219 = vunpack.c.h.b16 %v99
    %v220 = vunpack.c.l.b16 %v100
    %v221 = vunpack.c.h.b16 %v100
    %v222 = vunpack.c.l.b16 %v101
    %v223 = vunpack.c.h.b16 %v101
    %v224 = vunpack.c.l.b16 %v102
    %v225 = vunpack.c.h.b16 %v102
    %v226 = vunpack.c.l.b16 %v103
    %v227 = vunpack.c.h.b16 %v103
    %v228 = vunpack.c.l.b16 %v104
    %v229 = vunpack.c.h.b16 %v104
    %v230 = vunpack.c.l.b16 %v105
    %v231 = vunpack.c.h.b16 %v105
    %v232 = vunpack.c.l.b16 %v106
    %v233 = vunpack.c.h.b16 %v106
    %v234 = vunpack.c.l.b16 %v107
    %v235 = vunpack.c.h.b16 %v107
    %v236 = vunpack.c.l.b16 %v108
    %v237 = vunpack.c.h.b16 %v108
    %v238 = vunpack.c.l.b16 %v109
    %v239 = vunpack.c.h.b16 %v109
    %v240 = vunpack.c.l.b16 %v110
    %v241 = vunpack.c.h.b16 %v110
    %v242 = vunpack.c.l.b16 %v111
    %v243 = vunpack.c.h.b16 %v111
    %v244 = vunpack.c.l.b16 %v112
    %v245 = vunpack.c.h.b16 %v112
    %v246 = vunpack.c.l.b16 %v113
    %v247 = vunpack.c.h.b16 %v113
    %v248 = vunpack.c.l.b16 %v114
    %v249 = vunpack.c.h.b16 %v114
    %v250 = vunpack.c.l.b16 %v115
    %v251 = vunpack.c.h.b16 %v115
    %v252 = vunpack.c.l.b16 %v116
    %v253 = vunpack.c.h.b16 %v116
    %v254 = vunpack.c.l.b16 %v117
    %v255 = vunpack.c.h.b16 %v117
    %v256 = vunpack.c.l.b16 %v118
    %v257 = vunpack.c.h.b16 %v118
    %v258 = vunpack.c.l.b16 %v119
    %v259 = vunpack.c.h.b16 %v119
    %v260 = vunpack.c.l.b16 %v120
    %v261 = vunpack.c.h.b16 %v120
    %v262 = vunpack.c.l.b16 %v121
    %v263 = vunpack.c.h.b16 %v121
    %v264 = vunpack.c.l.b16 %v122
    %v265 = vunpack.c.h.b16 %v122
    %v266 = vunpack.c.l.b16 %v123
    %v267 = vunpack.c.h.b16 %v123
    %v268 = vunpack.c.l.b16 %v124
    %v269 = vunpack.c.h.b16 %v124
    %v270 = vunpack.c.l.b16 %v125
    %v271 = vunpack.c.h.b16 %v125
    %v272 = vpack.c.b16 %v182, %v176
    %v273 = vpack.c.b16 %v183, %v177
    %v274 = vpack.c.b16 %v184, %v178
    %v275 = vpack.c.b16 %v185, %v179
    %v276 = vpack.c.b16 %v186, %v180
    %v277 = vpack.c.b16 %v187, %v181
    %v278 = vpack.c.b16 %v194, %v188
    %v279 = vpack.c.b16 %v195, %v189
    %v280 = vpack.c.b16 %v196, %v190
    %v281 = vpack.c.b16 %v197, %v191
    %v282 = vpack.c.b16 %v198, %v192
    %v283 = vpack.c.b16 %v199, %v193
    %v284 = vpack.c.b16 %v206, %v200
    %v285 = vpack.c.b16 %v207, %v201
    %v286 = vpack.c.b16 %v208, %v202
    %v287 = vpack.c.b16 %v209, %v203
    %v288 = vpack.c.b16 %v210, %v204
    %v289 = vpack.c.b16 %v211, %v205
    %v290 = vpack.c.b16 %v218, %v212
    %v291 = vpack.c.b16 %v219, %v213
    %v292 = vpack.c.b16 %v220, %v214
    %v293 = vpack.c.b16 %v221, %v215
    %v294 = vpack.c.b16 %v222, %v216
    %v295 = vpack.c.b16 %v223, %v217
    %v296 = vpack.c.b16 %v230, %v224
    %v297 = vpack.c.b16 %v231, %v225
    %v298 = vpack.c.b16 %v232, %v226
    %v299 = vpack.c.b16 %v233, %v227
    %v300 = vpack.c.b16 %v234, %v228
    %v301 = vpack.c.b16 %v235, %v229
    %v302 = vpack.c.b16 %v242, %v236
    %v303 = vpack.c.b16 %v243, %v237
    %v304 = vpack.c.b16 %v244, %v238
    %v305 = vpack.c.b16 %v245, %v239
    %v306 = vpack.c.b16 %v246, %v240
    %v307 = vpack.c.b16 %v247, %v241
    %v308 = vpack.c.b16 %v254, %v248
    %v309 = vpack.c.b16 %v255, %v249
    %v310 = vpack.c.b16 %v256, %v250
    %v311 = vpack.c.b16 %v257, %v251
    %v312 = vpack.c.b16 %v258, %v252
    %v313 = vpack.c.b16 %v259, %v253
    %v314 = vpack.c.b16 %v266, %v260
    %v315 = vpack.c.b16 %v267, %v261
    %v316 = vpack.c.b16 %v268, %v262
    %v317 = vpack.c.b16 %v269, %v263
    %v318 = vpack.c.b16 %v270, %v264
    %v319 = vpack.c.b16 %v271, %v265
    %368 = vmatprep.subr.bf16.mxu0 %v273
    %369 = vmatpush1.bf16.msra.mxu0 %v272
    %370 = vmatprep.subr.bf16.mxu0 %v279
    %371 = vmatpush1.bf16.msra.mxu0 %v278
    %372 = vmatprep.subr.bf16.mxu0 %v285
    %373 = vmatpush1.bf16.msra.mxu0 %v284
    %374 = vmatprep.subr.bf16.mxu0 %v291
    %375 = vmatpush1.bf16.msra.mxu0 %v290
    %376 = vmatprep.subr.bf16.mxu0 %v297
    %377 = vmatpush1.bf16.msra.mxu0 %v296
    %378 = vmatprep.subr.bf16.mxu0 %v303
    %379 = vmatpush1.bf16.msra.mxu0 %v302
    %380 = vmatprep.subr.bf16.mxu0 %v309
    %381 = vmatpush1.bf16.msra.mxu0 %v308
    %382 = vmatprep.subr.bf16.mxu0 %v315
    %383 = vmatpush1.bf16.msra.mxu0 %v314
    %384 = vmatprep.subr.bf16.mxu0 0
    %385 = vmatpush1.bf16.msra.mxu0 0
    %386 = vmatprep.subr.bf16.mxu0 0
    %387 = vmatpush1.bf16.msra.mxu0 0
    %388 = vmatprep.subr.bf16.mxu0 0
    %389 = vmatpush1.bf16.msra.mxu0 0
    %390 = vmatprep.subr.bf16.mxu0 0
    %391 = vmatpush1.bf16.msra.mxu0 0
    %392 = vmatprep.subr.bf16.mxu0 0
    %393 = vmatpush1.bf16.msra.mxu0 0
    %394 = vmatprep.subr.bf16.mxu0 0
    %395 = vmatpush1.bf16.msra.mxu0 0
    %396 = vmatprep.subr.bf16.mxu0 0
    %397 = vmatpush1.bf16.msra.mxu0 0
    %398 = vmatprep.subr.bf16.mxu0 0
    %399 = vmatpush1.bf16.msra.mxu0 0
    %400 = vmatprep.mubr.bf16.mxu0 0
    %401 = vmatmul.mubr.bf16.gmra.mrb[0].mxu0 %v127
    %v402 = vpop.f32.mrb[0].mxu0
    %v403 = vadd.f32 0.0, %v402
    %v404 = vpop.f32.mrb[0].mxu0
    %v405 = vadd.f32 0.0, %v404
    %v406 = vpop.f32.mrb[0].mxu0
    %v407 = vpop.f32.mrb[0].mxu0
    %408 = vdwg.mxu0
    %409 = vmatprep.subr.bf16.mxu0 %v275
    %410 = vmatpush1.bf16.msra.mxu0 %v274
    %411 = vmatprep.subr.bf16.mxu0 %v281
    %412 = vmatpush1.bf16.msra.mxu0 %v280
    %413 = vmatprep.subr.bf16.mxu0 %v287
    %414 = vmatpush1.bf16.msra.mxu0 %v286
    %415 = vmatprep.subr.bf16.mxu0 %v293
    %416 = vmatpush1.bf16.msra.mxu0 %v292
    %417 = vmatprep.subr.bf16.mxu0 %v299
    %418 = vmatpush1.bf16.msra.mxu0 %v298
    %419 = vmatprep.subr.bf16.mxu0 %v305
    %420 = vmatpush1.bf16.msra.mxu0 %v304
    %421 = vmatprep.subr.bf16.mxu0 %v311
    %422 = vmatpush1.bf16.msra.mxu0 %v310
    %423 = vmatprep.subr.bf16.mxu0 %v317
    %424 = vmatpush1.bf16.msra.mxu0 %v316
    %425 = vmatprep.subr.bf16.mxu0 0
    %426 = vmatpush1.bf16.msra.mxu0 0
    %427 = vmatprep.subr.bf16.mxu0 0
    %428 = vmatpush1.bf16.msra.mxu0 0
    %429 = vmatprep.subr.bf16.mxu0 0
    %430 = vmatpush1.bf16.msra.mxu0 0
    %431 = vmatprep.subr.bf16.mxu0 0
    %432 = vmatpush1.bf16.msra.mxu0 0
    %433 = vmatprep.subr.bf16.mxu0 0
    %434 = vmatpush1.bf16.msra.mxu0 0
    %435 = vmatprep.subr.bf16.mxu0 0
    %436 = vmatpush1.bf16.msra.mxu0 0
    %437 = vmatprep.subr.bf16.mxu0 0
    %438 = vmatpush1.bf16.msra.mxu0 0
    %439 = vmatprep.subr.bf16.mxu0 0
    %440 = vmatpush1.bf16.msra.mxu0 0
    %441 = vmatprep.mubr.bf16.mxu0 0
    %442 = vmatmul.mubr.bf16.gmra.mrb[0].mxu0 %v127
    %v443 = vpop.f32.mrb[0].mxu0
    %v444 = vadd.f32 0.0, %v443
    %v445 = vpop.f32.mrb[0].mxu0
    %v446 = vadd.f32 0.0, %v445
    %v447 = vpop.f32.mrb[0].mxu0
    %v448 = vpop.f32.mrb[0].mxu0
    %449 = vdwg.mxu0
    %450 = vmatprep.subr.bf16.mxu0 %v277
    %451 = vmatpush1.bf16.msra.mxu0 %v276
    %452 = vmatprep.subr.bf16.mxu0 %v283
    %453 = vmatpush1.bf16.msra.mxu0 %v282
    %454 = vmatprep.subr.bf16.mxu0 %v289
    %455 = vmatpush1.bf16.msra.mxu0 %v288
    %456 = vmatprep.subr.bf16.mxu0 %v295
    %457 = vmatpush1.bf16.msra.mxu0 %v294
    %458 = vmatprep.subr.bf16.mxu0 %v301
    %459 = vmatpush1.bf16.msra.mxu0 %v300
    %460 = vmatprep.subr.bf16.mxu0 %v307
    %461 = vmatpush1.bf16.msra.mxu0 %v306
    %462 = vmatprep.subr.bf16.mxu0 %v313
    %463 = vmatpush1.bf16.msra.mxu0 %v312
    %464 = vmatprep.subr.bf16.mxu0 %v319
    %465 = vmatpush1.bf16.msra.mxu0 %v318
    %466 = vmatprep.subr.bf16.mxu0 0
    %467 = vmatpush1.bf16.msra.mxu0 0
    %468 = vmatprep.subr.bf16.mxu0 0
    %469 = vmatpush1.bf16.msra.mxu0 0
    %470 = vmatprep.subr.bf16.mxu0 0
    %471 = vmatpush1.bf16.msra.mxu0 0
    %472 = vmatprep.subr.bf16.mxu0 0
    %473 = vmatpush1.bf16.msra.mxu0 0
    %474 = vmatprep.subr.bf16.mxu0 0
    %475 = vmatpush1.bf16.msra.mxu0 0
    %476 = vmatprep.subr.bf16.mxu0 0
    %477 = vmatpush1.bf16.msra.mxu0 0
    %478 = vmatprep.subr.bf16.mxu0 0
    %479 = vmatpush1.bf16.msra.mxu0 0
    %480 = vmatprep.subr.bf16.mxu0 0
    %481 = vmatpush1.bf16.msra.mxu0 0
    %482 = vmatprep.mubr.bf16.mxu0 0
    %483 = vmatmul.mubr.bf16.gmra.mrb[0].mxu0 %v127
    %v484 = vpop.f32.mrb[0].mxu0
    %v485 = vadd.f32 0.0, %v484
    %v486 = vpop.f32.mrb[0].mxu0
    %v487 = vadd.f32 0.0, %v486
    %v488 = vpop.f32.mrb[0].mxu0
    %v489 = vpop.f32.mrb[0].mxu0
    %490 = vdwg.mxu0
    %v491 = vlaneseq
    %v492 = vand.u32 %v491, 127
    %v493 = vadd.s32 %v492, 128
    %v494 = vadd.s32 %v492, 256
    %v495 = vadd.s32 %v492, 384
    %v496 = vadd.s32 %v492, 512
    %v497 = vadd.s32 %v492, 640
    %vm498 = vcmp.ge.s32.totalorder %v492, 0
    %vm499 = vcmp.ge.s32.totalorder %v493, 0
    %vm500 = vcmp.ge.s32.totalorder %v494, 0
    %vm501 = vcmp.ge.s32.totalorder %v495, 0
    %vm502 = vcmp.ge.s32.totalorder %v496, 0
    %vm503 = vcmp.ge.s32.totalorder %v497, 0
    %vm504 = vcmp.lt.s32.totalorder %v492, 192
    %vm505 = vcmp.lt.s32.totalorder %v493, 192
    %vm506 = vcmp.lt.s32.totalorder %v494, 192
    %vm507 = vcmp.lt.s32.totalorder %v495, 192
    %vm508 = vcmp.lt.s32.totalorder %v496, 192
    %vm509 = vcmp.lt.s32.totalorder %v497, 192
    %vm510 = vmand %vm498, %vm504
    %vm511 = vmand %vm499, %vm505
    %vm512 = vmand %vm500, %vm506
    %vm513 = vmand %vm501, %vm507
    %vm514 = vmand %vm502, %vm508
    %vm515 = vmand %vm503, %vm509
    %vm516 = vcmp.ge.s32.totalorder %v492, 384
    %vm517 = vcmp.ge.s32.totalorder %v493, 384
    %vm518 = vcmp.ge.s32.totalorder %v494, 384
    %vm519 = vcmp.ge.s32.totalorder %v495, 384
    %vm520 = vcmp.ge.s32.totalorder %v496, 384
    %vm521 = vcmp.ge.s32.totalorder %v497, 384
    %vm522 = vcmp.lt.s32.totalorder %v492, 576
    %vm523 = vcmp.lt.s32.totalorder %v493, 576
    %vm524 = vcmp.lt.s32.totalorder %v494, 576
    %vm525 = vcmp.lt.s32.totalorder %v495, 576
    %vm526 = vcmp.lt.s32.totalorder %v496, 576
    %vm527 = vcmp.lt.s32.totalorder %v497, 576
    %vm528 = vmand %vm516, %vm522
    %vm529 = vmand %vm517, %vm523
    %vm530 = vmand %vm518, %vm524
    %vm531 = vmand %vm519, %vm525
    %vm532 = vmand %vm520, %vm526
    %vm533 = vmand %vm521, %vm527
    %vm534 = vmor %vm510, %vm528
    %vm535 = vmor %vm511, %vm529
    %vm536 = vmor %vm512, %vm530
    %vm537 = vmor %vm513, %vm531
    %vm538 = vmor %vm514, %vm532
    %vm539 = vmor %vm515, %vm533
    %v540 = vsel %vm534, %v403, -1e+30
    %v541 = vsel %vm535, %v405, -1e+30
    %v542 = vsel %vm536, %v444, -1e+30
    %v543 = vsel %vm537, %v446, -1e+30
    %v544 = vsel %vm538, %v485, -1e+30
    %v545 = vsel %vm539, %v487, -1e+30
    %vm546 = vcmask 1040384
    %v547 = vsel %vm546, %v540, -inf
    %v548 = vsel %vm546, %v541, -inf
    %v549 = vsel %vm546, %v542, -inf
    %v550 = vsel %vm546, %v543, -inf
    %v551 = vsel %vm546, %v544, -inf
    %v552 = vmax.f32 %v547, %v551
    %v553 = vsel %vm546, %v545, -inf
    %v554 = vmax.f32 %v548, %v553
    %v555 = vmax.f32 %v552, %v554
    %v556 = vmax.f32 %v549, %v550
    %v557 = vmax.f32 %v555, %v556
    %558 = vmax.xlane.f32.xlu0 %v557
    %v559 = vpop.xlane.xlu0 %558
    %v560 = vsub.f32 %v540, %v559
    %v561 = vsub.f32 %v541, %v559
    %v562 = vsub.f32 %v542, %v559
    %v563 = vsub.f32 %v543, %v559
    %v564 = vsub.f32 %v544, %v559
    %v565 = vsub.f32 %v545, %v559
    %v566 = vmul.f32 %v560, 1.442695
    %v567 = vpow.pop %v566
    %v568 = vmul.f32 %v561, 1.442695
    %v569 = vpow.pop %v568
    %v570 = vmul.f32 %v562, 1.442695
    %v571 = vpow.pop %v570
    %v572 = vmul.f32 %v563, 1.442695
    %v573 = vpow.pop %v572
    %v574 = vmul.f32 %v564, 1.442695
    %v575 = vpow.pop %v574
    %v576 = vmul.f32 %v565, 1.442695
    %v577 = vpow.pop %v576
    %v578 = vsel %vm546, %v567, 0.0
    %v579 = vsel %vm546, %v569, 0.0
    %v580 = vadd.f32 %v578, %v579
    %v581 = vsel %vm546, %v571, 0.0
    %v582 = vadd.f32 %v580, %v581
    %v583 = vsel %vm546, %v573, 0.0
    %v584 = vadd.f32 %v582, %v583
    %v585 = vsel %vm546, %v575, 0.0
    %v586 = vadd.f32 %v584, %v585
    %v587 = vsel %vm546, %v577, 0.0
    %v588 = vadd.f32 %v586, %v587
    %589 = vadd.xlane.f32.xlu0 %v588
    %v590 = vpop.xlane.xlu0 %589
    %v591 = vrcp.pop %v590
    %v592 = vmul.f32 %v567, %v591
    %v593 = vmul.f32 %v569, %v591
    %v594 = vmul.f32 %v571, %v591
    %v595 = vmul.f32 %v573, %v591
    %v596 = vmul.f32 %v575, %v591
    %v597 = vmul.f32 %v577, %v591
    %vm598 = vcmp.ge.s32.totalorder %v492, 192
    %vm599 = vcmp.ge.s32.totalorder %v493, 192
    %vm600 = vcmp.ge.s32.totalorder %v494, 192
    %vm601 = vcmp.ge.s32.totalorder %v495, 192
    %vm602 = vcmp.ge.s32.totalorder %v496, 192
    %vm603 = vcmp.ge.s32.totalorder %v497, 192
    %vm604 = vcmp.lt.s32.totalorder %v492, 384
    %vm605 = vcmp.lt.s32.totalorder %v493, 384
    %vm606 = vcmp.lt.s32.totalorder %v494, 384
    %vm607 = vcmp.lt.s32.totalorder %v495, 384
    %vm608 = vcmp.lt.s32.totalorder %v496, 384
    %vm609 = vcmp.lt.s32.totalorder %v497, 384
    %vm610 = vmand %vm598, %vm604
    %vm611 = vmand %vm599, %vm605
    %vm612 = vmand %vm600, %vm606
    %vm613 = vmand %vm601, %vm607
    %vm614 = vmand %vm602, %vm608
    %vm615 = vmand %vm603, %vm609
    %vm616 = vcmp.ge.s32.totalorder %v492, 576
    %vm617 = vcmp.ge.s32.totalorder %v493, 576
    %vm618 = vcmp.ge.s32.totalorder %v494, 576
    %vm619 = vcmp.ge.s32.totalorder %v495, 576
    %vm620 = vcmp.ge.s32.totalorder %v496, 576
    %vm621 = vcmp.ge.s32.totalorder %v497, 576
    %vm622 = vcmp.lt.s32.totalorder %v492, 768
    %vm623 = vcmp.lt.s32.totalorder %v493, 768
    %vm624 = vcmp.lt.s32.totalorder %v494, 768
    %vm625 = vcmp.lt.s32.totalorder %v495, 768
    %vm626 = vcmp.lt.s32.totalorder %v496, 768
    %vm627 = vcmp.lt.s32.totalorder %v497, 768
    %vm628 = vmand %vm616, %vm622
    %vm629 = vmand %vm617, %vm623
    %vm630 = vmand %vm618, %vm624
    %vm631 = vmand %vm619, %vm625
    %vm632 = vmand %vm620, %vm626
    %vm633 = vmand %vm621, %vm627
    %vm634 = vmor %vm610, %vm628
    %vm635 = vmor %vm611, %vm629
    %vm636 = vmor %vm612, %vm630
    %vm637 = vmor %vm613, %vm631
    %vm638 = vmor %vm614, %vm632
    %vm639 = vmor %vm615, %vm633
    %v640 = vsel %vm634, %v403, -1e+30
    %v641 = vsel %vm635, %v405, -1e+30
    %v642 = vsel %vm636, %v444, -1e+30
    %v643 = vsel %vm637, %v446, -1e+30
    %v644 = vsel %vm638, %v485, -1e+30
    %v645 = vsel %vm639, %v487, -1e+30
    %v646 = vsel %vm546, %v640, -inf
    %v647 = vsel %vm546, %v641, -inf
    %v648 = vsel %vm546, %v642, -inf
    %v649 = vsel %vm546, %v643, -inf
    %v650 = vsel %vm546, %v644, -inf
    %v651 = vmax.f32 %v646, %v650
    %v652 = vsel %vm546, %v645, -inf
    %v653 = vmax.f32 %v647, %v652
    %v654 = vmax.f32 %v651, %v653
    %v655 = vmax.f32 %v648, %v649
    %v656 = vmax.f32 %v654, %v655
    %657 = vmax.xlane.f32.xlu0 %v656
    %v658 = vpop.xlane.xlu0 %657
    %v659 = vsub.f32 %v640, %v658
    %v660 = vsub.f32 %v641, %v658
    %v661 = vsub.f32 %v642, %v658
    %v662 = vsub.f32 %v643, %v658
    %v663 = vsub.f32 %v644, %v658
    %v664 = vsub.f32 %v645, %v658
    %v665 = vmul.f32 %v659, 1.442695
    %v666 = vpow.pop %v665
    %v667 = vmul.f32 %v660, 1.442695
    %v668 = vpow.pop %v667
    %v669 = vmul.f32 %v661, 1.442695
    %v670 = vpow.pop %v669
    %v671 = vmul.f32 %v662, 1.442695
    %v672 = vpow.pop %v671
    %v673 = vmul.f32 %v663, 1.442695
    %v674 = vpow.pop %v673
    %v675 = vmul.f32 %v664, 1.442695
    %v676 = vpow.pop %v675
    %v677 = vsel %vm546, %v666, 0.0
    %v678 = vsel %vm546, %v668, 0.0
    %v679 = vadd.f32 %v677, %v678
    %v680 = vsel %vm546, %v670, 0.0
    %v681 = vadd.f32 %v679, %v680
    %v682 = vsel %vm546, %v672, 0.0
    %v683 = vadd.f32 %v681, %v682
    %v684 = vsel %vm546, %v674, 0.0
    %v685 = vadd.f32 %v683, %v684
    %v686 = vsel %vm546, %v676, 0.0
    %v687 = vadd.f32 %v685, %v686
    %688 = vadd.xlane.f32.xlu0 %v687
    %v689 = vpop.xlane.xlu0 %688
    %v690 = vrcp.pop %v689
    %v691 = vmul.f32 %v666, %v690
    %v692 = vmul.f32 %v668, %v690
    %v693 = vmul.f32 %v670, %v690
    %v694 = vmul.f32 %v672, %v690
    %v695 = vmul.f32 %v674, %v690
    %v696 = vmul.f32 %v676, %v690
    %v697 = vsel %vm510, 1.0, 0.0
    %v698 = vsel %vm511, 1.0, 0.0
    %v699 = vsel %vm512, 1.0, 0.0
    %v700 = vsel %vm513, 1.0, 0.0
    %v701 = vsel %vm514, 1.0, 0.0
    %v702 = vsel %vm515, 1.0, 0.0
    %v703 = vsel %vm610, 1.0, 0.0
    %v704 = vsel %vm611, 1.0, 0.0
    %v705 = vsel %vm612, 1.0, 0.0
    %v706 = vsel %vm613, 1.0, 0.0
    %v707 = vsel %vm614, 1.0, 0.0
    %v708 = vsel %vm615, 1.0, 0.0
    %v709 = vsel %vm528, 1.0, 0.0
    %v710 = vsel %vm529, 1.0, 0.0
    %v711 = vsel %vm530, 1.0, 0.0
    %v712 = vsel %vm531, 1.0, 0.0
    %v713 = vsel %vm532, 1.0, 0.0
    %v714 = vsel %vm533, 1.0, 0.0
    %v715 = vsel %vm628, 1.0, 0.0
    %v716 = vsel %vm629, 1.0, 0.0
    %v717 = vsel %vm630, 1.0, 0.0
    %v718 = vsel %vm631, 1.0, 0.0
    %v719 = vsel %vm632, 1.0, 0.0
    %v720 = vsel %vm633, 1.0, 0.0
    %v727 = vrot.slane %v691, 7
    %v728 = vrot.slane %v692, 7
    %v729 = vrot.slane %v693, 7
    %v730 = vrot.slane %v694, 7
    %v731 = vrot.slane %v695, 7
    %v732 = vrot.slane %v696, 7
    %v739 = vsel %vm546, %v592, %v727
    %v740 = vsel %vm546, %v593, %v728
    %v741 = vsel %vm546, %v594, %v729
    %v742 = vsel %vm546, %v595, %v730
    %v743 = vsel %vm546, %v596, %v731
    %v744 = vsel %vm546, %v597, %v732
    %vm745 = vcmask 1041408
    %v746 = vsel %vm745, %v739, %v697
    %v747 = vsel %vm745, %v740, %v698
    %v748 = vsel %vm745, %v741, %v699
    %v749 = vsel %vm745, %v742, %v700
    %v750 = vsel %vm745, %v743, %v701
    %v751 = vsel %vm745, %v744, %v702
    %vm752 = vcmask 1042432
    %v753 = vsel %vm752, %v746, %v703
    %v754 = vsel %vm752, %v747, %v704
    %v755 = vsel %vm752, %v748, %v705
    %v756 = vsel %vm752, %v749, %v706
    %v757 = vsel %vm752, %v750, %v707
    %v758 = vsel %vm752, %v751, %v708
    %vm759 = vcmask 1043456
    %v760 = vsel %vm759, %v753, %v709
    %v761 = vsel %vm759, %v754, %v710
    %v762 = vsel %vm759, %v755, %v711
    %v763 = vsel %vm759, %v756, %v712
    %v764 = vsel %vm759, %v757, %v713
    %v765 = vsel %vm759, %v758, %v714
    %vm766 = vcmask 1044480
    %v767 = vsel %vm766, %v760, %v715
    %v768 = vsel %vm766, %v761, %v716
    %v769 = vsel %vm766, %v762, %v717
    %v770 = vsel %vm766, %v763, %v718
    %v771 = vsel %vm766, %v764, %v719
    %v772 = vsel %vm766, %v765, %v720
    %v773 = vpack.c.bf16 %v767, %v767
    %v774 = vpack.c.bf16 %v768, %v768
    %v775 = vpack.c.bf16 %v769, %v769
    %v776 = vpack.c.bf16 %v770, %v770
    %v777 = vpack.c.bf16 %v771, %v771
    %v778 = vpack.c.bf16 %v772, %v772
    %779 = vmatprep.subr.bf16.mxu0 %v273
    %780 = vmatpush1.bf16.xpose.msra.mxu0 %v272
    %781 = vmatprep.subr.bf16.mxu0 %v279
    %782 = vmatpush1.bf16.xpose.msra.mxu0 %v278
    %783 = vmatprep.subr.bf16.mxu0 %v285
    %784 = vmatpush1.bf16.xpose.msra.mxu0 %v284
    %785 = vmatprep.subr.bf16.mxu0 %v291
    %786 = vmatpush1.bf16.xpose.msra.mxu0 %v290
    %787 = vmatprep.subr.bf16.mxu0 %v297
    %788 = vmatpush1.bf16.xpose.msra.mxu0 %v296
    %789 = vmatprep.subr.bf16.mxu0 %v303
    %790 = vmatpush1.bf16.xpose.msra.mxu0 %v302
    %791 = vmatprep.subr.bf16.mxu0 %v309
    %792 = vmatpush1.bf16.xpose.msra.mxu0 %v308
    %793 = vmatprep.subr.bf16.mxu0 %v315
    %794 = vmatpush1.bf16.xpose.msra.mxu0 %v314
    %795 = vmatprep.subr.bf16.mxu0 0
    %796 = vmatpush1.bf16.xpose.msra.mxu0 0
    %797 = vmatprep.subr.bf16.mxu0 0
    %798 = vmatpush1.bf16.xpose.msra.mxu0 0
    %799 = vmatprep.subr.bf16.mxu0 0
    %800 = vmatpush1.bf16.xpose.msra.mxu0 0
    %801 = vmatprep.subr.bf16.mxu0 0
    %802 = vmatpush1.bf16.xpose.msra.mxu0 0
    %803 = vmatprep.subr.bf16.mxu0 0
    %804 = vmatpush1.bf16.xpose.msra.mxu0 0
    %805 = vmatprep.subr.bf16.mxu0 0
    %806 = vmatpush1.bf16.xpose.msra.mxu0 0
    %807 = vmatprep.subr.bf16.mxu0 0
    %808 = vmatpush1.bf16.xpose.msra.mxu0 0
    %809 = vmatprep.subr.bf16.mxu0 0
    %810 = vmatpush1.bf16.xpose.msra.mxu0 0
    %811 = vmatprep.mubr.bf16.mxu0 %v774
    %812 = vmatmul.mubr.bf16.gmra.mrb[0].mxu0 %v773
    %v813 = vpop.f32.mrb[0].mxu0
    %v814 = vadd.f32 0.0, %v813
    %v815 = vpop.f32.mrb[0].mxu0
    %v816 = vpop.f32.mrb[0].mxu0
    %v817 = vpop.f32.mrb[0].mxu0
    %818 = vdwg.mxu0
    %819 = vmatprep.subr.bf16.mxu0 %v275
    %820 = vmatpush1.bf16.xpose.msra.mxu0 %v274
    %821 = vmatprep.subr.bf16.mxu0 %v281
    %822 = vmatpush1.bf16.xpose.msra.mxu0 %v280
    %823 = vmatprep.subr.bf16.mxu0 %v287
    %824 = vmatpush1.bf16.xpose.msra.mxu0 %v286
    %825 = vmatprep.subr.bf16.mxu0 %v293
    %826 = vmatpush1.bf16.xpose.msra.mxu0 %v292
    %827 = vmatprep.subr.bf16.mxu0 %v299
    %828 = vmatpush1.bf16.xpose.msra.mxu0 %v298
    %829 = vmatprep.subr.bf16.mxu0 %v305
    %830 = vmatpush1.bf16.xpose.msra.mxu0 %v304
    %831 = vmatprep.subr.bf16.mxu0 %v311
    %832 = vmatpush1.bf16.xpose.msra.mxu0 %v310
    %833 = vmatprep.subr.bf16.mxu0 %v317
    %834 = vmatpush1.bf16.xpose.msra.mxu0 %v316
    %835 = vmatprep.subr.bf16.mxu0 0
    %836 = vmatpush1.bf16.xpose.msra.mxu0 0
    %837 = vmatprep.subr.bf16.mxu0 0
    %838 = vmatpush1.bf16.xpose.msra.mxu0 0
    %839 = vmatprep.subr.bf16.mxu0 0
    %840 = vmatpush1.bf16.xpose.msra.mxu0 0
    %841 = vmatprep.subr.bf16.mxu0 0
    %842 = vmatpush1.bf16.xpose.msra.mxu0 0
    %843 = vmatprep.subr.bf16.mxu0 0
    %844 = vmatpush1.bf16.xpose.msra.mxu0 0
    %845 = vmatprep.subr.bf16.mxu0 0
    %846 = vmatpush1.bf16.xpose.msra.mxu0 0
    %847 = vmatprep.subr.bf16.mxu0 0
    %848 = vmatpush1.bf16.xpose.msra.mxu0 0
    %849 = vmatprep.subr.bf16.mxu0 0
    %850 = vmatpush1.bf16.xpose.msra.mxu0 0
    %851 = vmatprep.mubr.bf16.mxu0 %v776
    %852 = vmatmul.mubr.bf16.gmra.mrb[0].mxu0 %v775
    %v853 = vpop.f32.mrb[0].mxu0
    %v854 = vadd.f32 %v814, %v853
    %v855 = vpop.f32.mrb[0].mxu0
    %v856 = vpop.f32.mrb[0].mxu0
    %v857 = vpop.f32.mrb[0].mxu0
    %858 = vdwg.mxu0
    %859 = vmatprep.subr.bf16.mxu0 %v277
    %860 = vmatpush1.bf16.xpose.msra.mxu0 %v276
    %861 = vmatprep.subr.bf16.mxu0 %v283
    %862 = vmatpush1.bf16.xpose.msra.mxu0 %v282
    %863 = vmatprep.subr.bf16.mxu0 %v289
    %864 = vmatpush1.bf16.xpose.msra.mxu0 %v288
    %865 = vmatprep.subr.bf16.mxu0 %v295
    %866 = vmatpush1.bf16.xpose.msra.mxu0 %v294
    %867 = vmatprep.subr.bf16.mxu0 %v301
    %868 = vmatpush1.bf16.xpose.msra.mxu0 %v300
    %869 = vmatprep.subr.bf16.mxu0 %v307
    %870 = vmatpush1.bf16.xpose.msra.mxu0 %v306
    %871 = vmatprep.subr.bf16.mxu0 %v313
    %872 = vmatpush1.bf16.xpose.msra.mxu0 %v312
    %873 = vmatprep.subr.bf16.mxu0 %v319
    %874 = vmatpush1.bf16.xpose.msra.mxu0 %v318
    %875 = vmatprep.subr.bf16.mxu0 0
    %876 = vmatpush1.bf16.xpose.msra.mxu0 0
    %877 = vmatprep.subr.bf16.mxu0 0
    %878 = vmatpush1.bf16.xpose.msra.mxu0 0
    %879 = vmatprep.subr.bf16.mxu0 0
    %880 = vmatpush1.bf16.xpose.msra.mxu0 0
    %881 = vmatprep.subr.bf16.mxu0 0
    %882 = vmatpush1.bf16.xpose.msra.mxu0 0
    %883 = vmatprep.subr.bf16.mxu0 0
    %884 = vmatpush1.bf16.xpose.msra.mxu0 0
    %885 = vmatprep.subr.bf16.mxu0 0
    %886 = vmatpush1.bf16.xpose.msra.mxu0 0
    %887 = vmatprep.subr.bf16.mxu0 0
    %888 = vmatpush1.bf16.xpose.msra.mxu0 0
    %889 = vmatprep.subr.bf16.mxu0 0
    %890 = vmatpush1.bf16.xpose.msra.mxu0 0
    %891 = vmatprep.mubr.bf16.mxu0 %v778
    %892 = vmatmul.mubr.bf16.gmra.mrb[0].mxu0 %v777
    %v893 = vpop.f32.mrb[0].mxu0
    %v894 = vadd.f32 %v854, %v893
    %v895 = vpop.f32.mrb[0].mxu0
    %v896 = vpop.f32.mrb[0].mxu0
    %v897 = vpop.f32.mrb[0].mxu0
    %898 = vdwg.mxu0
    %v899 = vmul.f32 %v894, 0.0052083335
    %v900 = vld [vmem:[#allocation6 + $0x20] sm:$0xff]
    %v901 = vld [vmem:[#allocation6 + $0x28] sm:$0xff]
    %v902 = vld [vmem:[#allocation6 + $0x30] sm:$0xff]
    %v903 = vld [vmem:[#allocation6 + $0x38] sm:$0xff]
    %v904 = vld [vmem:[#allocation6 + $0x60] sm:$0xff]
    %v905 = vld [vmem:[#allocation6 + $0x68] sm:$0xff]
    %v906 = vld [vmem:[#allocation6 + $0x70] sm:$0xff]
    %v907 = vld [vmem:[#allocation6 + $0x78] sm:$0xff]
    %v908 = vld [vmem:[#allocation6 + $0xa0] sm:$0xff]
    %v909 = vld [vmem:[#allocation6 + $0xa8] sm:$0xff]
    %v910 = vld [vmem:[#allocation6 + $0xb0] sm:$0xff]
    %v911 = vld [vmem:[#allocation6 + $0xb8] sm:$0xff]
    %v912 = vld [vmem:[#allocation6 + $0xe0] sm:$0xff]
    %v913 = vld [vmem:[#allocation6 + $0xe8] sm:$0xff]
    %v914 = vld [vmem:[#allocation6 + $0xf0] sm:$0xff]
    %v915 = vld [vmem:[#allocation6 + $0xf8] sm:$0xff]
    %v916 = vld [vmem:[#allocation6 + $0x120] sm:$0xff]
    %v917 = vld [vmem:[#allocation6 + $0x128] sm:$0xff]
    %v918 = vld [vmem:[#allocation6 + $0x130] sm:$0xff]
    %v919 = vld [vmem:[#allocation6 + $0x138] sm:$0xff]
    %v920 = vld [vmem:[#allocation6 + $0x160] sm:$0xff]
    %v921 = vld [vmem:[#allocation6 + $0x168] sm:$0xff]
    %v922 = vld [vmem:[#allocation6 + $0x170] sm:$0xff]
    %v923 = vld [vmem:[#allocation6 + $0x178] sm:$0xff]
    %v924 = vld [vmem:[#allocation6 + $0x1a0] sm:$0xff]
    %v925 = vld [vmem:[#allocation6 + $0x1a8] sm:$0xff]
    %v926 = vld [vmem:[#allocation6 + $0x1b0] sm:$0xff]
    %v927 = vld [vmem:[#allocation6 + $0x1b8] sm:$0xff]
    %v928 = vld [vmem:[#allocation6 + $0x1e0] sm:$0xff]
    %v929 = vld [vmem:[#allocation6 + $0x1e8] sm:$0xff]
    %v930 = vld [vmem:[#allocation6 + $0x1f0] sm:$0xff]
    %v931 = vld [vmem:[#allocation6 + $0x1f8] sm:$0xff]
    %v932 = vld [vmem:[#allocation6 + $0x220] sm:$0xff]
    %v933 = vld [vmem:[#allocation6 + $0x228] sm:$0xff]
    %v934 = vld [vmem:[#allocation6 + $0x230] sm:$0xff]
    %v935 = vld [vmem:[#allocation6 + $0x238] sm:$0xff]
    %v936 = vld [vmem:[#allocation6 + $0x260] sm:$0xff]
    %v937 = vld [vmem:[#allocation6 + $0x268] sm:$0xff]
    %v938 = vld [vmem:[#allocation6 + $0x270] sm:$0xff]
    %v939 = vld [vmem:[#allocation6 + $0x278] sm:$0xff]
    %v940 = vld [vmem:[#allocation6 + $0x2a0] sm:$0xff]
    %v941 = vld [vmem:[#allocation6 + $0x2a8] sm:$0xff]
    %v942 = vld [vmem:[#allocation6 + $0x2b0] sm:$0xff]
    %v943 = vld [vmem:[#allocation6 + $0x2b8] sm:$0xff]
    %v944 = vld [vmem:[#allocation6 + $0x2e0] sm:$0xff]
    %v945 = vld [vmem:[#allocation6 + $0x2e8] sm:$0xff]
    %v946 = vld [vmem:[#allocation6 + $0x2f0] sm:$0xff]
    %v947 = vld [vmem:[#allocation6 + $0x2f8] sm:$0xff]
    %v948 = vld [vmem:[#allocation6 + $0x320] sm:$0xff]
    %v949 = vld [vmem:[#allocation6 + $0x328] sm:$0xff]
    %v950 = vld [vmem:[#allocation6 + $0x330] sm:$0xff]
    %v951 = vld [vmem:[#allocation6 + $0x338] sm:$0xff]
    %v952 = vld [vmem:[#allocation6 + $0x360] sm:$0xff]
    %v953 = vld [vmem:[#allocation6 + $0x368] sm:$0xff]
    %v954 = vld [vmem:[#allocation6 + $0x370] sm:$0xff]
    %v955 = vld [vmem:[#allocation6 + $0x378] sm:$0xff]
    %v956 = vld [vmem:[#allocation6 + $0x3a0] sm:$0xff]
    %v957 = vld [vmem:[#allocation6 + $0x3a8] sm:$0xff]
    %v958 = vld [vmem:[#allocation6 + $0x3b0] sm:$0xff]
    %v959 = vld [vmem:[#allocation6 + $0x3b8] sm:$0xff]
    %v960 = vld [vmem:[#allocation6 + $0x3e0] sm:$0xff]
    %v961 = vld [vmem:[#allocation6 + $0x3e8] sm:$0xff]
    %v962 = vld [vmem:[#allocation6 + $0x3f0] sm:$0xff]
    %v963 = vld [vmem:[#allocation6 + $0x3f8] sm:$0xff]
    %v964 = vld [vmem:[#allocation2] ss:$8 sm:$0xf]
    %v965 = vld [vmem:[#allocation2] ss:$8 sm:$0xf0]
    %v966 = vor.u32 %v964, %v965
    %v967 = vpack.c.bf16 %v894, %v894
    %v1032 = vunpack.c.l.b16 %v900
    %v1033 = vunpack.c.h.b16 %v900
    %v1034 = vunpack.c.l.b16 %v901
    %v1035 = vunpack.c.h.b16 %v901
    %v1036 = vunpack.c.l.b16 %v902
    %v1037 = vunpack.c.h.b16 %v902
    %v1038 = vunpack.c.l.b16 %v903
    %v1039 = vunpack.c.h.b16 %v903
    %v1040 = vunpack.c.l.b16 %v904
    %v1041 = vunpack.c.h.b16 %v904
    %v1042 = vunpack.c.l.b16 %v905
    %v1043 = vunpack.c.h.b16 %v905
    %v1044 = vunpack.c.l.b16 %v906
    %v1045 = vunpack.c.h.b16 %v906
    %v1046 = vunpack.c.l.b16 %v907
    %v1047 = vunpack.c.h.b16 %v907
    %v1048 = vunpack.c.l.b16 %v908
    %v1049 = vunpack.c.h.b16 %v908
    %v1050 = vunpack.c.l.b16 %v909
    %v1051 = vunpack.c.h.b16 %v909
    %v1052 = vunpack.c.l.b16 %v910
    %v1053 = vunpack.c.h.b16 %v910
    %v1054 = vunpack.c.l.b16 %v911
    %v1055 = vunpack.c.h.b16 %v911
    %v1056 = vunpack.c.l.b16 %v912
    %v1057 = vunpack.c.h.b16 %v912
    %v1058 = vunpack.c.l.b16 %v913
    %v1059 = vunpack.c.h.b16 %v913
    %v1060 = vunpack.c.l.b16 %v914
    %v1061 = vunpack.c.h.b16 %v914
    %v1062 = vunpack.c.l.b16 %v915
    %v1063 = vunpack.c.h.b16 %v915
    %v1064 = vunpack.c.l.b16 %v916
    %v1065 = vunpack.c.h.b16 %v916
    %v1066 = vunpack.c.l.b16 %v917
    %v1067 = vunpack.c.h.b16 %v917
    %v1068 = vunpack.c.l.b16 %v918
    %v1069 = vunpack.c.h.b16 %v918
    %v1070 = vunpack.c.l.b16 %v919
    %v1071 = vunpack.c.h.b16 %v919
    %v1072 = vunpack.c.l.b16 %v920
    %v1073 = vunpack.c.h.b16 %v920
    %v1074 = vunpack.c.l.b16 %v921
    %v1075 = vunpack.c.h.b16 %v921
    %v1076 = vunpack.c.l.b16 %v922
    %v1077 = vunpack.c.h.b16 %v922
    %v1078 = vunpack.c.l.b16 %v923
    %v1079 = vunpack.c.h.b16 %v923
    %v1080 = vunpack.c.l.b16 %v924
    %v1081 = vunpack.c.h.b16 %v924
    %v1082 = vunpack.c.l.b16 %v925
    %v1083 = vunpack.c.h.b16 %v925
    %v1084 = vunpack.c.l.b16 %v926
    %v1085 = vunpack.c.h.b16 %v926
    %v1086 = vunpack.c.l.b16 %v927
    %v1087 = vunpack.c.h.b16 %v927
    %v1088 = vunpack.c.l.b16 %v928
    %v1089 = vunpack.c.h.b16 %v928
    %v1090 = vunpack.c.l.b16 %v929
    %v1091 = vunpack.c.h.b16 %v929
    %v1092 = vunpack.c.l.b16 %v930
    %v1093 = vunpack.c.h.b16 %v930
    %v1094 = vunpack.c.l.b16 %v931
    %v1095 = vunpack.c.h.b16 %v931
    %v1096 = vunpack.c.l.b16 %v932
    %v1097 = vunpack.c.h.b16 %v932
    %v1098 = vunpack.c.l.b16 %v933
    %v1099 = vunpack.c.h.b16 %v933
    %v1100 = vunpack.c.l.b16 %v934
    %v1101 = vunpack.c.h.b16 %v934
    %v1102 = vunpack.c.l.b16 %v935
    %v1103 = vunpack.c.h.b16 %v935
    %v1104 = vunpack.c.l.b16 %v936
    %v1105 = vunpack.c.h.b16 %v936
    %v1106 = vunpack.c.l.b16 %v937
    %v1107 = vunpack.c.h.b16 %v937
    %v1108 = vunpack.c.l.b16 %v938
    %v1109 = vunpack.c.h.b16 %v938
    %v1110 = vunpack.c.l.b16 %v939
    %v1111 = vunpack.c.h.b16 %v939
    %v1112 = vunpack.c.l.b16 %v940
    %v1113 = vunpack.c.h.b16 %v940
    %v1114 = vunpack.c.l.b16 %v941
    %v1115 = vunpack.c.h.b16 %v941
    %v1116 = vunpack.c.l.b16 %v942
    %v1117 = vunpack.c.h.b16 %v942
    %v1118 = vunpack.c.l.b16 %v943
    %v1119 = vunpack.c.h.b16 %v943
    %v1120 = vunpack.c.l.b16 %v944
    %v1121 = vunpack.c.h.b16 %v944
    %v1122 = vunpack.c.l.b16 %v945
    %v1123 = vunpack.c.h.b16 %v945
    %v1124 = vunpack.c.l.b16 %v946
    %v1125 = vunpack.c.h.b16 %v946
    %v1126 = vunpack.c.l.b16 %v947
    %v1127 = vunpack.c.h.b16 %v947
    %v1128 = vunpack.c.l.b16 %v948
    %v1129 = vunpack.c.h.b16 %v948
    %v1130 = vunpack.c.l.b16 %v949
    %v1131 = vunpack.c.h.b16 %v949
    %v1132 = vunpack.c.l.b16 %v950
    %v1133 = vunpack.c.h.b16 %v950
    %v1134 = vunpack.c.l.b16 %v951
    %v1135 = vunpack.c.h.b16 %v951
    %v1136 = vunpack.c.l.b16 %v952
    %v1137 = vunpack.c.h.b16 %v952
    %v1138 = vunpack.c.l.b16 %v953
    %v1139 = vunpack.c.h.b16 %v953
    %v1140 = vunpack.c.l.b16 %v954
    %v1141 = vunpack.c.h.b16 %v954
    %v1142 = vunpack.c.l.b16 %v955
    %v1143 = vunpack.c.h.b16 %v955
    %v1144 = vunpack.c.l.b16 %v956
    %v1145 = vunpack.c.h.b16 %v956
    %v1146 = vunpack.c.l.b16 %v957
    %v1147 = vunpack.c.h.b16 %v957
    %v1148 = vunpack.c.l.b16 %v958
    %v1149 = vunpack.c.h.b16 %v958
    %v1150 = vunpack.c.l.b16 %v959
    %v1151 = vunpack.c.h.b16 %v959
    %v1152 = vunpack.c.l.b16 %v960
    %v1153 = vunpack.c.h.b16 %v960
    %v1154 = vunpack.c.l.b16 %v961
    %v1155 = vunpack.c.h.b16 %v961
    %v1156 = vunpack.c.l.b16 %v962
    %v1157 = vunpack.c.h.b16 %v962
    %v1158 = vunpack.c.l.b16 %v963
    %v1159 = vunpack.c.h.b16 %v963
    %v1160 = vpack.c.b16 %v1040, %v1032
    %v1161 = vpack.c.b16 %v1041, %v1033
    %v1162 = vpack.c.b16 %v1042, %v1034
    %v1163 = vpack.c.b16 %v1043, %v1035
    %v1164 = vpack.c.b16 %v1044, %v1036
    %v1165 = vpack.c.b16 %v1045, %v1037
    %v1166 = vpack.c.b16 %v1046, %v1038
    %v1167 = vpack.c.b16 %v1047, %v1039
    %v1168 = vpack.c.b16 %v1056, %v1048
    %v1169 = vpack.c.b16 %v1057, %v1049
    %v1170 = vpack.c.b16 %v1058, %v1050
    %v1171 = vpack.c.b16 %v1059, %v1051
    %v1172 = vpack.c.b16 %v1060, %v1052
    %v1173 = vpack.c.b16 %v1061, %v1053
    %v1174 = vpack.c.b16 %v1062, %v1054
    %v1175 = vpack.c.b16 %v1063, %v1055
    %v1176 = vpack.c.b16 %v1072, %v1064
    %v1177 = vpack.c.b16 %v1073, %v1065
    %v1178 = vpack.c.b16 %v1074, %v1066
    %v1179 = vpack.c.b16 %v1075, %v1067
    %v1180 = vpack.c.b16 %v1076, %v1068
    %v1181 = vpack.c.b16 %v1077, %v1069
    %v1182 = vpack.c.b16 %v1078, %v1070
    %v1183 = vpack.c.b16 %v1079, %v1071
    %v1184 = vpack.c.b16 %v1088, %v1080
    %v1185 = vpack.c.b16 %v1089, %v1081
    %v1186 = vpack.c.b16 %v1090, %v1082
    %v1187 = vpack.c.b16 %v1091, %v1083
    %v1188 = vpack.c.b16 %v1092, %v1084
    %v1189 = vpack.c.b16 %v1093, %v1085
    %v1190 = vpack.c.b16 %v1094, %v1086
    %v1191 = vpack.c.b16 %v1095, %v1087
    %v1192 = vpack.c.b16 %v1104, %v1096
    %v1193 = vpack.c.b16 %v1105, %v1097
    %v1194 = vpack.c.b16 %v1106, %v1098
    %v1195 = vpack.c.b16 %v1107, %v1099
    %v1196 = vpack.c.b16 %v1108, %v1100
    %v1197 = vpack.c.b16 %v1109, %v1101
    %v1198 = vpack.c.b16 %v1110, %v1102
    %v1199 = vpack.c.b16 %v1111, %v1103
    %v1200 = vpack.c.b16 %v1120, %v1112
    %v1201 = vpack.c.b16 %v1121, %v1113
    %v1202 = vpack.c.b16 %v1122, %v1114
    %v1203 = vpack.c.b16 %v1123, %v1115
    %v1204 = vpack.c.b16 %v1124, %v1116
    %v1205 = vpack.c.b16 %v1125, %v1117
    %v1206 = vpack.c.b16 %v1126, %v1118
    %v1207 = vpack.c.b16 %v1127, %v1119
    %v1208 = vpack.c.b16 %v1136, %v1128
    %v1209 = vpack.c.b16 %v1137, %v1129
    %v1210 = vpack.c.b16 %v1138, %v1130
    %v1211 = vpack.c.b16 %v1139, %v1131
    %v1212 = vpack.c.b16 %v1140, %v1132
    %v1213 = vpack.c.b16 %v1141, %v1133
    %v1214 = vpack.c.b16 %v1142, %v1134
    %v1215 = vpack.c.b16 %v1143, %v1135
    %v1216 = vpack.c.b16 %v1152, %v1144
    %v1217 = vpack.c.b16 %v1153, %v1145
    %v1218 = vpack.c.b16 %v1154, %v1146
    %v1219 = vpack.c.b16 %v1155, %v1147
    %v1220 = vpack.c.b16 %v1156, %v1148
    %v1221 = vpack.c.b16 %v1157, %v1149
    %v1222 = vpack.c.b16 %v1158, %v1150
    %v1223 = vpack.c.b16 %v1159, %v1151
    %1288 = vmatprep.subr.bf16.mxu0 %v1161
    %1289 = vmatpush1.bf16.msra.mxu0 %v1160
    %1290 = vmatprep.subr.bf16.mxu0 %v1169
    %1291 = vmatpush1.bf16.msra.mxu0 %v1168
    %1292 = vmatprep.subr.bf16.mxu0 %v1177
    %1293 = vmatpush1.bf16.msra.mxu0 %v1176
    %1294 = vmatprep.subr.bf16.mxu0 %v1185
    %1295 = vmatpush1.bf16.msra.mxu0 %v1184
    %1296 = vmatprep.subr.bf16.mxu0 %v1193
    %1297 = vmatpush1.bf16.msra.mxu0 %v1192
    %1298 = vmatprep.subr.bf16.mxu0 %v1201
    %1299 = vmatpush1.bf16.msra.mxu0 %v1200
    %1300 = vmatprep.subr.bf16.mxu0 %v1209
    %1301 = vmatpush1.bf16.msra.mxu0 %v1208
    %1302 = vmatprep.subr.bf16.mxu0 %v1217
    %1303 = vmatpush1.bf16.msra.mxu0 %v1216
    %1304 = vmatprep.subr.bf16.mxu0 0
    %1305 = vmatpush1.bf16.msra.mxu0 0
    %1306 = vmatprep.subr.bf16.mxu0 0
    %1307 = vmatpush1.bf16.msra.mxu0 0
    %1308 = vmatprep.subr.bf16.mxu0 0
    %1309 = vmatpush1.bf16.msra.mxu0 0
    %1310 = vmatprep.subr.bf16.mxu0 0
    %1311 = vmatpush1.bf16.msra.mxu0 0
    %1312 = vmatprep.subr.bf16.mxu0 0
    %1313 = vmatpush1.bf16.msra.mxu0 0
    %1314 = vmatprep.subr.bf16.mxu0 0
    %1315 = vmatpush1.bf16.msra.mxu0 0
    %1316 = vmatprep.subr.bf16.mxu0 0
    %1317 = vmatpush1.bf16.msra.mxu0 0
    %1318 = vmatprep.subr.bf16.mxu0 0
    %1319 = vmatpush1.bf16.msra.mxu0 0
    %1320 = vmatprep.mubr.bf16.mxu0 0
    %1321 = vmatmul.mubr.bf16.gmra.mrb[0].mxu0 %v967
    %v1322 = vpop.f32.mrb[0].mxu0
    %v1323 = vadd.f32 0.0, %v1322
    %v1324 = vpop.f32.mrb[0].mxu0
    %v1325 = vadd.f32 0.0, %v1324
    %v1326 = vpop.f32.mrb[0].mxu0
    %v1327 = vpop.f32.mrb[0].mxu0
    %1328 = vdwg.mxu0
    %1329 = vmatprep.subr.bf16.mxu0 %v1163
    %1330 = vmatpush1.bf16.msra.mxu0 %v1162
    %1331 = vmatprep.subr.bf16.mxu0 %v1171
    %1332 = vmatpush1.bf16.msra.mxu0 %v1170
    %1333 = vmatprep.subr.bf16.mxu0 %v1179
    %1334 = vmatpush1.bf16.msra.mxu0 %v1178
    %1335 = vmatprep.subr.bf16.mxu0 %v1187
    %1336 = vmatpush1.bf16.msra.mxu0 %v1186
    %1337 = vmatprep.subr.bf16.mxu0 %v1195
    %1338 = vmatpush1.bf16.msra.mxu0 %v1194
    %1339 = vmatprep.subr.bf16.mxu0 %v1203
    %1340 = vmatpush1.bf16.msra.mxu0 %v1202
    %1341 = vmatprep.subr.bf16.mxu0 %v1211
    %1342 = vmatpush1.bf16.msra.mxu0 %v1210
    %1343 = vmatprep.subr.bf16.mxu0 %v1219
    %1344 = vmatpush1.bf16.msra.mxu0 %v1218
    %1345 = vmatprep.subr.bf16.mxu0 0
    %1346 = vmatpush1.bf16.msra.mxu0 0
    %1347 = vmatprep.subr.bf16.mxu0 0
    %1348 = vmatpush1.bf16.msra.mxu0 0
    %1349 = vmatprep.subr.bf16.mxu0 0
    %1350 = vmatpush1.bf16.msra.mxu0 0
    %1351 = vmatprep.subr.bf16.mxu0 0
    %1352 = vmatpush1.bf16.msra.mxu0 0
    %1353 = vmatprep.subr.bf16.mxu0 0
    %1354 = vmatpush1.bf16.msra.mxu0 0
    %1355 = vmatprep.subr.bf16.mxu0 0
    %1356 = vmatpush1.bf16.msra.mxu0 0
    %1357 = vmatprep.subr.bf16.mxu0 0
    %1358 = vmatpush1.bf16.msra.mxu0 0
    %1359 = vmatprep.subr.bf16.mxu0 0
    %1360 = vmatpush1.bf16.msra.mxu0 0
    %1361 = vmatprep.mubr.bf16.mxu0 0
    %1362 = vmatmul.mubr.bf16.gmra.mrb[0].mxu0 %v967
    %v1363 = vpop.f32.mrb[0].mxu0
    %v1364 = vadd.f32 0.0, %v1363
    %v1365 = vpop.f32.mrb[0].mxu0
    %v1366 = vadd.f32 0.0, %v1365
    %v1367 = vpop.f32.mrb[0].mxu0
    %v1368 = vpop.f32.mrb[0].mxu0
    %1369 = vdwg.mxu0
    %1370 = vmatprep.subr.bf16.mxu0 %v1165
    %1371 = vmatpush1.bf16.msra.mxu0 %v1164
    %1372 = vmatprep.subr.bf16.mxu0 %v1173
    %1373 = vmatpush1.bf16.msra.mxu0 %v1172
    %1374 = vmatprep.subr.bf16.mxu0 %v1181
    %1375 = vmatpush1.bf16.msra.mxu0 %v1180
    %1376 = vmatprep.subr.bf16.mxu0 %v1189
    %1377 = vmatpush1.bf16.msra.mxu0 %v1188
    %1378 = vmatprep.subr.bf16.mxu0 %v1197
    %1379 = vmatpush1.bf16.msra.mxu0 %v1196
    %1380 = vmatprep.subr.bf16.mxu0 %v1205
    %1381 = vmatpush1.bf16.msra.mxu0 %v1204
    %1382 = vmatprep.subr.bf16.mxu0 %v1213
    %1383 = vmatpush1.bf16.msra.mxu0 %v1212
    %1384 = vmatprep.subr.bf16.mxu0 %v1221
    %1385 = vmatpush1.bf16.msra.mxu0 %v1220
    %1386 = vmatprep.subr.bf16.mxu0 0
    %1387 = vmatpush1.bf16.msra.mxu0 0
    %1388 = vmatprep.subr.bf16.mxu0 0
    %1389 = vmatpush1.bf16.msra.mxu0 0
    %1390 = vmatprep.subr.bf16.mxu0 0
    %1391 = vmatpush1.bf16.msra.mxu0 0
    %1392 = vmatprep.subr.bf16.mxu0 0
    %1393 = vmatpush1.bf16.msra.mxu0 0
    %1394 = vmatprep.subr.bf16.mxu0 0
    %1395 = vmatpush1.bf16.msra.mxu0 0
    %1396 = vmatprep.subr.bf16.mxu0 0
    %1397 = vmatpush1.bf16.msra.mxu0 0
    %1398 = vmatprep.subr.bf16.mxu0 0
    %1399 = vmatpush1.bf16.msra.mxu0 0
    %1400 = vmatprep.subr.bf16.mxu0 0
    %1401 = vmatpush1.bf16.msra.mxu0 0
    %1402 = vmatprep.mubr.bf16.mxu0 0
    %1403 = vmatmul.mubr.bf16.gmra.mrb[0].mxu0 %v967
    %v1404 = vpop.f32.mrb[0].mxu0
    %v1405 = vadd.f32 0.0, %v1404
    %v1406 = vpop.f32.mrb[0].mxu0
    %v1407 = vadd.f32 0.0, %v1406
    %v1408 = vpop.f32.mrb[0].mxu0
    %v1409 = vpop.f32.mrb[0].mxu0
    %1410 = vdwg.mxu0
    %1411 = vmatprep.subr.bf16.mxu0 %v1167
    %1412 = vmatpush1.bf16.msra.mxu0 %v1166
    %1413 = vmatprep.subr.bf16.mxu0 %v1175
    %1414 = vmatpush1.bf16.msra.mxu0 %v1174
    %1415 = vmatprep.subr.bf16.mxu0 %v1183
    %1416 = vmatpush1.bf16.msra.mxu0 %v1182
    %1417 = vmatprep.subr.bf16.mxu0 %v1191
    %1418 = vmatpush1.bf16.msra.mxu0 %v1190
    %1419 = vmatprep.subr.bf16.mxu0 %v1199
    %1420 = vmatpush1.bf16.msra.mxu0 %v1198
    %1421 = vmatprep.subr.bf16.mxu0 %v1207
    %1422 = vmatpush1.bf16.msra.mxu0 %v1206
    %1423 = vmatprep.subr.bf16.mxu0 %v1215
    %1424 = vmatpush1.bf16.msra.mxu0 %v1214
    %1425 = vmatprep.subr.bf16.mxu0 %v1223
    %1426 = vmatpush1.bf16.msra.mxu0 %v1222
    %1427 = vmatprep.subr.bf16.mxu0 0
    %1428 = vmatpush1.bf16.msra.mxu0 0
    %1429 = vmatprep.subr.bf16.mxu0 0
    %1430 = vmatpush1.bf16.msra.mxu0 0
    %1431 = vmatprep.subr.bf16.mxu0 0
    %1432 = vmatpush1.bf16.msra.mxu0 0
    %1433 = vmatprep.subr.bf16.mxu0 0
    %1434 = vmatpush1.bf16.msra.mxu0 0
    %1435 = vmatprep.subr.bf16.mxu0 0
    %1436 = vmatpush1.bf16.msra.mxu0 0
    %1437 = vmatprep.subr.bf16.mxu0 0
    %1438 = vmatpush1.bf16.msra.mxu0 0
    %1439 = vmatprep.subr.bf16.mxu0 0
    %1440 = vmatpush1.bf16.msra.mxu0 0
    %1441 = vmatprep.subr.bf16.mxu0 0
    %1442 = vmatpush1.bf16.msra.mxu0 0
    %1443 = vmatprep.mubr.bf16.mxu0 0
    %1444 = vmatmul.mubr.bf16.gmra.mrb[0].mxu0 %v967
    %v1445 = vpop.f32.mrb[0].mxu0
    %v1446 = vadd.f32 0.0, %v1445
    %v1447 = vpop.f32.mrb[0].mxu0
    %v1448 = vadd.f32 0.0, %v1447
    %v1449 = vpop.f32.mrb[0].mxu0
    %v1450 = vpop.f32.mrb[0].mxu0
    %1451 = vdwg.mxu0
    %v1453 = vlaneseq
    %v1454 = vshrl.u32 %v1453, 7
    %v1455 = vsub.s32 0, %v1454
    %v1456 = vrot.slane %v966, %v1455
    %v1457 = vlaneseq
    %v1458 = vshrl.u32 %v1457, 7
    %v1459 = vsub.s32 1, %v1458
    %v1460 = vrot.slane %v966, %v1459
    %v1461 = vlaneseq
    %v1462 = vshrl.u32 %v1461, 7
    %v1463 = vsub.s32 2, %v1462
    %v1464 = vrot.slane %v966, %v1463
    %v1465 = vlaneseq
    %v1466 = vshrl.u32 %v1465, 7
    %v1467 = vsub.s32 3, %v1466
    %v1468 = vrot.slane %v966, %v1467
    %v1469 = vlaneseq
    %v1470 = vshrl.u32 %v1469, 7
    %v1471 = vsub.s32 4, %v1470
    %v1472 = vrot.slane %v966, %v1471
    %v1473 = vlaneseq
    %v1474 = vshrl.u32 %v1473, 7
    %v1475 = vsub.s32 5, %v1474
    %v1476 = vrot.slane %v966, %v1475
    %v1477 = vlaneseq
    %v1478 = vshrl.u32 %v1477, 7
    %v1479 = vsub.s32 6, %v1478
    %v1480 = vrot.slane %v966, %v1479
    %v1481 = vlaneseq
    %v1482 = vshrl.u32 %v1481, 7
    %v1483 = vsub.s32 7, %v1482
    %v1484 = vrot.slane %v966, %v1483
    %v1493 = vadd.f32 %v1456, %v1323
    %v1494 = vadd.f32 %v1460, %v1325
    %v1495 = vadd.f32 %v1464, %v1364
    %v1496 = vadd.f32 %v1468, %v1366
    %v1497 = vadd.f32 %v1472, %v1405
    %v1498 = vadd.f32 %v1476, %v1407
    %v1499 = vadd.f32 %v1480, %v1446
    %v1500 = vadd.f32 %v1484, %v1448
    %s1501 = scalar_lea.vmem [#allocation2], 3
    %v1502 = vld [vmem:[%s1501] ss:$8 sm:$0xf]
    %v1503 = vld [vmem:[%s1501] ss:$8 sm:$0xf0]
    %v1504 = vor.u32 %v1502, %v1503
    %v1506 = vlaneseq
    %v1507 = vshrl.u32 %v1506, 7
    %v1508 = vsub.s32 0, %v1507
    %v1509 = vrot.slane %v1504, %v1508
    %v1510 = vlaneseq
    %v1511 = vshrl.u32 %v1510, 7
    %v1512 = vsub.s32 1, %v1511
    %v1513 = vrot.slane %v1504, %v1512
    %v1514 = vlaneseq
    %v1515 = vshrl.u32 %v1514, 7
    %v1516 = vsub.s32 2, %v1515
    %v1517 = vrot.slane %v1504, %v1516
    %v1518 = vlaneseq
    %v1519 = vshrl.u32 %v1518, 7
    %v1520 = vsub.s32 3, %v1519
    %v1521 = vrot.slane %v1504, %v1520
    %v1522 = vlaneseq
    %v1523 = vshrl.u32 %v1522, 7
    %v1524 = vsub.s32 4, %v1523
    %v1525 = vrot.slane %v1504, %v1524
    %v1526 = vlaneseq
    %v1527 = vshrl.u32 %v1526, 7
    %v1528 = vsub.s32 5, %v1527
    %v1529 = vrot.slane %v1504, %v1528
    %v1530 = vlaneseq
    %v1531 = vshrl.u32 %v1530, 7
    %v1532 = vsub.s32 6, %v1531
    %v1533 = vrot.slane %v1504, %v1532
    %v1534 = vlaneseq
    %v1535 = vshrl.u32 %v1534, 7
    %v1536 = vsub.s32 7, %v1535
    %v1537 = vrot.slane %v1504, %v1536
    %v1546 = vadd.f32 %v1493, %v1509
    %v1547 = vadd.f32 %v1494, %v1513
    %v1548 = vadd.f32 %v1495, %v1517
    %v1549 = vadd.f32 %v1496, %v1521
    %v1550 = vadd.f32 %v1497, %v1525
    %v1551 = vadd.f32 %v1498, %v1529
    %v1552 = vadd.f32 %v1499, %v1533
    %v1553 = vadd.f32 %v1500, %v1537
    %v1554 = vsel %vm745, %v1546, 0.0
    %v1555 = vsel %vm745, %v1547, 0.0
    %v1556 = vadd.f32 %v1554, %v1555
    %v1557 = vsel %vm745, %v1548, 0.0
    %v1558 = vadd.f32 %v1556, %v1557
    %v1559 = vsel %vm745, %v1549, 0.0
    %v1560 = vadd.f32 %v1558, %v1559
    %v1561 = vsel %vm745, %v1550, 0.0
    %v1562 = vadd.f32 %v1560, %v1561
    %v1563 = vsel %vm745, %v1551, 0.0
    %v1564 = vadd.f32 %v1562, %v1563
    %v1565 = vsel %vm745, %v1552, 0.0
    %v1566 = vadd.f32 %v1564, %v1565
    %v1567 = vsel %vm745, %v1553, 0.0
    %v1568 = vadd.f32 %v1566, %v1567
    %1569 = vadd.xlane.f32.xlu0 %v1568
    %v1570 = vpop.xlane.xlu0 %1569
    %v1571 = vrcp.pop 1024.0
    %v1572 = vmul.f32 %v1570, %v1571
    %v1573 = vsub.f32 %v1546, %v1572
    %v1574 = vsub.f32 %v1547, %v1572
    %v1575 = vsub.f32 %v1548, %v1572
    %v1576 = vsub.f32 %v1549, %v1572
    %v1577 = vsub.f32 %v1550, %v1572
    %v1578 = vsub.f32 %v1551, %v1572
    %v1579 = vsub.f32 %v1552, %v1572
    %v1580 = vsub.f32 %v1553, %v1572
    %v1581 = vmul.f32 %v1573, %v1573
    %v1582 = vmul.f32 %v1574, %v1574
    %v1583 = vmul.f32 %v1575, %v1575
    %v1584 = vmul.f32 %v1576, %v1576
    %v1585 = vmul.f32 %v1577, %v1577
    %v1586 = vmul.f32 %v1578, %v1578
    %v1587 = vmul.f32 %v1579, %v1579
    %v1588 = vmul.f32 %v1580, %v1580
    %v1589 = vsel %vm745, %v1581, 0.0
    %v1590 = vsel %vm745, %v1582, 0.0
    %v1591 = vadd.f32 %v1589, %v1590
    %v1592 = vsel %vm745, %v1583, 0.0
    %v1593 = vadd.f32 %v1591, %v1592
    %v1594 = vsel %vm745, %v1584, 0.0
    %v1595 = vadd.f32 %v1593, %v1594
    %v1596 = vsel %vm745, %v1585, 0.0
    %v1597 = vadd.f32 %v1595, %v1596
    %v1598 = vsel %vm745, %v1586, 0.0
    %v1599 = vadd.f32 %v1597, %v1598
    %v1600 = vsel %vm745, %v1587, 0.0
    %v1601 = vadd.f32 %v1599, %v1600
    %v1602 = vsel %vm745, %v1588, 0.0
    %v1603 = vadd.f32 %v1601, %v1602
    %1604 = vadd.xlane.f32.xlu0 %v1603
    %v1605 = vpop.xlane.xlu0 %1604
    %v1606 = vmul.f32 %v1605, %v1571
    %v1607 = vadd.f32 %v1606, 1e-05
    %v1608 = vrsqrt.pop %v1607
    %v1609 = vmul.f32 %v1573, %v1608
    %v1610 = vmul.f32 %v1574, %v1608
    %v1611 = vmul.f32 %v1575, %v1608
    %v1612 = vmul.f32 %v1576, %v1608
    %v1613 = vmul.f32 %v1577, %v1608
    %v1614 = vmul.f32 %v1578, %v1608
    %v1615 = vmul.f32 %v1579, %v1608
    %v1616 = vmul.f32 %v1580, %v1608
    %s1617 = scalar_lea.vmem [#allocation2], 1
    %v1618 = vld [vmem:[%s1617] ss:$8 sm:$0xf]
    %v1619 = vld [vmem:[%s1617] ss:$8 sm:$0xf0]
    %v1620 = vor.u32 %v1618, %v1619
    %v1622 = vlaneseq
    %v1623 = vshrl.u32 %v1622, 7
    %v1624 = vsub.s32 0, %v1623
    %v1625 = vrot.slane %v1620, %v1624
    %v1626 = vlaneseq
    %v1627 = vshrl.u32 %v1626, 7
    %v1628 = vsub.s32 1, %v1627
    %v1629 = vrot.slane %v1620, %v1628
    %v1630 = vlaneseq
    %v1631 = vshrl.u32 %v1630, 7
    %v1632 = vsub.s32 2, %v1631
    %v1633 = vrot.slane %v1620, %v1632
    %v1634 = vlaneseq
    %v1635 = vshrl.u32 %v1634, 7
    %v1636 = vsub.s32 3, %v1635
    %v1637 = vrot.slane %v1620, %v1636
    %v1638 = vlaneseq
    %v1639 = vshrl.u32 %v1638, 7
    %v1640 = vsub.s32 4, %v1639
    %v1641 = vrot.slane %v1620, %v1640
    %v1642 = vlaneseq
    %v1643 = vshrl.u32 %v1642, 7
    %v1644 = vsub.s32 5, %v1643
    %v1645 = vrot.slane %v1620, %v1644
    %v1646 = vlaneseq
    %v1647 = vshrl.u32 %v1646, 7
    %v1648 = vsub.s32 6, %v1647
    %v1649 = vrot.slane %v1620, %v1648
    %v1650 = vlaneseq
    %v1651 = vshrl.u32 %v1650, 7
    %v1652 = vsub.s32 7, %v1651
    %v1653 = vrot.slane %v1620, %v1652
    %v1662 = vmul.f32 %v1609, %v1625
    %v1663 = vmul.f32 %v1610, %v1629
    %v1664 = vmul.f32 %v1611, %v1633
    %v1665 = vmul.f32 %v1612, %v1637
    %v1666 = vmul.f32 %v1613, %v1641
    %v1667 = vmul.f32 %v1614, %v1645
    %v1668 = vmul.f32 %v1615, %v1649
    %v1669 = vmul.f32 %v1616, %v1653
    %s1670 = scalar_lea.vmem [#allocation2], 2
    %v1671 = vld [vmem:[%s1670] ss:$8 sm:$0xf]
    %v1672 = vld [vmem:[%s1670] ss:$8 sm:$0xf0]
    %v1673 = vor.u32 %v1671, %v1672
    %v1675 = vlaneseq
    %v1676 = vshrl.u32 %v1675, 7
    %v1677 = vsub.s32 0, %v1676
    %v1678 = vrot.slane %v1673, %v1677
    %v1679 = vlaneseq
    %v1680 = vshrl.u32 %v1679, 7
    %v1681 = vsub.s32 1, %v1680
    %v1682 = vrot.slane %v1673, %v1681
    %v1683 = vlaneseq
    %v1684 = vshrl.u32 %v1683, 7
    %v1685 = vsub.s32 2, %v1684
    %v1686 = vrot.slane %v1673, %v1685
    %v1687 = vlaneseq
    %v1688 = vshrl.u32 %v1687, 7
    %v1689 = vsub.s32 3, %v1688
    %v1690 = vrot.slane %v1673, %v1689
    %v1691 = vlaneseq
    %v1692 = vshrl.u32 %v1691, 7
    %v1693 = vsub.s32 4, %v1692
    %v1694 = vrot.slane %v1673, %v1693
    %v1695 = vlaneseq
    %v1696 = vshrl.u32 %v1695, 7
    %v1697 = vsub.s32 5, %v1696
    %v1698 = vrot.slane %v1673, %v1697
    %v1699 = vlaneseq
    %v1700 = vshrl.u32 %v1699, 7
    %v1701 = vsub.s32 6, %v1700
    %v1702 = vrot.slane %v1673, %v1701
    %v1703 = vlaneseq
    %v1704 = vshrl.u32 %v1703, 7
    %v1705 = vsub.s32 7, %v1704
    %v1706 = vrot.slane %v1673, %v1705
    %v1715 = vadd.f32 %v1662, %v1678
    %v1716 = vadd.f32 %v1663, %v1682
    %v1717 = vadd.f32 %v1664, %v1686
    %v1718 = vadd.f32 %v1665, %v1690
    %v1719 = vadd.f32 %v1666, %v1694
    %v1720 = vadd.f32 %v1667, %v1698
    %v1721 = vadd.f32 %v1668, %v1702
    %v1722 = vadd.f32 %v1669, %v1706
    %v1723 = vpack.c.bf16 %v1715, %v1715
    %v1724 = vpack.c.bf16 %v1716, %v1716
    %v1725 = vpack.c.bf16 %v1717, %v1717
    %v1726 = vpack.c.bf16 %v1718, %v1718
    %v1727 = vpack.c.bf16 %v1719, %v1719
    %v1728 = vpack.c.bf16 %v1720, %v1720
    %v1729 = vpack.c.bf16 %v1721, %v1721
    %v1730 = vpack.c.bf16 %v1722, %v1722
    %v1731 = vld [vmem:[#allocation4] sm:$0xff]
    %v1732 = vld [vmem:[#allocation4 + $0x34] sm:$0xff]
    %v1733 = vld [vmem:[#allocation4 + $0x68] sm:$0xff]
    %v1734 = vld [vmem:[#allocation4 + $0x9c] sm:$0xff]
    %v1735 = vld [vmem:[#allocation4 + $0xd0] sm:$0xff]
    %v1736 = vld [vmem:[#allocation4 + $0x104] sm:$0xff]
    %v1737 = vld [vmem:[#allocation4 + $0x138] sm:$0xff]
    %v1738 = vld [vmem:[#allocation4 + $0x16c] sm:$0xff]
    %v1739 = vld [vmem:[#allocation4 + $0x1a0] sm:$0xff]
    %v1740 = vld [vmem:[#allocation4 + $0x1d4] sm:$0xff]
    %v1741 = vld [vmem:[#allocation4 + $0x208] sm:$0xff]
    %v1742 = vld [vmem:[#allocation4 + $0x23c] sm:$0xff]
    %v1743 = vld [vmem:[#allocation4 + $0x270] sm:$0xff]
    %v1744 = vld [vmem:[#allocation4 + $0x2a4] sm:$0xff]
    %v1745 = vld [vmem:[#allocation4 + $0x2d8] sm:$0xff]
    %v1746 = vld [vmem:[#allocation4 + $0x30c] sm:$0xff]
    %v1747 = vld [vmem:[#allocation4 + $0x340] sm:$0xff]
    %v1748 = vld [vmem:[#allocation4 + $0x374] sm:$0xff]
    %v1749 = vld [vmem:[#allocation4 + $0x3a8] sm:$0xff]
    %v1750 = vld [vmem:[#allocation4 + $0x3dc] sm:$0xff]
    %v1751 = vld [vmem:[#allocation4 + $0x410] sm:$0xff]
    %v1752 = vld [vmem:[#allocation4 + $0x444] sm:$0xff]
    %v1753 = vld [vmem:[#allocation4 + $0x478] sm:$0xff]
    %v1754 = vld [vmem:[#allocation4 + $0x4ac] sm:$0xff]
    %v1755 = vld [vmem:[#allocation4 + $0x4e0] sm:$0xff]
    %v1756 = vld [vmem:[#allocation4 + $0x514] sm:$0xff]
    %v1757 = vld [vmem:[#allocation4 + $0x548] sm:$0xff]
    %v1758 = vld [vmem:[#allocation4 + $0x57c] sm:$0xff]
    %v1759 = vld [vmem:[#allocation4 + $0x5b0] sm:$0xff]
    %v1760 = vld [vmem:[#allocation4 + $0x5e4] sm:$0xff]
    %v1761 = vld [vmem:[#allocation4 + $0x618] sm:$0xff]
    %v1762 = vld [vmem:[#allocation4 + $0x64c] sm:$0xff]
    %v1763 = vld [vmem:[#allocation4 + $0x680] sm:$0xff]
    %v1764 = vld [vmem:[#allocation4 + $0x6b4] sm:$0xff]
    %v1765 = vld [vmem:[#allocation4 + $0x6e8] sm:$0xff]
    %v1766 = vld [vmem:[#allocation4 + $0x71c] sm:$0xff]
    %v1767 = vld [vmem:[#allocation4 + $0x750] sm:$0xff]
    %v1768 = vld [vmem:[#allocation4 + $0x784] sm:$0xff]
    %v1769 = vld [vmem:[#allocation4 + $0x7b8] sm:$0xff]
    %v1770 = vld [vmem:[#allocation4 + $0x7ec] sm:$0xff]
    %v1771 = vld [vmem:[#allocation4 + $0x820] sm:$0xff]
    %v1772 = vld [vmem:[#allocation4 + $0x854] sm:$0xff]
    %v1773 = vld [vmem:[#allocation4 + $0x888] sm:$0xff]
    %v1774 = vld [vmem:[#allocation4 + $0x8bc] sm:$0xff]
    %v1775 = vld [vmem:[#allocation4 + $0x8f0] sm:$0xff]
    %v1776 = vld [vmem:[#allocation4 + $0x924] sm:$0xff]
    %v1777 = vld [vmem:[#allocation4 + $0x958] sm:$0xff]
    %v1778 = vld [vmem:[#allocation4 + $0x98c] sm:$0xff]
    %v1779 = vld [vmem:[#allocation4 + $0x9c0] sm:$0xff]
    %v1780 = vld [vmem:[#allocation4 + $0x9f4] sm:$0xff]
    %v1781 = vld [vmem:[#allocation4 + $0xa28] sm:$0xff]
    %v1782 = vld [vmem:[#allocation4 + $0xa5c] sm:$0xff]
    %v1783 = vld [vmem:[#allocation4 + $0xa90] sm:$0xff]
    %v1784 = vld [vmem:[#allocation4 + $0xac4] sm:$0xff]
    %v1785 = vld [vmem:[#allocation4 + $0xaf8] sm:$0xff]
    %v1786 = vld [vmem:[#allocation4 + $0xb2c] sm:$0xff]
    %v1787 = vld [vmem:[#allocation4 + $0xb60] sm:$0xff]
    %v1788 = vld [vmem:[#allocation4 + $0xb94] sm:$0xff]
    %v1789 = vld [vmem:[#allocation4 + $0xbc8] sm:$0xff]
    %v1790 = vld [vmem:[#allocation4 + $0xbfc] sm:$0xff]
    %v1791 = vld [vmem:[#allocation4 + $0xc30] sm:$0xff]
    %v1792 = vld [vmem:[#allocation4 + $0xc64] sm:$0xff]
    %v1793 = vld [vmem:[#allocation4 + $0xc98] sm:$0xff]
    %v1794 = vld [vmem:[#allocation4 + $0xccc] sm:$0xff]
    %v1795 = vld [vmem:[#allocation4 + $0xd00] sm:$0xff]
    %v1796 = vld [vmem:[#allocation4 + $0xd34] sm:$0xff]
    %v1797 = vld [vmem:[#allocation4 + $0xd68] sm:$0xff]
    %v1798 = vld [vmem:[#allocation4 + $0xd9c] sm:$0xff]
    %v1799 = vld [vmem:[#allocation4 + $0xdd0] sm:$0xff]
    %v1800 = vld [vmem:[#allocation4 + $0xe04] sm:$0xff]
    %v1801 = vld [vmem:[#allocation4 + $0xe38] sm:$0xff]
    %v1802 = vld [vmem:[#allocation4 + $0xe6c] sm:$0xff]
    %v1803 = vld [vmem:[#allocation4 + $0xea0] sm:$0xff]
    %v1804 = vld [vmem:[#allocation4 + $0xed4] sm:$0xff]
    %v1805 = vld [vmem:[#allocation4 + $0xf08] sm:$0xff]
    %v1806 = vld [vmem:[#allocation4 + $0xf3c] sm:$0xff]
    %v1807 = vld [vmem:[#allocation4 + $0xf70] sm:$0xff]
    %v1808 = vld [vmem:[#allocation4 + $0xfa4] sm:$0xff]
    %v1809 = vld [vmem:[#allocation4 + $0xfd8] sm:$0xff]
    %v1810 = vld [vmem:[#allocation4 + $0x100c] sm:$0xff]
    %v1811 = vld [vmem:[#allocation4 + $0x1040] sm:$0xff]
    %v1812 = vld [vmem:[#allocation4 + $0x1074] sm:$0xff]
    %v1813 = vld [vmem:[#allocation4 + $0x10a8] sm:$0xff]
    %v1814 = vld [vmem:[#allocation4 + $0x10dc] sm:$0xff]
    %v1815 = vld [vmem:[#allocation4 + $0x1110] sm:$0xff]
    %v1816 = vld [vmem:[#allocation4 + $0x1144] sm:$0xff]
    %v1817 = vld [vmem:[#allocation4 + $0x1178] sm:$0xff]
    %v1818 = vld [vmem:[#allocation4 + $0x11ac] sm:$0xff]
    %v1819 = vld [vmem:[#allocation4 + $0x11e0] sm:$0xff]
    %v1820 = vld [vmem:[#allocation4 + $0x1214] sm:$0xff]
    %v1821 = vld [vmem:[#allocation4 + $0x1248] sm:$0xff]
    %v1822 = vld [vmem:[#allocation4 + $0x127c] sm:$0xff]
    %v1823 = vld [vmem:[#allocation4 + $0x12b0] sm:$0xff]
    %v1824 = vld [vmem:[#allocation4 + $0x12e4] sm:$0xff]
    %v1825 = vld [vmem:[#allocation4 + $0x1318] sm:$0xff]
    %v1826 = vld [vmem:[#allocation4 + $0x134c] sm:$0xff]
    %v1827 = vld [vmem:[#allocation4 + $0x1380] sm:$0xff]
    %v1828 = vld [vmem:[#allocation4 + $0x13b4] sm:$0xff]
    %v1829 = vld [vmem:[#allocation4 + $0x13e8] sm:$0xff]
    %v1830 = vld [vmem:[#allocation4 + $0x141c] sm:$0xff]
    %v1831 = vld [vmem:[#allocation4 + $0x1450] sm:$0xff]
    %v1832 = vld [vmem:[#allocation4 + $0x1484] sm:$0xff]
    %v1833 = vld [vmem:[#allocation4 + $0x14b8] sm:$0xff]
    %v1834 = vld [vmem:[#allocation4 + $0x14ec] sm:$0xff]
    %v1835 = vld [vmem:[#allocation4 + $0x1520] sm:$0xff]
    %v1836 = vld [vmem:[#allocation4 + $0x1554] sm:$0xff]
    %v1837 = vld [vmem:[#allocation4 + $0x1588] sm:$0xff]
    %v1838 = vld [vmem:[#allocation4 + $0x15bc] sm:$0xff]
    %v1839 = vld [vmem:[#allocation4 + $0x15f0] sm:$0xff]
    %v1840 = vld [vmem:[#allocation4 + $0x1624] sm:$0xff]
    %v1841 = vld [vmem:[#allocation4 + $0x1658] sm:$0xff]
    %v1842 = vld [vmem:[#allocation4 + $0x168c] sm:$0xff]
    %v1843 = vld [vmem:[#allocation4 + $0x16c0] sm:$0xff]
    %v1844 = vld [vmem:[#allocation4 + $0x16f4] sm:$0xff]
    %v1845 = vld [vmem:[#allocation4 + $0x1728] sm:$0xff]
    %v1846 = vld [vmem:[#allocation4 + $0x175c] sm:$0xff]
    %v1847 = vld [vmem:[#allocation4 + $0x1790] sm:$0xff]
    %v1848 = vld [vmem:[#allocation4 + $0x17c4] sm:$0xff]
    %v1849 = vld [vmem:[#allocation4 + $0x17f8] sm:$0xff]
    %v1850 = vld [vmem:[#allocation4 + $0x182c] sm:$0xff]
    %v1851 = vld [vmem:[#allocation4 + $0x1860] sm:$0xff]
    %v1852 = vld [vmem:[#allocation4 + $0x1894] sm:$0xff]
    %v1853 = vld [vmem:[#allocation4 + $0x18c8] sm:$0xff]
    %v1854 = vld [vmem:[#allocation4 + $0x18fc] sm:$0xff]
    %v1855 = vld [vmem:[#allocation4 + $0x1930] sm:$0xff]
    %v1856 = vld [vmem:[#allocation4 + $0x1964] sm:$0xff]
    %v1857 = vld [vmem:[#allocation4 + $0x1998] sm:$0xff]
    %v1858 = vld [vmem:[#allocation4 + $0x19cc] sm:$0xff]
    %s1859 = scalar_lea.vmem [#allocation2], 4
    %v1860 = vld [vmem:[%s1859] ss:$8 sm:$0x3]
    %v1862 = vlaneseq
    %v1863 = vshrl.u32 %v1862, 7
    %v1864 = vsub.s32 0, %v1863
    %v1865 = vrot.slane %v1860, %v1864
    %v1866 = vlaneseq
    %v1867 = vshrl.u32 %v1866, 7
    %v1868 = vsub.s32 1, %v1867
    %v1869 = vrot.slane %v1860, %v1868
    %v2000 = vunpack.c.l.b16 %v1731
    %v2001 = vunpack.c.h.b16 %v1731
    %v2002 = vunpack.c.l.b16 %v1732
    %v2003 = vunpack.c.h.b16 %v1732
    %v2004 = vunpack.c.l.b16 %v1733
    %v2005 = vunpack.c.h.b16 %v1733
    %v2006 = vunpack.c.l.b16 %v1734
    %v2007 = vunpack.c.h.b16 %v1734
    %v2008 = vunpack.c.l.b16 %v1735
    %v2009 = vunpack.c.h.b16 %v1735
    %v2010 = vunpack.c.l.b16 %v1736
    %v2011 = vunpack.c.h.b16 %v1736
    %v2012 = vunpack.c.l.b16 %v1737
    %v2013 = vunpack.c.h.b16 %v1737
    %v2014 = vunpack.c.l.b16 %v1738
    %v2015 = vunpack.c.h.b16 %v1738
    %v2016 = vunpack.c.l.b16 %v1739
    %v2017 = vunpack.c.h.b16 %v1739
    %v2018 = vunpack.c.l.b16 %v1740
    %v2019 = vunpack.c.h.b16 %v1740
    %v2020 = vunpack.c.l.b16 %v1741
    %v2021 = vunpack.c.h.b16 %v1741
    %v2022 = vunpack.c.l.b16 %v1742
    %v2023 = vunpack.c.h.b16 %v1742
    %v2024 = vunpack.c.l.b16 %v1743
    %v2025 = vunpack.c.h.b16 %v1743
    %v2026 = vunpack.c.l.b16 %v1744
    %v2027 = vunpack.c.h.b16 %v1744
    %v2028 = vunpack.c.l.b16 %v1745
    %v2029 = vunpack.c.h.b16 %v1745
    %v2030 = vunpack.c.l.b16 %v1746
    %v2031 = vunpack.c.h.b16 %v1746
    %v2032 = vunpack.c.l.b16 %v1747
    %v2033 = vunpack.c.h.b16 %v1747
    %v2034 = vunpack.c.l.b16 %v1748
    %v2035 = vunpack.c.h.b16 %v1748
    %v2036 = vunpack.c.l.b16 %v1749
    %v2037 = vunpack.c.h.b16 %v1749
    %v2038 = vunpack.c.l.b16 %v1750
    %v2039 = vunpack.c.h.b16 %v1750
    %v2040 = vunpack.c.l.b16 %v1751
    %v2041 = vunpack.c.h.b16 %v1751
    %v2042 = vunpack.c.l.b16 %v1752
    %v2043 = vunpack.c.h.b16 %v1752
    %v2044 = vunpack.c.l.b16 %v1753
    %v2045 = vunpack.c.h.b16 %v1753
    %v2046 = vunpack.c.l.b16 %v1754
    %v2047 = vunpack.c.h.b16 %v1754
    %v2048 = vunpack.c.l.b16 %v1755
    %v2049 = vunpack.c.h.b16 %v1755
    %v2050 = vunpack.c.l.b16 %v1756
    %v2051 = vunpack.c.h.b16 %v1756
    %v2052 = vunpack.c.l.b16 %v1757
    %v2053 = vunpack.c.h.b16 %v1757
    %v2054 = vunpack.c.l.b16 %v1758
    %v2055 = vunpack.c.h.b16 %v1758
    %v2056 = vunpack.c.l.b16 %v1759
    %v2057 = vunpack.c.h.b16 %v1759
    %v2058 = vunpack.c.l.b16 %v1760
    %v2059 = vunpack.c.h.b16 %v1760
    %v2060 = vunpack.c.l.b16 %v1761
    %v2061 = vunpack.c.h.b16 %v1761
    %v2062 = vunpack.c.l.b16 %v1762
    %v2063 = vunpack.c.h.b16 %v1762
    %v2064 = vunpack.c.l.b16 %v1763
    %v2065 = vunpack.c.h.b16 %v1763
    %v2066 = vunpack.c.l.b16 %v1764
    %v2067 = vunpack.c.h.b16 %v1764
    %v2068 = vunpack.c.l.b16 %v1765
    %v2069 = vunpack.c.h.b16 %v1765
    %v2070 = vunpack.c.l.b16 %v1766
    %v2071 = vunpack.c.h.b16 %v1766
    %v2072 = vunpack.c.l.b16 %v1767
    %v2073 = vunpack.c.h.b16 %v1767
    %v2074 = vunpack.c.l.b16 %v1768
    %v2075 = vunpack.c.h.b16 %v1768
    %v2076 = vunpack.c.l.b16 %v1769
    %v2077 = vunpack.c.h.b16 %v1769
    %v2078 = vunpack.c.l.b16 %v1770
    %v2079 = vunpack.c.h.b16 %v1770
    %v2080 = vunpack.c.l.b16 %v1771
    %v2081 = vunpack.c.h.b16 %v1771
    %v2082 = vunpack.c.l.b16 %v1772
    %v2083 = vunpack.c.h.b16 %v1772
    %v2084 = vunpack.c.l.b16 %v1773
    %v2085 = vunpack.c.h.b16 %v1773
    %v2086 = vunpack.c.l.b16 %v1774
    %v2087 = vunpack.c.h.b16 %v1774
    %v2088 = vunpack.c.l.b16 %v1775
    %v2089 = vunpack.c.h.b16 %v1775
    %v2090 = vunpack.c.l.b16 %v1776
    %v2091 = vunpack.c.h.b16 %v1776
    %v2092 = vunpack.c.l.b16 %v1777
    %v2093 = vunpack.c.h.b16 %v1777
    %v2094 = vunpack.c.l.b16 %v1778
    %v2095 = vunpack.c.h.b16 %v1778
    %v2096 = vunpack.c.l.b16 %v1779
    %v2097 = vunpack.c.h.b16 %v1779
    %v2098 = vunpack.c.l.b16 %v1780
    %v2099 = vunpack.c.h.b16 %v1780
    %v2100 = vunpack.c.l.b16 %v1781
    %v2101 = vunpack.c.h.b16 %v1781
    %v2102 = vunpack.c.l.b16 %v1782
    %v2103 = vunpack.c.h.b16 %v1782
    %v2104 = vunpack.c.l.b16 %v1783
    %v2105 = vunpack.c.h.b16 %v1783
    %v2106 = vunpack.c.l.b16 %v1784
    %v2107 = vunpack.c.h.b16 %v1784
    %v2108 = vunpack.c.l.b16 %v1785
    %v2109 = vunpack.c.h.b16 %v1785
    %v2110 = vunpack.c.l.b16 %v1786
    %v2111 = vunpack.c.h.b16 %v1786
    %v2112 = vunpack.c.l.b16 %v1787
    %v2113 = vunpack.c.h.b16 %v1787
    %v2114 = vunpack.c.l.b16 %v1788
    %v2115 = vunpack.c.h.b16 %v1788
    %v2116 = vunpack.c.l.b16 %v1789
    %v2117 = vunpack.c.h.b16 %v1789
    %v2118 = vunpack.c.l.b16 %v1790
    %v2119 = vunpack.c.h.b16 %v1790
    %v2120 = vunpack.c.l.b16 %v1791
    %v2121 = vunpack.c.h.b16 %v1791
    %v2122 = vunpack.c.l.b16 %v1792
    %v2123 = vunpack.c.h.b16 %v1792
    %v2124 = vunpack.c.l.b16 %v1793
    %v2125 = vunpack.c.h.b16 %v1793
    %v2126 = vunpack.c.l.b16 %v1794
    %v2127 = vunpack.c.h.b16 %v1794
    %v2128 = vunpack.c.l.b16 %v1795
    %v2129 = vunpack.c.h.b16 %v1795
    %v2130 = vunpack.c.l.b16 %v1796
    %v2131 = vunpack.c.h.b16 %v1796
    %v2132 = vunpack.c.l.b16 %v1797
    %v2133 = vunpack.c.h.b16 %v1797
    %v2134 = vunpack.c.l.b16 %v1798
    %v2135 = vunpack.c.h.b16 %v1798
    %v2136 = vunpack.c.l.b16 %v1799
    %v2137 = vunpack.c.h.b16 %v1799
    %v2138 = vunpack.c.l.b16 %v1800
    %v2139 = vunpack.c.h.b16 %v1800
    %v2140 = vunpack.c.l.b16 %v1801
    %v2141 = vunpack.c.h.b16 %v1801
    %v2142 = vunpack.c.l.b16 %v1802
    %v2143 = vunpack.c.h.b16 %v1802
    %v2144 = vunpack.c.l.b16 %v1803
    %v2145 = vunpack.c.h.b16 %v1803
    %v2146 = vunpack.c.l.b16 %v1804
    %v2147 = vunpack.c.h.b16 %v1804
    %v2148 = vunpack.c.l.b16 %v1805
    %v2149 = vunpack.c.h.b16 %v1805
    %v2150 = vunpack.c.l.b16 %v1806
    %v2151 = vunpack.c.h.b16 %v1806
    %v2152 = vunpack.c.l.b16 %v1807
    %v2153 = vunpack.c.h.b16 %v1807
    %v2154 = vunpack.c.l.b16 %v1808
    %v2155 = vunpack.c.h.b16 %v1808
    %v2156 = vunpack.c.l.b16 %v1809
    %v2157 = vunpack.c.h.b16 %v1809
    %v2158 = vunpack.c.l.b16 %v1810
    %v2159 = vunpack.c.h.b16 %v1810
    %v2160 = vunpack.c.l.b16 %v1811
    %v2161 = vunpack.c.h.b16 %v1811
    %v2162 = vunpack.c.l.b16 %v1812
    %v2163 = vunpack.c.h.b16 %v1812
    %v2164 = vunpack.c.l.b16 %v1813
    %v2165 = vunpack.c.h.b16 %v1813
    %v2166 = vunpack.c.l.b16 %v1814
    %v2167 = vunpack.c.h.b16 %v1814
    %v2168 = vunpack.c.l.b16 %v1815
    %v2169 = vunpack.c.h.b16 %v1815
    %v2170 = vunpack.c.l.b16 %v1816
    %v2171 = vunpack.c.h.b16 %v1816
    %v2172 = vunpack.c.l.b16 %v1817
    %v2173 = vunpack.c.h.b16 %v1817
    %v2174 = vunpack.c.l.b16 %v1818
    %v2175 = vunpack.c.h.b16 %v1818
    %v2176 = vunpack.c.l.b16 %v1819
    %v2177 = vunpack.c.h.b16 %v1819
    %v2178 = vunpack.c.l.b16 %v1820
    %v2179 = vunpack.c.h.b16 %v1820
    %v2180 = vunpack.c.l.b16 %v1821
    %v2181 = vunpack.c.h.b16 %v1821
    %v2182 = vunpack.c.l.b16 %v1822
    %v2183 = vunpack.c.h.b16 %v1822
    %v2184 = vunpack.c.l.b16 %v1823
    %v2185 = vunpack.c.h.b16 %v1823
    %v2186 = vunpack.c.l.b16 %v1824
    %v2187 = vunpack.c.h.b16 %v1824
    %v2188 = vunpack.c.l.b16 %v1825
    %v2189 = vunpack.c.h.b16 %v1825
    %v2190 = vunpack.c.l.b16 %v1826
    %v2191 = vunpack.c.h.b16 %v1826
    %v2192 = vunpack.c.l.b16 %v1827
    %v2193 = vunpack.c.h.b16 %v1827
    %v2194 = vunpack.c.l.b16 %v1828
    %v2195 = vunpack.c.h.b16 %v1828
    %v2196 = vunpack.c.l.b16 %v1829
    %v2197 = vunpack.c.h.b16 %v1829
    %v2198 = vunpack.c.l.b16 %v1830
    %v2199 = vunpack.c.h.b16 %v1830
    %v2200 = vunpack.c.l.b16 %v1831
    %v2201 = vunpack.c.h.b16 %v1831
    %v2202 = vunpack.c.l.b16 %v1832
    %v2203 = vunpack.c.h.b16 %v1832
    %v2204 = vunpack.c.l.b16 %v1833
    %v2205 = vunpack.c.h.b16 %v1833
    %v2206 = vunpack.c.l.b16 %v1834
    %v2207 = vunpack.c.h.b16 %v1834
    %v2208 = vunpack.c.l.b16 %v1835
    %v2209 = vunpack.c.h.b16 %v1835
    %v2210 = vunpack.c.l.b16 %v1836
    %v2211 = vunpack.c.h.b16 %v1836
    %v2212 = vunpack.c.l.b16 %v1837
    %v2213 = vunpack.c.h.b16 %v1837
    %v2214 = vunpack.c.l.b16 %v1838
    %v2215 = vunpack.c.h.b16 %v1838
    %v2216 = vunpack.c.l.b16 %v1839
    %v2217 = vunpack.c.h.b16 %v1839
    %v2218 = vunpack.c.l.b16 %v1840
    %v2219 = vunpack.c.h.b16 %v1840
    %v2220 = vunpack.c.l.b16 %v1841
    %v2221 = vunpack.c.h.b16 %v1841
    %v2222 = vunpack.c.l.b16 %v1842
    %v2223 = vunpack.c.h.b16 %v1842
    %v2224 = vunpack.c.l.b16 %v1843
    %v2225 = vunpack.c.h.b16 %v1843
    %v2226 = vunpack.c.l.b16 %v1844
    %v2227 = vunpack.c.h.b16 %v1844
    %v2228 = vunpack.c.l.b16 %v1845
    %v2229 = vunpack.c.h.b16 %v1845
    %v2230 = vunpack.c.l.b16 %v1846
    %v2231 = vunpack.c.h.b16 %v1846
    %v2232 = vunpack.c.l.b16 %v1847
    %v2233 = vunpack.c.h.b16 %v1847
    %v2234 = vunpack.c.l.b16 %v1848
    %v2235 = vunpack.c.h.b16 %v1848
    %v2236 = vunpack.c.l.b16 %v1849
    %v2237 = vunpack.c.h.b16 %v1849
    %v2238 = vunpack.c.l.b16 %v1850
    %v2239 = vunpack.c.h.b16 %v1850
    %v2240 = vunpack.c.l.b16 %v1851
    %v2241 = vunpack.c.h.b16 %v1851
    %v2242 = vunpack.c.l.b16 %v1852
    %v2243 = vunpack.c.h.b16 %v1852
    %v2244 = vunpack.c.l.b16 %v1853
    %v2245 = vunpack.c.h.b16 %v1853
    %v2246 = vunpack.c.l.b16 %v1854
    %v2247 = vunpack.c.h.b16 %v1854
    %v2248 = vunpack.c.l.b16 %v1855
    %v2249 = vunpack.c.h.b16 %v1855
    %v2250 = vunpack.c.l.b16 %v1856
    %v2251 = vunpack.c.h.b16 %v1856
    %v2252 = vunpack.c.l.b16 %v1857
    %v2253 = vunpack.c.h.b16 %v1857
    %v2254 = vunpack.c.l.b16 %v1858
    %v2255 = vunpack.c.h.b16 %v1858
    %v2256 = vpack.c.b16 %v2002, %v2000
    %v2257 = vpack.c.b16 %v2003, %v2001
    %v2258 = vpack.c.b16 %v2006, %v2004
    %v2259 = vpack.c.b16 %v2007, %v2005
    %v2260 = vpack.c.b16 %v2010, %v2008
    %v2261 = vpack.c.b16 %v2011, %v2009
    %v2262 = vpack.c.b16 %v2014, %v2012
    %v2263 = vpack.c.b16 %v2015, %v2013
    %v2264 = vpack.c.b16 %v2018, %v2016
    %v2265 = vpack.c.b16 %v2019, %v2017
    %v2266 = vpack.c.b16 %v2022, %v2020
    %v2267 = vpack.c.b16 %v2023, %v2021
    %v2268 = vpack.c.b16 %v2026, %v2024
    %v2269 = vpack.c.b16 %v2027, %v2025
    %v2270 = vpack.c.b16 %v2030, %v2028
    %v2271 = vpack.c.b16 %v2031, %v2029
    %v2272 = vpack.c.b16 %v2034, %v2032
    %v2273 = vpack.c.b16 %v2035, %v2033
    %v2274 = vpack.c.b16 %v2038, %v2036
    %v2275 = vpack.c.b16 %v2039, %v2037
    %v2276 = vpack.c.b16 %v2042, %v2040
    %v2277 = vpack.c.b16 %v2043, %v2041
    %v2278 = vpack.c.b16 %v2046, %v2044
    %v2279 = vpack.c.b16 %v2047, %v2045
    %v2280 = vpack.c.b16 %v2050, %v2048
    %v2281 = vpack.c.b16 %v2051, %v2049
    %v2282 = vpack.c.b16 %v2054, %v2052
    %v2283 = vpack.c.b16 %v2055, %v2053
    %v2284 = vpack.c.b16 %v2058, %v2056
    %v2285 = vpack.c.b16 %v2059, %v2057
    %v2286 = vpack.c.b16 %v2062, %v2060
    %v2287 = vpack.c.b16 %v2063, %v2061
    %v2288 = vpack.c.b16 %v2066, %v2064
    %v2289 = vpack.c.b16 %v2067, %v2065
    %v2290 = vpack.c.b16 %v2070, %v2068
    %v2291 = vpack.c.b16 %v2071, %v2069
    %v2292 = vpack.c.b16 %v2074, %v2072
    %v2293 = vpack.c.b16 %v2075, %v2073
    %v2294 = vpack.c.b16 %v2078, %v2076
    %v2295 = vpack.c.b16 %v2079, %v2077
    %v2296 = vpack.c.b16 %v2082, %v2080
    %v2297 = vpack.c.b16 %v2083, %v2081
    %v2298 = vpack.c.b16 %v2086, %v2084
    %v2299 = vpack.c.b16 %v2087, %v2085
    %v2300 = vpack.c.b16 %v2090, %v2088
    %v2301 = vpack.c.b16 %v2091, %v2089
    %v2302 = vpack.c.b16 %v2094, %v2092
    %v2303 = vpack.c.b16 %v2095, %v2093
    %v2304 = vpack.c.b16 %v2098, %v2096
    %v2305 = vpack.c.b16 %v2099, %v2097
    %v2306 = vpack.c.b16 %v2102, %v2100
    %v2307 = vpack.c.b16 %v2103, %v2101
    %v2308 = vpack.c.b16 %v2106, %v2104
    %v2309 = vpack.c.b16 %v2107, %v2105
    %v2310 = vpack.c.b16 %v2110, %v2108
    %v2311 = vpack.c.b16 %v2111, %v2109
    %v2312 = vpack.c.b16 %v2114, %v2112
    %v2313 = vpack.c.b16 %v2115, %v2113
    %v2314 = vpack.c.b16 %v2118, %v2116
    %v2315 = vpack.c.b16 %v2119, %v2117
    %v2316 = vpack.c.b16 %v2122, %v2120
    %v2317 = vpack.c.b16 %v2123, %v2121
    %v2318 = vpack.c.b16 %v2126, %v2124
    %v2319 = vpack.c.b16 %v2127, %v2125
    %v2320 = vpack.c.b16 %v2130, %v2128
    %v2321 = vpack.c.b16 %v2131, %v2129
    %v2322 = vpack.c.b16 %v2134, %v2132
    %v2323 = vpack.c.b16 %v2135, %v2133
    %v2324 = vpack.c.b16 %v2138, %v2136
    %v2325 = vpack.c.b16 %v2139, %v2137
    %v2326 = vpack.c.b16 %v2142, %v2140
    %v2327 = vpack.c.b16 %v2143, %v2141
    %v2328 = vpack.c.b16 %v2146, %v2144
    %v2329 = vpack.c.b16 %v2147, %v2145
    %v2330 = vpack.c.b16 %v2150, %v2148
    %v2331 = vpack.c.b16 %v2151, %v2149
    %v2332 = vpack.c.b16 %v2154, %v2152
    %v2333 = vpack.c.b16 %v2155, %v2153
    %v2334 = vpack.c.b16 %v2158, %v2156
    %v2335 = vpack.c.b16 %v2159, %v2157
    %v2336 = vpack.c.b16 %v2162, %v2160
    %v2337 = vpack.c.b16 %v2163, %v2161
    %v2338 = vpack.c.b16 %v2166, %v2164
    %v2339 = vpack.c.b16 %v2167, %v2165
    %v2340 = vpack.c.b16 %v2170, %v2168
    %v2341 = vpack.c.b16 %v2171, %v2169
    %v2342 = vpack.c.b16 %v2174, %v2172
    %v2343 = vpack.c.b16 %v2175, %v2173
    %v2344 = vpack.c.b16 %v2178, %v2176
    %v2345 = vpack.c.b16 %v2179, %v2177
    %v2346 = vpack.c.b16 %v2182, %v2180
    %v2347 = vpack.c.b16 %v2183, %v2181
    %v2348 = vpack.c.b16 %v2186, %v2184
    %v2349 = vpack.c.b16 %v2187, %v2185
    %v2350 = vpack.c.b16 %v2190, %v2188
    %v2351 = vpack.c.b16 %v2191, %v2189
    %v2352 = vpack.c.b16 %v2194, %v2192
    %v2353 = vpack.c.b16 %v2195, %v2193
    %v2354 = vpack.c.b16 %v2198, %v2196
    %v2355 = vpack.c.b16 %v2199, %v2197
    %v2356 = vpack.c.b16 %v2202, %v2200
    %v2357 = vpack.c.b16 %v2203, %v2201
    %v2358 = vpack.c.b16 %v2206, %v2204
    %v2359 = vpack.c.b16 %v2207, %v2205
    %v2360 = vpack.c.b16 %v2210, %v2208
    %v2361 = vpack.c.b16 %v2211, %v2209
    %v2362 = vpack.c.b16 %v2214, %v2212
    %v2363 = vpack.c.b16 %v2215, %v2213
    %v2364 = vpack.c.b16 %v2218, %v2216
    %v2365 = vpack.c.b16 %v2219, %v2217
    %v2366 = vpack.c.b16 %v2222, %v2220
    %v2367 = vpack.c.b16 %v2223, %v2221
    %v2368 = vpack.c.b16 %v2226, %v2224
    %v2369 = vpack.c.b16 %v2227, %v2225
    %v2370 = vpack.c.b16 %v2230, %v2228
    %v2371 = vpack.c.b16 %v2231, %v2229
    %v2372 = vpack.c.b16 %v2234, %v2232
    %v2373 = vpack.c.b16 %v2235, %v2233
    %v2374 = vpack.c.b16 %v2238, %v2236
    %v2375 = vpack.c.b16 %v2239, %v2237
    %v2376 = vpack.c.b16 %v2242, %v2240
    %v2377 = vpack.c.b16 %v2243, %v2241
    %v2378 = vpack.c.b16 %v2246, %v2244
    %v2379 = vpack.c.b16 %v2247, %v2245
    %v2380 = vpack.c.b16 %v2250, %v2248
    %v2381 = vpack.c.b16 %v2251, %v2249
    %v2382 = vpack.c.b16 %v2254, %v2252
    %v2383 = vpack.c.b16 %v2255, %v2253
    %2512 = vmatprep.subr.bf16.mxu0 %v2257
    %2513 = vmatpush1.bf16.msra.mxu0 %v2256
    %2514 = vmatprep.subr.bf16.mxu0 %v2259
    %2515 = vmatpush1.bf16.msra.mxu0 %v2258
    %2516 = vmatprep.subr.bf16.mxu0 %v2261
    %2517 = vmatpush1.bf16.msra.mxu0 %v2260
    %2518 = vmatprep.subr.bf16.mxu0 %v2263
    %2519 = vmatpush1.bf16.msra.mxu0 %v2262
    %2520 = vmatprep.subr.bf16.mxu0 %v2265
    %2521 = vmatpush1.bf16.msra.mxu0 %v2264
    %2522 = vmatprep.subr.bf16.mxu0 %v2267
    %2523 = vmatpush1.bf16.msra.mxu0 %v2266
    %2524 = vmatprep.subr.bf16.mxu0 %v2269
    %2525 = vmatpush1.bf16.msra.mxu0 %v2268
    %2526 = vmatprep.subr.bf16.mxu0 %v2271
    %2527 = vmatpush1.bf16.msra.mxu0 %v2270
    %2528 = vmatprep.subr.bf16.mxu0 %v2273
    %2529 = vmatpush1.bf16.msra.mxu0 %v2272
    %2530 = vmatprep.subr.bf16.mxu0 %v2275
    %2531 = vmatpush1.bf16.msra.mxu0 %v2274
    %2532 = vmatprep.subr.bf16.mxu0 %v2277
    %2533 = vmatpush1.bf16.msra.mxu0 %v2276
    %2534 = vmatprep.subr.bf16.mxu0 %v2279
    %2535 = vmatpush1.bf16.msra.mxu0 %v2278
    %2536 = vmatprep.subr.bf16.mxu0 %v2281
    %2537 = vmatpush1.bf16.msra.mxu0 %v2280
    %2538 = vmatprep.subr.bf16.mxu0 %v2283
    %2539 = vmatpush1.bf16.msra.mxu0 %v2282
    %2540 = vmatprep.subr.bf16.mxu0 %v2285
    %2541 = vmatpush1.bf16.msra.mxu0 %v2284
    %2542 = vmatprep.subr.bf16.mxu0 %v2287
    %2543 = vmatpush1.bf16.msra.mxu0 %v2286
    %2544 = vmatprep.mubr.bf16.mxu0 %v1724
    %2545 = vmatmul.mubr.bf16.gmra.mrb[0].mxu0 %v1723
    %v2546 = vpop.f32.mrb[0].mxu0
    %v2547 = vadd.f32 %v1865, %v2546
    %v2548 = vpop.f32.mrb[0].mxu0
    %v2549 = vadd.f32 %v1869, %v2548
    %v2550 = vpop.f32.mrb[0].mxu0
    %v2551 = vpop.f32.mrb[0].mxu0
    %2552 = vdwg.mxu0
    %2553 = vmatprep.subr.bf16.mxu0 %v2289
    %2554 = vmatpush1.bf16.msra.mxu0 %v2288
    %2555 = vmatprep.subr.bf16.mxu0 %v2291
    %2556 = vmatpush1.bf16.msra.mxu0 %v2290
    %2557 = vmatprep.subr.bf16.mxu0 %v2293
    %2558 = vmatpush1.bf16.msra.mxu0 %v2292
    %2559 = vmatprep.subr.bf16.mxu0 %v2295
    %2560 = vmatpush1.bf16.msra.mxu0 %v2294
    %2561 = vmatprep.subr.bf16.mxu0 %v2297
    %2562 = vmatpush1.bf16.msra.mxu0 %v2296
    %2563 = vmatprep.subr.bf16.mxu0 %v2299
    %2564 = vmatpush1.bf16.msra.mxu0 %v2298
    %2565 = vmatprep.subr.bf16.mxu0 %v2301
    %2566 = vmatpush1.bf16.msra.mxu0 %v2300
    %2567 = vmatprep.subr.bf16.mxu0 %v2303
    %2568 = vmatpush1.bf16.msra.mxu0 %v2302
    %2569 = vmatprep.subr.bf16.mxu0 %v2305
    %2570 = vmatpush1.bf16.msra.mxu0 %v2304
    %2571 = vmatprep.subr.bf16.mxu0 %v2307
    %2572 = vmatpush1.bf16.msra.mxu0 %v2306
    %2573 = vmatprep.subr.bf16.mxu0 %v2309
    %2574 = vmatpush1.bf16.msra.mxu0 %v2308
    %2575 = vmatprep.subr.bf16.mxu0 %v2311
    %2576 = vmatpush1.bf16.msra.mxu0 %v2310
    %2577 = vmatprep.subr.bf16.mxu0 %v2313
    %2578 = vmatpush1.bf16.msra.mxu0 %v2312
    %2579 = vmatprep.subr.bf16.mxu0 %v2315
    %2580 = vmatpush1.bf16.msra.mxu0 %v2314
    %2581 = vmatprep.subr.bf16.mxu0 %v2317
    %2582 = vmatpush1.bf16.msra.mxu0 %v2316
    %2583 = vmatprep.subr.bf16.mxu0 %v2319
    %2584 = vmatpush1.bf16.msra.mxu0 %v2318
    %2585 = vmatprep.mubr.bf16.mxu0 %v1726
    %2586 = vmatmul.mubr.bf16.gmra.mrb[0].mxu0 %v1725
    %v2587 = vpop.f32.mrb[0].mxu0
    %v2588 = vadd.f32 %v2547, %v2587
    %v2589 = vpop.f32.mrb[0].mxu0
    %v2590 = vadd.f32 %v2549, %v2589
    %v2591 = vpop.f32.mrb[0].mxu0
    %v2592 = vpop.f32.mrb[0].mxu0
    %2593 = vdwg.mxu0
    %2594 = vmatprep.subr.bf16.mxu0 %v2321
    %2595 = vmatpush1.bf16.msra.mxu0 %v2320
    %2596 = vmatprep.subr.bf16.mxu0 %v2323
    %2597 = vmatpush1.bf16.msra.mxu0 %v2322
    %2598 = vmatprep.subr.bf16.mxu0 %v2325
    %2599 = vmatpush1.bf16.msra.mxu0 %v2324
    %2600 = vmatprep.subr.bf16.mxu0 %v2327
    %2601 = vmatpush1.bf16.msra.mxu0 %v2326
    %2602 = vmatprep.subr.bf16.mxu0 %v2329
    %2603 = vmatpush1.bf16.msra.mxu0 %v2328
    %2604 = vmatprep.subr.bf16.mxu0 %v2331
    %2605 = vmatpush1.bf16.msra.mxu0 %v2330
    %2606 = vmatprep.subr.bf16.mxu0 %v2333
    %2607 = vmatpush1.bf16.msra.mxu0 %v2332
    %2608 = vmatprep.subr.bf16.mxu0 %v2335
    %2609 = vmatpush1.bf16.msra.mxu0 %v2334
    %2610 = vmatprep.subr.bf16.mxu0 %v2337
    %2611 = vmatpush1.bf16.msra.mxu0 %v2336
    %2612 = vmatprep.subr.bf16.mxu0 %v2339
    %2613 = vmatpush1.bf16.msra.mxu0 %v2338
    %2614 = vmatprep.subr.bf16.mxu0 %v2341
    %2615 = vmatpush1.bf16.msra.mxu0 %v2340
    %2616 = vmatprep.subr.bf16.mxu0 %v2343
    %2617 = vmatpush1.bf16.msra.mxu0 %v2342
    %2618 = vmatprep.subr.bf16.mxu0 %v2345
    %2619 = vmatpush1.bf16.msra.mxu0 %v2344
    %2620 = vmatprep.subr.bf16.mxu0 %v2347
    %2621 = vmatpush1.bf16.msra.mxu0 %v2346
    %2622 = vmatprep.subr.bf16.mxu0 %v2349
    %2623 = vmatpush1.bf16.msra.mxu0 %v2348
    %2624 = vmatprep.subr.bf16.mxu0 %v2351
    %2625 = vmatpush1.bf16.msra.mxu0 %v2350
    %2626 = vmatprep.mubr.bf16.mxu0 %v1728
    %2627 = vmatmul.mubr.bf16.gmra.mrb[0].mxu0 %v1727
    %v2628 = vpop.f32.mrb[0].mxu0
    %v2629 = vadd.f32 %v2588, %v2628
    %v2630 = vpop.f32.mrb[0].mxu0
    %v2631 = vadd.f32 %v2590, %v2630
    %v2632 = vpop.f32.mrb[0].mxu0
    %v2633 = vpop.f32.mrb[0].mxu0
    %2634 = vdwg.mxu0
    %2635 = vmatprep.subr.bf16.mxu0 %v2353
    %2636 = vmatpush1.bf16.msra.mxu0 %v2352
    %2637 = vmatprep.subr.bf16.mxu0 %v2355
    %2638 = vmatpush1.bf16.msra.mxu0 %v2354
    %2639 = vmatprep.subr.bf16.mxu0 %v2357
    %2640 = vmatpush1.bf16.msra.mxu0 %v2356
    %2641 = vmatprep.subr.bf16.mxu0 %v2359
    %2642 = vmatpush1.bf16.msra.mxu0 %v2358
    %2643 = vmatprep.subr.bf16.mxu0 %v2361
    %2644 = vmatpush1.bf16.msra.mxu0 %v2360
    %2645 = vmatprep.subr.bf16.mxu0 %v2363
    %2646 = vmatpush1.bf16.msra.mxu0 %v2362
    %2647 = vmatprep.subr.bf16.mxu0 %v2365
    %2648 = vmatpush1.bf16.msra.mxu0 %v2364
    %2649 = vmatprep.subr.bf16.mxu0 %v2367
    %2650 = vmatpush1.bf16.msra.mxu0 %v2366
    %2651 = vmatprep.subr.bf16.mxu0 %v2369
    %2652 = vmatpush1.bf16.msra.mxu0 %v2368
    %2653 = vmatprep.subr.bf16.mxu0 %v2371
    %2654 = vmatpush1.bf16.msra.mxu0 %v2370
    %2655 = vmatprep.subr.bf16.mxu0 %v2373
    %2656 = vmatpush1.bf16.msra.mxu0 %v2372
    %2657 = vmatprep.subr.bf16.mxu0 %v2375
    %2658 = vmatpush1.bf16.msra.mxu0 %v2374
    %2659 = vmatprep.subr.bf16.mxu0 %v2377
    %2660 = vmatpush1.bf16.msra.mxu0 %v2376
    %2661 = vmatprep.subr.bf16.mxu0 %v2379
    %2662 = vmatpush1.bf16.msra.mxu0 %v2378
    %2663 = vmatprep.subr.bf16.mxu0 %v2381
    %2664 = vmatpush1.bf16.msra.mxu0 %v2380
    %2665 = vmatprep.subr.bf16.mxu0 %v2383
    %2666 = vmatpush1.bf16.msra.mxu0 %v2382
    %2667 = vmatprep.mubr.bf16.mxu0 %v1730
    %2668 = vmatmul.mubr.bf16.gmra.mrb[0].mxu0 %v1729
    %v2669 = vpop.f32.mrb[0].mxu0
    %v2670 = vadd.f32 %v2629, %v2669
    %v2671 = vpop.f32.mrb[0].mxu0
    %v2672 = vadd.f32 %v2631, %v2671
    %v2673 = vpop.f32.mrb[0].mxu0
    %v2674 = vpop.f32.mrb[0].mxu0
    %2675 = vdwg.mxu0
    %v2676 = vmul.f32 %v2670, %v2670
    %v2677 = vmul.f32 %v2672, %v2672
    %v2678 = vmul.f32 %v2670, %v2676
    %v2679 = vmul.f32 %v2672, %v2677
    %v2680 = vmul.f32 %v2678, 0.044715
    %v2681 = vmul.f32 %v2679, 0.044715
    %v2682 = vadd.f32 %v2670, %v2680
    %v2683 = vadd.f32 %v2672, %v2681
    %v2684 = vmul.f32 %v2682, 0.7978846
    %v2685 = vmul.f32 %v2683, 0.7978846
    %v2686 = vtanh.pop %v2684
    %v2687 = vtanh.pop %v2685
    %v2688 = vadd.f32 %v2686, 1.0
    %v2689 = vadd.f32 %v2687, 1.0
    %v2690 = vmul.f32 %v2688, 0.5
    %v2691 = vmul.f32 %v2689, 0.5
    %v2692 = vmul.f32 %v2670, %v2690
    %v2693 = vmul.f32 %v2672, %v2691
    %v2694 = vpack.c.bf16 %v2692, %v2692
    %v2695 = vpack.c.bf16 %v2693, %v2693
    %v2696 = vld [vmem:[#allocation7] sm:$0xff]
    %v2697 = vld [vmem:[#allocation7 + $0x8] sm:$0xff]
    %v2698 = vld [vmem:[#allocation7 + $0x10] sm:$0xff]
    %v2699 = vld [vmem:[#allocation7 + $0x18] sm:$0xff]
    %v2700 = vld [vmem:[#allocation7 + $0x20] sm:$0xff]
    %v2701 = vld [vmem:[#allocation7 + $0x28] sm:$0xff]
    %v2702 = vld [vmem:[#allocation7 + $0x30] sm:$0xff]
    %v2703 = vld [vmem:[#allocation7 + $0x38] sm:$0xff]
    %v2704 = vld [vmem:[#allocation7 + $0x40] sm:$0xff]
    %v2705 = vld [vmem:[#allocation7 + $0x48] sm:$0xff]
    %v2706 = vld [vmem:[#allocation7 + $0x50] sm:$0xff]
    %v2707 = vld [vmem:[#allocation7 + $0x58] sm:$0xff]
    %v2708 = vld [vmem:[#allocation7 + $0x60] sm:$0xff]
    %v2709 = vld [vmem:[#allocation7 + $0x68] sm:$0xff]
    %v2710 = vld [vmem:[#allocation7 + $0x70] sm:$0xff]
    %v2711 = vld [vmem:[#allocation7 + $0x78] sm:$0xff]
    %v2712 = vld [vmem:[#allocation7 + $0x80] sm:$0xff]
    %v2713 = vld [vmem:[#allocation7 + $0x88] sm:$0xff]
    %v2714 = vld [vmem:[#allocation7 + $0x90] sm:$0xff]
    %v2715 = vld [vmem:[#allocation7 + $0x98] sm:$0xff]
    %v2716 = vld [vmem:[#allocation7 + $0xa0] sm:$0xff]
    %v2717 = vld [vmem:[#allocation7 + $0xa8] sm:$0xff]
    %v2718 = vld [vmem:[#allocation7 + $0xb0] sm:$0xff]
    %v2719 = vld [vmem:[#allocation7 + $0xb8] sm:$0xff]
    %v2720 = vld [vmem:[#allocation7 + $0xc0] sm:$0xff]
    %v2721 = vld [vmem:[#allocation7 + $0xc8] sm:$0xff]
    %v2722 = vld [vmem:[#allocation7 + $0xd0] sm:$0xff]
    %v2723 = vld [vmem:[#allocation7 + $0xd8] sm:$0xff]
    %v2724 = vld [vmem:[#allocation7 + $0xe0] sm:$0xff]
    %v2725 = vld [vmem:[#allocation7 + $0xe8] sm:$0xff]
    %v2726 = vld [vmem:[#allocation7 + $0xf0] sm:$0xff]
    %v2727 = vld [vmem:[#allocation7 + $0xf8] sm:$0xff]
    %v2728 = vld [vmem:[#allocation7 + $0x100] sm:$0xff]
    %v2729 = vld [vmem:[#allocation7 + $0x108] sm:$0xff]
    %v2730 = vld [vmem:[#allocation7 + $0x110] sm:$0xff]
    %v2731 = vld [vmem:[#allocation7 + $0x118] sm:$0xff]
    %v2732 = vld [vmem:[#allocation7 + $0x120] sm:$0xff]
    %v2733 = vld [vmem:[#allocation7 + $0x128] sm:$0xff]
    %v2734 = vld [vmem:[#allocation7 + $0x130] sm:$0xff]
    %v2735 = vld [vmem:[#allocation7 + $0x138] sm:$0xff]
    %v2736 = vld [vmem:[#allocation7 + $0x140] sm:$0xff]
    %v2737 = vld [vmem:[#allocation7 + $0x148] sm:$0xff]
    %v2738 = vld [vmem:[#allocation7 + $0x150] sm:$0xff]
    %v2739 = vld [vmem:[#allocation7 + $0x158] sm:$0xff]
    %v2740 = vld [vmem:[#allocation7 + $0x160] sm:$0xff]
    %v2741 = vld [vmem:[#allocation7 + $0x168] sm:$0xff]
    %v2742 = vld [vmem:[#allocation7 + $0x170] sm:$0xff]
    %v2743 = vld [vmem:[#allocation7 + $0x178] sm:$0xff]
    %v2744 = vld [vmem:[#allocation7 + $0x180] sm:$0xff]
    %v2745 = vld [vmem:[#allocation7 + $0x188] sm:$0xff]
    %v2746 = vld [vmem:[#allocation7 + $0x190] sm:$0xff]
    %v2747 = vld [vmem:[#allocation7 + $0x198] sm:$0xff]
    %v2748 = vld [vmem:[#allocation7 + $0x1a0] sm:$0xff]
    %v2749 = vld [vmem:[#allocation7 + $0x1a8] sm:$0xff]
    %v2750 = vld [vmem:[#allocation7 + $0x1b0] sm:$0xff]
    %v2751 = vld [vmem:[#allocation7 + $0x1b8] sm:$0xff]
    %v2752 = vld [vmem:[#allocation7 + $0x1c0] sm:$0xff]
    %v2753 = vld [vmem:[#allocation7 + $0x1c8] sm:$0xff]
    %v2754 = vld [vmem:[#allocation7 + $0x1d0] sm:$0xff]
    %v2755 = vld [vmem:[#allocation7 + $0x1d8] sm:$0xff]
    %v2756 = vld [vmem:[#allocation7 + $0x1e0] sm:$0xff]
    %v2757 = vld [vmem:[#allocation7 + $0x1e8] sm:$0xff]
    %v2758 = vld [vmem:[#allocation7 + $0x1f0] sm:$0xff]
    %v2759 = vld [vmem:[#allocation7 + $0x1f8] sm:$0xff]
    %v2760 = vld [vmem:[#allocation7 + $0x200] sm:$0xff]
    %v2761 = vld [vmem:[#allocation7 + $0x208] sm:$0xff]
    %v2762 = vld [vmem:[#allocation7 + $0x210] sm:$0xff]
    %v2763 = vld [vmem:[#allocation7 + $0x218] sm:$0xff]
    %v2764 = vld [vmem:[#allocation7 + $0x220] sm:$0xff]
    %v2765 = vld [vmem:[#allocation7 + $0x228] sm:$0xff]
    %v2766 = vld [vmem:[#allocation7 + $0x230] sm:$0xff]
    %v2767 = vld [vmem:[#allocation7 + $0x238] sm:$0xff]
    %v2768 = vld [vmem:[#allocation7 + $0x240] sm:$0xff]
    %v2769 = vld [vmem:[#allocation7 + $0x248] sm:$0xff]
    %v2770 = vld [vmem:[#allocation7 + $0x250] sm:$0xff]
    %v2771 = vld [vmem:[#allocation7 + $0x258] sm:$0xff]
    %v2772 = vld [vmem:[#allocation7 + $0x260] sm:$0xff]
    %v2773 = vld [vmem:[#allocation7 + $0x268] sm:$0xff]
    %v2774 = vld [vmem:[#allocation7 + $0x270] sm:$0xff]
    %v2775 = vld [vmem:[#allocation7 + $0x278] sm:$0xff]
    %v2776 = vld [vmem:[#allocation7 + $0x280] sm:$0xff]
    %v2777 = vld [vmem:[#allocation7 + $0x288] sm:$0xff]
    %v2778 = vld [vmem:[#allocation7 + $0x290] sm:$0xff]
    %v2779 = vld [vmem:[#allocation7 + $0x298] sm:$0xff]
    %v2780 = vld [vmem:[#allocation7 + $0x2a0] sm:$0xff]
    %v2781 = vld [vmem:[#allocation7 + $0x2a8] sm:$0xff]
    %v2782 = vld [vmem:[#allocation7 + $0x2b0] sm:$0xff]
    %v2783 = vld [vmem:[#allocation7 + $0x2b8] sm:$0xff]
    %v2784 = vld [vmem:[#allocation7 + $0x2c0] sm:$0xff]
    %v2785 = vld [vmem:[#allocation7 + $0x2c8] sm:$0xff]
    %v2786 = vld [vmem:[#allocation7 + $0x2d0] sm:$0xff]
    %v2787 = vld [vmem:[#allocation7 + $0x2d8] sm:$0xff]
    %v2788 = vld [vmem:[#allocation7 + $0x2e0] sm:$0xff]
    %v2789 = vld [vmem:[#allocation7 + $0x2e8] sm:$0xff]
    %v2790 = vld [vmem:[#allocation7 + $0x2f0] sm:$0xff]
    %v2791 = vld [vmem:[#allocation7 + $0x2f8] sm:$0xff]
    %v2792 = vld [vmem:[#allocation7 + $0x300] sm:$0xff]
    %v2793 = vld [vmem:[#allocation7 + $0x308] sm:$0xff]
    %v2794 = vld [vmem:[#allocation7 + $0x310] sm:$0xff]
    %v2795 = vld [vmem:[#allocation7 + $0x318] sm:$0xff]
    %v2796 = vld [vmem:[#allocation7 + $0x320] sm:$0xff]
    %v2797 = vld [vmem:[#allocation7 + $0x328] sm:$0xff]
    %v2798 = vld [vmem:[#allocation7 + $0x330] sm:$0xff]
    %v2799 = vld [vmem:[#allocation7 + $0x338] sm:$0xff]
    %v2800 = vld [vmem:[#allocation7 + $0x340] sm:$0xff]
    %v2801 = vld [vmem:[#allocation7 + $0x348] sm:$0xff]
    %v2802 = vld [vmem:[#allocation7 + $0x350] sm:$0xff]
    %v2803 = vld [vmem:[#allocation7 + $0x358] sm:$0xff]
    %v2804 = vld [vmem:[#allocation7 + $0x360] sm:$0xff]
    %v2805 = vld [vmem:[#allocation7 + $0x368] sm:$0xff]
    %v2806 = vld [vmem:[#allocation7 + $0x370] sm:$0xff]
    %v2807 = vld [vmem:[#allocation7 + $0x378] sm:$0xff]
    %v2808 = vld [vmem:[#allocation7 + $0x380] sm:$0xff]
    %v2809 = vld [vmem:[#allocation7 + $0x388] sm:$0xff]
    %v2810 = vld [vmem:[#allocation7 + $0x390] sm:$0xff]
    %v2811 = vld [vmem:[#allocation7 + $0x398] sm:$0xff]
    %v2812 = vld [vmem:[#allocation7 + $0x3a0] sm:$0xff]
    %v2813 = vld [vmem:[#allocation7 + $0x3a8] sm:$0xff]
    %v2814 = vld [vmem:[#allocation7 + $0x3b0] sm:$0xff]
    %v2815 = vld [vmem:[#allocation7 + $0x3b8] sm:$0xff]
    %v2816 = vld [vmem:[#allocation7 + $0x3c0] sm:$0xff]
    %v2817 = vld [vmem:[#allocation7 + $0x3c8] sm:$0xff]
    %v2818 = vld [vmem:[#allocation7 + $0x3d0] sm:$0xff]
    %v2819 = vld [vmem:[#allocation7 + $0x3d8] sm:$0xff]
    %v2820 = vld [vmem:[#allocation7 + $0x3e0] sm:$0xff]
    %v2821 = vld [vmem:[#allocation7 + $0x3e8] sm:$0xff]
    %v2822 = vld [vmem:[#allocation7 + $0x3f0] sm:$0xff]
    %v2823 = vld [vmem:[#allocation7 + $0x3f8] sm:$0xff]
    %v2952 = vunpack.c.l.b16 %v2696
    %v2953 = vunpack.c.h.b16 %v2696
    %v2954 = vunpack.c.l.b16 %v2697
    %v2955 = vunpack.c.h.b16 %v2697
    %v2956 = vunpack.c.l.b16 %v2698
    %v2957 = vunpack.c.h.b16 %v2698
    %v2958 = vunpack.c.l.b16 %v2699
    %v2959 = vunpack.c.h.b16 %v2699
    %v2960 = vunpack.c.l.b16 %v2700
    %v2961 = vunpack.c.h.b16 %v2700
    %v2962 = vunpack.c.l.b16 %v2701
    %v2963 = vunpack.c.h.b16 %v2701
    %v2964 = vunpack.c.l.b16 %v2702
    %v2965 = vunpack.c.h.b16 %v2702
    %v2966 = vunpack.c.l.b16 %v2703
    %v2967 = vunpack.c.h.b16 %v2703
    %v2968 = vunpack.c.l.b16 %v2704
    %v2969 = vunpack.c.h.b16 %v2704
    %v2970 = vunpack.c.l.b16 %v2705
    %v2971 = vunpack.c.h.b16 %v2705
    %v2972 = vunpack.c.l.b16 %v2706
    %v2973 = vunpack.c.h.b16 %v2706
    %v2974 = vunpack.c.l.b16 %v2707
    %v2975 = vunpack.c.h.b16 %v2707
    %v2976 = vunpack.c.l.b16 %v2708
    %v2977 = vunpack.c.h.b16 %v2708
    %v2978 = vunpack.c.l.b16 %v2709
    %v2979 = vunpack.c.h.b16 %v2709
    %v2980 = vunpack.c.l.b16 %v2710
    %v2981 = vunpack.c.h.b16 %v2710
    %v2982 = vunpack.c.l.b16 %v2711
    %v2983 = vunpack.c.h.b16 %v2711
    %v2984 = vunpack.c.l.b16 %v2712
    %v2985 = vunpack.c.h.b16 %v2712
    %v2986 = vunpack.c.l.b16 %v2713
    %v2987 = vunpack.c.h.b16 %v2713
    %v2988 = vunpack.c.l.b16 %v2714
    %v2989 = vunpack.c.h.b16 %v2714
    %v2990 = vunpack.c.l.b16 %v2715
    %v2991 = vunpack.c.h.b16 %v2715
    %v2992 = vunpack.c.l.b16 %v2716
    %v2993 = vunpack.c.h.b16 %v2716
    %v2994 = vunpack.c.l.b16 %v2717
    %v2995 = vunpack.c.h.b16 %v2717
    %v2996 = vunpack.c.l.b16 %v2718
    %v2997 = vunpack.c.h.b16 %v2718
    %v2998 = vunpack.c.l.b16 %v2719
    %v2999 = vunpack.c.h.b16 %v2719
    %v3000 = vunpack.c.l.b16 %v2720
    %v3001 = vunpack.c.h.b16 %v2720
    %v3002 = vunpack.c.l.b16 %v2721
    %v3003 = vunpack.c.h.b16 %v2721
    %v3004 = vunpack.c.l.b16 %v2722
    %v3005 = vunpack.c.h.b16 %v2722
    %v3006 = vunpack.c.l.b16 %v2723
    %v3007 = vunpack.c.h.b16 %v2723
    %v3008 = vunpack.c.l.b16 %v2724
    %v3009 = vunpack.c.h.b16 %v2724
    %v3010 = vunpack.c.l.b16 %v2725
    %v3011 = vunpack.c.h.b16 %v2725
    %v3012 = vunpack.c.l.b16 %v2726
    %v3013 = vunpack.c.h.b16 %v2726
    %v3014 = vunpack.c.l.b16 %v2727
    %v3015 = vunpack.c.h.b16 %v2727
    %v3016 = vunpack.c.l.b16 %v2728
    %v3017 = vunpack.c.h.b16 %v2728
    %v3018 = vunpack.c.l.b16 %v2729
    %v3019 = vunpack.c.h.b16 %v2729
    %v3020 = vunpack.c.l.b16 %v2730
    %v3021 = vunpack.c.h.b16 %v2730
    %v3022 = vunpack.c.l.b16 %v2731
    %v3023 = vunpack.c.h.b16 %v2731
    %v3024 = vunpack.c.l.b16 %v2732
    %v3025 = vunpack.c.h.b16 %v2732
    %v3026 = vunpack.c.l.b16 %v2733
    %v3027 = vunpack.c.h.b16 %v2733
    %v3028 = vunpack.c.l.b16 %v2734
    %v3029 = vunpack.c.h.b16 %v2734
    %v3030 = vunpack.c.l.b16 %v2735
    %v3031 = vunpack.c.h.b16 %v2735
    %v3032 = vunpack.c.l.b16 %v2736
    %v3033 = vunpack.c.h.b16 %v2736
    %v3034 = vunpack.c.l.b16 %v2737
    %v3035 = vunpack.c.h.b16 %v2737
    %v3036 = vunpack.c.l.b16 %v2738
    %v3037 = vunpack.c.h.b16 %v2738
    %v3038 = vunpack.c.l.b16 %v2739
    %v3039 = vunpack.c.h.b16 %v2739
    %v3040 = vunpack.c.l.b16 %v2740
    %v3041 = vunpack.c.h.b16 %v2740
    %v3042 = vunpack.c.l.b16 %v2741
    %v3043 = vunpack.c.h.b16 %v2741
    %v3044 = vunpack.c.l.b16 %v2742
    %v3045 = vunpack.c.h.b16 %v2742
    %v3046 = vunpack.c.l.b16 %v2743
    %v3047 = vunpack.c.h.b16 %v2743
    %v3048 = vunpack.c.l.b16 %v2744
    %v3049 = vunpack.c.h.b16 %v2744
    %v3050 = vunpack.c.l.b16 %v2745
    %v3051 = vunpack.c.h.b16 %v2745
    %v3052 = vunpack.c.l.b16 %v2746
    %v3053 = vunpack.c.h.b16 %v2746
    %v3054 = vunpack.c.l.b16 %v2747
    %v3055 = vunpack.c.h.b16 %v2747
    %v3056 = vunpack.c.l.b16 %v2748
    %v3057 = vunpack.c.h.b16 %v2748
    %v3058 = vunpack.c.l.b16 %v2749
    %v3059 = vunpack.c.h.b16 %v2749
    %v3060 = vunpack.c.l.b16 %v2750
    %v3061 = vunpack.c.h.b16 %v2750
    %v3062 = vunpack.c.l.b16 %v2751
    %v3063 = vunpack.c.h.b16 %v2751
    %v3064 = vunpack.c.l.b16 %v2752
    %v3065 = vunpack.c.h.b16 %v2752
    %v3066 = vunpack.c.l.b16 %v2753
    %v3067 = vunpack.c.h.b16 %v2753
    %v3068 = vunpack.c.l.b16 %v2754
    %v3069 = vunpack.c.h.b16 %v2754
    %v3070 = vunpack.c.l.b16 %v2755
    %v3071 = vunpack.c.h.b16 %v2755
    %v3072 = vunpack.c.l.b16 %v2756
    %v3073 = vunpack.c.h.b16 %v2756
    %v3074 = vunpack.c.l.b16 %v2757
    %v3075 = vunpack.c.h.b16 %v2757
    %v3076 = vunpack.c.l.b16 %v2758
    %v3077 = vunpack.c.h.b16 %v2758
    %v3078 = vunpack.c.l.b16 %v2759
    %v3079 = vunpack.c.h.b16 %v2759
    %v3080 = vunpack.c.l.b16 %v2760
    %v3081 = vunpack.c.h.b16 %v2760
    %v3082 = vunpack.c.l.b16 %v2761
    %v3083 = vunpack.c.h.b16 %v2761
    %v3084 = vunpack.c.l.b16 %v2762
    %v3085 = vunpack.c.h.b16 %v2762
    %v3086 = vunpack.c.l.b16 %v2763
    %v3087 = vunpack.c.h.b16 %v2763
    %v3088 = vunpack.c.l.b16 %v2764
    %v3089 = vunpack.c.h.b16 %v2764
    %v3090 = vunpack.c.l.b16 %v2765
    %v3091 = vunpack.c.h.b16 %v2765
    %v3092 = vunpack.c.l.b16 %v2766
    %v3093 = vunpack.c.h.b16 %v2766
    %v3094 = vunpack.c.l.b16 %v2767
    %v3095 = vunpack.c.h.b16 %v2767
    %v3096 = vunpack.c.l.b16 %v2768
    %v3097 = vunpack.c.h.b16 %v2768
    %v3098 = vunpack.c.l.b16 %v2769
    %v3099 = vunpack.c.h.b16 %v2769
    %v3100 = vunpack.c.l.b16 %v2770
    %v3101 = vunpack.c.h.b16 %v2770
    %v3102 = vunpack.c.l.b16 %v2771
    %v3103 = vunpack.c.h.b16 %v2771
    %v3104 = vunpack.c.l.b16 %v2772
    %v3105 = vunpack.c.h.b16 %v2772
    %v3106 = vunpack.c.l.b16 %v2773
    %v3107 = vunpack.c.h.b16 %v2773
    %v3108 = vunpack.c.l.b16 %v2774
    %v3109 = vunpack.c.h.b16 %v2774
    %v3110 = vunpack.c.l.b16 %v2775
    %v3111 = vunpack.c.h.b16 %v2775
    %v3112 = vunpack.c.l.b16 %v2776
    %v3113 = vunpack.c.h.b16 %v2776
    %v3114 = vunpack.c.l.b16 %v2777
    %v3115 = vunpack.c.h.b16 %v2777
    %v3116 = vunpack.c.l.b16 %v2778
    %v3117 = vunpack.c.h.b16 %v2778
    %v3118 = vunpack.c.l.b16 %v2779
    %v3119 = vunpack.c.h.b16 %v2779
    %v3120 = vunpack.c.l.b16 %v2780
    %v3121 = vunpack.c.h.b16 %v2780
    %v3122 = vunpack.c.l.b16 %v2781
    %v3123 = vunpack.c.h.b16 %v2781
    %v3124 = vunpack.c.l.b16 %v2782
    %v3125 = vunpack.c.h.b16 %v2782
    %v3126 = vunpack.c.l.b16 %v2783
    %v3127 = vunpack.c.h.b16 %v2783
    %v3128 = vunpack.c.l.b16 %v2784
    %v3129 = vunpack.c.h.b16 %v2784
    %v3130 = vunpack.c.l.b16 %v2785
    %v3131 = vunpack.c.h.b16 %v2785
    %v3132 = vunpack.c.l.b16 %v2786
    %v3133 = vunpack.c.h.b16 %v2786
    %v3134 = vunpack.c.l.b16 %v2787
    %v3135 = vunpack.c.h.b16 %v2787
    %v3136 = vunpack.c.l.b16 %v2788
    %v3137 = vunpack.c.h.b16 %v2788
    %v3138 = vunpack.c.l.b16 %v2789
    %v3139 = vunpack.c.h.b16 %v2789
    %v3140 = vunpack.c.l.b16 %v2790
    %v3141 = vunpack.c.h.b16 %v2790
    %v3142 = vunpack.c.l.b16 %v2791
    %v3143 = vunpack.c.h.b16 %v2791
    %v3144 = vunpack.c.l.b16 %v2792
    %v3145 = vunpack.c.h.b16 %v2792
    %v3146 = vunpack.c.l.b16 %v2793
    %v3147 = vunpack.c.h.b16 %v2793
    %v3148 = vunpack.c.l.b16 %v2794
    %v3149 = vunpack.c.h.b16 %v2794
    %v3150 = vunpack.c.l.b16 %v2795
    %v3151 = vunpack.c.h.b16 %v2795
    %v3152 = vunpack.c.l.b16 %v2796
    %v3153 = vunpack.c.h.b16 %v2796
    %v3154 = vunpack.c.l.b16 %v2797
    %v3155 = vunpack.c.h.b16 %v2797
    %v3156 = vunpack.c.l.b16 %v2798
    %v3157 = vunpack.c.h.b16 %v2798
    %v3158 = vunpack.c.l.b16 %v2799
    %v3159 = vunpack.c.h.b16 %v2799
    %v3160 = vunpack.c.l.b16 %v2800
    %v3161 = vunpack.c.h.b16 %v2800
    %v3162 = vunpack.c.l.b16 %v2801
    %v3163 = vunpack.c.h.b16 %v2801
    %v3164 = vunpack.c.l.b16 %v2802
    %v3165 = vunpack.c.h.b16 %v2802
    %v3166 = vunpack.c.l.b16 %v2803
    %v3167 = vunpack.c.h.b16 %v2803
    %v3168 = vunpack.c.l.b16 %v2804
    %v3169 = vunpack.c.h.b16 %v2804
    %v3170 = vunpack.c.l.b16 %v2805
    %v3171 = vunpack.c.h.b16 %v2805
    %v3172 = vunpack.c.l.b16 %v2806
    %v3173 = vunpack.c.h.b16 %v2806
    %v3174 = vunpack.c.l.b16 %v2807
    %v3175 = vunpack.c.h.b16 %v2807
    %v3176 = vunpack.c.l.b16 %v2808
    %v3177 = vunpack.c.h.b16 %v2808
    %v3178 = vunpack.c.l.b16 %v2809
    %v3179 = vunpack.c.h.b16 %v2809
    %v3180 = vunpack.c.l.b16 %v2810
    %v3181 = vunpack.c.h.b16 %v2810
    %v3182 = vunpack.c.l.b16 %v2811
    %v3183 = vunpack.c.h.b16 %v2811
    %v3184 = vunpack.c.l.b16 %v2812
    %v3185 = vunpack.c.h.b16 %v2812
    %v3186 = vunpack.c.l.b16 %v2813
    %v3187 = vunpack.c.h.b16 %v2813
    %v3188 = vunpack.c.l.b16 %v2814
    %v3189 = vunpack.c.h.b16 %v2814
    %v3190 = vunpack.c.l.b16 %v2815
    %v3191 = vunpack.c.h.b16 %v2815
    %v3192 = vunpack.c.l.b16 %v2816
    %v3193 = vunpack.c.h.b16 %v2816
    %v3194 = vunpack.c.l.b16 %v2817
    %v3195 = vunpack.c.h.b16 %v2817
    %v3196 = vunpack.c.l.b16 %v2818
    %v3197 = vunpack.c.h.b16 %v2818
    %v3198 = vunpack.c.l.b16 %v2819
    %v3199 = vunpack.c.h.b16 %v2819
    %v3200 = vunpack.c.l.b16 %v2820
    %v3201 = vunpack.c.h.b16 %v2820
    %v3202 = vunpack.c.l.b16 %v2821
    %v3203 = vunpack.c.h.b16 %v2821
    %v3204 = vunpack.c.l.b16 %v2822
    %v3205 = vunpack.c.h.b16 %v2822
    %v3206 = vunpack.c.l.b16 %v2823
    %v3207 = vunpack.c.h.b16 %v2823
    %v3208 = vpack.c.b16 %v2960, %v2952
    %v3209 = vpack.c.b16 %v2961, %v2953
    %v3210 = vpack.c.b16 %v2962, %v2954
    %v3211 = vpack.c.b16 %v2963, %v2955
    %v3212 = vpack.c.b16 %v2964, %v2956
    %v3213 = vpack.c.b16 %v2965, %v2957
    %v3214 = vpack.c.b16 %v2966, %v2958
    %v3215 = vpack.c.b16 %v2967, %v2959
    %v3216 = vpack.c.b16 %v2976, %v2968
    %v3217 = vpack.c.b16 %v2977, %v2969
    %v3218 = vpack.c.b16 %v2978, %v2970
    %v3219 = vpack.c.b16 %v2979, %v2971
    %v3220 = vpack.c.b16 %v2980, %v2972
    %v3221 = vpack.c.b16 %v2981, %v2973
    %v3222 = vpack.c.b16 %v2982, %v2974
    %v3223 = vpack.c.b16 %v2983, %v2975
    %v3224 = vpack.c.b16 %v2992, %v2984
    %v3225 = vpack.c.b16 %v2993, %v2985
    %v3226 = vpack.c.b16 %v2994, %v2986
    %v3227 = vpack.c.b16 %v2995, %v2987
    %v3228 = vpack.c.b16 %v2996, %v2988
    %v3229 = vpack.c.b16 %v2997, %v2989
    %v3230 = vpack.c.b16 %v2998, %v2990
    %v3231 = vpack.c.b16 %v2999, %v2991
    %v3232 = vpack.c.b16 %v3008, %v3000
    %v3233 = vpack.c.b16 %v3009, %v3001
    %v3234 = vpack.c.b16 %v3010, %v3002
    %v3235 = vpack.c.b16 %v3011, %v3003
    %v3236 = vpack.c.b16 %v3012, %v3004
    %v3237 = vpack.c.b16 %v3013, %v3005
    %v3238 = vpack.c.b16 %v3014, %v3006
    %v3239 = vpack.c.b16 %v3015, %v3007
    %v3240 = vpack.c.b16 %v3024, %v3016
    %v3241 = vpack.c.b16 %v3025, %v3017
    %v3242 = vpack.c.b16 %v3026, %v3018
    %v3243 = vpack.c.b16 %v3027, %v3019
    %v3244 = vpack.c.b16 %v3028, %v3020
    %v3245 = vpack.c.b16 %v3029, %v3021
    %v3246 = vpack.c.b16 %v3030, %v3022
    %v3247 = vpack.c.b16 %v3031, %v3023
    %v3248 = vpack.c.b16 %v3040, %v3032
    %v3249 = vpack.c.b16 %v3041, %v3033
    %v3250 = vpack.c.b16 %v3042, %v3034
    %v3251 = vpack.c.b16 %v3043, %v3035
    %v3252 = vpack.c.b16 %v3044, %v3036
    %v3253 = vpack.c.b16 %v3045, %v3037
    %v3254 = vpack.c.b16 %v3046, %v3038
    %v3255 = vpack.c.b16 %v3047, %v3039
    %v3256 = vpack.c.b16 %v3056, %v3048
    %v3257 = vpack.c.b16 %v3057, %v3049
    %v3258 = vpack.c.b16 %v3058, %v3050
    %v3259 = vpack.c.b16 %v3059, %v3051
    %v3260 = vpack.c.b16 %v3060, %v3052
    %v3261 = vpack.c.b16 %v3061, %v3053
    %v3262 = vpack.c.b16 %v3062, %v3054
    %v3263 = vpack.c.b16 %v3063, %v3055
    %v3264 = vpack.c.b16 %v3072, %v3064
    %v3265 = vpack.c.b16 %v3073, %v3065
    %v3266 = vpack.c.b16 %v3074, %v3066
    %v3267 = vpack.c.b16 %v3075, %v3067
    %v3268 = vpack.c.b16 %v3076, %v3068
    %v3269 = vpack.c.b16 %v3077, %v3069
    %v3270 = vpack.c.b16 %v3078, %v3070
    %v3271 = vpack.c.b16 %v3079, %v3071
    %v3272 = vpack.c.b16 %v3088, %v3080
    %v3273 = vpack.c.b16 %v3089, %v3081
    %v3274 = vpack.c.b16 %v3090, %v3082
    %v3275 = vpack.c.b16 %v3091, %v3083
    %v3276 = vpack.c.b16 %v3092, %v3084
    %v3277 = vpack.c.b16 %v3093, %v3085
    %v3278 = vpack.c.b16 %v3094, %v3086
    %v3279 = vpack.c.b16 %v3095, %v3087
    %v3280 = vpack.c.b16 %v3104, %v3096
    %v3281 = vpack.c.b16 %v3105, %v3097
    %v3282 = vpack.c.b16 %v3106, %v3098
    %v3283 = vpack.c.b16 %v3107, %v3099
    %v3284 = vpack.c.b16 %v3108, %v3100
    %v3285 = vpack.c.b16 %v3109, %v3101
    %v3286 = vpack.c.b16 %v3110, %v3102
    %v3287 = vpack.c.b16 %v3111, %v3103
    %v3288 = vpack.c.b16 %v3120, %v3112
    %v3289 = vpack.c.b16 %v3121, %v3113
    %v3290 = vpack.c.b16 %v3122, %v3114
    %v3291 = vpack.c.b16 %v3123, %v3115
    %v3292 = vpack.c.b16 %v3124, %v3116
    %v3293 = vpack.c.b16 %v3125, %v3117
    %v3294 = vpack.c.b16 %v3126, %v3118
    %v3295 = vpack.c.b16 %v3127, %v3119
    %v3296 = vpack.c.b16 %v3136, %v3128
    %v3297 = vpack.c.b16 %v3137, %v3129
    %v3298 = vpack.c.b16 %v3138, %v3130
    %v3299 = vpack.c.b16 %v3139, %v3131
    %v3300 = vpack.c.b16 %v3140, %v3132
    %v3301 = vpack.c.b16 %v3141, %v3133
    %v3302 = vpack.c.b16 %v3142, %v3134
    %v3303 = vpack.c.b16 %v3143, %v3135
    %v3304 = vpack.c.b16 %v3152, %v3144
    %v3305 = vpack.c.b16 %v3153, %v3145
    %v3306 = vpack.c.b16 %v3154, %v3146
    %v3307 = vpack.c.b16 %v3155, %v3147
    %v3308 = vpack.c.b16 %v3156, %v3148
    %v3309 = vpack.c.b16 %v3157, %v3149
    %v3310 = vpack.c.b16 %v3158, %v3150
    %v3311 = vpack.c.b16 %v3159, %v3151
    %v3312 = vpack.c.b16 %v3168, %v3160
    %v3313 = vpack.c.b16 %v3169, %v3161
    %v3314 = vpack.c.b16 %v3170, %v3162
    %v3315 = vpack.c.b16 %v3171, %v3163
    %v3316 = vpack.c.b16 %v3172, %v3164
    %v3317 = vpack.c.b16 %v3173, %v3165
    %v3318 = vpack.c.b16 %v3174, %v3166
    %v3319 = vpack.c.b16 %v3175, %v3167
    %v3320 = vpack.c.b16 %v3184, %v3176
    %v3321 = vpack.c.b16 %v3185, %v3177
    %v3322 = vpack.c.b16 %v3186, %v3178
    %v3323 = vpack.c.b16 %v3187, %v3179
    %v3324 = vpack.c.b16 %v3188, %v3180
    %v3325 = vpack.c.b16 %v3189, %v3181
    %v3326 = vpack.c.b16 %v3190, %v3182
    %v3327 = vpack.c.b16 %v3191, %v3183
    %v3328 = vpack.c.b16 %v3200, %v3192
    %v3329 = vpack.c.b16 %v3201, %v3193
    %v3330 = vpack.c.b16 %v3202, %v3194
    %v3331 = vpack.c.b16 %v3203, %v3195
    %v3332 = vpack.c.b16 %v3204, %v3196
    %v3333 = vpack.c.b16 %v3205, %v3197
    %v3334 = vpack.c.b16 %v3206, %v3198
    %v3335 = vpack.c.b16 %v3207, %v3199
    %3464 = vmatprep.subr.bf16.mxu0 %v3209
    %3465 = vmatpush1.bf16.msra.mxu0 %v3208
    %3466 = vmatprep.subr.bf16.mxu0 %v3217
    %3467 = vmatpush1.bf16.msra.mxu0 %v3216
    %3468 = vmatprep.subr.bf16.mxu0 %v3225
    %3469 = vmatpush1.bf16.msra.mxu0 %v3224
    %3470 = vmatprep.subr.bf16.mxu0 %v3233
    %3471 = vmatpush1.bf16.msra.mxu0 %v3232
    %3472 = vmatprep.subr.bf16.mxu0 %v3241
    %3473 = vmatpush1.bf16.msra.mxu0 %v3240
    %3474 = vmatprep.subr.bf16.mxu0 %v3249
    %3475 = vmatpush1.bf16.msra.mxu0 %v3248
    %3476 = vmatprep.subr.bf16.mxu0 %v3257
    %3477 = vmatpush1.bf16.msra.mxu0 %v3256
    %3478 = vmatprep.subr.bf16.mxu0 %v3265
    %3479 = vmatpush1.bf16.msra.mxu0 %v3264
    %3480 = vmatprep.subr.bf16.mxu0 %v3273
    %3481 = vmatpush1.bf16.msra.mxu0 %v3272
    %3482 = vmatprep.subr.bf16.mxu0 %v3281
    %3483 = vmatpush1.bf16.msra.mxu0 %v3280
    %3484 = vmatprep.subr.bf16.mxu0 %v3289
    %3485 = vmatpush1.bf16.msra.mxu0 %v3288
    %3486 = vmatprep.subr.bf16.mxu0 %v3297
    %3487 = vmatpush1.bf16.msra.mxu0 %v3296
    %3488 = vmatprep.subr.bf16.mxu0 %v3305
    %3489 = vmatpush1.bf16.msra.mxu0 %v3304
    %3490 = vmatprep.subr.bf16.mxu0 %v3313
    %3491 = vmatpush1.bf16.msra.mxu0 %v3312
    %3492 = vmatprep.subr.bf16.mxu0 %v3321
    %3493 = vmatpush1.bf16.msra.mxu0 %v3320
    %3494 = vmatprep.subr.bf16.mxu0 %v3329
    %3495 = vmatpush1.bf16.msra.mxu0 %v3328
    %3496 = vmatprep.mubr.bf16.mxu0 %v2695
    %3497 = vmatmul.mubr.bf16.gmra.mrb[0].mxu0 %v2694
    %v3498 = vpop.f32.mrb[0].mxu0
    %v3499 = vadd.f32 0.0, %v3498
    %v3500 = vpop.f32.mrb[0].mxu0
    %v3501 = vadd.f32 0.0, %v3500
    %v3502 = vpop.f32.mrb[0].mxu0
    %v3503 = vpop.f32.mrb[0].mxu0
    %3504 = vdwg.mxu0
    %3505 = vmatprep.subr.bf16.mxu0 %v3211
    %3506 = vmatpush1.bf16.msra.mxu0 %v3210
    %3507 = vmatprep.subr.bf16.mxu0 %v3219
    %3508 = vmatpush1.bf16.msra.mxu0 %v3218
    %3509 = vmatprep.subr.bf16.mxu0 %v3227
    %3510 = vmatpush1.bf16.msra.mxu0 %v3226
    %3511 = vmatprep.subr.bf16.mxu0 %v3235
    %3512 = vmatpush1.bf16.msra.mxu0 %v3234
    %3513 = vmatprep.subr.bf16.mxu0 %v3243
    %3514 = vmatpush1.bf16.msra.mxu0 %v3242
    %3515 = vmatprep.subr.bf16.mxu0 %v3251
    %3516 = vmatpush1.bf16.msra.mxu0 %v3250
    %3517 = vmatprep.subr.bf16.mxu0 %v3259
    %3518 = vmatpush1.bf16.msra.mxu0 %v3258
    %3519 = vmatprep.subr.bf16.mxu0 %v3267
    %3520 = vmatpush1.bf16.msra.mxu0 %v3266
    %3521 = vmatprep.subr.bf16.mxu0 %v3275
    %3522 = vmatpush1.bf16.msra.mxu0 %v3274
    %3523 = vmatprep.subr.bf16.mxu0 %v3283
    %3524 = vmatpush1.bf16.msra.mxu0 %v3282
    %3525 = vmatprep.subr.bf16.mxu0 %v3291
    %3526 = vmatpush1.bf16.msra.mxu0 %v3290
    %3527 = vmatprep.subr.bf16.mxu0 %v3299
    %3528 = vmatpush1.bf16.msra.mxu0 %v3298
    %3529 = vmatprep.subr.bf16.mxu0 %v3307
    %3530 = vmatpush1.bf16.msra.mxu0 %v3306
    %3531 = vmatprep.subr.bf16.mxu0 %v3315
    %3532 = vmatpush1.bf16.msra.mxu0 %v3314
    %3533 = vmatprep.subr.bf16.mxu0 %v3323
    %3534 = vmatpush1.bf16.msra.mxu0 %v3322
    %3535 = vmatprep.subr.bf16.mxu0 %v3331
    %3536 = vmatpush1.bf16.msra.mxu0 %v3330
    %3537 = vmatprep.mubr.bf16.mxu0 %v2695
    %3538 = vmatmul.mubr.bf16.gmra.mrb[0].mxu0 %v2694
    %v3539 = vpop.f32.mrb[0].mxu0
    %v3540 = vadd.f32 0.0, %v3539
    %v3541 = vpop.f32.mrb[0].mxu0
    %v3542 = vadd.f32 0.0, %v3541
    %v3543 = vpop.f32.mrb[0].mxu0
    %v3544 = vpop.f32.mrb[0].mxu0
    %3545 = vdwg.mxu0
    %3546 = vmatprep.subr.bf16.mxu0 %v3213
    %3547 = vmatpush1.bf16.msra.mxu0 %v3212
    %3548 = vmatprep.subr.bf16.mxu0 %v3221
    %3549 = vmatpush1.bf16.msra.mxu0 %v3220
    %3550 = vmatprep.subr.bf16.mxu0 %v3229
    %3551 = vmatpush1.bf16.msra.mxu0 %v3228
    %3552 = vmatprep.subr.bf16.mxu0 %v3237
    %3553 = vmatpush1.bf16.msra.mxu0 %v3236
    %3554 = vmatprep.subr.bf16.mxu0 %v3245
    %3555 = vmatpush1.bf16.msra.mxu0 %v3244
    %3556 = vmatprep.subr.bf16.mxu0 %v3253
    %3557 = vmatpush1.bf16.msra.mxu0 %v3252
    %3558 = vmatprep.subr.bf16.mxu0 %v3261
    %3559 = vmatpush1.bf16.msra.mxu0 %v3260
    %3560 = vmatprep.subr.bf16.mxu0 %v3269
    %3561 = vmatpush1.bf16.msra.mxu0 %v3268
    %3562 = vmatprep.subr.bf16.mxu0 %v3277
    %3563 = vmatpush1.bf16.msra.mxu0 %v3276
    %3564 = vmatprep.subr.bf16.mxu0 %v3285
    %3565 = vmatpush1.bf16.msra.mxu0 %v3284
    %3566 = vmatprep.subr.bf16.mxu0 %v3293
    %3567 = vmatpush1.bf16.msra.mxu0 %v3292
    %3568 = vmatprep.subr.bf16.mxu0 %v3301
    %3569 = vmatpush1.bf16.msra.mxu0 %v3300
    %3570 = vmatprep.subr.bf16.mxu0 %v3309
    %3571 = vmatpush1.bf16.msra.mxu0 %v3308
    %3572 = vmatprep.subr.bf16.mxu0 %v3317
    %3573 = vmatpush1.bf16.msra.mxu0 %v3316
    %3574 = vmatprep.subr.bf16.mxu0 %v3325
    %3575 = vmatpush1.bf16.msra.mxu0 %v3324
    %3576 = vmatprep.subr.bf16.mxu0 %v3333
    %3577 = vmatpush1.bf16.msra.mxu0 %v3332
    %3578 = vmatprep.mubr.bf16.mxu0 %v2695
    %3579 = vmatmul.mubr.bf16.gmra.mrb[0].mxu0 %v2694
    %v3580 = vpop.f32.mrb[0].mxu0
    %v3581 = vadd.f32 0.0, %v3580
    %v3582 = vpop.f32.mrb[0].mxu0
    %v3583 = vadd.f32 0.0, %v3582
    %v3584 = vpop.f32.mrb[0].mxu0
    %v3585 = vpop.f32.mrb[0].mxu0
    %3586 = vdwg.mxu0
    %3587 = vmatprep.subr.bf16.mxu0 %v3215
    %3588 = vmatpush1.bf16.msra.mxu0 %v3214
    %3589 = vmatprep.subr.bf16.mxu0 %v3223
    %3590 = vmatpush1.bf16.msra.mxu0 %v3222
    %3591 = vmatprep.subr.bf16.mxu0 %v3231
    %3592 = vmatpush1.bf16.msra.mxu0 %v3230
    %3593 = vmatprep.subr.bf16.mxu0 %v3239
    %3594 = vmatpush1.bf16.msra.mxu0 %v3238
    %3595 = vmatprep.subr.bf16.mxu0 %v3247
    %3596 = vmatpush1.bf16.msra.mxu0 %v3246
    %3597 = vmatprep.subr.bf16.mxu0 %v3255
    %3598 = vmatpush1.bf16.msra.mxu0 %v3254
    %3599 = vmatprep.subr.bf16.mxu0 %v3263
    %3600 = vmatpush1.bf16.msra.mxu0 %v3262
    %3601 = vmatprep.subr.bf16.mxu0 %v3271
    %3602 = vmatpush1.bf16.msra.mxu0 %v3270
    %3603 = vmatprep.subr.bf16.mxu0 %v3279
    %3604 = vmatpush1.bf16.msra.mxu0 %v3278
    %3605 = vmatprep.subr.bf16.mxu0 %v3287
    %3606 = vmatpush1.bf16.msra.mxu0 %v3286
    %3607 = vmatprep.subr.bf16.mxu0 %v3295
    %3608 = vmatpush1.bf16.msra.mxu0 %v3294
    %3609 = vmatprep.subr.bf16.mxu0 %v3303
    %3610 = vmatpush1.bf16.msra.mxu0 %v3302
    %3611 = vmatprep.subr.bf16.mxu0 %v3311
    %3612 = vmatpush1.bf16.msra.mxu0 %v3310
    %3613 = vmatprep.subr.bf16.mxu0 %v3319
    %3614 = vmatpush1.bf16.msra.mxu0 %v3318
    %3615 = vmatprep.subr.bf16.mxu0 %v3327
    %3616 = vmatpush1.bf16.msra.mxu0 %v3326
    %3617 = vmatprep.subr.bf16.mxu0 %v3335
    %3618 = vmatpush1.bf16.msra.mxu0 %v3334
    %3619 = vmatprep.mubr.bf16.mxu0 %v2695
    %3620 = vmatmul.mubr.bf16.gmra.mrb[0].mxu0 %v2694
    %v3621 = vpop.f32.mrb[0].mxu0
    %v3622 = vadd.f32 0.0, %v3621
    %v3623 = vpop.f32.mrb[0].mxu0
    %v3624 = vadd.f32 0.0, %v3623
    %v3625 = vpop.f32.mrb[0].mxu0
    %v3626 = vpop.f32.mrb[0].mxu0
    %3627 = vdwg.mxu0
    %v3628 = vadd.f32 %v1546, %v3499
    %v3629 = vadd.f32 %v1547, %v3501
    %v3630 = vadd.f32 %v1548, %v3540
    %v3631 = vadd.f32 %v1549, %v3542
    %v3632 = vadd.f32 %v1550, %v3581
    %v3633 = vadd.f32 %v1551, %v3583
    %v3634 = vadd.f32 %v1552, %v3622
    %v3635 = vadd.f32 %v1553, %v3624
    %s3636 = scalar_lea.vmem [#allocation2], 5
    %v3637 = vld [vmem:[%s3636] ss:$8 sm:$0xf]
    %v3638 = vld [vmem:[%s3636] ss:$8 sm:$0xf0]
    %v3639 = vor.u32 %v3637, %v3638
    %v3641 = vlaneseq
    %v3642 = vshrl.u32 %v3641, 7
    %v3643 = vsub.s32 0, %v3642
    %v3644 = vrot.slane %v3639, %v3643
    %v3645 = vlaneseq
    %v3646 = vshrl.u32 %v3645, 7
    %v3647 = vsub.s32 1, %v3646
    %v3648 = vrot.slane %v3639, %v3647
    %v3649 = vlaneseq
    %v3650 = vshrl.u32 %v3649, 7
    %v3651 = vsub.s32 2, %v3650
    %v3652 = vrot.slane %v3639, %v3651
    %v3653 = vlaneseq
    %v3654 = vshrl.u32 %v3653, 7
    %v3655 = vsub.s32 3, %v3654
    %v3656 = vrot.slane %v3639, %v3655
    %v3657 = vlaneseq
    %v3658 = vshrl.u32 %v3657, 7
    %v3659 = vsub.s32 4, %v3658
    %v3660 = vrot.slane %v3639, %v3659
    %v3661 = vlaneseq
    %v3662 = vshrl.u32 %v3661, 7
    %v3663 = vsub.s32 5, %v3662
    %v3664 = vrot.slane %v3639, %v3663
    %v3665 = vlaneseq
    %v3666 = vshrl.u32 %v3665, 7
    %v3667 = vsub.s32 6, %v3666
    %v3668 = vrot.slane %v3639, %v3667
    %v3669 = vlaneseq
    %v3670 = vshrl.u32 %v3669, 7
    %v3671 = vsub.s32 7, %v3670
    %v3672 = vrot.slane %v3639, %v3671
    %v3681 = vadd.f32 %v3628, %v3644
    %v3682 = vadd.f32 %v3629, %v3648
    %v3683 = vadd.f32 %v3630, %v3652
    %v3684 = vadd.f32 %v3631, %v3656
    %v3685 = vadd.f32 %v3632, %v3660
    %v3686 = vadd.f32 %v3633, %v3664
    %v3687 = vadd.f32 %v3634, %v3668
    %v3688 = vadd.f32 %v3635, %v3672
    %s3689 = scalar_lea.vmem [#allocation2], 65
    %v3690 = vld [vmem:[%s3689] ss:$8 sm:$0x3]
    %v3691 = vpack.c.bf16 %v3681, %v3681
    %v3692 = vpack.c.bf16 %v3682, %v3682
    %v3693 = vpack.c.bf16 %v3683, %v3683
    %v3694 = vpack.c.bf16 %v3684, %v3684
    %v3695 = vpack.c.bf16 %v3685, %v3685
    %v3696 = vpack.c.bf16 %v3686, %v3686
    %v3697 = vpack.c.bf16 %v3687, %v3687
    %v3698 = vpack.c.bf16 %v3688, %v3688
    %v3699 = vld [vmem:[#allocation4 + $0x8] sm:$0xff]
    %v3700 = vld [vmem:[#allocation4 + $0x3c] sm:$0xff]
    %v3701 = vld [vmem:[#allocation4 + $0x70] sm:$0xff]
    %v3702 = vld [vmem:[#allocation4 + $0xa4] sm:$0xff]
    %v3703 = vld [vmem:[#allocation4 + $0xd8] sm:$0xff]
    %v3704 = vld [vmem:[#allocation4 + $0x10c] sm:$0xff]
    %v3705 = vld [vmem:[#allocation4 + $0x140] sm:$0xff]
    %v3706 = vld [vmem:[#allocation4 + $0x174] sm:$0xff]
    %v3707 = vld [vmem:[#allocation4 + $0x1a8] sm:$0xff]
    %v3708 = vld [vmem:[#allocation4 + $0x1dc] sm:$0xff]
    %v3709 = vld [vmem:[#allocation4 + $0x210] sm:$0xff]
    %v3710 = vld [vmem:[#allocation4 + $0x244] sm:$0xff]
    %v3711 = vld [vmem:[#allocation4 + $0x278] sm:$0xff]
    %v3712 = vld [vmem:[#allocation4 + $0x2ac] sm:$0xff]
    %v3713 = vld [vmem:[#allocation4 + $0x2e0] sm:$0xff]
    %v3714 = vld [vmem:[#allocation4 + $0x314] sm:$0xff]
    %v3715 = vld [vmem:[#allocation4 + $0x348] sm:$0xff]
    %v3716 = vld [vmem:[#allocation4 + $0x37c] sm:$0xff]
    %v3717 = vld [vmem:[#allocation4 + $0x3b0] sm:$0xff]
    %v3718 = vld [vmem:[#allocation4 + $0x3e4] sm:$0xff]
    %v3719 = vld [vmem:[#allocation4 + $0x418] sm:$0xff]
    %v3720 = vld [vmem:[#allocation4 + $0x44c] sm:$0xff]
    %v3721 = vld [vmem:[#allocation4 + $0x480] sm:$0xff]
    %v3722 = vld [vmem:[#allocation4 + $0x4b4] sm:$0xff]
    %v3723 = vld [vmem:[#allocation4 + $0x4e8] sm:$0xff]
    %v3724 = vld [vmem:[#allocation4 + $0x51c] sm:$0xff]
    %v3725 = vld [vmem:[#allocation4 + $0x550] sm:$0xff]
    %v3726 = vld [vmem:[#allocation4 + $0x584] sm:$0xff]
    %v3727 = vld [vmem:[#allocation4 + $0x5b8] sm:$0xff]
    %v3728 = vld [vmem:[#allocation4 + $0x5ec] sm:$0xff]
    %v3729 = vld [vmem:[#allocation4 + $0x620] sm:$0xff]
    %v3730 = vld [vmem:[#allocation4 + $0x654] sm:$0xff]
    %v3731 = vld [vmem:[#allocation4 + $0x688] sm:$0xff]
    %v3732 = vld [vmem:[#allocation4 + $0x6bc] sm:$0xff]
    %v3733 = vld [vmem:[#allocation4 + $0x6f0] sm:$0xff]
    %v3734 = vld [vmem:[#allocation4 + $0x724] sm:$0xff]
    %v3735 = vld [vmem:[#allocation4 + $0x758] sm:$0xff]
    %v3736 = vld [vmem:[#allocation4 + $0x78c] sm:$0xff]
    %v3737 = vld [vmem:[#allocation4 + $0x7c0] sm:$0xff]
    %v3738 = vld [vmem:[#allocation4 + $0x7f4] sm:$0xff]
    %v3739 = vld [vmem:[#allocation4 + $0x828] sm:$0xff]
    %v3740 = vld [vmem:[#allocation4 + $0x85c] sm:$0xff]
    %v3741 = vld [vmem:[#allocation4 + $0x890] sm:$0xff]
    %v3742 = vld [vmem:[#allocation4 + $0x8c4] sm:$0xff]
    %v3743 = vld [vmem:[#allocation4 + $0x8f8] sm:$0xff]
    %v3744 = vld [vmem:[#allocation4 + $0x92c] sm:$0xff]
    %v3745 = vld [vmem:[#allocation4 + $0x960] sm:$0xff]
    %v3746 = vld [vmem:[#allocation4 + $0x994] sm:$0xff]
    %v3747 = vld [vmem:[#allocation4 + $0x9c8] sm:$0xff]
    %v3748 = vld [vmem:[#allocation4 + $0x9fc] sm:$0xff]
    %v3749 = vld [vmem:[#allocation4 + $0xa30] sm:$0xff]
    %v3750 = vld [vmem:[#allocation4 + $0xa64] sm:$0xff]
    %v3751 = vld [vmem:[#allocation4 + $0xa98] sm:$0xff]
    %v3752 = vld [vmem:[#allocation4 + $0xacc] sm:$0xff]
    %v3753 = vld [vmem:[#allocation4 + $0xb00] sm:$0xff]
    %v3754 = vld [vmem:[#allocation4 + $0xb34] sm:$0xff]
    %v3755 = vld [vmem:[#allocation4 + $0xb68] sm:$0xff]
    %v3756 = vld [vmem:[#allocation4 + $0xb9c] sm:$0xff]
    %v3757 = vld [vmem:[#allocation4 + $0xbd0] sm:$0xff]
    %v3758 = vld [vmem:[#allocation4 + $0xc04] sm:$0xff]
    %v3759 = vld [vmem:[#allocation4 + $0xc38] sm:$0xff]
    %v3760 = vld [vmem:[#allocation4 + $0xc6c] sm:$0xff]
    %v3761 = vld [vmem:[#allocation4 + $0xca0] sm:$0xff]
    %v3762 = vld [vmem:[#allocation4 + $0xcd4] sm:$0xff]
    %v3763 = vld [vmem:[#allocation4 + $0xd08] sm:$0xff]
    %v3764 = vld [vmem:[#allocation4 + $0xd3c] sm:$0xff]
    %v3765 = vld [vmem:[#allocation4 + $0xd70] sm:$0xff]
    %v3766 = vld [vmem:[#allocation4 + $0xda4] sm:$0xff]
    %v3767 = vld [vmem:[#allocation4 + $0xdd8] sm:$0xff]
    %v3768 = vld [vmem:[#allocation4 + $0xe0c] sm:$0xff]
    %v3769 = vld [vmem:[#allocation4 + $0xe40] sm:$0xff]
    %v3770 = vld [vmem:[#allocation4 + $0xe74] sm:$0xff]
    %v3771 = vld [vmem:[#allocation4 + $0xea8] sm:$0xff]
    %v3772 = vld [vmem:[#allocation4 + $0xedc] sm:$0xff]
    %v3773 = vld [vmem:[#allocation4 + $0xf10] sm:$0xff]
    %v3774 = vld [vmem:[#allocation4 + $0xf44] sm:$0xff]
    %v3775 = vld [vmem:[#allocation4 + $0xf78] sm:$0xff]
    %v3776 = vld [vmem:[#allocation4 + $0xfac] sm:$0xff]
    %v3777 = vld [vmem:[#allocation4 + $0xfe0] sm:$0xff]
    %v3778 = vld [vmem:[#allocation4 + $0x1014] sm:$0xff]
    %v3779 = vld [vmem:[#allocation4 + $0x1048] sm:$0xff]
    %v3780 = vld [vmem:[#allocation4 + $0x107c] sm:$0xff]
    %v3781 = vld [vmem:[#allocation4 + $0x10b0] sm:$0xff]
    %v3782 = vld [vmem:[#allocation4 + $0x10e4] sm:$0xff]
    %v3783 = vld [vmem:[#allocation4 + $0x1118] sm:$0xff]
    %v3784 = vld [vmem:[#allocation4 + $0x114c] sm:$0xff]
    %v3785 = vld [vmem:[#allocation4 + $0x1180] sm:$0xff]
    %v3786 = vld [vmem:[#allocation4 + $0x11b4] sm:$0xff]
    %v3787 = vld [vmem:[#allocation4 + $0x11e8] sm:$0xff]
    %v3788 = vld [vmem:[#allocation4 + $0x121c] sm:$0xff]
    %v3789 = vld [vmem:[#allocation4 + $0x1250] sm:$0xff]
    %v3790 = vld [vmem:[#allocation4 + $0x1284] sm:$0xff]
    %v3791 = vld [vmem:[#allocation4 + $0x12b8] sm:$0xff]
    %v3792 = vld [vmem:[#allocation4 + $0x12ec] sm:$0xff]
    %v3793 = vld [vmem:[#allocation4 + $0x1320] sm:$0xff]
    %v3794 = vld [vmem:[#allocation4 + $0x1354] sm:$0xff]
    %v3795 = vld [vmem:[#allocation4 + $0x1388] sm:$0xff]
    %v3796 = vld [vmem:[#allocation4 + $0x13bc] sm:$0xff]
    %v3797 = vld [vmem:[#allocation4 + $0x13f0] sm:$0xff]
    %v3798 = vld [vmem:[#allocation4 + $0x1424] sm:$0xff]
    %v3799 = vld [vmem:[#allocation4 + $0x1458] sm:$0xff]
    %v3800 = vld [vmem:[#allocation4 + $0x148c] sm:$0xff]
    %v3801 = vld [vmem:[#allocation4 + $0x14c0] sm:$0xff]
    %v3802 = vld [vmem:[#allocation4 + $0x14f4] sm:$0xff]
    %v3803 = vld [vmem:[#allocation4 + $0x1528] sm:$0xff]
    %v3804 = vld [vmem:[#allocation4 + $0x155c] sm:$0xff]
    %v3805 = vld [vmem:[#allocation4 + $0x1590] sm:$0xff]
    %v3806 = vld [vmem:[#allocation4 + $0x15c4] sm:$0xff]
    %v3807 = vld [vmem:[#allocation4 + $0x15f8] sm:$0xff]
    %v3808 = vld [vmem:[#allocation4 + $0x162c] sm:$0xff]
    %v3809 = vld [vmem:[#allocation4 + $0x1660] sm:$0xff]
    %v3810 = vld [vmem:[#allocation4 + $0x1694] sm:$0xff]
    %v3811 = vld [vmem:[#allocation4 + $0x16c8] sm:$0xff]
    %v3812 = vld [vmem:[#allocation4 + $0x16fc] sm:$0xff]
    %v3813 = vld [vmem:[#allocation4 + $0x1730] sm:$0xff]
    %v3814 = vld [vmem:[#allocation4 + $0x1764] sm:$0xff]
    %v3815 = vld [vmem:[#allocation4 + $0x1798] sm:$0xff]
    %v3816 = vld [vmem:[#allocation4 + $0x17cc] sm:$0xff]
    %v3817 = vld [vmem:[#allocation4 + $0x1800] sm:$0xff]
    %v3818 = vld [vmem:[#allocation4 + $0x1834] sm:$0xff]
    %v3819 = vld [vmem:[#allocation4 + $0x1868] sm:$0xff]
    %v3820 = vld [vmem:[#allocation4 + $0x189c] sm:$0xff]
    %v3821 = vld [vmem:[#allocation4 + $0x18d0] sm:$0xff]
    %v3822 = vld [vmem:[#allocation4 + $0x1904] sm:$0xff]
    %v3823 = vld [vmem:[#allocation4 + $0x1938] sm:$0xff]
    %v3824 = vld [vmem:[#allocation4 + $0x196c] sm:$0xff]
    %v3825 = vld [vmem:[#allocation4 + $0x19a0] sm:$0xff]
    %v3826 = vld [vmem:[#allocation4 + $0x19d4] sm:$0xff]
    %v3955 = vunpack.c.l.b16 %v3699
    %v3956 = vunpack.c.h.b16 %v3699
    %v3957 = vunpack.c.l.b16 %v3700
    %v3958 = vunpack.c.h.b16 %v3700
    %v3959 = vunpack.c.l.b16 %v3701
    %v3960 = vunpack.c.h.b16 %v3701
    %v3961 = vunpack.c.l.b16 %v3702
    %v3962 = vunpack.c.h.b16 %v3702
    %v3963 = vunpack.c.l.b16 %v3703
    %v3964 = vunpack.c.h.b16 %v3703
    %v3965 = vunpack.c.l.b16 %v3704
    %v3966 = vunpack.c.h.b16 %v3704
    %v3967 = vunpack.c.l.b16 %v3705
    %v3968 = vunpack.c.h.b16 %v3705
    %v3969 = vunpack.c.l.b16 %v3706
    %v3970 = vunpack.c.h.b16 %v3706
    %v3971 = vunpack.c.l.b16 %v3707
    %v3972 = vunpack.c.h.b16 %v3707
    %v3973 = vunpack.c.l.b16 %v3708
    %v3974 = vunpack.c.h.b16 %v3708
    %v3975 = vunpack.c.l.b16 %v3709
    %v3976 = vunpack.c.h.b16 %v3709
    %v3977 = vunpack.c.l.b16 %v3710
    %v3978 = vunpack.c.h.b16 %v3710
    %v3979 = vunpack.c.l.b16 %v3711
    %v3980 = vunpack.c.h.b16 %v3711
    %v3981 = vunpack.c.l.b16 %v3712
    %v3982 = vunpack.c.h.b16 %v3712
    %v3983 = vunpack.c.l.b16 %v3713
    %v3984 = vunpack.c.h.b16 %v3713
    %v3985 = vunpack.c.l.b16 %v3714
    %v3986 = vunpack.c.h.b16 %v3714
    %v3987 = vunpack.c.l.b16 %v3715
    %v3988 = vunpack.c.h.b16 %v3715
    %v3989 = vunpack.c.l.b16 %v3716
    %v3990 = vunpack.c.h.b16 %v3716
    %v3991 = vunpack.c.l.b16 %v3717
    %v3992 = vunpack.c.h.b16 %v3717
    %v3993 = vunpack.c.l.b16 %v3718
    %v3994 = vunpack.c.h.b16 %v3718
    %v3995 = vunpack.c.l.b16 %v3719
    %v3996 = vunpack.c.h.b16 %v3719
    %v3997 = vunpack.c.l.b16 %v3720
    %v3998 = vunpack.c.h.b16 %v3720
    %v3999 = vunpack.c.l.b16 %v3721
    %v4000 = vunpack.c.h.b16 %v3721
    %v4001 = vunpack.c.l.b16 %v3722
    %v4002 = vunpack.c.h.b16 %v3722
    %v4003 = vunpack.c.l.b16 %v3723
    %v4004 = vunpack.c.h.b16 %v3723
    %v4005 = vunpack.c.l.b16 %v3724
    %v4006 = vunpack.c.h.b16 %v3724
    %v4007 = vunpack.c.l.b16 %v3725
    %v4008 = vunpack.c.h.b16 %v3725
    %v4009 = vunpack.c.l.b16 %v3726
    %v4010 = vunpack.c.h.b16 %v3726
    %v4011 = vunpack.c.l.b16 %v3727
    %v4012 = vunpack.c.h.b16 %v3727
    %v4013 = vunpack.c.l.b16 %v3728
    %v4014 = vunpack.c.h.b16 %v3728
    %v4015 = vunpack.c.l.b16 %v3729
    %v4016 = vunpack.c.h.b16 %v3729
    %v4017 = vunpack.c.l.b16 %v3730
    %v4018 = vunpack.c.h.b16 %v3730
    %v4019 = vunpack.c.l.b16 %v3731
    %v4020 = vunpack.c.h.b16 %v3731
    %v4021 = vunpack.c.l.b16 %v3732
    %v4022 = vunpack.c.h.b16 %v3732
    %v4023 = vunpack.c.l.b16 %v3733
    %v4024 = vunpack.c.h.b16 %v3733
    %v4025 = vunpack.c.l.b16 %v3734
    %v4026 = vunpack.c.h.b16 %v3734
    %v4027 = vunpack.c.l.b16 %v3735
    %v4028 = vunpack.c.h.b16 %v3735
    %v4029 = vunpack.c.l.b16 %v3736
    %v4030 = vunpack.c.h.b16 %v3736
    %v4031 = vunpack.c.l.b16 %v3737
    %v4032 = vunpack.c.h.b16 %v3737
    %v4033 = vunpack.c.l.b16 %v3738
    %v4034 = vunpack.c.h.b16 %v3738
    %v4035 = vunpack.c.l.b16 %v3739
    %v4036 = vunpack.c.h.b16 %v3739
    %v4037 = vunpack.c.l.b16 %v3740
    %v4038 = vunpack.c.h.b16 %v3740
    %v4039 = vunpack.c.l.b16 %v3741
    %v4040 = vunpack.c.h.b16 %v3741
    %v4041 = vunpack.c.l.b16 %v3742
    %v4042 = vunpack.c.h.b16 %v3742
    %v4043 = vunpack.c.l.b16 %v3743
    %v4044 = vunpack.c.h.b16 %v3743
    %v4045 = vunpack.c.l.b16 %v3744
    %v4046 = vunpack.c.h.b16 %v3744
    %v4047 = vunpack.c.l.b16 %v3745
    %v4048 = vunpack.c.h.b16 %v3745
    %v4049 = vunpack.c.l.b16 %v3746
    %v4050 = vunpack.c.h.b16 %v3746
    %v4051 = vunpack.c.l.b16 %v3747
    %v4052 = vunpack.c.h.b16 %v3747
    %v4053 = vunpack.c.l.b16 %v3748
    %v4054 = vunpack.c.h.b16 %v3748
    %v4055 = vunpack.c.l.b16 %v3749
    %v4056 = vunpack.c.h.b16 %v3749
    %v4057 = vunpack.c.l.b16 %v3750
    %v4058 = vunpack.c.h.b16 %v3750
    %v4059 = vunpack.c.l.b16 %v3751
    %v4060 = vunpack.c.h.b16 %v3751
    %v4061 = vunpack.c.l.b16 %v3752
    %v4062 = vunpack.c.h.b16 %v3752
    %v4063 = vunpack.c.l.b16 %v3753
    %v4064 = vunpack.c.h.b16 %v3753
    %v4065 = vunpack.c.l.b16 %v3754
    %v4066 = vunpack.c.h.b16 %v3754
    %v4067 = vunpack.c.l.b16 %v3755
    %v4068 = vunpack.c.h.b16 %v3755
    %v4069 = vunpack.c.l.b16 %v3756
    %v4070 = vunpack.c.h.b16 %v3756
    %v4071 = vunpack.c.l.b16 %v3757
    %v4072 = vunpack.c.h.b16 %v3757
    %v4073 = vunpack.c.l.b16 %v3758
    %v4074 = vunpack.c.h.b16 %v3758
    %v4075 = vunpack.c.l.b16 %v3759
    %v4076 = vunpack.c.h.b16 %v3759
    %v4077 = vunpack.c.l.b16 %v3760
    %v4078 = vunpack.c.h.b16 %v3760
    %v4079 = vunpack.c.l.b16 %v3761
    %v4080 = vunpack.c.h.b16 %v3761
    %v4081 = vunpack.c.l.b16 %v3762
    %v4082 = vunpack.c.h.b16 %v3762
    %v4083 = vunpack.c.l.b16 %v3763
    %v4084 = vunpack.c.h.b16 %v3763
    %v4085 = vunpack.c.l.b16 %v3764
    %v4086 = vunpack.c.h.b16 %v3764
    %v4087 = vunpack.c.l.b16 %v3765
    %v4088 = vunpack.c.h.b16 %v3765
    %v4089 = vunpack.c.l.b16 %v3766
    %v4090 = vunpack.c.h.b16 %v3766
    %v4091 = vunpack.c.l.b16 %v3767
    %v4092 = vunpack.c.h.b16 %v3767
    %v4093 = vunpack.c.l.b16 %v3768
    %v4094 = vunpack.c.h.b16 %v3768
    %v4095 = vunpack.c.l.b16 %v3769
    %v4096 = vunpack.c.h.b16 %v3769
    %v4097 = vunpack.c.l.b16 %v3770
    %v4098 = vunpack.c.h.b16 %v3770
    %v4099 = vunpack.c.l.b16 %v3771
    %v4100 = vunpack.c.h.b16 %v3771
    %v4101 = vunpack.c.l.b16 %v3772
    %v4102 = vunpack.c.h.b16 %v3772
    %v4103 = vunpack.c.l.b16 %v3773
    %v4104 = vunpack.c.h.b16 %v3773
    %v4105 = vunpack.c.l.b16 %v3774
    %v4106 = vunpack.c.h.b16 %v3774
    %v4107 = vunpack.c.l.b16 %v3775
    %v4108 = vunpack.c.h.b16 %v3775
    %v4109 = vunpack.c.l.b16 %v3776
    %v4110 = vunpack.c.h.b16 %v3776
    %v4111 = vunpack.c.l.b16 %v3777
    %v4112 = vunpack.c.h.b16 %v3777
    %v4113 = vunpack.c.l.b16 %v3778
    %v4114 = vunpack.c.h.b16 %v3778
    %v4115 = vunpack.c.l.b16 %v3779
    %v4116 = vunpack.c.h.b16 %v3779
    %v4117 = vunpack.c.l.b16 %v3780
    %v4118 = vunpack.c.h.b16 %v3780
    %v4119 = vunpack.c.l.b16 %v3781
    %v4120 = vunpack.c.h.b16 %v3781
    %v4121 = vunpack.c.l.b16 %v3782
    %v4122 = vunpack.c.h.b16 %v3782
    %v4123 = vunpack.c.l.b16 %v3783
    %v4124 = vunpack.c.h.b16 %v3783
    %v4125 = vunpack.c.l.b16 %v3784
    %v4126 = vunpack.c.h.b16 %v3784
    %v4127 = vunpack.c.l.b16 %v3785
    %v4128 = vunpack.c.h.b16 %v3785
    %v4129 = vunpack.c.l.b16 %v3786
    %v4130 = vunpack.c.h.b16 %v3786
    %v4131 = vunpack.c.l.b16 %v3787
    %v4132 = vunpack.c.h.b16 %v3787
    %v4133 = vunpack.c.l.b16 %v3788
    %v4134 = vunpack.c.h.b16 %v3788
    %v4135 = vunpack.c.l.b16 %v3789
    %v4136 = vunpack.c.h.b16 %v3789
    %v4137 = vunpack.c.l.b16 %v3790
    %v4138 = vunpack.c.h.b16 %v3790
    %v4139 = vunpack.c.l.b16 %v3791
    %v4140 = vunpack.c.h.b16 %v3791
    %v4141 = vunpack.c.l.b16 %v3792
    %v4142 = vunpack.c.h.b16 %v3792
    %v4143 = vunpack.c.l.b16 %v3793
    %v4144 = vunpack.c.h.b16 %v3793
    %v4145 = vunpack.c.l.b16 %v3794
    %v4146 = vunpack.c.h.b16 %v3794
    %v4147 = vunpack.c.l.b16 %v3795
    %v4148 = vunpack.c.h.b16 %v3795
    %v4149 = vunpack.c.l.b16 %v3796
    %v4150 = vunpack.c.h.b16 %v3796
    %v4151 = vunpack.c.l.b16 %v3797
    %v4152 = vunpack.c.h.b16 %v3797
    %v4153 = vunpack.c.l.b16 %v3798
    %v4154 = vunpack.c.h.b16 %v3798
    %v4155 = vunpack.c.l.b16 %v3799
    %v4156 = vunpack.c.h.b16 %v3799
    %v4157 = vunpack.c.l.b16 %v3800
    %v4158 = vunpack.c.h.b16 %v3800
    %v4159 = vunpack.c.l.b16 %v3801
    %v4160 = vunpack.c.h.b16 %v3801
    %v4161 = vunpack.c.l.b16 %v3802
    %v4162 = vunpack.c.h.b16 %v3802
    %v4163 = vunpack.c.l.b16 %v3803
    %v4164 = vunpack.c.h.b16 %v3803
    %v4165 = vunpack.c.l.b16 %v3804
    %v4166 = vunpack.c.h.b16 %v3804
    %v4167 = vunpack.c.l.b16 %v3805
    %v4168 = vunpack.c.h.b16 %v3805
    %v4169 = vunpack.c.l.b16 %v3806
    %v4170 = vunpack.c.h.b16 %v3806
    %v4171 = vunpack.c.l.b16 %v3807
    %v4172 = vunpack.c.h.b16 %v3807
    %v4173 = vunpack.c.l.b16 %v3808
    %v4174 = vunpack.c.h.b16 %v3808
    %v4175 = vunpack.c.l.b16 %v3809
    %v4176 = vunpack.c.h.b16 %v3809
    %v4177 = vunpack.c.l.b16 %v3810
    %v4178 = vunpack.c.h.b16 %v3810
    %v4179 = vunpack.c.l.b16 %v3811
    %v4180 = vunpack.c.h.b16 %v3811
    %v4181 = vunpack.c.l.b16 %v3812
    %v4182 = vunpack.c.h.b16 %v3812
    %v4183 = vunpack.c.l.b16 %v3813
    %v4184 = vunpack.c.h.b16 %v3813
    %v4185 = vunpack.c.l.b16 %v3814
    %v4186 = vunpack.c.h.b16 %v3814
    %v4187 = vunpack.c.l.b16 %v3815
    %v4188 = vunpack.c.h.b16 %v3815
    %v4189 = vunpack.c.l.b16 %v3816
    %v4190 = vunpack.c.h.b16 %v3816
    %v4191 = vunpack.c.l.b16 %v3817
    %v4192 = vunpack.c.h.b16 %v3817
    %v4193 = vunpack.c.l.b16 %v3818
    %v4194 = vunpack.c.h.b16 %v3818
    %v4195 = vunpack.c.l.b16 %v3819
    %v4196 = vunpack.c.h.b16 %v3819
    %v4197 = vunpack.c.l.b16 %v3820
    %v4198 = vunpack.c.h.b16 %v3820
    %v4199 = vunpack.c.l.b16 %v3821
    %v4200 = vunpack.c.h.b16 %v3821
    %v4201 = vunpack.c.l.b16 %v3822
    %v4202 = vunpack.c.h.b16 %v3822
    %v4203 = vunpack.c.l.b16 %v3823
    %v4204 = vunpack.c.h.b16 %v3823
    %v4205 = vunpack.c.l.b16 %v3824
    %v4206 = vunpack.c.h.b16 %v3824
    %v4207 = vunpack.c.l.b16 %v3825
    %v4208 = vunpack.c.h.b16 %v3825
    %v4209 = vunpack.c.l.b16 %v3826
    %v4210 = vunpack.c.h.b16 %v3826
    %v4211 = vpack.c.b16 %v3957, %v3955
    %v4212 = vpack.c.b16 %v3958, %v3956
    %v4213 = vpack.c.b16 %v3961, %v3959
    %v4214 = vpack.c.b16 %v3962, %v3960
    %v4215 = vpack.c.b16 %v3965, %v3963
    %v4216 = vpack.c.b16 %v3966, %v3964
    %v4217 = vpack.c.b16 %v3969, %v3967
    %v4218 = vpack.c.b16 %v3970, %v3968
    %v4219 = vpack.c.b16 %v3973, %v3971
    %v4220 = vpack.c.b16 %v3974, %v3972
    %v4221 = vpack.c.b16 %v3977, %v3975
    %v4222 = vpack.c.b16 %v3978, %v3976
    %v4223 = vpack.c.b16 %v3981, %v3979
    %v4224 = vpack.c.b16 %v3982, %v3980
    %v4225 = vpack.c.b16 %v3985, %v3983
    %v4226 = vpack.c.b16 %v3986, %v3984
    %v4227 = vpack.c.b16 %v3989, %v3987
    %v4228 = vpack.c.b16 %v3990, %v3988
    %v4229 = vpack.c.b16 %v3993, %v3991
    %v4230 = vpack.c.b16 %v3994, %v3992
    %v4231 = vpack.c.b16 %v3997, %v3995
    %v4232 = vpack.c.b16 %v3998, %v3996
    %v4233 = vpack.c.b16 %v4001, %v3999
    %v4234 = vpack.c.b16 %v4002, %v4000
    %v4235 = vpack.c.b16 %v4005, %v4003
    %v4236 = vpack.c.b16 %v4006, %v4004
    %v4237 = vpack.c.b16 %v4009, %v4007
    %v4238 = vpack.c.b16 %v4010, %v4008
    %v4239 = vpack.c.b16 %v4013, %v4011
    %v4240 = vpack.c.b16 %v4014, %v4012
    %v4241 = vpack.c.b16 %v4017, %v4015
    %v4242 = vpack.c.b16 %v4018, %v4016
    %v4243 = vpack.c.b16 %v4021, %v4019
    %v4244 = vpack.c.b16 %v4022, %v4020
    %v4245 = vpack.c.b16 %v4025, %v4023
    %v4246 = vpack.c.b16 %v4026, %v4024
    %v4247 = vpack.c.b16 %v4029, %v4027
    %v4248 = vpack.c.b16 %v4030, %v4028
    %v4249 = vpack.c.b16 %v4033, %v4031
    %v4250 = vpack.c.b16 %v4034, %v4032
    %v4251 = vpack.c.b16 %v4037, %v4035
    %v4252 = vpack.c.b16 %v4038, %v4036
    %v4253 = vpack.c.b16 %v4041, %v4039
    %v4254 = vpack.c.b16 %v4042, %v4040
    %v4255 = vpack.c.b16 %v4045, %v4043
    %v4256 = vpack.c.b16 %v4046, %v4044
    %v4257 = vpack.c.b16 %v4049, %v4047
    %v4258 = vpack.c.b16 %v4050, %v4048
    %v4259 = vpack.c.b16 %v4053, %v4051
    %v4260 = vpack.c.b16 %v4054, %v4052
    %v4261 = vpack.c.b16 %v4057, %v4055
    %v4262 = vpack.c.b16 %v4058, %v4056
    %v4263 = vpack.c.b16 %v4061, %v4059
    %v4264 = vpack.c.b16 %v4062, %v4060
    %v4265 = vpack.c.b16 %v4065, %v4063
    %v4266 = vpack.c.b16 %v4066, %v4064
    %v4267 = vpack.c.b16 %v4069, %v4067
    %v4268 = vpack.c.b16 %v4070, %v4068
    %v4269 = vpack.c.b16 %v4073, %v4071
    %v4270 = vpack.c.b16 %v4074, %v4072
    %v4271 = vpack.c.b16 %v4077, %v4075
    %v4272 = vpack.c.b16 %v4078, %v4076
    %v4273 = vpack.c.b16 %v4081, %v4079
    %v4274 = vpack.c.b16 %v4082, %v4080
    %v4275 = vpack.c.b16 %v4085, %v4083
    %v4276 = vpack.c.b16 %v4086, %v4084
    %v4277 = vpack.c.b16 %v4089, %v4087
    %v4278 = vpack.c.b16 %v4090, %v4088
    %v4279 = vpack.c.b16 %v4093, %v4091
    %v4280 = vpack.c.b16 %v4094, %v4092
    %v4281 = vpack.c.b16 %v4097, %v4095
    %v4282 = vpack.c.b16 %v4098, %v4096
    %v4283 = vpack.c.b16 %v4101, %v4099
    %v4284 = vpack.c.b16 %v4102, %v4100
    %v4285 = vpack.c.b16 %v4105, %v4103
    %v4286 = vpack.c.b16 %v4106, %v4104
    %v4287 = vpack.c.b16 %v4109, %v4107
    %v4288 = vpack.c.b16 %v4110, %v4108
    %v4289 = vpack.c.b16 %v4113, %v4111
    %v4290 = vpack.c.b16 %v4114, %v4112
    %v4291 = vpack.c.b16 %v4117, %v4115
    %v4292 = vpack.c.b16 %v4118, %v4116
    %v4293 = vpack.c.b16 %v4121, %v4119
    %v4294 = vpack.c.b16 %v4122, %v4120
    %v4295 = vpack.c.b16 %v4125, %v4123
    %v4296 = vpack.c.b16 %v4126, %v4124
    %v4297 = vpack.c.b16 %v4129, %v4127
    %v4298 = vpack.c.b16 %v4130, %v4128
    %v4299 = vpack.c.b16 %v4133, %v4131
    %v4300 = vpack.c.b16 %v4134, %v4132
    %v4301 = vpack.c.b16 %v4137, %v4135
    %v4302 = vpack.c.b16 %v4138, %v4136
    %v4303 = vpack.c.b16 %v4141, %v4139
    %v4304 = vpack.c.b16 %v4142, %v4140
    %v4305 = vpack.c.b16 %v4145, %v4143
    %v4306 = vpack.c.b16 %v4146, %v4144
    %v4307 = vpack.c.b16 %v4149, %v4147
    %v4308 = vpack.c.b16 %v4150, %v4148
    %v4309 = vpack.c.b16 %v4153, %v4151
    %v4310 = vpack.c.b16 %v4154, %v4152
    %v4311 = vpack.c.b16 %v4157, %v4155
    %v4312 = vpack.c.b16 %v4158, %v4156
    %v4313 = vpack.c.b16 %v4161, %v4159
    %v4314 = vpack.c.b16 %v4162, %v4160
    %v4315 = vpack.c.b16 %v4165, %v4163
    %v4316 = vpack.c.b16 %v4166, %v4164
    %v4317 = vpack.c.b16 %v4169, %v4167
    %v4318 = vpack.c.b16 %v4170, %v4168
    %v4319 = vpack.c.b16 %v4173, %v4171
    %v4320 = vpack.c.b16 %v4174, %v4172
    %v4321 = vpack.c.b16 %v4177, %v4175
    %v4322 = vpack.c.b16 %v4178, %v4176
    %v4323 = vpack.c.b16 %v4181, %v4179
    %v4324 = vpack.c.b16 %v4182, %v4180
    %v4325 = vpack.c.b16 %v4185, %v4183
    %v4326 = vpack.c.b16 %v4186, %v4184
    %v4327 = vpack.c.b16 %v4189, %v4187
    %v4328 = vpack.c.b16 %v4190, %v4188
    %v4329 = vpack.c.b16 %v4193, %v4191
    %v4330 = vpack.c.b16 %v4194, %v4192
    %v4331 = vpack.c.b16 %v4197, %v4195
    %v4332 = vpack.c.b16 %v4198, %v4196
    %v4333 = vpack.c.b16 %v4201, %v4199
    %v4334 = vpack.c.b16 %v4202, %v4200
    %v4335 = vpack.c.b16 %v4205, %v4203
    %v4336 = vpack.c.b16 %v4206, %v4204
    %v4337 = vpack.c.b16 %v4209, %v4207
    %v4338 = vpack.c.b16 %v4210, %v4208
    %4467 = vmatprep.subr.bf16.mxu0 %v4212
    %4468 = vmatpush1.bf16.msra.mxu0 %v4211
    %4469 = vmatprep.subr.bf16.mxu0 %v4214
    %4470 = vmatpush1.bf16.msra.mxu0 %v4213
    %4471 = vmatprep.subr.bf16.mxu0 %v4216
    %4472 = vmatpush1.bf16.msra.mxu0 %v4215
    %4473 = vmatprep.subr.bf16.mxu0 %v4218
    %4474 = vmatpush1.bf16.msra.mxu0 %v4217
    %4475 = vmatprep.subr.bf16.mxu0 %v4220
    %4476 = vmatpush1.bf16.msra.mxu0 %v4219
    %4477 = vmatprep.subr.bf16.mxu0 %v4222
    %4478 = vmatpush1.bf16.msra.mxu0 %v4221
    %4479 = vmatprep.subr.bf16.mxu0 %v4224
    %4480 = vmatpush1.bf16.msra.mxu0 %v4223
    %4481 = vmatprep.subr.bf16.mxu0 %v4226
    %4482 = vmatpush1.bf16.msra.mxu0 %v4225
    %4483 = vmatprep.subr.bf16.mxu0 %v4228
    %4484 = vmatpush1.bf16.msra.mxu0 %v4227
    %4485 = vmatprep.subr.bf16.mxu0 %v4230
    %4486 = vmatpush1.bf16.msra.mxu0 %v4229
    %4487 = vmatprep.subr.bf16.mxu0 %v4232
    %4488 = vmatpush1.bf16.msra.mxu0 %v4231
    %4489 = vmatprep.subr.bf16.mxu0 %v4234
    %4490 = vmatpush1.bf16.msra.mxu0 %v4233
    %4491 = vmatprep.subr.bf16.mxu0 %v4236
    %4492 = vmatpush1.bf16.msra.mxu0 %v4235
    %4493 = vmatprep.subr.bf16.mxu0 %v4238
    %4494 = vmatpush1.bf16.msra.mxu0 %v4237
    %4495 = vmatprep.subr.bf16.mxu0 %v4240
    %4496 = vmatpush1.bf16.msra.mxu0 %v4239
    %4497 = vmatprep.subr.bf16.mxu0 %v4242
    %4498 = vmatpush1.bf16.msra.mxu0 %v4241
    %4499 = vmatprep.mubr.bf16.mxu0 %v3692
    %4500 = vmatmul.mubr.bf16.gmra.mrb[0].mxu0 %v3691
    %v4501 = vpop.f32.mrb[0].mxu0
    %v4502 = vadd.f32 0.0, %v4501
    %v4503 = vpop.f32.mrb[0].mxu0
    %v4504 = vadd.f32 0.0, %v4503
    %v4505 = vpop.f32.mrb[0].mxu0
    %v4506 = vpop.f32.mrb[0].mxu0
    %4507 = vdwg.mxu0
    %4508 = vmatprep.subr.bf16.mxu0 %v4244
    %4509 = vmatpush1.bf16.msra.mxu0 %v4243
    %4510 = vmatprep.subr.bf16.mxu0 %v4246
    %4511 = vmatpush1.bf16.msra.mxu0 %v4245
    %4512 = vmatprep.subr.bf16.mxu0 %v4248
    %4513 = vmatpush1.bf16.msra.mxu0 %v4247
    %4514 = vmatprep.subr.bf16.mxu0 %v4250
    %4515 = vmatpush1.bf16.msra.mxu0 %v4249
    %4516 = vmatprep.subr.bf16.mxu0 %v4252
    %4517 = vmatpush1.bf16.msra.mxu0 %v4251
    %4518 = vmatprep.subr.bf16.mxu0 %v4254
    %4519 = vmatpush1.bf16.msra.mxu0 %v4253
    %4520 = vmatprep.subr.bf16.mxu0 %v4256
    %4521 = vmatpush1.bf16.msra.mxu0 %v4255
    %4522 = vmatprep.subr.bf16.mxu0 %v4258
    %4523 = vmatpush1.bf16.msra.mxu0 %v4257
    %4524 = vmatprep.subr.bf16.mxu0 %v4260
    %4525 = vmatpush1.bf16.msra.mxu0 %v4259
    %4526 = vmatprep.subr.bf16.mxu0 %v4262
    %4527 = vmatpush1.bf16.msra.mxu0 %v4261
    %4528 = vmatprep.subr.bf16.mxu0 %v4264
    %4529 = vmatpush1.bf16.msra.mxu0 %v4263
    %4530 = vmatprep.subr.bf16.mxu0 %v4266
    %4531 = vmatpush1.bf16.msra.mxu0 %v4265
    %4532 = vmatprep.subr.bf16.mxu0 %v4268
    %4533 = vmatpush1.bf16.msra.mxu0 %v4267
    %4534 = vmatprep.subr.bf16.mxu0 %v4270
    %4535 = vmatpush1.bf16.msra.mxu0 %v4269
    %4536 = vmatprep.subr.bf16.mxu0 %v4272
    %4537 = vmatpush1.bf16.msra.mxu0 %v4271
    %4538 = vmatprep.subr.bf16.mxu0 %v4274
    %4539 = vmatpush1.bf16.msra.mxu0 %v4273
    %4540 = vmatprep.mubr.bf16.mxu0 %v3694
    %4541 = vmatmul.mubr.bf16.gmra.mrb[0].mxu0 %v3693
    %v4542 = vpop.f32.mrb[0].mxu0
    %v4543 = vadd.f32 %v4502, %v4542
    %v4544 = vpop.f32.mrb[0].mxu0
    %v4545 = vadd.f32 %v4504, %v4544
    %v4546 = vpop.f32.mrb[0].mxu0
    %v4547 = vpop.f32.mrb[0].mxu0
    %4548 = vdwg.mxu0
    %4549 = vmatprep.subr.bf16.mxu0 %v4276
    %4550 = vmatpush1.bf16.msra.mxu0 %v4275
    %4551 = vmatprep.subr.bf16.mxu0 %v4278
    %4552 = vmatpush1.bf16.msra.mxu0 %v4277
    %4553 = vmatprep.subr.bf16.mxu0 %v4280
    %4554 = vmatpush1.bf16.msra.mxu0 %v4279
    %4555 = vmatprep.subr.bf16.mxu0 %v4282
    %4556 = vmatpush1.bf16.msra.mxu0 %v4281
    %4557 = vmatprep.subr.bf16.mxu0 %v4284
    %4558 = vmatpush1.bf16.msra.mxu0 %v4283
    %4559 = vmatprep.subr.bf16.mxu0 %v4286
    %4560 = vmatpush1.bf16.msra.mxu0 %v4285
    %4561 = vmatprep.subr.bf16.mxu0 %v4288
    %4562 = vmatpush1.bf16.msra.mxu0 %v4287
    %4563 = vmatprep.subr.bf16.mxu0 %v4290
    %4564 = vmatpush1.bf16.msra.mxu0 %v4289
    %4565 = vmatprep.subr.bf16.mxu0 %v4292
    %4566 = vmatpush1.bf16.msra.mxu0 %v4291
    %4567 = vmatprep.subr.bf16.mxu0 %v4294
    %4568 = vmatpush1.bf16.msra.mxu0 %v4293
    %4569 = vmatprep.subr.bf16.mxu0 %v4296
    %4570 = vmatpush1.bf16.msra.mxu0 %v4295
    %4571 = vmatprep.subr.bf16.mxu0 %v4298
    %4572 = vmatpush1.bf16.msra.mxu0 %v4297
    %4573 = vmatprep.subr.bf16.mxu0 %v4300
    %4574 = vmatpush1.bf16.msra.mxu0 %v4299
    %4575 = vmatprep.subr.bf16.mxu0 %v4302
    %4576 = vmatpush1.bf16.msra.mxu0 %v4301
    %4577 = vmatprep.subr.bf16.mxu0 %v4304
    %4578 = vmatpush1.bf16.msra.mxu0 %v4303
    %4579 = vmatprep.subr.bf16.mxu0 %v4306
    %4580 = vmatpush1.bf16.msra.mxu0 %v4305
    %4581 = vmatprep.mubr.bf16.mxu0 %v3696
    %4582 = vmatmul.mubr.bf16.gmra.mrb[0].mxu0 %v3695
    %v4583 = vpop.f32.mrb[0].mxu0
    %v4584 = vadd.f32 %v4543, %v4583
    %v4585 = vpop.f32.mrb[0].mxu0
    %v4586 = vadd.f32 %v4545, %v4585
    %v4587 = vpop.f32.mrb[0].mxu0
    %v4588 = vpop.f32.mrb[0].mxu0
    %4589 = vdwg.mxu0
    %4590 = vmatprep.subr.bf16.mxu0 %v4308
    %4591 = vmatpush1.bf16.msra.mxu0 %v4307
    %4592 = vmatprep.subr.bf16.mxu0 %v4310
    %4593 = vmatpush1.bf16.msra.mxu0 %v4309
    %4594 = vmatprep.subr.bf16.mxu0 %v4312
    %4595 = vmatpush1.bf16.msra.mxu0 %v4311
    %4596 = vmatprep.subr.bf16.mxu0 %v4314
    %4597 = vmatpush1.bf16.msra.mxu0 %v4313
    %4598 = vmatprep.subr.bf16.mxu0 %v4316
    %4599 = vmatpush1.bf16.msra.mxu0 %v4315
    %4600 = vmatprep.subr.bf16.mxu0 %v4318
    %4601 = vmatpush1.bf16.msra.mxu0 %v4317
    %4602 = vmatprep.subr.bf16.mxu0 %v4320
    %4603 = vmatpush1.bf16.msra.mxu0 %v4319
    %4604 = vmatprep.subr.bf16.mxu0 %v4322
    %4605 = vmatpush1.bf16.msra.mxu0 %v4321
    %4606 = vmatprep.subr.bf16.mxu0 %v4324
    %4607 = vmatpush1.bf16.msra.mxu0 %v4323
    %4608 = vmatprep.subr.bf16.mxu0 %v4326
    %4609 = vmatpush1.bf16.msra.mxu0 %v4325
    %4610 = vmatprep.subr.bf16.mxu0 %v4328
    %4611 = vmatpush1.bf16.msra.mxu0 %v4327
    %4612 = vmatprep.subr.bf16.mxu0 %v4330
    %4613 = vmatpush1.bf16.msra.mxu0 %v4329
    %4614 = vmatprep.subr.bf16.mxu0 %v4332
    %4615 = vmatpush1.bf16.msra.mxu0 %v4331
    %4616 = vmatprep.subr.bf16.mxu0 %v4334
    %4617 = vmatpush1.bf16.msra.mxu0 %v4333
    %4618 = vmatprep.subr.bf16.mxu0 %v4336
    %4619 = vmatpush1.bf16.msra.mxu0 %v4335
    %4620 = vmatprep.subr.bf16.mxu0 %v4338
    %4621 = vmatpush1.bf16.msra.mxu0 %v4337
    %4622 = vmatprep.mubr.bf16.mxu0 %v3698
    %4623 = vmatmul.mubr.bf16.gmra.mrb[0].mxu0 %v3697
    %v4624 = vpop.f32.mrb[0].mxu0
    %v4625 = vadd.f32 %v4584, %v4624
    %v4626 = vpop.f32.mrb[0].mxu0
    %v4627 = vadd.f32 %v4586, %v4626
    %v4628 = vpop.f32.mrb[0].mxu0
    %v4629 = vpop.f32.mrb[0].mxu0
    %4630 = vdwg.mxu0
    %v4632 = vlaneseq
    %v4633 = vshrl.u32 %v4632, 7
    %v4634 = vsub.s32 0, %v4633
    %v4635 = vrot.slane %v3690, %v4634
    %v4636 = vlaneseq
    %v4637 = vshrl.u32 %v4636, 7
    %v4638 = vsub.s32 1, %v4637
    %v4639 = vrot.slane %v3690, %v4638
    %v4642 = vadd.f32 %v4635, %v4625
    %v4643 = vadd.f32 %v4639, %v4627
    %v4646 = vcombine.low %v4642, %v4643
    %v4648 = vunpack.c.l.s4 1983009808
    %v4649 = vunpack.c.0.s8 %v4648
    %v4650 = vlaneseq
    %v4651 = vshrl.u32 %v4650, 7
    %v4652 = vsub.s32 %v4649, %v4651
    %v4653 = vrot.slane %v4646, %v4652
    %4655 = vst [vmem:[%s5] sm:$0xf] %v4653
    %v4656 = vpack.c.bf16 %v899, %v899
    %v4657 = vld [vmem:[#allocation6] sm:$0xff]
    %v4658 = vld [vmem:[#allocation6 + $0x8] sm:$0xff]
    %v4659 = vld [vmem:[#allocation6 + $0x10] sm:$0xff]
    %v4660 = vld [vmem:[#allocation6 + $0x18] sm:$0xff]
    %v4661 = vld [vmem:[#allocation6 + $0x40] sm:$0xff]
    %v4662 = vld [vmem:[#allocation6 + $0x48] sm:$0xff]
    %v4663 = vld [vmem:[#allocation6 + $0x50] sm:$0xff]
    %v4664 = vld [vmem:[#allocation6 + $0x58] sm:$0xff]
    %v4665 = vld [vmem:[#allocation6 + $0x80] sm:$0xff]
    %v4666 = vld [vmem:[#allocation6 + $0x88] sm:$0xff]
    %v4667 = vld [vmem:[#allocation6 + $0x90] sm:$0xff]
    %v4668 = vld [vmem:[#allocation6 + $0x98] sm:$0xff]
    %v4669 = vld [vmem:[#allocation6 + $0xc0] sm:$0xff]
    %v4670 = vld [vmem:[#allocation6 + $0xc8] sm:$0xff]
    %v4671 = vld [vmem:[#allocation6 + $0xd0] sm:$0xff]
    %v4672 = vld [vmem:[#allocation6 + $0xd8] sm:$0xff]
    %v4673 = vld [vmem:[#allocation6 + $0x100] sm:$0xff]
    %v4674 = vld [vmem:[#allocation6 + $0x108] sm:$0xff]
    %v4675 = vld [vmem:[#allocation6 + $0x110] sm:$0xff]
    %v4676 = vld [vmem:[#allocation6 + $0x118] sm:$0xff]
    %v4677 = vld [vmem:[#allocation6 + $0x140] sm:$0xff]
    %v4678 = vld [vmem:[#allocation6 + $0x148] sm:$0xff]
    %v4679 = vld [vmem:[#allocation6 + $0x150] sm:$0xff]
    %v4680 = vld [vmem:[#allocation6 + $0x158] sm:$0xff]
    %v4681 = vld [vmem:[#allocation6 + $0x180] sm:$0xff]
    %v4682 = vld [vmem:[#allocation6 + $0x188] sm:$0xff]
    %v4683 = vld [vmem:[#allocation6 + $0x190] sm:$0xff]
    %v4684 = vld [vmem:[#allocation6 + $0x198] sm:$0xff]
    %v4685 = vld [vmem:[#allocation6 + $0x1c0] sm:$0xff]
    %v4686 = vld [vmem:[#allocation6 + $0x1c8] sm:$0xff]
    %v4687 = vld [vmem:[#allocation6 + $0x1d0] sm:$0xff]
    %v4688 = vld [vmem:[#allocation6 + $0x1d8] sm:$0xff]
    %v4689 = vld [vmem:[#allocation6 + $0x200] sm:$0xff]
    %v4690 = vld [vmem:[#allocation6 + $0x208] sm:$0xff]
    %v4691 = vld [vmem:[#allocation6 + $0x210] sm:$0xff]
    %v4692 = vld [vmem:[#allocation6 + $0x218] sm:$0xff]
    %v4693 = vld [vmem:[#allocation6 + $0x240] sm:$0xff]
    %v4694 = vld [vmem:[#allocation6 + $0x248] sm:$0xff]
    %v4695 = vld [vmem:[#allocation6 + $0x250] sm:$0xff]
    %v4696 = vld [vmem:[#allocation6 + $0x258] sm:$0xff]
    %v4697 = vld [vmem:[#allocation6 + $0x280] sm:$0xff]
    %v4698 = vld [vmem:[#allocation6 + $0x288] sm:$0xff]
    %v4699 = vld [vmem:[#allocation6 + $0x290] sm:$0xff]
    %v4700 = vld [vmem:[#allocation6 + $0x298] sm:$0xff]
    %v4701 = vld [vmem:[#allocation6 + $0x2c0] sm:$0xff]
    %v4702 = vld [vmem:[#allocation6 + $0x2c8] sm:$0xff]
    %v4703 = vld [vmem:[#allocation6 + $0x2d0] sm:$0xff]
    %v4704 = vld [vmem:[#allocation6 + $0x2d8] sm:$0xff]
    %v4705 = vld [vmem:[#allocation6 + $0x300] sm:$0xff]
    %v4706 = vld [vmem:[#allocation6 + $0x308] sm:$0xff]
    %v4707 = vld [vmem:[#allocation6 + $0x310] sm:$0xff]
    %v4708 = vld [vmem:[#allocation6 + $0x318] sm:$0xff]
    %v4709 = vld [vmem:[#allocation6 + $0x340] sm:$0xff]
    %v4710 = vld [vmem:[#allocation6 + $0x348] sm:$0xff]
    %v4711 = vld [vmem:[#allocation6 + $0x350] sm:$0xff]
    %v4712 = vld [vmem:[#allocation6 + $0x358] sm:$0xff]
    %v4713 = vld [vmem:[#allocation6 + $0x380] sm:$0xff]
    %v4714 = vld [vmem:[#allocation6 + $0x388] sm:$0xff]
    %v4715 = vld [vmem:[#allocation6 + $0x390] sm:$0xff]
    %v4716 = vld [vmem:[#allocation6 + $0x398] sm:$0xff]
    %v4717 = vld [vmem:[#allocation6 + $0x3c0] sm:$0xff]
    %v4718 = vld [vmem:[#allocation6 + $0x3c8] sm:$0xff]
    %v4719 = vld [vmem:[#allocation6 + $0x3d0] sm:$0xff]
    %v4720 = vld [vmem:[#allocation6 + $0x3d8] sm:$0xff]
    %s4721 = scalar_lea.vmem [#allocation2], 6
    %v4722 = vld [vmem:[%s4721] ss:$8 sm:$0xf]
    %v4723 = vld [vmem:[%s4721] ss:$8 sm:$0xf0]
    %v4724 = vor.u32 %v4722, %v4723
    %v4726 = vlaneseq
    %v4727 = vshrl.u32 %v4726, 7
    %v4728 = vsub.s32 0, %v4727
    %v4729 = vrot.slane %v4724, %v4728
    %v4730 = vlaneseq
    %v4731 = vshrl.u32 %v4730, 7
    %v4732 = vsub.s32 1, %v4731
    %v4733 = vrot.slane %v4724, %v4732
    %v4734 = vlaneseq
    %v4735 = vshrl.u32 %v4734, 7
    %v4736 = vsub.s32 2, %v4735
    %v4737 = vrot.slane %v4724, %v4736
    %v4738 = vlaneseq
    %v4739 = vshrl.u32 %v4738, 7
    %v4740 = vsub.s32 3, %v4739
    %v4741 = vrot.slane %v4724, %v4740
    %v4742 = vlaneseq
    %v4743 = vshrl.u32 %v4742, 7
    %v4744 = vsub.s32 4, %v4743
    %v4745 = vrot.slane %v4724, %v4744
    %v4746 = vlaneseq
    %v4747 = vshrl.u32 %v4746, 7
    %v4748 = vsub.s32 5, %v4747
    %v4749 = vrot.slane %v4724, %v4748
    %v4750 = vlaneseq
    %v4751 = vshrl.u32 %v4750, 7
    %v4752 = vsub.s32 6, %v4751
    %v4753 = vrot.slane %v4724, %v4752
    %v4754 = vlaneseq
    %v4755 = vshrl.u32 %v4754, 7
    %v4756 = vsub.s32 7, %v4755
    %v4757 = vrot.slane %v4724, %v4756
    %v4767 = vrot.slane %v4656, 1
    %v4833 = vunpack.c.l.b16 %v4657
    %v4834 = vunpack.c.h.b16 %v4657
    %v4835 = vunpack.c.l.b16 %v4658
    %v4836 = vunpack.c.h.b16 %v4658
    %v4837 = vunpack.c.l.b16 %v4659
    %v4838 = vunpack.c.h.b16 %v4659
    %v4839 = vunpack.c.l.b16 %v4660
    %v4840 = vunpack.c.h.b16 %v4660
    %v4841 = vunpack.c.l.b16 %v4661
    %v4842 = vunpack.c.h.b16 %v4661
    %v4843 = vunpack.c.l.b16 %v4662
    %v4844 = vunpack.c.h.b16 %v4662
    %v4845 = vunpack.c.l.b16 %v4663
    %v4846 = vunpack.c.h.b16 %v4663
    %v4847 = vunpack.c.l.b16 %v4664
    %v4848 = vunpack.c.h.b16 %v4664
    %v4849 = vunpack.c.l.b16 %v4665
    %v4850 = vunpack.c.h.b16 %v4665
    %v4851 = vunpack.c.l.b16 %v4666
    %v4852 = vunpack.c.h.b16 %v4666
    %v4853 = vunpack.c.l.b16 %v4667
    %v4854 = vunpack.c.h.b16 %v4667
    %v4855 = vunpack.c.l.b16 %v4668
    %v4856 = vunpack.c.h.b16 %v4668
    %v4857 = vunpack.c.l.b16 %v4669
    %v4858 = vunpack.c.h.b16 %v4669
    %v4859 = vunpack.c.l.b16 %v4670
    %v4860 = vunpack.c.h.b16 %v4670
    %v4861 = vunpack.c.l.b16 %v4671
    %v4862 = vunpack.c.h.b16 %v4671
    %v4863 = vunpack.c.l.b16 %v4672
    %v4864 = vunpack.c.h.b16 %v4672
    %v4865 = vunpack.c.l.b16 %v4673
    %v4866 = vunpack.c.h.b16 %v4673
    %v4867 = vunpack.c.l.b16 %v4674
    %v4868 = vunpack.c.h.b16 %v4674
    %v4869 = vunpack.c.l.b16 %v4675
    %v4870 = vunpack.c.h.b16 %v4675
    %v4871 = vunpack.c.l.b16 %v4676
    %v4872 = vunpack.c.h.b16 %v4676
    %v4873 = vunpack.c.l.b16 %v4677
    %v4874 = vunpack.c.h.b16 %v4677
    %v4875 = vunpack.c.l.b16 %v4678
    %v4876 = vunpack.c.h.b16 %v4678
    %v4877 = vunpack.c.l.b16 %v4679
    %v4878 = vunpack.c.h.b16 %v4679
    %v4879 = vunpack.c.l.b16 %v4680
    %v4880 = vunpack.c.h.b16 %v4680
    %v4881 = vunpack.c.l.b16 %v4681
    %v4882 = vunpack.c.h.b16 %v4681
    %v4883 = vunpack.c.l.b16 %v4682
    %v4884 = vunpack.c.h.b16 %v4682
    %v4885 = vunpack.c.l.b16 %v4683
    %v4886 = vunpack.c.h.b16 %v4683
    %v4887 = vunpack.c.l.b16 %v4684
    %v4888 = vunpack.c.h.b16 %v4684
    %v4889 = vunpack.c.l.b16 %v4685
    %v4890 = vunpack.c.h.b16 %v4685
    %v4891 = vunpack.c.l.b16 %v4686
    %v4892 = vunpack.c.h.b16 %v4686
    %v4893 = vunpack.c.l.b16 %v4687
    %v4894 = vunpack.c.h.b16 %v4687
    %v4895 = vunpack.c.l.b16 %v4688
    %v4896 = vunpack.c.h.b16 %v4688
    %v4897 = vunpack.c.l.b16 %v4689
    %v4898 = vunpack.c.h.b16 %v4689
    %v4899 = vunpack.c.l.b16 %v4690
    %v4900 = vunpack.c.h.b16 %v4690
    %v4901 = vunpack.c.l.b16 %v4691
    %v4902 = vunpack.c.h.b16 %v4691
    %v4903 = vunpack.c.l.b16 %v4692
    %v4904 = vunpack.c.h.b16 %v4692
    %v4905 = vunpack.c.l.b16 %v4693
    %v4906 = vunpack.c.h.b16 %v4693
    %v4907 = vunpack.c.l.b16 %v4694
    %v4908 = vunpack.c.h.b16 %v4694
    %v4909 = vunpack.c.l.b16 %v4695
    %v4910 = vunpack.c.h.b16 %v4695
    %v4911 = vunpack.c.l.b16 %v4696
    %v4912 = vunpack.c.h.b16 %v4696
    %v4913 = vunpack.c.l.b16 %v4697
    %v4914 = vunpack.c.h.b16 %v4697
    %v4915 = vunpack.c.l.b16 %v4698
    %v4916 = vunpack.c.h.b16 %v4698
    %v4917 = vunpack.c.l.b16 %v4699
    %v4918 = vunpack.c.h.b16 %v4699
    %v4919 = vunpack.c.l.b16 %v4700
    %v4920 = vunpack.c.h.b16 %v4700
    %v4921 = vunpack.c.l.b16 %v4701
    %v4922 = vunpack.c.h.b16 %v4701
    %v4923 = vunpack.c.l.b16 %v4702
    %v4924 = vunpack.c.h.b16 %v4702
    %v4925 = vunpack.c.l.b16 %v4703
    %v4926 = vunpack.c.h.b16 %v4703
    %v4927 = vunpack.c.l.b16 %v4704
    %v4928 = vunpack.c.h.b16 %v4704
    %v4929 = vunpack.c.l.b16 %v4705
    %v4930 = vunpack.c.h.b16 %v4705
    %v4931 = vunpack.c.l.b16 %v4706
    %v4932 = vunpack.c.h.b16 %v4706
    %v4933 = vunpack.c.l.b16 %v4707
    %v4934 = vunpack.c.h.b16 %v4707
    %v4935 = vunpack.c.l.b16 %v4708
    %v4936 = vunpack.c.h.b16 %v4708
    %v4937 = vunpack.c.l.b16 %v4709
    %v4938 = vunpack.c.h.b16 %v4709
    %v4939 = vunpack.c.l.b16 %v4710
    %v4940 = vunpack.c.h.b16 %v4710
    %v4941 = vunpack.c.l.b16 %v4711
    %v4942 = vunpack.c.h.b16 %v4711
    %v4943 = vunpack.c.l.b16 %v4712
    %v4944 = vunpack.c.h.b16 %v4712
    %v4945 = vunpack.c.l.b16 %v4713
    %v4946 = vunpack.c.h.b16 %v4713
    %v4947 = vunpack.c.l.b16 %v4714
    %v4948 = vunpack.c.h.b16 %v4714
    %v4949 = vunpack.c.l.b16 %v4715
    %v4950 = vunpack.c.h.b16 %v4715
    %v4951 = vunpack.c.l.b16 %v4716
    %v4952 = vunpack.c.h.b16 %v4716
    %v4953 = vunpack.c.l.b16 %v4717
    %v4954 = vunpack.c.h.b16 %v4717
    %v4955 = vunpack.c.l.b16 %v4718
    %v4956 = vunpack.c.h.b16 %v4718
    %v4957 = vunpack.c.l.b16 %v4719
    %v4958 = vunpack.c.h.b16 %v4719
    %v4959 = vunpack.c.l.b16 %v4720
    %v4960 = vunpack.c.h.b16 %v4720
    %v4961 = vpack.c.b16 %v4841, %v4833
    %v4962 = vpack.c.b16 %v4842, %v4834
    %v4963 = vpack.c.b16 %v4843, %v4835
    %v4964 = vpack.c.b16 %v4844, %v4836
    %v4965 = vpack.c.b16 %v4845, %v4837
    %v4966 = vpack.c.b16 %v4846, %v4838
    %v4967 = vpack.c.b16 %v4847, %v4839
    %v4968 = vpack.c.b16 %v4848, %v4840
    %v4969 = vpack.c.b16 %v4857, %v4849
    %v4970 = vpack.c.b16 %v4858, %v4850
    %v4971 = vpack.c.b16 %v4859, %v4851
    %v4972 = vpack.c.b16 %v4860, %v4852
    %v4973 = vpack.c.b16 %v4861, %v4853
    %v4974 = vpack.c.b16 %v4862, %v4854
    %v4975 = vpack.c.b16 %v4863, %v4855
    %v4976 = vpack.c.b16 %v4864, %v4856
    %v4977 = vpack.c.b16 %v4873, %v4865
    %v4978 = vpack.c.b16 %v4874, %v4866
    %v4979 = vpack.c.b16 %v4875, %v4867
    %v4980 = vpack.c.b16 %v4876, %v4868
    %v4981 = vpack.c.b16 %v4877, %v4869
    %v4982 = vpack.c.b16 %v4878, %v4870
    %v4983 = vpack.c.b16 %v4879, %v4871
    %v4984 = vpack.c.b16 %v4880, %v4872
    %v4985 = vpack.c.b16 %v4889, %v4881
    %v4986 = vpack.c.b16 %v4890, %v4882
    %v4987 = vpack.c.b16 %v4891, %v4883
    %v4988 = vpack.c.b16 %v4892, %v4884
    %v4989 = vpack.c.b16 %v4893, %v4885
    %v4990 = vpack.c.b16 %v4894, %v4886
    %v4991 = vpack.c.b16 %v4895, %v4887
    %v4992 = vpack.c.b16 %v4896, %v4888
    %v4993 = vpack.c.b16 %v4905, %v4897
    %v4994 = vpack.c.b16 %v4906, %v4898
    %v4995 = vpack.c.b16 %v4907, %v4899
    %v4996 = vpack.c.b16 %v4908, %v4900
    %v4997 = vpack.c.b16 %v4909, %v4901
    %v4998 = vpack.c.b16 %v4910, %v4902
    %v4999 = vpack.c.b16 %v4911, %v4903
    %v5000 = vpack.c.b16 %v4912, %v4904
    %v5001 = vpack.c.b16 %v4921, %v4913
    %v5002 = vpack.c.b16 %v4922, %v4914
    %v5003 = vpack.c.b16 %v4923, %v4915
    %v5004 = vpack.c.b16 %v4924, %v4916
    %v5005 = vpack.c.b16 %v4925, %v4917
    %v5006 = vpack.c.b16 %v4926, %v4918
    %v5007 = vpack.c.b16 %v4927, %v4919
    %v5008 = vpack.c.b16 %v4928, %v4920
    %v5009 = vpack.c.b16 %v4937, %v4929
    %v5010 = vpack.c.b16 %v4938, %v4930
    %v5011 = vpack.c.b16 %v4939, %v4931
    %v5012 = vpack.c.b16 %v4940, %v4932
    %v5013 = vpack.c.b16 %v4941, %v4933
    %v5014 = vpack.c.b16 %v4942, %v4934
    %v5015 = vpack.c.b16 %v4943, %v4935
    %v5016 = vpack.c.b16 %v4944, %v4936
    %v5017 = vpack.c.b16 %v4953, %v4945
    %v5018 = vpack.c.b16 %v4954, %v4946
    %v5019 = vpack.c.b16 %v4955, %v4947
    %v5020 = vpack.c.b16 %v4956, %v4948
    %v5021 = vpack.c.b16 %v4957, %v4949
    %v5022 = vpack.c.b16 %v4958, %v4950
    %v5023 = vpack.c.b16 %v4959, %v4951
    %v5024 = vpack.c.b16 %v4960, %v4952
    %5089 = vmatprep.subr.bf16.mxu0 %v4962
    %5090 = vmatpush1.bf16.msra.mxu0 %v4961
    %5091 = vmatprep.subr.bf16.mxu0 %v4970
    %5092 = vmatpush1.bf16.msra.mxu0 %v4969
    %5093 = vmatprep.subr.bf16.mxu0 %v4978
    %5094 = vmatpush1.bf16.msra.mxu0 %v4977
    %5095 = vmatprep.subr.bf16.mxu0 %v4986
    %5096 = vmatpush1.bf16.msra.mxu0 %v4985
    %5097 = vmatprep.subr.bf16.mxu0 %v4994
    %5098 = vmatpush1.bf16.msra.mxu0 %v4993
    %5099 = vmatprep.subr.bf16.mxu0 %v5002
    %5100 = vmatpush1.bf16.msra.mxu0 %v5001
    %5101 = vmatprep.subr.bf16.mxu0 %v5010
    %5102 = vmatpush1.bf16.msra.mxu0 %v5009
    %5103 = vmatprep.subr.bf16.mxu0 %v5018
    %5104 = vmatpush1.bf16.msra.mxu0 %v5017
    %5105 = vmatprep.subr.bf16.mxu0 0
    %5106 = vmatpush1.bf16.msra.mxu0 0
    %5107 = vmatprep.subr.bf16.mxu0 0
    %5108 = vmatpush1.bf16.msra.mxu0 0
    %5109 = vmatprep.subr.bf16.mxu0 0
    %5110 = vmatpush1.bf16.msra.mxu0 0
    %5111 = vmatprep.subr.bf16.mxu0 0
    %5112 = vmatpush1.bf16.msra.mxu0 0
    %5113 = vmatprep.subr.bf16.mxu0 0
    %5114 = vmatpush1.bf16.msra.mxu0 0
    %5115 = vmatprep.subr.bf16.mxu0 0
    %5116 = vmatpush1.bf16.msra.mxu0 0
    %5117 = vmatprep.subr.bf16.mxu0 0
    %5118 = vmatpush1.bf16.msra.mxu0 0
    %5119 = vmatprep.subr.bf16.mxu0 0
    %5120 = vmatpush1.bf16.msra.mxu0 0
    %5121 = vmatprep.mubr.bf16.mxu0 0
    %5122 = vmatmul.mubr.bf16.gmra.mrb[0].mxu0 %v4767
    %v5123 = vpop.f32.mrb[0].mxu0
    %v5124 = vadd.f32 %v4729, %v5123
    %v5125 = vpop.f32.mrb[0].mxu0
    %v5126 = vadd.f32 %v4733, %v5125
    %v5127 = vpop.f32.mrb[0].mxu0
    %v5128 = vpop.f32.mrb[0].mxu0
    %5129 = vdwg.mxu0
    %5130 = vmatprep.subr.bf16.mxu0 %v4964
    %5131 = vmatpush1.bf16.msra.mxu0 %v4963
    %5132 = vmatprep.subr.bf16.mxu0 %v4972
    %5133 = vmatpush1.bf16.msra.mxu0 %v4971
    %5134 = vmatprep.subr.bf16.mxu0 %v4980
    %5135 = vmatpush1.bf16.msra.mxu0 %v4979
    %5136 = vmatprep.subr.bf16.mxu0 %v4988
    %5137 = vmatpush1.bf16.msra.mxu0 %v4987
    %5138 = vmatprep.subr.bf16.mxu0 %v4996
    %5139 = vmatpush1.bf16.msra.mxu0 %v4995
    %5140 = vmatprep.subr.bf16.mxu0 %v5004
    %5141 = vmatpush1.bf16.msra.mxu0 %v5003
    %5142 = vmatprep.subr.bf16.mxu0 %v5012
    %5143 = vmatpush1.bf16.msra.mxu0 %v5011
    %5144 = vmatprep.subr.bf16.mxu0 %v5020
    %5145 = vmatpush1.bf16.msra.mxu0 %v5019
    %5146 = vmatprep.subr.bf16.mxu0 0
    %5147 = vmatpush1.bf16.msra.mxu0 0
    %5148 = vmatprep.subr.bf16.mxu0 0
    %5149 = vmatpush1.bf16.msra.mxu0 0
    %5150 = vmatprep.subr.bf16.mxu0 0
    %5151 = vmatpush1.bf16.msra.mxu0 0
    %5152 = vmatprep.subr.bf16.mxu0 0
    %5153 = vmatpush1.bf16.msra.mxu0 0
    %5154 = vmatprep.subr.bf16.mxu0 0
    %5155 = vmatpush1.bf16.msra.mxu0 0
    %5156 = vmatprep.subr.bf16.mxu0 0
    %5157 = vmatpush1.bf16.msra.mxu0 0
    %5158 = vmatprep.subr.bf16.mxu0 0
    %5159 = vmatpush1.bf16.msra.mxu0 0
    %5160 = vmatprep.subr.bf16.mxu0 0
    %5161 = vmatpush1.bf16.msra.mxu0 0
    %5162 = vmatprep.mubr.bf16.mxu0 0
    %5163 = vmatmul.mubr.bf16.gmra.mrb[0].mxu0 %v4767
    %v5164 = vpop.f32.mrb[0].mxu0
    %v5165 = vadd.f32 %v4737, %v5164
    %v5166 = vpop.f32.mrb[0].mxu0
    %v5167 = vadd.f32 %v4741, %v5166
    %v5168 = vpop.f32.mrb[0].mxu0
    %v5169 = vpop.f32.mrb[0].mxu0
    %5170 = vdwg.mxu0
    %5171 = vmatprep.subr.bf16.mxu0 %v4966
    %5172 = vmatpush1.bf16.msra.mxu0 %v4965
    %5173 = vmatprep.subr.bf16.mxu0 %v4974
    %5174 = vmatpush1.bf16.msra.mxu0 %v4973
    %5175 = vmatprep.subr.bf16.mxu0 %v4982
    %5176 = vmatpush1.bf16.msra.mxu0 %v4981
    %5177 = vmatprep.subr.bf16.mxu0 %v4990
    %5178 = vmatpush1.bf16.msra.mxu0 %v4989
    %5179 = vmatprep.subr.bf16.mxu0 %v4998
    %5180 = vmatpush1.bf16.msra.mxu0 %v4997
    %5181 = vmatprep.subr.bf16.mxu0 %v5006
    %5182 = vmatpush1.bf16.msra.mxu0 %v5005
    %5183 = vmatprep.subr.bf16.mxu0 %v5014
    %5184 = vmatpush1.bf16.msra.mxu0 %v5013
    %5185 = vmatprep.subr.bf16.mxu0 %v5022
    %5186 = vmatpush1.bf16.msra.mxu0 %v5021
    %5187 = vmatprep.subr.bf16.mxu0 0
    %5188 = vmatpush1.bf16.msra.mxu0 0
    %5189 = vmatprep.subr.bf16.mxu0 0
    %5190 = vmatpush1.bf16.msra.mxu0 0
    %5191 = vmatprep.subr.bf16.mxu0 0
    %5192 = vmatpush1.bf16.msra.mxu0 0
    %5193 = vmatprep.subr.bf16.mxu0 0
    %5194 = vmatpush1.bf16.msra.mxu0 0
    %5195 = vmatprep.subr.bf16.mxu0 0
    %5196 = vmatpush1.bf16.msra.mxu0 0
    %5197 = vmatprep.subr.bf16.mxu0 0
    %5198 = vmatpush1.bf16.msra.mxu0 0
    %5199 = vmatprep.subr.bf16.mxu0 0
    %5200 = vmatpush1.bf16.msra.mxu0 0
    %5201 = vmatprep.subr.bf16.mxu0 0
    %5202 = vmatpush1.bf16.msra.mxu0 0
    %5203 = vmatprep.mubr.bf16.mxu0 0
    %5204 = vmatmul.mubr.bf16.gmra.mrb[0].mxu0 %v4767
    %v5205 = vpop.f32.mrb[0].mxu0
    %v5206 = vadd.f32 %v4745, %v5205
    %v5207 = vpop.f32.mrb[0].mxu0
    %v5208 = vadd.f32 %v4749, %v5207
    %v5209 = vpop.f32.mrb[0].mxu0
    %v5210 = vpop.f32.mrb[0].mxu0
    %5211 = vdwg.mxu0
    %5212 = vmatprep.subr.bf16.mxu0 %v4968
    %5213 = vmatpush1.bf16.msra.mxu0 %v4967
    %5214 = vmatprep.subr.bf16.mxu0 %v4976
    %5215 = vmatpush1.bf16.msra.mxu0 %v4975
    %5216 = vmatprep.subr.bf16.mxu0 %v4984
    %5217 = vmatpush1.bf16.msra.mxu0 %v4983
    %5218 = vmatprep.subr.bf16.mxu0 %v4992
    %5219 = vmatpush1.bf16.msra.mxu0 %v4991
    %5220 = vmatprep.subr.bf16.mxu0 %v5000
    %5221 = vmatpush1.bf16.msra.mxu0 %v4999
    %5222 = vmatprep.subr.bf16.mxu0 %v5008
    %5223 = vmatpush1.bf16.msra.mxu0 %v5007
    %5224 = vmatprep.subr.bf16.mxu0 %v5016
    %5225 = vmatpush1.bf16.msra.mxu0 %v5015
    %5226 = vmatprep.subr.bf16.mxu0 %v5024
    %5227 = vmatpush1.bf16.msra.mxu0 %v5023
    %5228 = vmatprep.subr.bf16.mxu0 0
    %5229 = vmatpush1.bf16.msra.mxu0 0
    %5230 = vmatprep.subr.bf16.mxu0 0
    %5231 = vmatpush1.bf16.msra.mxu0 0
    %5232 = vmatprep.subr.bf16.mxu0 0
    %5233 = vmatpush1.bf16.msra.mxu0 0
    %5234 = vmatprep.subr.bf16.mxu0 0
    %5235 = vmatpush1.bf16.msra.mxu0 0
    %5236 = vmatprep.subr.bf16.mxu0 0
    %5237 = vmatpush1.bf16.msra.mxu0 0
    %5238 = vmatprep.subr.bf16.mxu0 0
    %5239 = vmatpush1.bf16.msra.mxu0 0
    %5240 = vmatprep.subr.bf16.mxu0 0
    %5241 = vmatpush1.bf16.msra.mxu0 0
    %5242 = vmatprep.subr.bf16.mxu0 0
    %5243 = vmatpush1.bf16.msra.mxu0 0
    %5244 = vmatprep.mubr.bf16.mxu0 0
    %5245 = vmatmul.mubr.bf16.gmra.mrb[0].mxu0 %v4767
    %v5246 = vpop.f32.mrb[0].mxu0
    %v5247 = vadd.f32 %v4753, %v5246
    %v5248 = vpop.f32.mrb[0].mxu0
    %v5249 = vadd.f32 %v4757, %v5248
    %v5250 = vpop.f32.mrb[0].mxu0
    %v5251 = vpop.f32.mrb[0].mxu0
    %5252 = vdwg.mxu0
    %v5253 = vpack.c.bf16 %v5124, %v5124
    %v5254 = vpack.c.bf16 %v5126, %v5126
    %v5255 = vpack.c.bf16 %v5165, %v5165
    %v5256 = vpack.c.bf16 %v5167, %v5167
    %v5257 = vpack.c.bf16 %v5206, %v5206
    %v5258 = vpack.c.bf16 %v5208, %v5208
    %v5259 = vpack.c.bf16 %v5247, %v5247
    %v5260 = vpack.c.bf16 %v5249, %v5249
    %v5261 = vld [vmem:[#allocation4 + $0x10] sm:$0xff]
    %v5262 = vld [vmem:[#allocation4 + $0x18] sm:$0xff]
    %v5263 = vld [vmem:[#allocation4 + $0x20] sm:$0xff]
    %v5264 = vld [vmem:[#allocation4 + $0x28] sm:$0xff]
    %v5265 = vld [vmem:[#allocation4 + $0x44] sm:$0xff]
    %v5266 = vld [vmem:[#allocation4 + $0x4c] sm:$0xff]
    %v5267 = vld [vmem:[#allocation4 + $0x54] sm:$0xff]
    %v5268 = vld [vmem:[#allocation4 + $0x5c] sm:$0xff]
    %v5269 = vld [vmem:[#allocation4 + $0x78] sm:$0xff]
    %v5270 = vld [vmem:[#allocation4 + $0x80] sm:$0xff]
    %v5271 = vld [vmem:[#allocation4 + $0x88] sm:$0xff]
    %v5272 = vld [vmem:[#allocation4 + $0x90] sm:$0xff]
    %v5273 = vld [vmem:[#allocation4 + $0xac] sm:$0xff]
    %v5274 = vld [vmem:[#allocation4 + $0xb4] sm:$0xff]
    %v5275 = vld [vmem:[#allocation4 + $0xbc] sm:$0xff]
    %v5276 = vld [vmem:[#allocation4 + $0xc4] sm:$0xff]
    %v5277 = vld [vmem:[#allocation4 + $0xe0] sm:$0xff]
    %v5278 = vld [vmem:[#allocation4 + $0xe8] sm:$0xff]
    %v5279 = vld [vmem:[#allocation4 + $0xf0] sm:$0xff]
    %v5280 = vld [vmem:[#allocation4 + $0xf8] sm:$0xff]
    %v5281 = vld [vmem:[#allocation4 + $0x114] sm:$0xff]
    %v5282 = vld [vmem:[#allocation4 + $0x11c] sm:$0xff]
    %v5283 = vld [vmem:[#allocation4 + $0x124] sm:$0xff]
    %v5284 = vld [vmem:[#allocation4 + $0x12c] sm:$0xff]
    %v5285 = vld [vmem:[#allocation4 + $0x148] sm:$0xff]
    %v5286 = vld [vmem:[#allocation4 + $0x150] sm:$0xff]
    %v5287 = vld [vmem:[#allocation4 + $0x158] sm:$0xff]
    %v5288 = vld [vmem:[#allocation4 + $0x160] sm:$0xff]
    %v5289 = vld [vmem:[#allocation4 + $0x17c] sm:$0xff]
    %v5290 = vld [vmem:[#allocation4 + $0x184] sm:$0xff]
    %v5291 = vld [vmem:[#allocation4 + $0x18c] sm:$0xff]
    %v5292 = vld [vmem:[#allocation4 + $0x194] sm:$0xff]
    %v5293 = vld [vmem:[#allocation4 + $0x1b0] sm:$0xff]
    %v5294 = vld [vmem:[#allocation4 + $0x1b8] sm:$0xff]
    %v5295 = vld [vmem:[#allocation4 + $0x1c0] sm:$0xff]
    %v5296 = vld [vmem:[#allocation4 + $0x1c8] sm:$0xff]
    %v5297 = vld [vmem:[#allocation4 + $0x1e4] sm:$0xff]
    %v5298 = vld [vmem:[#allocation4 + $0x1ec] sm:$0xff]
    %v5299 = vld [vmem:[#allocation4 + $0x1f4] sm:$0xff]
    %v5300 = vld [vmem:[#allocation4 + $0x1fc] sm:$0xff]
    %v5301 = vld [vmem:[#allocation4 + $0x218] sm:$0xff]
    %v5302 = vld [vmem:[#allocation4 + $0x220] sm:$0xff]
    %v5303 = vld [vmem:[#allocation4 + $0x228] sm:$0xff]
    %v5304 = vld [vmem:[#allocation4 + $0x230] sm:$0xff]
    %v5305 = vld [vmem:[#allocation4 + $0x24c] sm:$0xff]
    %v5306 = vld [vmem:[#allocation4 + $0x254] sm:$0xff]
    %v5307 = vld [vmem:[#allocation4 + $0x25c] sm:$0xff]
    %v5308 = vld [vmem:[#allocation4 + $0x264] sm:$0xff]
    %v5309 = vld [vmem:[#allocation4 + $0x280] sm:$0xff]
    %v5310 = vld [vmem:[#allocation4 + $0x288] sm:$0xff]
    %v5311 = vld [vmem:[#allocation4 + $0x290] sm:$0xff]
    %v5312 = vld [vmem:[#allocation4 + $0x298] sm:$0xff]
    %v5313 = vld [vmem:[#allocation4 + $0x2b4] sm:$0xff]
    %v5314 = vld [vmem:[#allocation4 + $0x2bc] sm:$0xff]
    %v5315 = vld [vmem:[#allocation4 + $0x2c4] sm:$0xff]
    %v5316 = vld [vmem:[#allocation4 + $0x2cc] sm:$0xff]
    %v5317 = vld [vmem:[#allocation4 + $0x2e8] sm:$0xff]
    %v5318 = vld [vmem:[#allocation4 + $0x2f0] sm:$0xff]
    %v5319 = vld [vmem:[#allocation4 + $0x2f8] sm:$0xff]
    %v5320 = vld [vmem:[#allocation4 + $0x300] sm:$0xff]
    %v5321 = vld [vmem:[#allocation4 + $0x31c] sm:$0xff]
    %v5322 = vld [vmem:[#allocation4 + $0x324] sm:$0xff]
    %v5323 = vld [vmem:[#allocation4 + $0x32c] sm:$0xff]
    %v5324 = vld [vmem:[#allocation4 + $0x334] sm:$0xff]
    %v5325 = vld [vmem:[#allocation4 + $0x350] sm:$0xff]
    %v5326 = vld [vmem:[#allocation4 + $0x358] sm:$0xff]
    %v5327 = vld [vmem:[#allocation4 + $0x360] sm:$0xff]
    %v5328 = vld [vmem:[#allocation4 + $0x368] sm:$0xff]
    %v5329 = vld [vmem:[#allocation4 + $0x384] sm:$0xff]
    %v5330 = vld [vmem:[#allocation4 + $0x38c] sm:$0xff]
    %v5331 = vld [vmem:[#allocation4 + $0x394] sm:$0xff]
    %v5332 = vld [vmem:[#allocation4 + $0x39c] sm:$0xff]
    %v5333 = vld [vmem:[#allocation4 + $0x3b8] sm:$0xff]
    %v5334 = vld [vmem:[#allocation4 + $0x3c0] sm:$0xff]
    %v5335 = vld [vmem:[#allocation4 + $0x3c8] sm:$0xff]
    %v5336 = vld [vmem:[#allocation4 + $0x3d0] sm:$0xff]
    %v5337 = vld [vmem:[#allocation4 + $0x3ec] sm:$0xff]
    %v5338 = vld [vmem:[#allocation4 + $0x3f4] sm:$0xff]
    %v5339 = vld [vmem:[#allocation4 + $0x3fc] sm:$0xff]
    %v5340 = vld [vmem:[#allocation4 + $0x404] sm:$0xff]
    %v5341 = vld [vmem:[#allocation4 + $0x420] sm:$0xff]
    %v5342 = vld [vmem:[#allocation4 + $0x428] sm:$0xff]
    %v5343 = vld [vmem:[#allocation4 + $0x430] sm:$0xff]
    %v5344 = vld [vmem:[#allocation4 + $0x438] sm:$0xff]
    %v5345 = vld [vmem:[#allocation4 + $0x454] sm:$0xff]
    %v5346 = vld [vmem:[#allocation4 + $0x45c] sm:$0xff]
    %v5347 = vld [vmem:[#allocation4 + $0x464] sm:$0xff]
    %v5348 = vld [vmem:[#allocation4 + $0x46c] sm:$0xff]
    %v5349 = vld [vmem:[#allocation4 + $0x488] sm:$0xff]
    %v5350 = vld [vmem:[#allocation4 + $0x490] sm:$0xff]
    %v5351 = vld [vmem:[#allocation4 + $0x498] sm:$0xff]
    %v5352 = vld [vmem:[#allocation4 + $0x4a0] sm:$0xff]
    %v5353 = vld [vmem:[#allocation4 + $0x4bc] sm:$0xff]
    %v5354 = vld [vmem:[#allocation4 + $0x4c4] sm:$0xff]
    %v5355 = vld [vmem:[#allocation4 + $0x4cc] sm:$0xff]
    %v5356 = vld [vmem:[#allocation4 + $0x4d4] sm:$0xff]
    %v5357 = vld [vmem:[#allocation4 + $0x4f0] sm:$0xff]
    %v5358 = vld [vmem:[#allocation4 + $0x4f8] sm:$0xff]
    %v5359 = vld [vmem:[#allocation4 + $0x500] sm:$0xff]
    %v5360 = vld [vmem:[#allocation4 + $0x508] sm:$0xff]
    %v5361 = vld [vmem:[#allocation4 + $0x524] sm:$0xff]
    %v5362 = vld [vmem:[#allocation4 + $0x52c] sm:$0xff]
    %v5363 = vld [vmem:[#allocation4 + $0x534] sm:$0xff]
    %v5364 = vld [vmem:[#allocation4 + $0x53c] sm:$0xff]
    %v5365 = vld [vmem:[#allocation4 + $0x558] sm:$0xff]
    %v5366 = vld [vmem:[#allocation4 + $0x560] sm:$0xff]
    %v5367 = vld [vmem:[#allocation4 + $0x568] sm:$0xff]
    %v5368 = vld [vmem:[#allocation4 + $0x570] sm:$0xff]
    %v5369 = vld [vmem:[#allocation4 + $0x58c] sm:$0xff]
    %v5370 = vld [vmem:[#allocation4 + $0x594] sm:$0xff]
    %v5371 = vld [vmem:[#allocation4 + $0x59c] sm:$0xff]
    %v5372 = vld [vmem:[#allocation4 + $0x5a4] sm:$0xff]
    %v5373 = vld [vmem:[#allocation4 + $0x5c0] sm:$0xff]
    %v5374 = vld [vmem:[#allocation4 + $0x5c8] sm:$0xff]
    %v5375 = vld [vmem:[#allocation4 + $0x5d0] sm:$0xff]
    %v5376 = vld [vmem:[#allocation4 + $0x5d8] sm:$0xff]
    %v5377 = vld [vmem:[#allocation4 + $0x5f4] sm:$0xff]
    %v5378 = vld [vmem:[#allocation4 + $0x5fc] sm:$0xff]
    %v5379 = vld [vmem:[#allocation4 + $0x604] sm:$0xff]
    %v5380 = vld [vmem:[#allocation4 + $0x60c] sm:$0xff]
    %v5381 = vld [vmem:[#allocation4 + $0x628] sm:$0xff]
    %v5382 = vld [vmem:[#allocation4 + $0x630] sm:$0xff]
    %v5383 = vld [vmem:[#allocation4 + $0x638] sm:$0xff]
    %v5384 = vld [vmem:[#allocation4 + $0x640] sm:$0xff]
    %v5385 = vld [vmem:[#allocation4 + $0x65c] sm:$0xff]
    %v5386 = vld [vmem:[#allocation4 + $0x664] sm:$0xff]
    %v5387 = vld [vmem:[#allocation4 + $0x66c] sm:$0xff]
    %v5388 = vld [vmem:[#allocation4 + $0x674] sm:$0xff]
    %v5389 = vld [vmem:[#allocation4 + $0x690] sm:$0xff]
    %v5390 = vld [vmem:[#allocation4 + $0x698] sm:$0xff]
    %v5391 = vld [vmem:[#allocation4 + $0x6a0] sm:$0xff]
    %v5392 = vld [vmem:[#allocation4 + $0x6a8] sm:$0xff]
    %v5393 = vld [vmem:[#allocation4 + $0x6c4] sm:$0xff]
    %v5394 = vld [vmem:[#allocation4 + $0x6cc] sm:$0xff]
    %v5395 = vld [vmem:[#allocation4 + $0x6d4] sm:$0xff]
    %v5396 = vld [vmem:[#allocation4 + $0x6dc] sm:$0xff]
    %v5397 = vld [vmem:[#allocation4 + $0x6f8] sm:$0xff]
    %v5398 = vld [vmem:[#allocation4 + $0x700] sm:$0xff]
    %v5399 = vld [vmem:[#allocation4 + $0x708] sm:$0xff]
    %v5400 = vld [vmem:[#allocation4 + $0x710] sm:$0xff]
    %v5401 = vld [vmem:[#allocation4 + $0x72c] sm:$0xff]
    %v5402 = vld [vmem:[#allocation4 + $0x734] sm:$0xff]
    %v5403 = vld [vmem:[#allocation4 + $0x73c] sm:$0xff]
    %v5404 = vld [vmem:[#allocation4 + $0x744] sm:$0xff]
    %v5405 = vld [vmem:[#allocation4 + $0x760] sm:$0xff]
    %v5406 = vld [vmem:[#allocation4 + $0x768] sm:$0xff]
    %v5407 = vld [vmem:[#allocation4 + $0x770] sm:$0xff]
    %v5408 = vld [vmem:[#allocation4 + $0x778] sm:$0xff]
    %v5409 = vld [vmem:[#allocation4 + $0x794] sm:$0xff]
    %v5410 = vld [vmem:[#allocation4 + $0x79c] sm:$0xff]
    %v5411 = vld [vmem:[#allocation4 + $0x7a4] sm:$0xff]
    %v5412 = vld [vmem:[#allocation4 + $0x7ac] sm:$0xff]
    %v5413 = vld [vmem:[#allocation4 + $0x7c8] sm:$0xff]
    %v5414 = vld [vmem:[#allocation4 + $0x7d0] sm:$0xff]
    %v5415 = vld [vmem:[#allocation4 + $0x7d8] sm:$0xff]
    %v5416 = vld [vmem:[#allocation4 + $0x7e0] sm:$0xff]
    %v5417 = vld [vmem:[#allocation4 + $0x7fc] sm:$0xff]
    %v5418 = vld [vmem:[#allocation4 + $0x804] sm:$0xff]
    %v5419 = vld [vmem:[#allocation4 + $0x80c] sm:$0xff]
    %v5420 = vld [vmem:[#allocation4 + $0x814] sm:$0xff]
    %v5421 = vld [vmem:[#allocation4 + $0x830] sm:$0xff]
    %v5422 = vld [vmem:[#allocation4 + $0x838] sm:$0xff]
    %v5423 = vld [vmem:[#allocation4 + $0x840] sm:$0xff]
    %v5424 = vld [vmem:[#allocation4 + $0x848] sm:$0xff]
    %v5425 = vld [vmem:[#allocation4 + $0x864] sm:$0xff]
    %v5426 = vld [vmem:[#allocation4 + $0x86c] sm:$0xff]
    %v5427 = vld [vmem:[#allocation4 + $0x874] sm:$0xff]
    %v5428 = vld [vmem:[#allocation4 + $0x87c] sm:$0xff]
    %v5429 = vld [vmem:[#allocation4 + $0x898] sm:$0xff]
    %v5430 = vld [vmem:[#allocation4 + $0x8a0] sm:$0xff]
    %v5431 = vld [vmem:[#allocation4 + $0x8a8] sm:$0xff]
    %v5432 = vld [vmem:[#allocation4 + $0x8b0] sm:$0xff]
    %v5433 = vld [vmem:[#allocation4 + $0x8cc] sm:$0xff]
    %v5434 = vld [vmem:[#allocation4 + $0x8d4] sm:$0xff]
    %v5435 = vld [vmem:[#allocation4 + $0x8dc] sm:$0xff]
    %v5436 = vld [vmem:[#allocation4 + $0x8e4] sm:$0xff]
    %v5437 = vld [vmem:[#allocation4 + $0x900] sm:$0xff]
    %v5438 = vld [vmem:[#allocation4 + $0x908] sm:$0xff]
    %v5439 = vld [vmem:[#allocation4 + $0x910] sm:$0xff]
    %v5440 = vld [vmem:[#allocation4 + $0x918] sm:$0xff]
    %v5441 = vld [vmem:[#allocation4 + $0x934] sm:$0xff]
    %v5442 = vld [vmem:[#allocation4 + $0x93c] sm:$0xff]
    %v5443 = vld [vmem:[#allocation4 + $0x944] sm:$0xff]
    %v5444 = vld [vmem:[#allocation4 + $0x94c] sm:$0xff]
    %v5445 = vld [vmem:[#allocation4 + $0x968] sm:$0xff]
    %v5446 = vld [vmem:[#allocation4 + $0x970] sm:$0xff]
    %v5447 = vld [vmem:[#allocation4 + $0x978] sm:$0xff]
    %v5448 = vld [vmem:[#allocation4 + $0x980] sm:$0xff]
    %v5449 = vld [vmem:[#allocation4 + $0x99c] sm:$0xff]
    %v5450 = vld [vmem:[#allocation4 + $0x9a4] sm:$0xff]
    %v5451 = vld [vmem:[#allocation4 + $0x9ac] sm:$0xff]
    %v5452 = vld [vmem:[#allocation4 + $0x9b4] sm:$0xff]
    %v5453 = vld [vmem:[#allocation4 + $0x9d0] sm:$0xff]
    %v5454 = vld [vmem:[#allocation4 + $0x9d8] sm:$0xff]
    %v5455 = vld [vmem:[#allocation4 + $0x9e0] sm:$0xff]
    %v5456 = vld [vmem:[#allocation4 + $0x9e8] sm:$0xff]
    %v5457 = vld [vmem:[#allocation4 + $0xa04] sm:$0xff]
    %v5458 = vld [vmem:[#allocation4 + $0xa0c] sm:$0xff]
    %v5459 = vld [vmem:[#allocation4 + $0xa14] sm:$0xff]
    %v5460 = vld [vmem:[#allocation4 + $0xa1c] sm:$0xff]
    %v5461 = vld [vmem:[#allocation4 + $0xa38] sm:$0xff]
    %v5462 = vld [vmem:[#allocation4 + $0xa40] sm:$0xff]
    %v5463 = vld [vmem:[#allocation4 + $0xa48] sm:$0xff]
    %v5464 = vld [vmem:[#allocation4 + $0xa50] sm:$0xff]
    %v5465 = vld [vmem:[#allocation4 + $0xa6c] sm:$0xff]
    %v5466 = vld [vmem:[#allocation4 + $0xa74] sm:$0xff]
    %v5467 = vld [vmem:[#allocation4 + $0xa7c] sm:$0xff]
    %v5468 = vld [vmem:[#allocation4 + $0xa84] sm:$0xff]
    %v5469 = vld [vmem:[#allocation4 + $0xaa0] sm:$0xff]
    %v5470 = vld [vmem:[#allocation4 + $0xaa8] sm:$0xff]
    %v5471 = vld [vmem:[#allocation4 + $0xab0] sm:$0xff]
    %v5472 = vld [vmem:[#allocation4 + $0xab8] sm:$0xff]
    %v5473 = vld [vmem:[#allocation4 + $0xad4] sm:$0xff]
    %v5474 = vld [vmem:[#allocation4 + $0xadc] sm:$0xff]
    %v5475 = vld [vmem:[#allocation4 + $0xae4] sm:$0xff]
    %v5476 = vld [vmem:[#allocation4 + $0xaec] sm:$0xff]
    %v5477 = vld [vmem:[#allocation4 + $0xb08] sm:$0xff]
    %v5478 = vld [vmem:[#allocation4 + $0xb10] sm:$0xff]
    %v5479 = vld [vmem:[#allocation4 + $0xb18] sm:$0xff]
    %v5480 = vld [vmem:[#allocation4 + $0xb20] sm:$0xff]
    %v5481 = vld [vmem:[#allocation4 + $0xb3c] sm:$0xff]
    %v5482 = vld [vmem:[#allocation4 + $0xb44] sm:$0xff]
    %v5483 = vld [vmem:[#allocation4 + $0xb4c] sm:$0xff]
    %v5484 = vld [vmem:[#allocation4 + $0xb54] sm:$0xff]
    %v5485 = vld [vmem:[#allocation4 + $0xb70] sm:$0xff]
    %v5486 = vld [vmem:[#allocation4 + $0xb78] sm:$0xff]
    %v5487 = vld [vmem:[#allocation4 + $0xb80] sm:$0xff]
    %v5488 = vld [vmem:[#allocation4 + $0xb88] sm:$0xff]
    %v5489 = vld [vmem:[#allocation4 + $0xba4] sm:$0xff]
    %v5490 = vld [vmem:[#allocation4 + $0xbac] sm:$0xff]
    %v5491 = vld [vmem:[#allocation4 + $0xbb4] sm:$0xff]
    %v5492 = vld [vmem:[#allocation4 + $0xbbc] sm:$0xff]
    %v5493 = vld [vmem:[#allocation4 + $0xbd8] sm:$0xff]
    %v5494 = vld [vmem:[#allocation4 + $0xbe0] sm:$0xff]
    %v5495 = vld [vmem:[#allocation4 + $0xbe8] sm:$0xff]
    %v5496 = vld [vmem:[#allocation4 + $0xbf0] sm:$0xff]
    %v5497 = vld [vmem:[#allocation4 + $0xc0c] sm:$0xff]
    %v5498 = vld [vmem:[#allocation4 + $0xc14] sm:$0xff]
    %v5499 = vld [vmem:[#allocation4 + $0xc1c] sm:$0xff]
    %v5500 = vld [vmem:[#allocation4 + $0xc24] sm:$0xff]
    %v5501 = vld [vmem:[#allocation4 + $0xc40] sm:$0xff]
    %v5502 = vld [vmem:[#allocation4 + $0xc48] sm:$0xff]
    %v5503 = vld [vmem:[#allocation4 + $0xc50] sm:$0xff]
    %v5504 = vld [vmem:[#allocation4 + $0xc58] sm:$0xff]
    %v5505 = vld [vmem:[#allocation4 + $0xc74] sm:$0xff]
    %v5506 = vld [vmem:[#allocation4 + $0xc7c] sm:$0xff]
    %v5507 = vld [vmem:[#allocation4 + $0xc84] sm:$0xff]
    %v5508 = vld [vmem:[#allocation4 + $0xc8c] sm:$0xff]
    %v5509 = vld [vmem:[#allocation4 + $0xca8] sm:$0xff]
    %v5510 = vld [vmem:[#allocation4 + $0xcb0] sm:$0xff]
    %v5511 = vld [vmem:[#allocation4 + $0xcb8] sm:$0xff]
    %v5512 = vld [vmem:[#allocation4 + $0xcc0] sm:$0xff]
    %v5513 = vld [vmem:[#allocation4 + $0xcdc] sm:$0xff]
    %v5514 = vld [vmem:[#allocation4 + $0xce4] sm:$0xff]
    %v5515 = vld [vmem:[#allocation4 + $0xcec] sm:$0xff]
    %v5516 = vld [vmem:[#allocation4 + $0xcf4] sm:$0xff]
    %v5517 = vld [vmem:[#allocation4 + $0xd10] sm:$0xff]
    %v5518 = vld [vmem:[#allocation4 + $0xd18] sm:$0xff]
    %v5519 = vld [vmem:[#allocation4 + $0xd20] sm:$0xff]
    %v5520 = vld [vmem:[#allocation4 + $0xd28] sm:$0xff]
    %v5521 = vld [vmem:[#allocation4 + $0xd44] sm:$0xff]
    %v5522 = vld [vmem:[#allocation4 + $0xd4c] sm:$0xff]
    %v5523 = vld [vmem:[#allocation4 + $0xd54] sm:$0xff]
    %v5524 = vld [vmem:[#allocation4 + $0xd5c] sm:$0xff]
    %v5525 = vld [vmem:[#allocation4 + $0xd78] sm:$0xff]
    %v5526 = vld [vmem:[#allocation4 + $0xd80] sm:$0xff]
    %v5527 = vld [vmem:[#allocation4 + $0xd88] sm:$0xff]
    %v5528 = vld [vmem:[#allocation4 + $0xd90] sm:$0xff]
    %v5529 = vld [vmem:[#allocation4 + $0xdac] sm:$0xff]
    %v5530 = vld [vmem:[#allocation4 + $0xdb4] sm:$0xff]
    %v5531 = vld [vmem:[#allocation4 + $0xdbc] sm:$0xff]
    %v5532 = vld [vmem:[#allocation4 + $0xdc4] sm:$0xff]
    %v5533 = vld [vmem:[#allocation4 + $0xde0] sm:$0xff]
    %v5534 = vld [vmem:[#allocation4 + $0xde8] sm:$0xff]
    %v5535 = vld [vmem:[#allocation4 + $0xdf0] sm:$0xff]
    %v5536 = vld [vmem:[#allocation4 + $0xdf8] sm:$0xff]
    %v5537 = vld [vmem:[#allocation4 + $0xe14] sm:$0xff]
    %v5538 = vld [vmem:[#allocation4 + $0xe1c] sm:$0xff]
    %v5539 = vld [vmem:[#allocation4 + $0xe24] sm:$0xff]
    %v5540 = vld [vmem:[#allocation4 + $0xe2c] sm:$0xff]
    %v5541 = vld [vmem:[#allocation4 + $0xe48] sm:$0xff]
    %v5542 = vld [vmem:[#allocation4 + $0xe50] sm:$0xff]
    %v5543 = vld [vmem:[#allocation4 + $0xe58] sm:$0xff]
    %v5544 = vld [vmem:[#allocation4 + $0xe60] sm:$0xff]
    %v5545 = vld [vmem:[#allocation4 + $0xe7c] sm:$0xff]
    %v5546 = vld [vmem:[#allocation4 + $0xe84] sm:$0xff]
    %v5547 = vld [vmem:[#allocation4 + $0xe8c] sm:$0xff]
    %v5548 = vld [vmem:[#allocation4 + $0xe94] sm:$0xff]
    %v5549 = vld [vmem:[#allocation4 + $0xeb0] sm:$0xff]
    %v5550 = vld [vmem:[#allocation4 + $0xeb8] sm:$0xff]
    %v5551 = vld [vmem:[#allocation4 + $0xec0] sm:$0xff]
    %v5552 = vld [vmem:[#allocation4 + $0xec8] sm:$0xff]
    %v5553 = vld [vmem:[#allocation4 + $0xee4] sm:$0xff]
    %v5554 = vld [vmem:[#allocation4 + $0xeec] sm:$0xff]
    %v5555 = vld [vmem:[#allocation4 + $0xef4] sm:$0xff]
    %v5556 = vld [vmem:[#allocation4 + $0xefc] sm:$0xff]
    %v5557 = vld [vmem:[#allocation4 + $0xf18] sm:$0xff]
    %v5558 = vld [vmem:[#allocation4 + $0xf20] sm:$0xff]
    %v5559 = vld [vmem:[#allocation4 + $0xf28] sm:$0xff]
    %v5560 = vld [vmem:[#allocation4 + $0xf30] sm:$0xff]
    %v5561 = vld [vmem:[#allocation4 + $0xf4c] sm:$0xff]
    %v5562 = vld [vmem:[#allocation4 + $0xf54] sm:$0xff]
    %v5563 = vld [vmem:[#allocation4 + $0xf5c] sm:$0xff]
    %v5564 = vld [vmem:[#allocation4 + $0xf64] sm:$0xff]
    %v5565 = vld [vmem:[#allocation4 + $0xf80] sm:$0xff]
    %v5566 = vld [vmem:[#allocation4 + $0xf88] sm:$0xff]
    %v5567 = vld [vmem:[#allocation4 + $0xf90] sm:$0xff]
    %v5568 = vld [vmem:[#allocation4 + $0xf98] sm:$0xff]
    %v5569 = vld [vmem:[#allocation4 + $0xfb4] sm:$0xff]
    %v5570 = vld [vmem:[#allocation4 + $0xfbc] sm:$0xff]
    %v5571 = vld [vmem:[#allocation4 + $0xfc4] sm:$0xff]
    %v5572 = vld [vmem:[#allocation4 + $0xfcc] sm:$0xff]
    %v5573 = vld [vmem:[#allocation4 + $0xfe8] sm:$0xff]
    %v5574 = vld [vmem:[#allocation4 + $0xff0] sm:$0xff]
    %v5575 = vld [vmem:[#allocation4 + $0xff8] sm:$0xff]
    %v5576 = vld [vmem:[#allocation4 + $0x1000] sm:$0xff]
    %v5577 = vld [vmem:[#allocation4 + $0x101c] sm:$0xff]
    %v5578 = vld [vmem:[#allocation4 + $0x1024] sm:$0xff]
    %v5579 = vld [vmem:[#allocation4 + $0x102c] sm:$0xff]
    %v5580 = vld [vmem:[#allocation4 + $0x1034] sm:$0xff]
    %v5581 = vld [vmem:[#allocation4 + $0x1050] sm:$0xff]
    %v5582 = vld [vmem:[#allocation4 + $0x1058] sm:$0xff]
    %v5583 = vld [vmem:[#allocation4 + $0x1060] sm:$0xff]
    %v5584 = vld [vmem:[#allocation4 + $0x1068] sm:$0xff]
    %v5585 = vld [vmem:[#allocation4 + $0x1084] sm:$0xff]
    %v5586 = vld [vmem:[#allocation4 + $0x108c] sm:$0xff]
    %v5587 = vld [vmem:[#allocation4 + $0x1094] sm:$0xff]
    %v5588 = vld [vmem:[#allocation4 + $0x109c] sm:$0xff]
    %v5589 = vld [vmem:[#allocation4 + $0x10b8] sm:$0xff]
    %v5590 = vld [vmem:[#allocation4 + $0x10c0] sm:$0xff]
    %v5591 = vld [vmem:[#allocation4 + $0x10c8] sm:$0xff]
    %v5592 = vld [vmem:[#allocation4 + $0x10d0] sm:$0xff]
    %v5593 = vld [vmem:[#allocation4 + $0x10ec] sm:$0xff]
    %v5594 = vld [vmem:[#allocation4 + $0x10f4] sm:$0xff]
    %v5595 = vld [vmem:[#allocation4 + $0x10fc] sm:$0xff]
    %v5596 = vld [vmem:[#allocation4 + $0x1104] sm:$0xff]
    %v5597 = vld [vmem:[#allocation4 + $0x1120] sm:$0xff]
    %v5598 = vld [vmem:[#allocation4 + $0x1128] sm:$0xff]
    %v5599 = vld [vmem:[#allocation4 + $0x1130] sm:$0xff]
    %v5600 = vld [vmem:[#allocation4 + $0x1138] sm:$0xff]
    %v5601 = vld [vmem:[#allocation4 + $0x1154] sm:$0xff]
    %v5602 = vld [vmem:[#allocation4 + $0x115c] sm:$0xff]
    %v5603 = vld [vmem:[#allocation4 + $0x1164] sm:$0xff]
    %v5604 = vld [vmem:[#allocation4 + $0x116c] sm:$0xff]
    %v5605 = vld [vmem:[#allocation4 + $0x1188] sm:$0xff]
    %v5606 = vld [vmem:[#allocation4 + $0x1190] sm:$0xff]
    %v5607 = vld [vmem:[#allocation4 + $0x1198] sm:$0xff]
    %v5608 = vld [vmem:[#allocation4 + $0x11a0] sm:$0xff]
    %v5609 = vld [vmem:[#allocation4 + $0x11bc] sm:$0xff]
    %v5610 = vld [vmem:[#allocation4 + $0x11c4] sm:$0xff]
    %v5611 = vld [vmem:[#allocation4 + $0x11cc] sm:$0xff]
    %v5612 = vld [vmem:[#allocation4 + $0x11d4] sm:$0xff]
    %v5613 = vld [vmem:[#allocation4 + $0x11f0] sm:$0xff]
    %v5614 = vld [vmem:[#allocation4 + $0x11f8] sm:$0xff]
    %v5615 = vld [vmem:[#allocation4 + $0x1200] sm:$0xff]
    %v5616 = vld [vmem:[#allocation4 + $0x1208] sm:$0xff]
    %v5617 = vld [vmem:[#allocation4 + $0x1224] sm:$0xff]
    %v5618 = vld [vmem:[#allocation4 + $0x122c] sm:$0xff]
    %v5619 = vld [vmem:[#allocation4 + $0x1234] sm:$0xff]
    %v5620 = vld [vmem:[#allocation4 + $0x123c] sm:$0xff]
    %v5621 = vld [vmem:[#allocation4 + $0x1258] sm:$0xff]
    %v5622 = vld [vmem:[#allocation4 + $0x1260] sm:$0xff]
    %v5623 = vld [vmem:[#allocation4 + $0x1268] sm:$0xff]
    %v5624 = vld [vmem:[#allocation4 + $0x1270] sm:$0xff]
    %v5625 = vld [vmem:[#allocation4 + $0x128c] sm:$0xff]
    %v5626 = vld [vmem:[#allocation4 + $0x1294] sm:$0xff]
    %v5627 = vld [vmem:[#allocation4 + $0x129c] sm:$0xff]
    %v5628 = vld [vmem:[#allocation4 + $0x12a4] sm:$0xff]
    %v5629 = vld [vmem:[#allocation4 + $0x12c0] sm:$0xff]
    %v5630 = vld [vmem:[#allocation4 + $0x12c8] sm:$0xff]
    %v5631 = vld [vmem:[#allocation4 + $0x12d0] sm:$0xff]
    %v5632 = vld [vmem:[#allocation4 + $0x12d8] sm:$0xff]
    %v5633 = vld [vmem:[#allocation4 + $0x12f4] sm:$0xff]
    %v5634 = vld [vmem:[#allocation4 + $0x12fc] sm:$0xff]
    %v5635 = vld [vmem:[#allocation4 + $0x1304] sm:$0xff]
    %v5636 = vld [vmem:[#allocation4 + $0x130c] sm:$0xff]
    %v5637 = vld [vmem:[#allocation4 + $0x1328] sm:$0xff]
    %v5638 = vld [vmem:[#allocation4 + $0x1330] sm:$0xff]
    %v5639 = vld [vmem:[#allocation4 + $0x1338] sm:$0xff]
    %v5640 = vld [vmem:[#allocation4 + $0x1340] sm:$0xff]
    %v5641 = vld [vmem:[#allocation4 + $0x135c] sm:$0xff]
    %v5642 = vld [vmem:[#allocation4 + $0x1364] sm:$0xff]
    %v5643 = vld [vmem:[#allocation4 + $0x136c] sm:$0xff]
    %v5644 = vld [vmem:[#allocation4 + $0x1374] sm:$0xff]
    %v5645 = vld [vmem:[#allocation4 + $0x1390] sm:$0xff]
    %v5646 = vld [vmem:[#allocation4 + $0x1398] sm:$0xff]
    %v5647 = vld [vmem:[#allocation4 + $0x13a0] sm:$0xff]
    %v5648 = vld [vmem:[#allocation4 + $0x13a8] sm:$0xff]
    %v5649 = vld [vmem:[#allocation4 + $0x13c4] sm:$0xff]
    %v5650 = vld [vmem:[#allocation4 + $0x13cc] sm:$0xff]
    %v5651 = vld [vmem:[#allocation4 + $0x13d4] sm:$0xff]
    %v5652 = vld [vmem:[#allocation4 + $0x13dc] sm:$0xff]
    %v5653 = vld [vmem:[#allocation4 + $0x13f8] sm:$0xff]
    %v5654 = vld [vmem:[#allocation4 + $0x1400] sm:$0xff]
    %v5655 = vld [vmem:[#allocation4 + $0x1408] sm:$0xff]
    %v5656 = vld [vmem:[#allocation4 + $0x1410] sm:$0xff]
    %v5657 = vld [vmem:[#allocation4 + $0x142c] sm:$0xff]
    %v5658 = vld [vmem:[#allocation4 + $0x1434] sm:$0xff]
    %v5659 = vld [vmem:[#allocation4 + $0x143c] sm:$0xff]
    %v5660 = vld [vmem:[#allocation4 + $0x1444] sm:$0xff]
    %v5661 = vld [vmem:[#allocation4 + $0x1460] sm:$0xff]
    %v5662 = vld [vmem:[#allocation4 + $0x1468] sm:$0xff]
    %v5663 = vld [vmem:[#allocation4 + $0x1470] sm:$0xff]
    %v5664 = vld [vmem:[#allocation4 + $0x1478] sm:$0xff]
    %v5665 = vld [vmem:[#allocation4 + $0x1494] sm:$0xff]
    %v5666 = vld [vmem:[#allocation4 + $0x149c] sm:$0xff]
    %v5667 = vld [vmem:[#allocation4 + $0x14a4] sm:$0xff]
    %v5668 = vld [vmem:[#allocation4 + $0x14ac] sm:$0xff]
    %v5669 = vld [vmem:[#allocation4 + $0x14c8] sm:$0xff]
    %v5670 = vld [vmem:[#allocation4 + $0x14d0] sm:$0xff]
    %v5671 = vld [vmem:[#allocation4 + $0x14d8] sm:$0xff]
    %v5672 = vld [vmem:[#allocation4 + $0x14e0] sm:$0xff]
    %v5673 = vld [vmem:[#allocation4 + $0x14fc] sm:$0xff]
    %v5674 = vld [vmem:[#allocation4 + $0x1504] sm:$0xff]
    %v5675 = vld [vmem:[#allocation4 + $0x150c] sm:$0xff]
    %v5676 = vld [vmem:[#allocation4 + $0x1514] sm:$0xff]
    %v5677 = vld [vmem:[#allocation4 + $0x1530] sm:$0xff]
    %v5678 = vld [vmem:[#allocation4 + $0x1538] sm:$0xff]
    %v5679 = vld [vmem:[#allocation4 + $0x1540] sm:$0xff]
    %v5680 = vld [vmem:[#allocation4 + $0x1548] sm:$0xff]
    %v5681 = vld [vmem:[#allocation4 + $0x1564] sm:$0xff]
    %v5682 = vld [vmem:[#allocation4 + $0x156c] sm:$0xff]
    %v5683 = vld [vmem:[#allocation4 + $0x1574] sm:$0xff]
    %v5684 = vld [vmem:[#allocation4 + $0x157c] sm:$0xff]
    %v5685 = vld [vmem:[#allocation4 + $0x1598] sm:$0xff]
    %v5686 = vld [vmem:[#allocation4 + $0x15a0] sm:$0xff]
    %v5687 = vld [vmem:[#allocation4 + $0x15a8] sm:$0xff]
    %v5688 = vld [vmem:[#allocation4 + $0x15b0] sm:$0xff]
    %v5689 = vld [vmem:[#allocation4 + $0x15cc] sm:$0xff]
    %v5690 = vld [vmem:[#allocation4 + $0x15d4] sm:$0xff]
    %v5691 = vld [vmem:[#allocation4 + $0x15dc] sm:$0xff]
    %v5692 = vld [vmem:[#allocation4 + $0x15e4] sm:$0xff]
    %v5693 = vld [vmem:[#allocation4 + $0x1600] sm:$0xff]
    %v5694 = vld [vmem:[#allocation4 + $0x1608] sm:$0xff]
    %v5695 = vld [vmem:[#allocation4 + $0x1610] sm:$0xff]
    %v5696 = vld [vmem:[#allocation4 + $0x1618] sm:$0xff]
    %v5697 = vld [vmem:[#allocation4 + $0x1634] sm:$0xff]
    %v5698 = vld [vmem:[#allocation4 + $0x163c] sm:$0xff]
    %v5699 = vld [vmem:[#allocation4 + $0x1644] sm:$0xff]
    %v5700 = vld [vmem:[#allocation4 + $0x164c] sm:$0xff]
    %v5701 = vld [vmem:[#allocation4 + $0x1668] sm:$0xff]
    %v5702 = vld [vmem:[#allocation4 + $0x1670] sm:$0xff]
    %v5703 = vld [vmem:[#allocation4 + $0x1678] sm:$0xff]
    %v5704 = vld [vmem:[#allocation4 + $0x1680] sm:$0xff]
    %v5705 = vld [vmem:[#allocation4 + $0x169c] sm:$0xff]
    %v5706 = vld [vmem:[#allocation4 + $0x16a4] sm:$0xff]
    %v5707 = vld [vmem:[#allocation4 + $0x16ac] sm:$0xff]
    %v5708 = vld [vmem:[#allocation4 + $0x16b4] sm:$0xff]
    %v5709 = vld [vmem:[#allocation4 + $0x16d0] sm:$0xff]
    %v5710 = vld [vmem:[#allocation4 + $0x16d8] sm:$0xff]
    %v5711 = vld [vmem:[#allocation4 + $0x16e0] sm:$0xff]
    %v5712 = vld [vmem:[#allocation4 + $0x16e8] sm:$0xff]
    %v5713 = vld [vmem:[#allocation4 + $0x1704] sm:$0xff]
    %v5714 = vld [vmem:[#allocation4 + $0x170c] sm:$0xff]
    %v5715 = vld [vmem:[#allocation4 + $0x1714] sm:$0xff]
    %v5716 = vld [vmem:[#allocation4 + $0x171c] sm:$0xff]
    %v5717 = vld [vmem:[#allocation4 + $0x1738] sm:$0xff]
    %v5718 = vld [vmem:[#allocation4 + $0x1740] sm:$0xff]
    %v5719 = vld [vmem:[#allocation4 + $0x1748] sm:$0xff]
    %v5720 = vld [vmem:[#allocation4 + $0x1750] sm:$0xff]
    %v5721 = vld [vmem:[#allocation4 + $0x176c] sm:$0xff]
    %v5722 = vld [vmem:[#allocation4 + $0x1774] sm:$0xff]
    %v5723 = vld [vmem:[#allocation4 + $0x177c] sm:$0xff]
    %v5724 = vld [vmem:[#allocation4 + $0x1784] sm:$0xff]
    %v5725 = vld [vmem:[#allocation4 + $0x17a0] sm:$0xff]
    %v5726 = vld [vmem:[#allocation4 + $0x17a8] sm:$0xff]
    %v5727 = vld [vmem:[#allocation4 + $0x17b0] sm:$0xff]
    %v5728 = vld [vmem:[#allocation4 + $0x17b8] sm:$0xff]
    %v5729 = vld [vmem:[#allocation4 + $0x17d4] sm:$0xff]
    %v5730 = vld [vmem:[#allocation4 + $0x17dc] sm:$0xff]
    %v5731 = vld [vmem:[#allocation4 + $0x17e4] sm:$0xff]
    %v5732 = vld [vmem:[#allocation4 + $0x17ec] sm:$0xff]
    %v5733 = vld [vmem:[#allocation4 + $0x1808] sm:$0xff]
    %v5734 = vld [vmem:[#allocation4 + $0x1810] sm:$0xff]
    %v5735 = vld [vmem:[#allocation4 + $0x1818] sm:$0xff]
    %v5736 = vld [vmem:[#allocation4 + $0x1820] sm:$0xff]
    %v5737 = vld [vmem:[#allocation4 + $0x183c] sm:$0xff]
    %v5738 = vld [vmem:[#allocation4 + $0x1844] sm:$0xff]
    %v5739 = vld [vmem:[#allocation4 + $0x184c] sm:$0xff]
    %v5740 = vld [vmem:[#allocation4 + $0x1854] sm:$0xff]
    %v5741 = vld [vmem:[#allocation4 + $0x1870] sm:$0xff]
    %v5742 = vld [vmem:[#allocation4 + $0x1878] sm:$0xff]
    %v5743 = vld [vmem:[#allocation4 + $0x1880] sm:$0xff]
    %v5744 = vld [vmem:[#allocation4 + $0x1888] sm:$0xff]
    %v5745 = vld [vmem:[#allocation4 + $0x18a4] sm:$0xff]
    %v5746 = vld [vmem:[#allocation4 + $0x18ac] sm:$0xff]
    %v5747 = vld [vmem:[#allocation4 + $0x18b4] sm:$0xff]
    %v5748 = vld [vmem:[#allocation4 + $0x18bc] sm:$0xff]
    %v5749 = vld [vmem:[#allocation4 + $0x18d8] sm:$0xff]
    %v5750 = vld [vmem:[#allocation4 + $0x18e0] sm:$0xff]
    %v5751 = vld [vmem:[#allocation4 + $0x18e8] sm:$0xff]
    %v5752 = vld [vmem:[#allocation4 + $0x18f0] sm:$0xff]
    %v5753 = vld [vmem:[#allocation4 + $0x190c] sm:$0xff]
    %v5754 = vld [vmem:[#allocation4 + $0x1914] sm:$0xff]
    %v5755 = vld [vmem:[#allocation4 + $0x191c] sm:$0xff]
    %v5756 = vld [vmem:[#allocation4 + $0x1924] sm:$0xff]
    %v5757 = vld [vmem:[#allocation4 + $0x1940] sm:$0xff]
    %v5758 = vld [vmem:[#allocation4 + $0x1948] sm:$0xff]
    %v5759 = vld [vmem:[#allocation4 + $0x1950] sm:$0xff]
    %v5760 = vld [vmem:[#allocation4 + $0x1958] sm:$0xff]
    %v5761 = vld [vmem:[#allocation4 + $0x1974] sm:$0xff]
    %v5762 = vld [vmem:[#allocation4 + $0x197c] sm:$0xff]
    %v5763 = vld [vmem:[#allocation4 + $0x1984] sm:$0xff]
    %v5764 = vld [vmem:[#allocation4 + $0x198c] sm:$0xff]
    %v5765 = vld [vmem:[#allocation4 + $0x19a8] sm:$0xff]
    %v5766 = vld [vmem:[#allocation4 + $0x19b0] sm:$0xff]
    %v5767 = vld [vmem:[#allocation4 + $0x19b8] sm:$0xff]
    %v5768 = vld [vmem:[#allocation4 + $0x19c0] sm:$0xff]
    %v5769 = vld [vmem:[#allocation4 + $0x19dc] sm:$0xff]
    %v5770 = vld [vmem:[#allocation4 + $0x19e4] sm:$0xff]
    %v5771 = vld [vmem:[#allocation4 + $0x19ec] sm:$0xff]
    %v5772 = vld [vmem:[#allocation4 + $0x19f4] sm:$0xff]
    %s5773 = scalar_lea.vmem [#allocation2], 7
    %v5774 = vld [vmem:[%s5773] ss:$8 sm:$0xf]
    %v5775 = vld [vmem:[%s5773] ss:$8 sm:$0xf0]
    %v5776 = vor.u32 %v5774, %v5775
    %v5778 = vlaneseq
    %v5779 = vshrl.u32 %v5778, 7
    %v5780 = vsub.s32 0, %v5779
    %v5781 = vrot.slane %v5776, %v5780
    %v5782 = vlaneseq
    %v5783 = vshrl.u32 %v5782, 7
    %v5784 = vsub.s32 1, %v5783
    %v5785 = vrot.slane %v5776, %v5784
    %v5786 = vlaneseq
    %v5787 = vshrl.u32 %v5786, 7
    %v5788 = vsub.s32 2, %v5787
    %v5789 = vrot.slane %v5776, %v5788
    %v5790 = vlaneseq
    %v5791 = vshrl.u32 %v5790, 7
    %v5792 = vsub.s32 3, %v5791
    %v5793 = vrot.slane %v5776, %v5792
    %v5794 = vlaneseq
    %v5795 = vshrl.u32 %v5794, 7
    %v5796 = vsub.s32 4, %v5795
    %v5797 = vrot.slane %v5776, %v5796
    %v5798 = vlaneseq
    %v5799 = vshrl.u32 %v5798, 7
    %v5800 = vsub.s32 5, %v5799
    %v5801 = vrot.slane %v5776, %v5800
    %v5802 = vlaneseq
    %v5803 = vshrl.u32 %v5802, 7
    %v5804 = vsub.s32 6, %v5803
    %v5805 = vrot.slane %v5776, %v5804
    %v5806 = vlaneseq
    %v5807 = vshrl.u32 %v5806, 7
    %v5808 = vsub.s32 7, %v5807
    %v5809 = vrot.slane %v5776, %v5808
    %v6330 = vunpack.c.l.b16 %v5261
    %v6331 = vunpack.c.h.b16 %v5261
    %v6332 = vunpack.c.l.b16 %v5262
    %v6333 = vunpack.c.h.b16 %v5262
    %v6334 = vunpack.c.l.b16 %v5263
    %v6335 = vunpack.c.h.b16 %v5263
    %v6336 = vunpack.c.l.b16 %v5264
    %v6337 = vunpack.c.h.b16 %v5264
    %v6338 = vunpack.c.l.b16 %v5265
    %v6339 = vunpack.c.h.b16 %v5265
    %v6340 = vunpack.c.l.b16 %v5266
    %v6341 = vunpack.c.h.b16 %v5266
    %v6342 = vunpack.c.l.b16 %v5267
    %v6343 = vunpack.c.h.b16 %v5267
    %v6344 = vunpack.c.l.b16 %v5268
    %v6345 = vunpack.c.h.b16 %v5268
    %v6346 = vunpack.c.l.b16 %v5269
    %v6347 = vunpack.c.h.b16 %v5269
    %v6348 = vunpack.c.l.b16 %v5270
    %v6349 = vunpack.c.h.b16 %v5270
    %v6350 = vunpack.c.l.b16 %v5271
    %v6351 = vunpack.c.h.b16 %v5271
    %v6352 = vunpack.c.l.b16 %v5272
    %v6353 = vunpack.c.h.b16 %v5272
    %v6354 = vunpack.c.l.b16 %v5273
    %v6355 = vunpack.c.h.b16 %v5273
    %v6356 = vunpack.c.l.b16 %v5274
    %v6357 = vunpack.c.h.b16 %v5274
    %v6358 = vunpack.c.l.b16 %v5275
    %v6359 = vunpack.c.h.b16 %v5275
    %v6360 = vunpack.c.l.b16 %v5276
    %v6361 = vunpack.c.h.b16 %v5276
    %v6362 = vunpack.c.l.b16 %v5277
    %v6363 = vunpack.c.h.b16 %v5277
    %v6364 = vunpack.c.l.b16 %v5278
    %v6365 = vunpack.c.h.b16 %v5278
    %v6366 = vunpack.c.l.b16 %v5279
    %v6367 = vunpack.c.h.b16 %v5279
    %v6368 = vunpack.c.l.b16 %v5280
    %v6369 = vunpack.c.h.b16 %v5280
    %v6370 = vunpack.c.l.b16 %v5281
    %v6371 = vunpack.c.h.b16 %v5281
    %v6372 = vunpack.c.l.b16 %v5282
    %v6373 = vunpack.c.h.b16 %v5282
    %v6374 = vunpack.c.l.b16 %v5283
    %v6375 = vunpack.c.h.b16 %v5283
    %v6376 = vunpack.c.l.b16 %v5284
    %v6377 = vunpack.c.h.b16 %v5284
    %v6378 = vunpack.c.l.b16 %v5285
    %v6379 = vunpack.c.h.b16 %v5285
    %v6380 = vunpack.c.l.b16 %v5286
    %v6381 = vunpack.c.h.b16 %v5286
    %v6382 = vunpack.c.l.b16 %v5287
    %v6383 = vunpack.c.h.b16 %v5287
    %v6384 = vunpack.c.l.b16 %v5288
    %v6385 = vunpack.c.h.b16 %v5288
    %v6386 = vunpack.c.l.b16 %v5289
    %v6387 = vunpack.c.h.b16 %v5289
    %v6388 = vunpack.c.l.b16 %v5290
    %v6389 = vunpack.c.h.b16 %v5290
    %v6390 = vunpack.c.l.b16 %v5291
    %v6391 = vunpack.c.h.b16 %v5291
    %v6392 = vunpack.c.l.b16 %v5292
    %v6393 = vunpack.c.h.b16 %v5292
    %v6394 = vunpack.c.l.b16 %v5293
    %v6395 = vunpack.c.h.b16 %v5293
    %v6396 = vunpack.c.l.b16 %v5294
    %v6397 = vunpack.c.h.b16 %v5294
    %v6398 = vunpack.c.l.b16 %v5295
    %v6399 = vunpack.c.h.b16 %v5295
    %v6400 = vunpack.c.l.b16 %v5296
    %v6401 = vunpack.c.h.b16 %v5296
    %v6402 = vunpack.c.l.b16 %v5297
    %v6403 = vunpack.c.h.b16 %v5297
    %v6404 = vunpack.c.l.b16 %v5298
    %v6405 = vunpack.c.h.b16 %v5298
    %v6406 = vunpack.c.l.b16 %v5299
    %v6407 = vunpack.c.h.b16 %v5299
    %v6408 = vunpack.c.l.b16 %v5300
    %v6409 = vunpack.c.h.b16 %v5300
    %v6410 = vunpack.c.l.b16 %v5301
    %v6411 = vunpack.c.h.b16 %v5301
    %v6412 = vunpack.c.l.b16 %v5302
    %v6413 = vunpack.c.h.b16 %v5302
    %v6414 = vunpack.c.l.b16 %v5303
    %v6415 = vunpack.c.h.b16 %v5303
    %v6416 = vunpack.c.l.b16 %v5304
    %v6417 = vunpack.c.h.b16 %v5304
    %v6418 = vunpack.c.l.b16 %v5305
    %v6419 = vunpack.c.h.b16 %v5305
    %v6420 = vunpack.c.l.b16 %v5306
    %v6421 = vunpack.c.h.b16 %v5306
    %v6422 = vunpack.c.l.b16 %v5307
    %v6423 = vunpack.c.h.b16 %v5307
    %v6424 = vunpack.c.l.b16 %v5308
    %v6425 = vunpack.c.h.b16 %v5308
    %v6426 = vunpack.c.l.b16 %v5309
    %v6427 = vunpack.c.h.b16 %v5309
    %v6428 = vunpack.c.l.b16 %v5310
    %v6429 = vunpack.c.h.b16 %v5310
    %v6430 = vunpack.c.l.b16 %v5311
    %v6431 = vunpack.c.h.b16 %v5311
    %v6432 = vunpack.c.l.b16 %v5312
    %v6433 = vunpack.c.h.b16 %v5312
    %v6434 = vunpack.c.l.b16 %v5313
    %v6435 = vunpack.c.h.b16 %v5313
    %v6436 = vunpack.c.l.b16 %v5314
    %v6437 = vunpack.c.h.b16 %v5314
    %v6438 = vunpack.c.l.b16 %v5315
    %v6439 = vunpack.c.h.b16 %v5315
    %v6440 = vunpack.c.l.b16 %v5316
    %v6441 = vunpack.c.h.b16 %v5316
    %v6442 = vunpack.c.l.b16 %v5317
    %v6443 = vunpack.c.h.b16 %v5317
    %v6444 = vunpack.c.l.b16 %v5318
    %v6445 = vunpack.c.h.b16 %v5318
    %v6446 = vunpack.c.l.b16 %v5319
    %v6447 = vunpack.c.h.b16 %v5319
    %v6448 = vunpack.c.l.b16 %v5320
    %v6449 = vunpack.c.h.b16 %v5320
    %v6450 = vunpack.c.l.b16 %v5321
    %v6451 = vunpack.c.h.b16 %v5321
    %v6452 = vunpack.c.l.b16 %v5322
    %v6453 = vunpack.c.h.b16 %v5322
    %v6454 = vunpack.c.l.b16 %v5323
    %v6455 = vunpack.c.h.b16 %v5323
    %v6456 = vunpack.c.l.b16 %v5324
    %v6457 = vunpack.c.h.b16 %v5324
    %v6458 = vunpack.c.l.b16 %v5325
    %v6459 = vunpack.c.h.b16 %v5325
    %v6460 = vunpack.c.l.b16 %v5326
    %v6461 = vunpack.c.h.b16 %v5326
    %v6462 = vunpack.c.l.b16 %v5327
    %v6463 = vunpack.c.h.b16 %v5327
    %v6464 = vunpack.c.l.b16 %v5328
    %v6465 = vunpack.c.h.b16 %v5328
    %v6466 = vunpack.c.l.b16 %v5329
    %v6467 = vunpack.c.h.b16 %v5329
    %v6468 = vunpack.c.l.b16 %v5330
    %v6469 = vunpack.c.h.b16 %v5330
    %v6470 = vunpack.c.l.b16 %v5331
    %v6471 = vunpack.c.h.b16 %v5331
    %v6472 = vunpack.c.l.b16 %v5332
    %v6473 = vunpack.c.h.b16 %v5332
    %v6474 = vunpack.c.l.b16 %v5333
    %v6475 = vunpack.c.h.b16 %v5333
    %v6476 = vunpack.c.l.b16 %v5334
    %v6477 = vunpack.c.h.b16 %v5334
    %v6478 = vunpack.c.l.b16 %v5335
    %v6479 = vunpack.c.h.b16 %v5335
    %v6480 = vunpack.c.l.b16 %v5336
    %v6481 = vunpack.c.h.b16 %v5336
    %v6482 = vunpack.c.l.b16 %v5337
    %v6483 = vunpack.c.h.b16 %v5337
    %v6484 = vunpack.c.l.b16 %v5338
    %v6485 = vunpack.c.h.b16 %v5338
    %v6486 = vunpack.c.l.b16 %v5339
    %v6487 = vunpack.c.h.b16 %v5339
    %v6488 = vunpack.c.l.b16 %v5340
    %v6489 = vunpack.c.h.b16 %v5340
    %v6490 = vunpack.c.l.b16 %v5341
    %v6491 = vunpack.c.h.b16 %v5341
    %v6492 = vunpack.c.l.b16 %v5342
    %v6493 = vunpack.c.h.b16 %v5342
    %v6494 = vunpack.c.l.b16 %v5343
    %v6495 = vunpack.c.h.b16 %v5343
    %v6496 = vunpack.c.l.b16 %v5344
    %v6497 = vunpack.c.h.b16 %v5344
    %v6498 = vunpack.c.l.b16 %v5345
    %v6499 = vunpack.c.h.b16 %v5345
    %v6500 = vunpack.c.l.b16 %v5346
    %v6501 = vunpack.c.h.b16 %v5346
    %v6502 = vunpack.c.l.b16 %v5347
    %v6503 = vunpack.c.h.b16 %v5347
    %v6504 = vunpack.c.l.b16 %v5348
    %v6505 = vunpack.c.h.b16 %v5348
    %v6506 = vunpack.c.l.b16 %v5349
    %v6507 = vunpack.c.h.b16 %v5349
    %v6508 = vunpack.c.l.b16 %v5350
    %v6509 = vunpack.c.h.b16 %v5350
    %v6510 = vunpack.c.l.b16 %v5351
    %v6511 = vunpack.c.h.b16 %v5351
    %v6512 = vunpack.c.l.b16 %v5352
    %v6513 = vunpack.c.h.b16 %v5352
    %v6514 = vunpack.c.l.b16 %v5353
    %v6515 = vunpack.c.h.b16 %v5353
    %v6516 = vunpack.c.l.b16 %v5354
    %v6517 = vunpack.c.h.b16 %v5354
    %v6518 = vunpack.c.l.b16 %v5355
    %v6519 = vunpack.c.h.b16 %v5355
    %v6520 = vunpack.c.l.b16 %v5356
    %v6521 = vunpack.c.h.b16 %v5356
    %v6522 = vunpack.c.l.b16 %v5357
    %v6523 = vunpack.c.h.b16 %v5357
    %v6524 = vunpack.c.l.b16 %v5358
    %v6525 = vunpack.c.h.b16 %v5358
    %v6526 = vunpack.c.l.b16 %v5359
    %v6527 = vunpack.c.h.b16 %v5359
    %v6528 = vunpack.c.l.b16 %v5360
    %v6529 = vunpack.c.h.b16 %v5360
    %v6530 = vunpack.c.l.b16 %v5361
    %v6531 = vunpack.c.h.b16 %v5361
    %v6532 = vunpack.c.l.b16 %v5362
    %v6533 = vunpack.c.h.b16 %v5362
    %v6534 = vunpack.c.l.b16 %v5363
    %v6535 = vunpack.c.h.b16 %v5363
    %v6536 = vunpack.c.l.b16 %v5364
    %v6537 = vunpack.c.h.b16 %v5364
    %v6538 = vunpack.c.l.b16 %v5365
    %v6539 = vunpack.c.h.b16 %v5365
    %v6540 = vunpack.c.l.b16 %v5366
    %v6541 = vunpack.c.h.b16 %v5366
    %v6542 = vunpack.c.l.b16 %v5367
    %v6543 = vunpack.c.h.b16 %v5367
    %v6544 = vunpack.c.l.b16 %v5368
    %v6545 = vunpack.c.h.b16 %v5368
    %v6546 = vunpack.c.l.b16 %v5369
    %v6547 = vunpack.c.h.b16 %v5369
    %v6548 = vunpack.c.l.b16 %v5370
    %v6549 = vunpack.c.h.b16 %v5370
    %v6550 = vunpack.c.l.b16 %v5371
    %v6551 = vunpack.c.h.b16 %v5371
    %v6552 = vunpack.c.l.b16 %v5372
    %v6553 = vunpack.c.h.b16 %v5372
    %v6554 = vunpack.c.l.b16 %v5373
    %v6555 = vunpack.c.h.b16 %v5373
    %v6556 = vunpack.c.l.b16 %v5374
    %v6557 = vunpack.c.h.b16 %v5374
    %v6558 = vunpack.c.l.b16 %v5375
    %v6559 = vunpack.c.h.b16 %v5375
    %v6560 = vunpack.c.l.b16 %v5376
    %v6561 = vunpack.c.h.b16 %v5376
    %v6562 = vunpack.c.l.b16 %v5377
    %v6563 = vunpack.c.h.b16 %v5377
    %v6564 = vunpack.c.l.b16 %v5378
    %v6565 = vunpack.c.h.b16 %v5378
    %v6566 = vunpack.c.l.b16 %v5379
    %v6567 = vunpack.c.h.b16 %v5379
    %v6568 = vunpack.c.l.b16 %v5380
    %v6569 = vunpack.c.h.b16 %v5380
    %v6570 = vunpack.c.l.b16 %v5381
    %v6571 = vunpack.c.h.b16 %v5381
    %v6572 = vunpack.c.l.b16 %v5382
    %v6573 = vunpack.c.h.b16 %v5382
    %v6574 = vunpack.c.l.b16 %v5383
    %v6575 = vunpack.c.h.b16 %v5383
    %v6576 = vunpack.c.l.b16 %v5384
    %v6577 = vunpack.c.h.b16 %v5384
    %v6578 = vunpack.c.l.b16 %v5385
    %v6579 = vunpack.c.h.b16 %v5385
    %v6580 = vunpack.c.l.b16 %v5386
    %v6581 = vunpack.c.h.b16 %v5386
    %v6582 = vunpack.c.l.b16 %v5387
    %v6583 = vunpack.c.h.b16 %v5387
    %v6584 = vunpack.c.l.b16 %v5388
    %v6585 = vunpack.c.h.b16 %v5388
    %v6586 = vunpack.c.l.b16 %v5389
    %v6587 = vunpack.c.h.b16 %v5389
    %v6588 = vunpack.c.l.b16 %v5390
    %v6589 = vunpack.c.h.b16 %v5390
    %v6590 = vunpack.c.l.b16 %v5391
    %v6591 = vunpack.c.h.b16 %v5391
    %v6592 = vunpack.c.l.b16 %v5392
    %v6593 = vunpack.c.h.b16 %v5392
    %v6594 = vunpack.c.l.b16 %v5393
    %v6595 = vunpack.c.h.b16 %v5393
    %v6596 = vunpack.c.l.b16 %v5394
    %v6597 = vunpack.c.h.b16 %v5394
    %v6598 = vunpack.c.l.b16 %v5395
    %v6599 = vunpack.c.h.b16 %v5395
    %v6600 = vunpack.c.l.b16 %v5396
    %v6601 = vunpack.c.h.b16 %v5396
    %v6602 = vunpack.c.l.b16 %v5397
    %v6603 = vunpack.c.h.b16 %v5397
    %v6604 = vunpack.c.l.b16 %v5398
    %v6605 = vunpack.c.h.b16 %v5398
    %v6606 = vunpack.c.l.b16 %v5399
    %v6607 = vunpack.c.h.b16 %v5399
    %v6608 = vunpack.c.l.b16 %v5400
    %v6609 = vunpack.c.h.b16 %v5400
    %v6610 = vunpack.c.l.b16 %v5401
    %v6611 = vunpack.c.h.b16 %v5401
    %v6612 = vunpack.c.l.b16 %v5402
    %v6613 = vunpack.c.h.b16 %v5402
    %v6614 = vunpack.c.l.b16 %v5403
    %v6615 = vunpack.c.h.b16 %v5403
    %v6616 = vunpack.c.l.b16 %v5404
    %v6617 = vunpack.c.h.b16 %v5404
    %v6618 = vunpack.c.l.b16 %v5405
    %v6619 = vunpack.c.h.b16 %v5405
    %v6620 = vunpack.c.l.b16 %v5406
    %v6621 = vunpack.c.h.b16 %v5406
    %v6622 = vunpack.c.l.b16 %v5407
    %v6623 = vunpack.c.h.b16 %v5407
    %v6624 = vunpack.c.l.b16 %v5408
    %v6625 = vunpack.c.h.b16 %v5408
    %v6626 = vunpack.c.l.b16 %v5409
    %v6627 = vunpack.c.h.b16 %v5409
    %v6628 = vunpack.c.l.b16 %v5410
    %v6629 = vunpack.c.h.b16 %v5410
    %v6630 = vunpack.c.l.b16 %v5411
    %v6631 = vunpack.c.h.b16 %v5411
    %v6632 = vunpack.c.l.b16 %v5412
    %v6633 = vunpack.c.h.b16 %v5412
    %v6634 = vunpack.c.l.b16 %v5413
    %v6635 = vunpack.c.h.b16 %v5413
    %v6636 = vunpack.c.l.b16 %v5414
    %v6637 = vunpack.c.h.b16 %v5414
    %v6638 = vunpack.c.l.b16 %v5415
    %v6639 = vunpack.c.h.b16 %v5415
    %v6640 = vunpack.c.l.b16 %v5416
    %v6641 = vunpack.c.h.b16 %v5416
    %v6642 = vunpack.c.l.b16 %v5417
    %v6643 = vunpack.c.h.b16 %v5417
    %v6644 = vunpack.c.l.b16 %v5418
    %v6645 = vunpack.c.h.b16 %v5418
    %v6646 = vunpack.c.l.b16 %v5419
    %v6647 = vunpack.c.h.b16 %v5419
    %v6648 = vunpack.c.l.b16 %v5420
    %v6649 = vunpack.c.h.b16 %v5420
    %v6650 = vunpack.c.l.b16 %v5421
    %v6651 = vunpack.c.h.b16 %v5421
    %v6652 = vunpack.c.l.b16 %v5422
    %v6653 = vunpack.c.h.b16 %v5422
    %v6654 = vunpack.c.l.b16 %v5423
    %v6655 = vunpack.c.h.b16 %v5423
    %v6656 = vunpack.c.l.b16 %v5424
    %v6657 = vunpack.c.h.b16 %v5424
    %v6658 = vunpack.c.l.b16 %v5425
    %v6659 = vunpack.c.h.b16 %v5425
    %v6660 = vunpack.c.l.b16 %v5426
    %v6661 = vunpack.c.h.b16 %v5426
    %v6662 = vunpack.c.l.b16 %v5427
    %v6663 = vunpack.c.h.b16 %v5427
    %v6664 = vunpack.c.l.b16 %v5428
    %v6665 = vunpack.c.h.b16 %v5428
    %v6666 = vunpack.c.l.b16 %v5429
    %v6667 = vunpack.c.h.b16 %v5429
    %v6668 = vunpack.c.l.b16 %v5430
    %v6669 = vunpack.c.h.b16 %v5430
    %v6670 = vunpack.c.l.b16 %v5431
    %v6671 = vunpack.c.h.b16 %v5431
    %v6672 = vunpack.c.l.b16 %v5432
    %v6673 = vunpack.c.h.b16 %v5432
    %v6674 = vunpack.c.l.b16 %v5433
    %v6675 = vunpack.c.h.b16 %v5433
    %v6676 = vunpack.c.l.b16 %v5434
    %v6677 = vunpack.c.h.b16 %v5434
    %v6678 = vunpack.c.l.b16 %v5435
    %v6679 = vunpack.c.h.b16 %v5435
    %v6680 = vunpack.c.l.b16 %v5436
    %v6681 = vunpack.c.h.b16 %v5436
    %v6682 = vunpack.c.l.b16 %v5437
    %v6683 = vunpack.c.h.b16 %v5437
    %v6684 = vunpack.c.l.b16 %v5438
    %v6685 = vunpack.c.h.b16 %v5438
    %v6686 = vunpack.c.l.b16 %v5439
    %v6687 = vunpack.c.h.b16 %v5439
    %v6688 = vunpack.c.l.b16 %v5440
    %v6689 = vunpack.c.h.b16 %v5440
    %v6690 = vunpack.c.l.b16 %v5441
    %v6691 = vunpack.c.h.b16 %v5441
    %v6692 = vunpack.c.l.b16 %v5442
    %v6693 = vunpack.c.h.b16 %v5442
    %v6694 = vunpack.c.l.b16 %v5443
    %v6695 = vunpack.c.h.b16 %v5443
    %v6696 = vunpack.c.l.b16 %v5444
    %v6697 = vunpack.c.h.b16 %v5444
    %v6698 = vunpack.c.l.b16 %v5445
    %v6699 = vunpack.c.h.b16 %v5445
    %v6700 = vunpack.c.l.b16 %v5446
    %v6701 = vunpack.c.h.b16 %v5446
    %v6702 = vunpack.c.l.b16 %v5447
    %v6703 = vunpack.c.h.b16 %v5447
    %v6704 = vunpack.c.l.b16 %v5448
    %v6705 = vunpack.c.h.b16 %v5448
    %v6706 = vunpack.c.l.b16 %v5449
    %v6707 = vunpack.c.h.b16 %v5449
    %v6708 = vunpack.c.l.b16 %v5450
    %v6709 = vunpack.c.h.b16 %v5450
    %v6710 = vunpack.c.l.b16 %v5451
    %v6711 = vunpack.c.h.b16 %v5451
    %v6712 = vunpack.c.l.b16 %v5452
    %v6713 = vunpack.c.h.b16 %v5452
    %v6714 = vunpack.c.l.b16 %v5453
    %v6715 = vunpack.c.h.b16 %v5453
    %v6716 = vunpack.c.l.b16 %v5454
    %v6717 = vunpack.c.h.b16 %v5454
    %v6718 = vunpack.c.l.b16 %v5455
    %v6719 = vunpack.c.h.b16 %v5455
    %v6720 = vunpack.c.l.b16 %v5456
    %v6721 = vunpack.c.h.b16 %v5456
    %v6722 = vunpack.c.l.b16 %v5457
    %v6723 = vunpack.c.h.b16 %v5457
    %v6724 = vunpack.c.l.b16 %v5458
    %v6725 = vunpack.c.h.b16 %v5458
    %v6726 = vunpack.c.l.b16 %v5459
    %v6727 = vunpack.c.h.b16 %v5459
    %v6728 = vunpack.c.l.b16 %v5460
    %v6729 = vunpack.c.h.b16 %v5460
    %v6730 = vunpack.c.l.b16 %v5461
    %v6731 = vunpack.c.h.b16 %v5461
    %v6732 = vunpack.c.l.b16 %v5462
    %v6733 = vunpack.c.h.b16 %v5462
    %v6734 = vunpack.c.l.b16 %v5463
    %v6735 = vunpack.c.h.b16 %v5463
    %v6736 = vunpack.c.l.b16 %v5464
    %v6737 = vunpack.c.h.b16 %v5464
    %v6738 = vunpack.c.l.b16 %v5465
    %v6739 = vunpack.c.h.b16 %v5465
    %v6740 = vunpack.c.l.b16 %v5466
    %v6741 = vunpack.c.h.b16 %v5466
    %v6742 = vunpack.c.l.b16 %v5467
    %v6743 = vunpack.c.h.b16 %v5467
    %v6744 = vunpack.c.l.b16 %v5468
    %v6745 = vunpack.c.h.b16 %v5468
    %v6746 = vunpack.c.l.b16 %v5469
    %v6747 = vunpack.c.h.b16 %v5469
    %v6748 = vunpack.c.l.b16 %v5470
    %v6749 = vunpack.c.h.b16 %v5470
    %v6750 = vunpack.c.l.b16 %v5471
    %v6751 = vunpack.c.h.b16 %v5471
    %v6752 = vunpack.c.l.b16 %v5472
    %v6753 = vunpack.c.h.b16 %v5472
    %v6754 = vunpack.c.l.b16 %v5473
    %v6755 = vunpack.c.h.b16 %v5473
    %v6756 = vunpack.c.l.b16 %v5474
    %v6757 = vunpack.c.h.b16 %v5474
    %v6758 = vunpack.c.l.b16 %v5475
    %v6759 = vunpack.c.h.b16 %v5475
    %v6760 = vunpack.c.l.b16 %v5476
    %v6761 = vunpack.c.h.b16 %v5476
    %v6762 = vunpack.c.l.b16 %v5477
    %v6763 = vunpack.c.h.b16 %v5477
    %v6764 = vunpack.c.l.b16 %v5478
    %v6765 = vunpack.c.h.b16 %v5478
    %v6766 = vunpack.c.l.b16 %v5479
    %v6767 = vunpack.c.h.b16 %v5479
    %v6768 = vunpack.c.l.b16 %v5480
    %v6769 = vunpack.c.h.b16 %v5480
    %v6770 = vunpack.c.l.b16 %v5481
    %v6771 = vunpack.c.h.b16 %v5481
    %v6772 = vunpack.c.l.b16 %v5482
    %v6773 = vunpack.c.h.b16 %v5482
    %v6774 = vunpack.c.l.b16 %v5483
    %v6775 = vunpack.c.h.b16 %v5483
    %v6776 = vunpack.c.l.b16 %v5484
    %v6777 = vunpack.c.h.b16 %v5484
    %v6778 = vunpack.c.l.b16 %v5485
    %v6779 = vunpack.c.h.b16 %v5485
    %v6780 = vunpack.c.l.b16 %v5486
    %v6781 = vunpack.c.h.b16 %v5486
    %v6782 = vunpack.c.l.b16 %v5487
    %v6783 = vunpack.c.h.b16 %v5487
    %v6784 = vunpack.c.l.b16 %v5488
    %v6785 = vunpack.c.h.b16 %v5488
    %v6786 = vunpack.c.l.b16 %v5489
    %v6787 = vunpack.c.h.b16 %v5489
    %v6788 = vunpack.c.l.b16 %v5490
    %v6789 = vunpack.c.h.b16 %v5490
    %v6790 = vunpack.c.l.b16 %v5491
    %v6791 = vunpack.c.h.b16 %v5491
    %v6792 = vunpack.c.l.b16 %v5492
    %v6793 = vunpack.c.h.b16 %v5492
    %v6794 = vunpack.c.l.b16 %v5493
    %v6795 = vunpack.c.h.b16 %v5493
    %v6796 = vunpack.c.l.b16 %v5494
    %v6797 = vunpack.c.h.b16 %v5494
    %v6798 = vunpack.c.l.b16 %v5495
    %v6799 = vunpack.c.h.b16 %v5495
    %v6800 = vunpack.c.l.b16 %v5496
    %v6801 = vunpack.c.h.b16 %v5496
    %v6802 = vunpack.c.l.b16 %v5497
    %v6803 = vunpack.c.h.b16 %v5497
    %v6804 = vunpack.c.l.b16 %v5498
    %v6805 = vunpack.c.h.b16 %v5498
    %v6806 = vunpack.c.l.b16 %v5499
    %v6807 = vunpack.c.h.b16 %v5499
    %v6808 = vunpack.c.l.b16 %v5500
    %v6809 = vunpack.c.h.b16 %v5500
    %v6810 = vunpack.c.l.b16 %v5501
    %v6811 = vunpack.c.h.b16 %v5501
    %v6812 = vunpack.c.l.b16 %v5502
    %v6813 = vunpack.c.h.b16 %v5502
    %v6814 = vunpack.c.l.b16 %v5503
    %v6815 = vunpack.c.h.b16 %v5503
    %v6816 = vunpack.c.l.b16 %v5504
    %v6817 = vunpack.c.h.b16 %v5504
    %v6818 = vunpack.c.l.b16 %v5505
    %v6819 = vunpack.c.h.b16 %v5505
    %v6820 = vunpack.c.l.b16 %v5506
    %v6821 = vunpack.c.h.b16 %v5506
    %v6822 = vunpack.c.l.b16 %v5507
    %v6823 = vunpack.c.h.b16 %v5507
    %v6824 = vunpack.c.l.b16 %v5508
    %v6825 = vunpack.c.h.b16 %v5508
    %v6826 = vunpack.c.l.b16 %v5509
    %v6827 = vunpack.c.h.b16 %v5509
    %v6828 = vunpack.c.l.b16 %v5510
    %v6829 = vunpack.c.h.b16 %v5510
    %v6830 = vunpack.c.l.b16 %v5511
    %v6831 = vunpack.c.h.b16 %v5511
    %v6832 = vunpack.c.l.b16 %v5512
    %v6833 = vunpack.c.h.b16 %v5512
    %v6834 = vunpack.c.l.b16 %v5513
    %v6835 = vunpack.c.h.b16 %v5513
    %v6836 = vunpack.c.l.b16 %v5514
    %v6837 = vunpack.c.h.b16 %v5514
    %v6838 = vunpack.c.l.b16 %v5515
    %v6839 = vunpack.c.h.b16 %v5515
    %v6840 = vunpack.c.l.b16 %v5516
    %v6841 = vunpack.c.h.b16 %v5516
    %v6842 = vunpack.c.l.b16 %v5517
    %v6843 = vunpack.c.h.b16 %v5517
    %v6844 = vunpack.c.l.b16 %v5518
    %v6845 = vunpack.c.h.b16 %v5518
    %v6846 = vunpack.c.l.b16 %v5519
    %v6847 = vunpack.c.h.b16 %v5519
    %v6848 = vunpack.c.l.b16 %v5520
    %v6849 = vunpack.c.h.b16 %v5520
    %v6850 = vunpack.c.l.b16 %v5521
    %v6851 = vunpack.c.h.b16 %v5521
    %v6852 = vunpack.c.l.b16 %v5522
    %v6853 = vunpack.c.h.b16 %v5522
    %v6854 = vunpack.c.l.b16 %v5523
    %v6855 = vunpack.c.h.b16 %v5523
    %v6856 = vunpack.c.l.b16 %v5524
    %v6857 = vunpack.c.h.b16 %v5524
    %v6858 = vunpack.c.l.b16 %v5525
    %v6859 = vunpack.c.h.b16 %v5525
    %v6860 = vunpack.c.l.b16 %v5526
    %v6861 = vunpack.c.h.b16 %v5526
    %v6862 = vunpack.c.l.b16 %v5527
    %v6863 = vunpack.c.h.b16 %v5527
    %v6864 = vunpack.c.l.b16 %v5528
    %v6865 = vunpack.c.h.b16 %v5528
    %v6866 = vunpack.c.l.b16 %v5529
    %v6867 = vunpack.c.h.b16 %v5529
    %v6868 = vunpack.c.l.b16 %v5530
    %v6869 = vunpack.c.h.b16 %v5530
    %v6870 = vunpack.c.l.b16 %v5531
    %v6871 = vunpack.c.h.b16 %v5531
    %v6872 = vunpack.c.l.b16 %v5532
    %v6873 = vunpack.c.h.b16 %v5532
    %v6874 = vunpack.c.l.b16 %v5533
    %v6875 = vunpack.c.h.b16 %v5533
    %v6876 = vunpack.c.l.b16 %v5534
    %v6877 = vunpack.c.h.b16 %v5534
    %v6878 = vunpack.c.l.b16 %v5535
    %v6879 = vunpack.c.h.b16 %v5535
    %v6880 = vunpack.c.l.b16 %v5536
    %v6881 = vunpack.c.h.b16 %v5536
    %v6882 = vunpack.c.l.b16 %v5537
    %v6883 = vunpack.c.h.b16 %v5537
    %v6884 = vunpack.c.l.b16 %v5538
    %v6885 = vunpack.c.h.b16 %v5538
    %v6886 = vunpack.c.l.b16 %v5539
    %v6887 = vunpack.c.h.b16 %v5539
    %v6888 = vunpack.c.l.b16 %v5540
    %v6889 = vunpack.c.h.b16 %v5540
    %v6890 = vunpack.c.l.b16 %v5541
    %v6891 = vunpack.c.h.b16 %v5541
    %v6892 = vunpack.c.l.b16 %v5542
    %v6893 = vunpack.c.h.b16 %v5542
    %v6894 = vunpack.c.l.b16 %v5543
    %v6895 = vunpack.c.h.b16 %v5543
    %v6896 = vunpack.c.l.b16 %v5544
    %v6897 = vunpack.c.h.b16 %v5544
    %v6898 = vunpack.c.l.b16 %v5545
    %v6899 = vunpack.c.h.b16 %v5545
    %v6900 = vunpack.c.l.b16 %v5546
    %v6901 = vunpack.c.h.b16 %v5546
    %v6902 = vunpack.c.l.b16 %v5547
    %v6903 = vunpack.c.h.b16 %v5547
    %v6904 = vunpack.c.l.b16 %v5548
    %v6905 = vunpack.c.h.b16 %v5548
    %v6906 = vunpack.c.l.b16 %v5549
    %v6907 = vunpack.c.h.b16 %v5549
    %v6908 = vunpack.c.l.b16 %v5550
    %v6909 = vunpack.c.h.b16 %v5550
    %v6910 = vunpack.c.l.b16 %v5551
    %v6911 = vunpack.c.h.b16 %v5551
    %v6912 = vunpack.c.l.b16 %v5552
    %v6913 = vunpack.c.h.b16 %v5552
    %v6914 = vunpack.c.l.b16 %v5553
    %v6915 = vunpack.c.h.b16 %v5553
    %v6916 = vunpack.c.l.b16 %v5554
    %v6917 = vunpack.c.h.b16 %v5554
    %v6918 = vunpack.c.l.b16 %v5555
    %v6919 = vunpack.c.h.b16 %v5555
    %v6920 = vunpack.c.l.b16 %v5556
    %v6921 = vunpack.c.h.b16 %v5556
    %v6922 = vunpack.c.l.b16 %v5557
    %v6923 = vunpack.c.h.b16 %v5557
    %v6924 = vunpack.c.l.b16 %v5558
    %v6925 = vunpack.c.h.b16 %v5558
    %v6926 = vunpack.c.l.b16 %v5559
    %v6927 = vunpack.c.h.b16 %v5559
    %v6928 = vunpack.c.l.b16 %v5560
    %v6929 = vunpack.c.h.b16 %v5560
    %v6930 = vunpack.c.l.b16 %v5561
    %v6931 = vunpack.c.h.b16 %v5561
    %v6932 = vunpack.c.l.b16 %v5562
    %v6933 = vunpack.c.h.b16 %v5562
    %v6934 = vunpack.c.l.b16 %v5563
    %v6935 = vunpack.c.h.b16 %v5563
    %v6936 = vunpack.c.l.b16 %v5564
    %v6937 = vunpack.c.h.b16 %v5564
    %v6938 = vunpack.c.l.b16 %v5565
    %v6939 = vunpack.c.h.b16 %v5565
    %v6940 = vunpack.c.l.b16 %v5566
    %v6941 = vunpack.c.h.b16 %v5566
    %v6942 = vunpack.c.l.b16 %v5567
    %v6943 = vunpack.c.h.b16 %v5567
    %v6944 = vunpack.c.l.b16 %v5568
    %v6945 = vunpack.c.h.b16 %v5568
    %v6946 = vunpack.c.l.b16 %v5569
    %v6947 = vunpack.c.h.b16 %v5569
    %v6948 = vunpack.c.l.b16 %v5570
    %v6949 = vunpack.c.h.b16 %v5570
    %v6950 = vunpack.c.l.b16 %v5571
    %v6951 = vunpack.c.h.b16 %v5571
    %v6952 = vunpack.c.l.b16 %v5572
    %v6953 = vunpack.c.h.b16 %v5572
    %v6954 = vunpack.c.l.b16 %v5573
    %v6955 = vunpack.c.h.b16 %v5573
    %v6956 = vunpack.c.l.b16 %v5574
    %v6957 = vunpack.c.h.b16 %v5574
    %v6958 = vunpack.c.l.b16 %v5575
    %v6959 = vunpack.c.h.b16 %v5575
    %v6960 = vunpack.c.l.b16 %v5576
    %v6961 = vunpack.c.h.b16 %v5576
    %v6962 = vunpack.c.l.b16 %v5577
    %v6963 = vunpack.c.h.b16 %v5577
    %v6964 = vunpack.c.l.b16 %v5578
    %v6965 = vunpack.c.h.b16 %v5578
    %v6966 = vunpack.c.l.b16 %v5579
    %v6967 = vunpack.c.h.b16 %v5579
    %v6968 = vunpack.c.l.b16 %v5580
    %v6969 = vunpack.c.h.b16 %v5580
    %v6970 = vunpack.c.l.b16 %v5581
    %v6971 = vunpack.c.h.b16 %v5581
    %v6972 = vunpack.c.l.b16 %v5582
    %v6973 = vunpack.c.h.b16 %v5582
    %v6974 = vunpack.c.l.b16 %v5583
    %v6975 = vunpack.c.h.b16 %v5583
    %v6976 = vunpack.c.l.b16 %v5584
    %v6977 = vunpack.c.h.b16 %v5584
    %v6978 = vunpack.c.l.b16 %v5585
    %v6979 = vunpack.c.h.b16 %v5585
    %v6980 = vunpack.c.l.b16 %v5586
    %v6981 = vunpack.c.h.b16 %v5586
    %v6982 = vunpack.c.l.b16 %v5587
    %v6983 = vunpack.c.h.b16 %v5587
    %v6984 = vunpack.c.l.b16 %v5588
    %v6985 = vunpack.c.h.b16 %v5588
    %v6986 = vunpack.c.l.b16 %v5589
    %v6987 = vunpack.c.h.b16 %v5589
    %v6988 = vunpack.c.l.b16 %v5590
    %v6989 = vunpack.c.h.b16 %v5590
    %v6990 = vunpack.c.l.b16 %v5591
    %v6991 = vunpack.c.h.b16 %v5591
    %v6992 = vunpack.c.l.b16 %v5592
    %v6993 = vunpack.c.h.b16 %v5592
    %v6994 = vunpack.c.l.b16 %v5593
    %v6995 = vunpack.c.h.b16 %v5593
    %v6996 = vunpack.c.l.b16 %v5594
    %v6997 = vunpack.c.h.b16 %v5594
    %v6998 = vunpack.c.l.b16 %v5595
    %v6999 = vunpack.c.h.b16 %v5595
    %v7000 = vunpack.c.l.b16 %v5596
    %v7001 = vunpack.c.h.b16 %v5596
    %v7002 = vunpack.c.l.b16 %v5597
    %v7003 = vunpack.c.h.b16 %v5597
    %v7004 = vunpack.c.l.b16 %v5598
    %v7005 = vunpack.c.h.b16 %v5598
    %v7006 = vunpack.c.l.b16 %v5599
    %v7007 = vunpack.c.h.b16 %v5599
    %v7008 = vunpack.c.l.b16 %v5600
    %v7009 = vunpack.c.h.b16 %v5600
    %v7010 = vunpack.c.l.b16 %v5601
    %v7011 = vunpack.c.h.b16 %v5601
    %v7012 = vunpack.c.l.b16 %v5602
    %v7013 = vunpack.c.h.b16 %v5602
    %v7014 = vunpack.c.l.b16 %v5603
    %v7015 = vunpack.c.h.b16 %v5603
    %v7016 = vunpack.c.l.b16 %v5604
    %v7017 = vunpack.c.h.b16 %v5604
    %v7018 = vunpack.c.l.b16 %v5605
    %v7019 = vunpack.c.h.b16 %v5605
    %v7020 = vunpack.c.l.b16 %v5606
    %v7021 = vunpack.c.h.b16 %v5606
    %v7022 = vunpack.c.l.b16 %v5607
    %v7023 = vunpack.c.h.b16 %v5607
    %v7024 = vunpack.c.l.b16 %v5608
    %v7025 = vunpack.c.h.b16 %v5608
    %v7026 = vunpack.c.l.b16 %v5609
    %v7027 = vunpack.c.h.b16 %v5609
    %v7028 = vunpack.c.l.b16 %v5610
    %v7029 = vunpack.c.h.b16 %v5610
    %v7030 = vunpack.c.l.b16 %v5611
    %v7031 = vunpack.c.h.b16 %v5611
    %v7032 = vunpack.c.l.b16 %v5612
    %v7033 = vunpack.c.h.b16 %v5612
    %v7034 = vunpack.c.l.b16 %v5613
    %v7035 = vunpack.c.h.b16 %v5613
    %v7036 = vunpack.c.l.b16 %v5614
    %v7037 = vunpack.c.h.b16 %v5614
    %v7038 = vunpack.c.l.b16 %v5615
    %v7039 = vunpack.c.h.b16 %v5615
    %v7040 = vunpack.c.l.b16 %v5616
    %v7041 = vunpack.c.h.b16 %v5616
    %v7042 = vunpack.c.l.b16 %v5617
    %v7043 = vunpack.c.h.b16 %v5617
    %v7044 = vunpack.c.l.b16 %v5618
    %v7045 = vunpack.c.h.b16 %v5618
    %v7046 = vunpack.c.l.b16 %v5619
    %v7047 = vunpack.c.h.b16 %v5619
    %v7048 = vunpack.c.l.b16 %v5620
    %v7049 = vunpack.c.h.b16 %v5620
    %v7050 = vunpack.c.l.b16 %v5621
    %v7051 = vunpack.c.h.b16 %v5621
    %v7052 = vunpack.c.l.b16 %v5622
    %v7053 = vunpack.c.h.b16 %v5622
    %v7054 = vunpack.c.l.b16 %v5623
    %v7055 = vunpack.c.h.b16 %v5623
    %v7056 = vunpack.c.l.b16 %v5624
    %v7057 = vunpack.c.h.b16 %v5624
    %v7058 = vunpack.c.l.b16 %v5625
    %v7059 = vunpack.c.h.b16 %v5625
    %v7060 = vunpack.c.l.b16 %v5626
    %v7061 = vunpack.c.h.b16 %v5626
    %v7062 = vunpack.c.l.b16 %v5627
    %v7063 = vunpack.c.h.b16 %v5627
    %v7064 = vunpack.c.l.b16 %v5628
    %v7065 = vunpack.c.h.b16 %v5628
    %v7066 = vunpack.c.l.b16 %v5629
    %v7067 = vunpack.c.h.b16 %v5629
    %v7068 = vunpack.c.l.b16 %v5630
    %v7069 = vunpack.c.h.b16 %v5630
    %v7070 = vunpack.c.l.b16 %v5631
    %v7071 = vunpack.c.h.b16 %v5631
    %v7072 = vunpack.c.l.b16 %v5632
    %v7073 = vunpack.c.h.b16 %v5632
    %v7074 = vunpack.c.l.b16 %v5633
    %v7075 = vunpack.c.h.b16 %v5633
    %v7076 = vunpack.c.l.b16 %v5634
    %v7077 = vunpack.c.h.b16 %v5634
    %v7078 = vunpack.c.l.b16 %v5635
    %v7079 = vunpack.c.h.b16 %v5635
    %v7080 = vunpack.c.l.b16 %v5636
    %v7081 = vunpack.c.h.b16 %v5636
    %v7082 = vunpack.c.l.b16 %v5637
    %v7083 = vunpack.c.h.b16 %v5637
    %v7084 = vunpack.c.l.b16 %v5638
    %v7085 = vunpack.c.h.b16 %v5638
    %v7086 = vunpack.c.l.b16 %v5639
    %v7087 = vunpack.c.h.b16 %v5639
    %v7088 = vunpack.c.l.b16 %v5640
    %v7089 = vunpack.c.h.b16 %v5640
    %v7090 = vunpack.c.l.b16 %v5641
    %v7091 = vunpack.c.h.b16 %v5641
    %v7092 = vunpack.c.l.b16 %v5642
    %v7093 = vunpack.c.h.b16 %v5642
    %v7094 = vunpack.c.l.b16 %v5643
    %v7095 = vunpack.c.h.b16 %v5643
    %v7096 = vunpack.c.l.b16 %v5644
    %v7097 = vunpack.c.h.b16 %v5644
    %v7098 = vunpack.c.l.b16 %v5645
    %v7099 = vunpack.c.h.b16 %v5645
    %v7100 = vunpack.c.l.b16 %v5646
    %v7101 = vunpack.c.h.b16 %v5646
    %v7102 = vunpack.c.l.b16 %v5647
    %v7103 = vunpack.c.h.b16 %v5647
    %v7104 = vunpack.c.l.b16 %v5648
    %v7105 = vunpack.c.h.b16 %v5648
    %v7106 = vunpack.c.l.b16 %v5649
    %v7107 = vunpack.c.h.b16 %v5649
    %v7108 = vunpack.c.l.b16 %v5650
    %v7109 = vunpack.c.h.b16 %v5650
    %v7110 = vunpack.c.l.b16 %v5651
    %v7111 = vunpack.c.h.b16 %v5651
    %v7112 = vunpack.c.l.b16 %v5652
    %v7113 = vunpack.c.h.b16 %v5652
    %v7114 = vunpack.c.l.b16 %v5653
    %v7115 = vunpack.c.h.b16 %v5653
    %v7116 = vunpack.c.l.b16 %v5654
    %v7117 = vunpack.c.h.b16 %v5654
    %v7118 = vunpack.c.l.b16 %v5655
    %v7119 = vunpack.c.h.b16 %v5655
    %v7120 = vunpack.c.l.b16 %v5656
    %v7121 = vunpack.c.h.b16 %v5656
    %v7122 = vunpack.c.l.b16 %v5657
    %v7123 = vunpack.c.h.b16 %v5657
    %v7124 = vunpack.c.l.b16 %v5658
    %v7125 = vunpack.c.h.b16 %v5658
    %v7126 = vunpack.c.l.b16 %v5659
    %v7127 = vunpack.c.h.b16 %v5659
    %v7128 = vunpack.c.l.b16 %v5660
    %v7129 = vunpack.c.h.b16 %v5660
    %v7130 = vunpack.c.l.b16 %v5661
    %v7131 = vunpack.c.h.b16 %v5661
    %v7132 = vunpack.c.l.b16 %v5662
    %v7133 = vunpack.c.h.b16 %v5662
    %v7134 = vunpack.c.l.b16 %v5663
    %v7135 = vunpack.c.h.b16 %v5663
    %v7136 = vunpack.c.l.b16 %v5664
    %v7137 = vunpack.c.h.b16 %v5664
    %v7138 = vunpack.c.l.b16 %v5665
    %v7139 = vunpack.c.h.b16 %v5665
    %v7140 = vunpack.c.l.b16 %v5666
    %v7141 = vunpack.c.h.b16 %v5666
    %v7142 = vunpack.c.l.b16 %v5667
    %v7143 = vunpack.c.h.b16 %v5667
    %v7144 = vunpack.c.l.b16 %v5668
    %v7145 = vunpack.c.h.b16 %v5668
    %v7146 = vunpack.c.l.b16 %v5669
    %v7147 = vunpack.c.h.b16 %v5669
    %v7148 = vunpack.c.l.b16 %v5670
    %v7149 = vunpack.c.h.b16 %v5670
    %v7150 = vunpack.c.l.b16 %v5671
    %v7151 = vunpack.c.h.b16 %v5671
    %v7152 = vunpack.c.l.b16 %v5672
    %v7153 = vunpack.c.h.b16 %v5672
    %v7154 = vunpack.c.l.b16 %v5673
    %v7155 = vunpack.c.h.b16 %v5673
    %v7156 = vunpack.c.l.b16 %v5674
    %v7157 = vunpack.c.h.b16 %v5674
    %v7158 = vunpack.c.l.b16 %v5675
    %v7159 = vunpack.c.h.b16 %v5675
    %v7160 = vunpack.c.l.b16 %v5676
    %v7161 = vunpack.c.h.b16 %v5676
    %v7162 = vunpack.c.l.b16 %v5677
    %v7163 = vunpack.c.h.b16 %v5677
    %v7164 = vunpack.c.l.b16 %v5678
    %v7165 = vunpack.c.h.b16 %v5678
    %v7166 = vunpack.c.l.b16 %v5679
    %v7167 = vunpack.c.h.b16 %v5679
    %v7168 = vunpack.c.l.b16 %v5680
    %v7169 = vunpack.c.h.b16 %v5680
    %v7170 = vunpack.c.l.b16 %v5681
    %v7171 = vunpack.c.h.b16 %v5681
    %v7172 = vunpack.c.l.b16 %v5682
    %v7173 = vunpack.c.h.b16 %v5682
    %v7174 = vunpack.c.l.b16 %v5683
    %v7175 = vunpack.c.h.b16 %v5683
    %v7176 = vunpack.c.l.b16 %v5684
    %v7177 = vunpack.c.h.b16 %v5684
    %v7178 = vunpack.c.l.b16 %v5685
    %v7179 = vunpack.c.h.b16 %v5685
    %v7180 = vunpack.c.l.b16 %v5686
    %v7181 = vunpack.c.h.b16 %v5686
    %v7182 = vunpack.c.l.b16 %v5687
    %v7183 = vunpack.c.h.b16 %v5687
    %v7184 = vunpack.c.l.b16 %v5688
    %v7185 = vunpack.c.h.b16 %v5688
    %v7186 = vunpack.c.l.b16 %v5689
    %v7187 = vunpack.c.h.b16 %v5689
    %v7188 = vunpack.c.l.b16 %v5690
    %v7189 = vunpack.c.h.b16 %v5690
    %v7190 = vunpack.c.l.b16 %v5691
    %v7191 = vunpack.c.h.b16 %v5691
    %v7192 = vunpack.c.l.b16 %v5692
    %v7193 = vunpack.c.h.b16 %v5692
    %v7194 = vunpack.c.l.b16 %v5693
    %v7195 = vunpack.c.h.b16 %v5693
    %v7196 = vunpack.c.l.b16 %v5694
    %v7197 = vunpack.c.h.b16 %v5694
    %v7198 = vunpack.c.l.b16 %v5695
    %v7199 = vunpack.c.h.b16 %v5695
    %v7200 = vunpack.c.l.b16 %v5696
    %v7201 = vunpack.c.h.b16 %v5696
    %v7202 = vunpack.c.l.b16 %v5697
    %v7203 = vunpack.c.h.b16 %v5697
    %v7204 = vunpack.c.l.b16 %v5698
    %v7205 = vunpack.c.h.b16 %v5698
    %v7206 = vunpack.c.l.b16 %v5699
    %v7207 = vunpack.c.h.b16 %v5699
    %v7208 = vunpack.c.l.b16 %v5700
    %v7209 = vunpack.c.h.b16 %v5700
    %v7210 = vunpack.c.l.b16 %v5701
    %v7211 = vunpack.c.h.b16 %v5701
    %v7212 = vunpack.c.l.b16 %v5702
    %v7213 = vunpack.c.h.b16 %v5702
    %v7214 = vunpack.c.l.b16 %v5703
    %v7215 = vunpack.c.h.b16 %v5703
    %v7216 = vunpack.c.l.b16 %v5704
    %v7217 = vunpack.c.h.b16 %v5704
    %v7218 = vunpack.c.l.b16 %v5705
    %v7219 = vunpack.c.h.b16 %v5705
    %v7220 = vunpack.c.l.b16 %v5706
    %v7221 = vunpack.c.h.b16 %v5706
    %v7222 = vunpack.c.l.b16 %v5707
    %v7223 = vunpack.c.h.b16 %v5707
    %v7224 = vunpack.c.l.b16 %v5708
    %v7225 = vunpack.c.h.b16 %v5708
    %v7226 = vunpack.c.l.b16 %v5709
    %v7227 = vunpack.c.h.b16 %v5709
    %v7228 = vunpack.c.l.b16 %v5710
    %v7229 = vunpack.c.h.b16 %v5710
    %v7230 = vunpack.c.l.b16 %v5711
    %v7231 = vunpack.c.h.b16 %v5711
    %v7232 = vunpack.c.l.b16 %v5712
    %v7233 = vunpack.c.h.b16 %v5712
    %v7234 = vunpack.c.l.b16 %v5713
    %v7235 = vunpack.c.h.b16 %v5713
    %v7236 = vunpack.c.l.b16 %v5714
    %v7237 = vunpack.c.h.b16 %v5714
    %v7238 = vunpack.c.l.b16 %v5715
    %v7239 = vunpack.c.h.b16 %v5715
    %v7240 = vunpack.c.l.b16 %v5716
    %v7241 = vunpack.c.h.b16 %v5716
    %v7242 = vunpack.c.l.b16 %v5717
    %v7243 = vunpack.c.h.b16 %v5717
    %v7244 = vunpack.c.l.b16 %v5718
    %v7245 = vunpack.c.h.b16 %v5718
    %v7246 = vunpack.c.l.b16 %v5719
    %v7247 = vunpack.c.h.b16 %v5719
    %v7248 = vunpack.c.l.b16 %v5720
    %v7249 = vunpack.c.h.b16 %v5720
    %v7250 = vunpack.c.l.b16 %v5721
    %v7251 = vunpack.c.h.b16 %v5721
    %v7252 = vunpack.c.l.b16 %v5722
    %v7253 = vunpack.c.h.b16 %v5722
    %v7254 = vunpack.c.l.b16 %v5723
    %v7255 = vunpack.c.h.b16 %v5723
    %v7256 = vunpack.c.l.b16 %v5724
    %v7257 = vunpack.c.h.b16 %v5724
    %v7258 = vunpack.c.l.b16 %v5725
    %v7259 = vunpack.c.h.b16 %v5725
    %v7260 = vunpack.c.l.b16 %v5726
    %v7261 = vunpack.c.h.b16 %v5726
    %v7262 = vunpack.c.l.b16 %v5727
    %v7263 = vunpack.c.h.b16 %v5727
    %v7264 = vunpack.c.l.b16 %v5728
    %v7265 = vunpack.c.h.b16 %v5728
    %v7266 = vunpack.c.l.b16 %v5729
    %v7267 = vunpack.c.h.b16 %v5729
    %v7268 = vunpack.c.l.b16 %v5730
    %v7269 = vunpack.c.h.b16 %v5730
    %v7270 = vunpack.c.l.b16 %v5731
    %v7271 = vunpack.c.h.b16 %v5731
    %v7272 = vunpack.c.l.b16 %v5732
    %v7273 = vunpack.c.h.b16 %v5732
    %v7274 = vunpack.c.l.b16 %v5733
    %v7275 = vunpack.c.h.b16 %v5733
    %v7276 = vunpack.c.l.b16 %v5734
    %v7277 = vunpack.c.h.b16 %v5734
    %v7278 = vunpack.c.l.b16 %v5735
    %v7279 = vunpack.c.h.b16 %v5735
    %v7280 = vunpack.c.l.b16 %v5736
    %v7281 = vunpack.c.h.b16 %v5736
    %v7282 = vunpack.c.l.b16 %v5737
    %v7283 = vunpack.c.h.b16 %v5737
    %v7284 = vunpack.c.l.b16 %v5738
    %v7285 = vunpack.c.h.b16 %v5738
    %v7286 = vunpack.c.l.b16 %v5739
    %v7287 = vunpack.c.h.b16 %v5739
    %v7288 = vunpack.c.l.b16 %v5740
    %v7289 = vunpack.c.h.b16 %v5740
    %v7290 = vunpack.c.l.b16 %v5741
    %v7291 = vunpack.c.h.b16 %v5741
    %v7292 = vunpack.c.l.b16 %v5742
    %v7293 = vunpack.c.h.b16 %v5742
    %v7294 = vunpack.c.l.b16 %v5743
    %v7295 = vunpack.c.h.b16 %v5743
    %v7296 = vunpack.c.l.b16 %v5744
    %v7297 = vunpack.c.h.b16 %v5744
    %v7298 = vunpack.c.l.b16 %v5745
    %v7299 = vunpack.c.h.b16 %v5745
    %v7300 = vunpack.c.l.b16 %v5746
    %v7301 = vunpack.c.h.b16 %v5746
    %v7302 = vunpack.c.l.b16 %v5747
    %v7303 = vunpack.c.h.b16 %v5747
    %v7304 = vunpack.c.l.b16 %v5748
    %v7305 = vunpack.c.h.b16 %v5748
    %v7306 = vunpack.c.l.b16 %v5749
    %v7307 = vunpack.c.h.b16 %v5749
    %v7308 = vunpack.c.l.b16 %v5750
    %v7309 = vunpack.c.h.b16 %v5750
    %v7310 = vunpack.c.l.b16 %v5751
    %v7311 = vunpack.c.h.b16 %v5751
    %v7312 = vunpack.c.l.b16 %v5752
    %v7313 = vunpack.c.h.b16 %v5752
    %v7314 = vunpack.c.l.b16 %v5753
    %v7315 = vunpack.c.h.b16 %v5753
    %v7316 = vunpack.c.l.b16 %v5754
    %v7317 = vunpack.c.h.b16 %v5754
    %v7318 = vunpack.c.l.b16 %v5755
    %v7319 = vunpack.c.h.b16 %v5755
    %v7320 = vunpack.c.l.b16 %v5756
    %v7321 = vunpack.c.h.b16 %v5756
    %v7322 = vunpack.c.l.b16 %v5757
    %v7323 = vunpack.c.h.b16 %v5757
    %v7324 = vunpack.c.l.b16 %v5758
    %v7325 = vunpack.c.h.b16 %v5758
    %v7326 = vunpack.c.l.b16 %v5759
    %v7327 = vunpack.c.h.b16 %v5759
    %v7328 = vunpack.c.l.b16 %v5760
    %v7329 = vunpack.c.h.b16 %v5760
    %v7330 = vunpack.c.l.b16 %v5761
    %v7331 = vunpack.c.h.b16 %v5761
    %v7332 = vunpack.c.l.b16 %v5762
    %v7333 = vunpack.c.h.b16 %v5762
    %v7334 = vunpack.c.l.b16 %v5763
    %v7335 = vunpack.c.h.b16 %v5763
    %v7336 = vunpack.c.l.b16 %v5764
    %v7337 = vunpack.c.h.b16 %v5764
    %v7338 = vunpack.c.l.b16 %v5765
    %v7339 = vunpack.c.h.b16 %v5765
    %v7340 = vunpack.c.l.b16 %v5766
    %v7341 = vunpack.c.h.b16 %v5766
    %v7342 = vunpack.c.l.b16 %v5767
    %v7343 = vunpack.c.h.b16 %v5767
    %v7344 = vunpack.c.l.b16 %v5768
    %v7345 = vunpack.c.h.b16 %v5768
    %v7346 = vunpack.c.l.b16 %v5769
    %v7347 = vunpack.c.h.b16 %v5769
    %v7348 = vunpack.c.l.b16 %v5770
    %v7349 = vunpack.c.h.b16 %v5770
    %v7350 = vunpack.c.l.b16 %v5771
    %v7351 = vunpack.c.h.b16 %v5771
    %v7352 = vunpack.c.l.b16 %v5772
    %v7353 = vunpack.c.h.b16 %v5772
    %v7354 = vpack.c.b16 %v6338, %v6330
    %v7355 = vpack.c.b16 %v6339, %v6331
    %v7356 = vpack.c.b16 %v6340, %v6332
    %v7357 = vpack.c.b16 %v6341, %v6333
    %v7358 = vpack.c.b16 %v6342, %v6334
    %v7359 = vpack.c.b16 %v6343, %v6335
    %v7360 = vpack.c.b16 %v6344, %v6336
    %v7361 = vpack.c.b16 %v6345, %v6337
    %v7362 = vpack.c.b16 %v6354, %v6346
    %v7363 = vpack.c.b16 %v6355, %v6347
    %v7364 = vpack.c.b16 %v6356, %v6348
    %v7365 = vpack.c.b16 %v6357, %v6349
    %v7366 = vpack.c.b16 %v6358, %v6350
    %v7367 = vpack.c.b16 %v6359, %v6351
    %v7368 = vpack.c.b16 %v6360, %v6352
    %v7369 = vpack.c.b16 %v6361, %v6353
    %v7370 = vpack.c.b16 %v6370, %v6362
    %v7371 = vpack.c.b16 %v6371, %v6363
    %v7372 = vpack.c.b16 %v6372, %v6364
    %v7373 = vpack.c.b16 %v6373, %v6365
    %v7374 = vpack.c.b16 %v6374, %v6366
    %v7375 = vpack.c.b16 %v6375, %v6367
    %v7376 = vpack.c.b16 %v6376, %v6368
    %v7377 = vpack.c.b16 %v6377, %v6369
    %v7378 = vpack.c.b16 %v6386, %v6378
    %v7379 = vpack.c.b16 %v6387, %v6379
    %v7380 = vpack.c.b16 %v6388, %v6380
    %v7381 = vpack.c.b16 %v6389, %v6381
    %v7382 = vpack.c.b16 %v6390, %v6382
    %v7383 = vpack.c.b16 %v6391, %v6383
    %v7384 = vpack.c.b16 %v6392, %v6384
    %v7385 = vpack.c.b16 %v6393, %v6385
    %v7386 = vpack.c.b16 %v6402, %v6394
    %v7387 = vpack.c.b16 %v6403, %v6395
    %v7388 = vpack.c.b16 %v6404, %v6396
    %v7389 = vpack.c.b16 %v6405, %v6397
    %v7390 = vpack.c.b16 %v6406, %v6398
    %v7391 = vpack.c.b16 %v6407, %v6399
    %v7392 = vpack.c.b16 %v6408, %v6400
    %v7393 = vpack.c.b16 %v6409, %v6401
    %v7394 = vpack.c.b16 %v6418, %v6410
    %v7395 = vpack.c.b16 %v6419, %v6411
    %v7396 = vpack.c.b16 %v6420, %v6412
    %v7397 = vpack.c.b16 %v6421, %v6413
    %v7398 = vpack.c.b16 %v6422, %v6414
    %v7399 = vpack.c.b16 %v6423, %v6415
    %v7400 = vpack.c.b16 %v6424, %v6416
    %v7401 = vpack.c.b16 %v6425, %v6417
    %v7402 = vpack.c.b16 %v6434, %v6426
    %v7403 = vpack.c.b16 %v6435, %v6427
    %v7404 = vpack.c.b16 %v6436, %v6428
    %v7405 = vpack.c.b16 %v6437, %v6429
    %v7406 = vpack.c.b16 %v6438, %v6430
    %v7407 = vpack.c.b16 %v6439, %v6431
    %v7408 = vpack.c.b16 %v6440, %v6432
    %v7409 = vpack.c.b16 %v6441, %v6433
    %v7410 = vpack.c.b16 %v6450, %v6442
    %v7411 = vpack.c.b16 %v6451, %v6443
    %v7412 = vpack.c.b16 %v6452, %v6444
    %v7413 = vpack.c.b16 %v6453, %v6445
    %v7414 = vpack.c.b16 %v6454, %v6446
    %v7415 = vpack.c.b16 %v6455, %v6447
    %v7416 = vpack.c.b16 %v6456, %v6448
    %v7417 = vpack.c.b16 %v6457, %v6449
    %v7418 = vpack.c.b16 %v6466, %v6458
    %v7419 = vpack.c.b16 %v6467, %v6459
    %v7420 = vpack.c.b16 %v6468, %v6460
    %v7421 = vpack.c.b16 %v6469, %v6461
    %v7422 = vpack.c.b16 %v6470, %v6462
    %v7423 = vpack.c.b16 %v6471, %v6463
    %v7424 = vpack.c.b16 %v6472, %v6464
    %v7425 = vpack.c.b16 %v6473, %v6465
    %v7426 = vpack.c.b16 %v6482, %v6474
    %v7427 = vpack.c.b16 %v6483, %v6475
    %v7428 = vpack.c.b16 %v6484, %v6476
    %v7429 = vpack.c.b16 %v6485, %v6477
    %v7430 = vpack.c.b16 %v6486, %v6478
    %v7431 = vpack.c.b16 %v6487, %v6479
    %v7432 = vpack.c.b16 %v6488, %v6480
    %v7433 = vpack.c.b16 %v6489, %v6481
    %v7434 = vpack.c.b16 %v6498, %v6490
    %v7435 = vpack.c.b16 %v6499, %v6491
    %v7436 = vpack.c.b16 %v6500, %v6492
    %v7437 = vpack.c.b16 %v6501, %v6493
    %v7438 = vpack.c.b16 %v6502, %v6494
    %v7439 = vpack.c.b16 %v6503, %v6495
    %v7440 = vpack.c.b16 %v6504, %v6496
    %v7441 = vpack.c.b16 %v6505, %v6497
    %v7442 = vpack.c.b16 %v6514, %v6506
    %v7443 = vpack.c.b16 %v6515, %v6507
    %v7444 = vpack.c.b16 %v6516, %v6508
    %v7445 = vpack.c.b16 %v6517, %v6509
    %v7446 = vpack.c.b16 %v6518, %v6510
    %v7447 = vpack.c.b16 %v6519, %v6511
    %v7448 = vpack.c.b16 %v6520, %v6512
    %v7449 = vpack.c.b16 %v6521, %v6513
    %v7450 = vpack.c.b16 %v6530, %v6522
    %v7451 = vpack.c.b16 %v6531, %v6523
    %v7452 = vpack.c.b16 %v6532, %v6524
    %v7453 = vpack.c.b16 %v6533, %v6525
    %v7454 = vpack.c.b16 %v6534, %v6526
    %v7455 = vpack.c.b16 %v6535, %v6527
    %v7456 = vpack.c.b16 %v6536, %v6528
    %v7457 = vpack.c.b16 %v6537, %v6529
    %v7458 = vpack.c.b16 %v6546, %v6538
    %v7459 = vpack.c.b16 %v6547, %v6539
    %v7460 = vpack.c.b16 %v6548, %v6540
    %v7461 = vpack.c.b16 %v6549, %v6541
    %v7462 = vpack.c.b16 %v6550, %v6542
    %v7463 = vpack.c.b16 %v6551, %v6543
    %v7464 = vpack.c.b16 %v6552, %v6544
    %v7465 = vpack.c.b16 %v6553, %v6545
    %v7466 = vpack.c.b16 %v6562, %v6554
    %v7467 = vpack.c.b16 %v6563, %v6555
    %v7468 = vpack.c.b16 %v6564, %v6556
    %v7469 = vpack.c.b16 %v6565, %v6557
    %v7470 = vpack.c.b16 %v6566, %v6558
    %v7471 = vpack.c.b16 %v6567, %v6559
    %v7472 = vpack.c.b16 %v6568, %v6560
    %v7473 = vpack.c.b16 %v6569, %v6561
    %v7474 = vpack.c.b16 %v6578, %v6570
    %v7475 = vpack.c.b16 %v6579, %v6571
    %v7476 = vpack.c.b16 %v6580, %v6572
    %v7477 = vpack.c.b16 %v6581, %v6573
    %v7478 = vpack.c.b16 %v6582, %v6574
    %v7479 = vpack.c.b16 %v6583, %v6575
    %v7480 = vpack.c.b16 %v6584, %v6576
    %v7481 = vpack.c.b16 %v6585, %v6577
    %v7482 = vpack.c.b16 %v6594, %v6586
    %v7483 = vpack.c.b16 %v6595, %v6587
    %v7484 = vpack.c.b16 %v6596, %v6588
    %v7485 = vpack.c.b16 %v6597, %v6589
    %v7486 = vpack.c.b16 %v6598, %v6590
    %v7487 = vpack.c.b16 %v6599, %v6591
    %v7488 = vpack.c.b16 %v6600, %v6592
    %v7489 = vpack.c.b16 %v6601, %v6593
    %v7490 = vpack.c.b16 %v6610, %v6602
    %v7491 = vpack.c.b16 %v6611, %v6603
    %v7492 = vpack.c.b16 %v6612, %v6604
    %v7493 = vpack.c.b16 %v6613, %v6605
    %v7494 = vpack.c.b16 %v6614, %v6606
    %v7495 = vpack.c.b16 %v6615, %v6607
    %v7496 = vpack.c.b16 %v6616, %v6608
    %v7497 = vpack.c.b16 %v6617, %v6609
    %v7498 = vpack.c.b16 %v6626, %v6618
    %v7499 = vpack.c.b16 %v6627, %v6619
    %v7500 = vpack.c.b16 %v6628, %v6620
    %v7501 = vpack.c.b16 %v6629, %v6621
    %v7502 = vpack.c.b16 %v6630, %v6622
    %v7503 = vpack.c.b16 %v6631, %v6623
    %v7504 = vpack.c.b16 %v6632, %v6624
    %v7505 = vpack.c.b16 %v6633, %v6625
    %v7506 = vpack.c.b16 %v6642, %v6634
    %v7507 = vpack.c.b16 %v6643, %v6635
    %v7508 = vpack.c.b16 %v6644, %v6636
    %v7509 = vpack.c.b16 %v6645, %v6637
    %v7510 = vpack.c.b16 %v6646, %v6638
    %v7511 = vpack.c.b16 %v6647, %v6639
    %v7512 = vpack.c.b16 %v6648, %v6640
    %v7513 = vpack.c.b16 %v6649, %v6641
    %v7514 = vpack.c.b16 %v6658, %v6650
    %v7515 = vpack.c.b16 %v6659, %v6651
    %v7516 = vpack.c.b16 %v6660, %v6652
    %v7517 = vpack.c.b16 %v6661, %v6653
    %v7518 = vpack.c.b16 %v6662, %v6654
    %v7519 = vpack.c.b16 %v6663, %v6655
    %v7520 = vpack.c.b16 %v6664, %v6656
    %v7521 = vpack.c.b16 %v6665, %v6657
    %v7522 = vpack.c.b16 %v6674, %v6666
    %v7523 = vpack.c.b16 %v6675, %v6667
    %v7524 = vpack.c.b16 %v6676, %v6668
    %v7525 = vpack.c.b16 %v6677, %v6669
    %v7526 = vpack.c.b16 %v6678, %v6670
    %v7527 = vpack.c.b16 %v6679, %v6671
    %v7528 = vpack.c.b16 %v6680, %v6672
    %v7529 = vpack.c.b16 %v6681, %v6673
    %v7530 = vpack.c.b16 %v6690, %v6682
    %v7531 = vpack.c.b16 %v6691, %v6683
    %v7532 = vpack.c.b16 %v6692, %v6684
    %v7533 = vpack.c.b16 %v6693, %v6685
    %v7534 = vpack.c.b16 %v6694, %v6686
    %v7535 = vpack.c.b16 %v6695, %v6687
    %v7536 = vpack.c.b16 %v6696, %v6688
    %v7537 = vpack.c.b16 %v6697, %v6689
    %v7538 = vpack.c.b16 %v6706, %v6698
    %v7539 = vpack.c.b16 %v6707, %v6699
    %v7540 = vpack.c.b16 %v6708, %v6700
    %v7541 = vpack.c.b16 %v6709, %v6701
    %v7542 = vpack.c.b16 %v6710, %v6702
    %v7543 = vpack.c.b16 %v6711, %v6703
    %v7544 = vpack.c.b16 %v6712, %v6704
    %v7545 = vpack.c.b16 %v6713, %v6705
    %v7546 = vpack.c.b16 %v6722, %v6714
    %v7547 = vpack.c.b16 %v6723, %v6715
    %v7548 = vpack.c.b16 %v6724, %v6716
    %v7549 = vpack.c.b16 %v6725, %v6717
    %v7550 = vpack.c.b16 %v6726, %v6718
    %v7551 = vpack.c.b16 %v6727, %v6719
    %v7552 = vpack.c.b16 %v6728, %v6720
    %v7553 = vpack.c.b16 %v6729, %v6721
    %v7554 = vpack.c.b16 %v6738, %v6730
    %v7555 = vpack.c.b16 %v6739, %v6731
    %v7556 = vpack.c.b16 %v6740, %v6732
    %v7557 = vpack.c.b16 %v6741, %v6733
    %v7558 = vpack.c.b16 %v6742, %v6734
    %v7559 = vpack.c.b16 %v6743, %v6735
    %v7560 = vpack.c.b16 %v6744, %v6736
    %v7561 = vpack.c.b16 %v6745, %v6737
    %v7562 = vpack.c.b16 %v6754, %v6746
    %v7563 = vpack.c.b16 %v6755, %v6747
    %v7564 = vpack.c.b16 %v6756, %v6748
    %v7565 = vpack.c.b16 %v6757, %v6749
    %v7566 = vpack.c.b16 %v6758, %v6750
    %v7567 = vpack.c.b16 %v6759, %v6751
    %v7568 = vpack.c.b16 %v6760, %v6752
    %v7569 = vpack.c.b16 %v6761, %v6753
    %v7570 = vpack.c.b16 %v6770, %v6762
    %v7571 = vpack.c.b16 %v6771, %v6763
    %v7572 = vpack.c.b16 %v6772, %v6764
    %v7573 = vpack.c.b16 %v6773, %v6765
    %v7574 = vpack.c.b16 %v6774, %v6766
    %v7575 = vpack.c.b16 %v6775, %v6767
    %v7576 = vpack.c.b16 %v6776, %v6768
    %v7577 = vpack.c.b16 %v6777, %v6769
    %v7578 = vpack.c.b16 %v6786, %v6778
    %v7579 = vpack.c.b16 %v6787, %v6779
    %v7580 = vpack.c.b16 %v6788, %v6780
    %v7581 = vpack.c.b16 %v6789, %v6781
    %v7582 = vpack.c.b16 %v6790, %v6782
    %v7583 = vpack.c.b16 %v6791, %v6783
    %v7584 = vpack.c.b16 %v6792, %v6784
    %v7585 = vpack.c.b16 %v6793, %v6785
    %v7586 = vpack.c.b16 %v6802, %v6794
    %v7587 = vpack.c.b16 %v6803, %v6795
    %v7588 = vpack.c.b16 %v6804, %v6796
    %v7589 = vpack.c.b16 %v6805, %v6797
    %v7590 = vpack.c.b16 %v6806, %v6798
    %v7591 = vpack.c.b16 %v6807, %v6799
    %v7592 = vpack.c.b16 %v6808, %v6800
    %v7593 = vpack.c.b16 %v6809, %v6801
    %v7594 = vpack.c.b16 %v6818, %v6810
    %v7595 = vpack.c.b16 %v6819, %v6811
    %v7596 = vpack.c.b16 %v6820, %v6812
    %v7597 = vpack.c.b16 %v6821, %v6813
    %v7598 = vpack.c.b16 %v6822, %v6814
    %v7599 = vpack.c.b16 %v6823, %v6815
    %v7600 = vpack.c.b16 %v6824, %v6816
    %v7601 = vpack.c.b16 %v6825, %v6817
    %v7602 = vpack.c.b16 %v6834, %v6826
    %v7603 = vpack.c.b16 %v6835, %v6827
    %v7604 = vpack.c.b16 %v6836, %v6828
    %v7605 = vpack.c.b16 %v6837, %v6829
    %v7606 = vpack.c.b16 %v6838, %v6830
    %v7607 = vpack.c.b16 %v6839, %v6831
    %v7608 = vpack.c.b16 %v6840, %v6832
    %v7609 = vpack.c.b16 %v6841, %v6833
    %v7610 = vpack.c.b16 %v6850, %v6842
    %v7611 = vpack.c.b16 %v6851, %v6843
    %v7612 = vpack.c.b16 %v6852, %v6844
    %v7613 = vpack.c.b16 %v6853, %v6845
    %v7614 = vpack.c.b16 %v6854, %v6846
    %v7615 = vpack.c.b16 %v6855, %v6847
    %v7616 = vpack.c.b16 %v6856, %v6848
    %v7617 = vpack.c.b16 %v6857, %v6849
    %v7618 = vpack.c.b16 %v6866, %v6858
    %v7619 = vpack.c.b16 %v6867, %v6859
    %v7620 = vpack.c.b16 %v6868, %v6860
    %v7621 = vpack.c.b16 %v6869, %v6861
    %v7622 = vpack.c.b16 %v6870, %v6862
    %v7623 = vpack.c.b16 %v6871, %v6863
    %v7624 = vpack.c.b16 %v6872, %v6864
    %v7625 = vpack.c.b16 %v6873, %v6865
    %v7626 = vpack.c.b16 %v6882, %v6874
    %v7627 = vpack.c.b16 %v6883, %v6875
    %v7628 = vpack.c.b16 %v6884, %v6876
    %v7629 = vpack.c.b16 %v6885, %v6877
    %v7630 = vpack.c.b16 %v6886, %v6878
    %v7631 = vpack.c.b16 %v6887, %v6879
    %v7632 = vpack.c.b16 %v6888, %v6880
    %v7633 = vpack.c.b16 %v6889, %v6881
    %v7634 = vpack.c.b16 %v6898, %v6890
    %v7635 = vpack.c.b16 %v6899, %v6891
    %v7636 = vpack.c.b16 %v6900, %v6892
    %v7637 = vpack.c.b16 %v6901, %v6893
    %v7638 = vpack.c.b16 %v6902, %v6894
    %v7639 = vpack.c.b16 %v6903, %v6895
    %v7640 = vpack.c.b16 %v6904, %v6896
    %v7641 = vpack.c.b16 %v6905, %v6897
    %v7642 = vpack.c.b16 %v6914, %v6906
    %v7643 = vpack.c.b16 %v6915, %v6907
    %v7644 = vpack.c.b16 %v6916, %v6908
    %v7645 = vpack.c.b16 %v6917, %v6909
    %v7646 = vpack.c.b16 %v6918, %v6910
    %v7647 = vpack.c.b16 %v6919, %v6911
    %v7648 = vpack.c.b16 %v6920, %v6912
    %v7649 = vpack.c.b16 %v6921, %v6913
    %v7650 = vpack.c.b16 %v6930, %v6922
    %v7651 = vpack.c.b16 %v6931, %v6923
    %v7652 = vpack.c.b16 %v6932, %v6924
    %v7653 = vpack.c.b16 %v6933, %v6925
    %v7654 = vpack.c.b16 %v6934, %v6926
    %v7655 = vpack.c.b16 %v6935, %v6927
    %v7656 = vpack.c.b16 %v6936, %v6928
    %v7657 = vpack.c.b16 %v6937, %v6929
    %v7658 = vpack.c.b16 %v6946, %v6938
    %v7659 = vpack.c.b16 %v6947, %v6939
    %v7660 = vpack.c.b16 %v6948, %v6940
    %v7661 = vpack.c.b16 %v6949, %v6941
    %v7662 = vpack.c.b16 %v6950, %v6942
    %v7663 = vpack.c.b16 %v6951, %v6943
    %v7664 = vpack.c.b16 %v6952, %v6944
    %v7665 = vpack.c.b16 %v6953, %v6945
    %v7666 = vpack.c.b16 %v6962, %v6954
    %v7667 = vpack.c.b16 %v6963, %v6955
    %v7668 = vpack.c.b16 %v6964, %v6956
    %v7669 = vpack.c.b16 %v6965, %v6957
    %v7670 = vpack.c.b16 %v6966, %v6958
    %v7671 = vpack.c.b16 %v6967, %v6959
    %v7672 = vpack.c.b16 %v6968, %v6960
    %v7673 = vpack.c.b16 %v6969, %v6961
    %v7674 = vpack.c.b16 %v6978, %v6970
    %v7675 = vpack.c.b16 %v6979, %v6971
    %v7676 = vpack.c.b16 %v6980, %v6972
    %v7677 = vpack.c.b16 %v6981, %v6973
    %v7678 = vpack.c.b16 %v6982, %v6974
    %v7679 = vpack.c.b16 %v6983, %v6975
    %v7680 = vpack.c.b16 %v6984, %v6976
    %v7681 = vpack.c.b16 %v6985, %v6977
    %v7682 = vpack.c.b16 %v6994, %v6986
    %v7683 = vpack.c.b16 %v6995, %v6987
    %v7684 = vpack.c.b16 %v6996, %v6988
    %v7685 = vpack.c.b16 %v6997, %v6989
    %v7686 = vpack.c.b16 %v6998, %v6990
    %v7687 = vpack.c.b16 %v6999, %v6991
    %v7688 = vpack.c.b16 %v7000, %v6992
    %v7689 = vpack.c.b16 %v7001, %v6993
    %v7690 = vpack.c.b16 %v7010, %v7002
    %v7691 = vpack.c.b16 %v7011, %v7003
    %v7692 = vpack.c.b16 %v7012, %v7004
    %v7693 = vpack.c.b16 %v7013, %v7005
    %v7694 = vpack.c.b16 %v7014, %v7006
    %v7695 = vpack.c.b16 %v7015, %v7007
    %v7696 = vpack.c.b16 %v7016, %v7008
    %v7697 = vpack.c.b16 %v7017, %v7009
    %v7698 = vpack.c.b16 %v7026, %v7018
    %v7699 = vpack.c.b16 %v7027, %v7019
    %v7700 = vpack.c.b16 %v7028, %v7020
    %v7701 = vpack.c.b16 %v7029, %v7021
    %v7702 = vpack.c.b16 %v7030, %v7022
    %v7703 = vpack.c.b16 %v7031, %v7023
    %v7704 = vpack.c.b16 %v7032, %v7024
    %v7705 = vpack.c.b16 %v7033, %v7025
    %v7706 = vpack.c.b16 %v7042, %v7034
    %v7707 = vpack.c.b16 %v7043, %v7035
    %v7708 = vpack.c.b16 %v7044, %v7036
    %v7709 = vpack.c.b16 %v7045, %v7037
    %v7710 = vpack.c.b16 %v7046, %v7038
    %v7711 = vpack.c.b16 %v7047, %v7039
    %v7712 = vpack.c.b16 %v7048, %v7040
    %v7713 = vpack.c.b16 %v7049, %v7041
    %v7714 = vpack.c.b16 %v7058, %v7050
    %v7715 = vpack.c.b16 %v7059, %v7051
    %v7716 = vpack.c.b16 %v7060, %v7052
    %v7717 = vpack.c.b16 %v7061, %v7053
    %v7718 = vpack.c.b16 %v7062, %v7054
    %v7719 = vpack.c.b16 %v7063, %v7055
    %v7720 = vpack.c.b16 %v7064, %v7056
    %v7721 = vpack.c.b16 %v7065, %v7057
    %v7722 = vpack.c.b16 %v7074, %v7066
    %v7723 = vpack.c.b16 %v7075, %v7067
    %v7724 = vpack.c.b16 %v7076, %v7068
    %v7725 = vpack.c.b16 %v7077, %v7069
    %v7726 = vpack.c.b16 %v7078, %v7070
    %v7727 = vpack.c.b16 %v7079, %v7071
    %v7728 = vpack.c.b16 %v7080, %v7072
    %v7729 = vpack.c.b16 %v7081, %v7073
    %v7730 = vpack.c.b16 %v7090, %v7082
    %v7731 = vpack.c.b16 %v7091, %v7083
    %v7732 = vpack.c.b16 %v7092, %v7084
    %v7733 = vpack.c.b16 %v7093, %v7085
    %v7734 = vpack.c.b16 %v7094, %v7086
    %v7735 = vpack.c.b16 %v7095, %v7087
    %v7736 = vpack.c.b16 %v7096, %v7088
    %v7737 = vpack.c.b16 %v7097, %v7089
    %v7738 = vpack.c.b16 %v7106, %v7098
    %v7739 = vpack.c.b16 %v7107, %v7099
    %v7740 = vpack.c.b16 %v7108, %v7100
    %v7741 = vpack.c.b16 %v7109, %v7101
    %v7742 = vpack.c.b16 %v7110, %v7102
    %v7743 = vpack.c.b16 %v7111, %v7103
    %v7744 = vpack.c.b16 %v7112, %v7104
    %v7745 = vpack.c.b16 %v7113, %v7105
    %v7746 = vpack.c.b16 %v7122, %v7114
    %v7747 = vpack.c.b16 %v7123, %v7115
    %v7748 = vpack.c.b16 %v7124, %v7116
    %v7749 = vpack.c.b16 %v7125, %v7117
    %v7750 = vpack.c.b16 %v7126, %v7118
    %v7751 = vpack.c.b16 %v7127, %v7119
    %v7752 = vpack.c.b16 %v7128, %v7120
    %v7753 = vpack.c.b16 %v7129, %v7121
    %v7754 = vpack.c.b16 %v7138, %v7130
    %v7755 = vpack.c.b16 %v7139, %v7131
    %v7756 = vpack.c.b16 %v7140, %v7132
    %v7757 = vpack.c.b16 %v7141, %v7133
    %v7758 = vpack.c.b16 %v7142, %v7134
    %v7759 = vpack.c.b16 %v7143, %v7135
    %v7760 = vpack.c.b16 %v7144, %v7136
    %v7761 = vpack.c.b16 %v7145, %v7137
    %v7762 = vpack.c.b16 %v7154, %v7146
    %v7763 = vpack.c.b16 %v7155, %v7147
    %v7764 = vpack.c.b16 %v7156, %v7148
    %v7765 = vpack.c.b16 %v7157, %v7149
    %v7766 = vpack.c.b16 %v7158, %v7150
    %v7767 = vpack.c.b16 %v7159, %v7151
    %v7768 = vpack.c.b16 %v7160, %v7152
    %v7769 = vpack.c.b16 %v7161, %v7153
    %v7770 = vpack.c.b16 %v7170, %v7162
    %v7771 = vpack.c.b16 %v7171, %v7163
    %v7772 = vpack.c.b16 %v7172, %v7164
    %v7773 = vpack.c.b16 %v7173, %v7165
    %v7774 = vpack.c.b16 %v7174, %v7166
    %v7775 = vpack.c.b16 %v7175, %v7167
    %v7776 = vpack.c.b16 %v7176, %v7168
    %v7777 = vpack.c.b16 %v7177, %v7169
    %v7778 = vpack.c.b16 %v7186, %v7178
    %v7779 = vpack.c.b16 %v7187, %v7179
    %v7780 = vpack.c.b16 %v7188, %v7180
    %v7781 = vpack.c.b16 %v7189, %v7181
    %v7782 = vpack.c.b16 %v7190, %v7182
    %v7783 = vpack.c.b16 %v7191, %v7183
    %v7784 = vpack.c.b16 %v7192, %v7184
    %v7785 = vpack.c.b16 %v7193, %v7185
    %v7786 = vpack.c.b16 %v7202, %v7194
    %v7787 = vpack.c.b16 %v7203, %v7195
    %v7788 = vpack.c.b16 %v7204, %v7196
    %v7789 = vpack.c.b16 %v7205, %v7197
    %v7790 = vpack.c.b16 %v7206, %v7198
    %v7791 = vpack.c.b16 %v7207, %v7199
    %v7792 = vpack.c.b16 %v7208, %v7200
    %v7793 = vpack.c.b16 %v7209, %v7201
    %v7794 = vpack.c.b16 %v7218, %v7210
    %v7795 = vpack.c.b16 %v7219, %v7211
    %v7796 = vpack.c.b16 %v7220, %v7212
    %v7797 = vpack.c.b16 %v7221, %v7213
    %v7798 = vpack.c.b16 %v7222, %v7214
    %v7799 = vpack.c.b16 %v7223, %v7215
    %v7800 = vpack.c.b16 %v7224, %v7216
    %v7801 = vpack.c.b16 %v7225, %v7217
    %v7802 = vpack.c.b16 %v7234, %v7226
    %v7803 = vpack.c.b16 %v7235, %v7227
    %v7804 = vpack.c.b16 %v7236, %v7228
    %v7805 = vpack.c.b16 %v7237, %v7229
    %v7806 = vpack.c.b16 %v7238, %v7230
    %v7807 = vpack.c.b16 %v7239, %v7231
    %v7808 = vpack.c.b16 %v7240, %v7232
    %v7809 = vpack.c.b16 %v7241, %v7233
    %v7810 = vpack.c.b16 %v7250, %v7242
    %v7811 = vpack.c.b16 %v7251, %v7243
    %v7812 = vpack.c.b16 %v7252, %v7244
    %v7813 = vpack.c.b16 %v7253, %v7245
    %v7814 = vpack.c.b16 %v7254, %v7246
    %v7815 = vpack.c.b16 %v7255, %v7247
    %v7816 = vpack.c.b16 %v7256, %v7248
    %v7817 = vpack.c.b16 %v7257, %v7249
    %v7818 = vpack.c.b16 %v7266, %v7258
    %v7819 = vpack.c.b16 %v7267, %v7259
    %v7820 = vpack.c.b16 %v7268, %v7260
    %v7821 = vpack.c.b16 %v7269, %v7261
    %v7822 = vpack.c.b16 %v7270, %v7262
    %v7823 = vpack.c.b16 %v7271, %v7263
    %v7824 = vpack.c.b16 %v7272, %v7264
    %v7825 = vpack.c.b16 %v7273, %v7265
    %v7826 = vpack.c.b16 %v7282, %v7274
    %v7827 = vpack.c.b16 %v7283, %v7275
    %v7828 = vpack.c.b16 %v7284, %v7276
    %v7829 = vpack.c.b16 %v7285, %v7277
    %v7830 = vpack.c.b16 %v7286, %v7278
    %v7831 = vpack.c.b16 %v7287, %v7279
    %v7832 = vpack.c.b16 %v7288, %v7280
    %v7833 = vpack.c.b16 %v7289, %v7281
    %v7834 = vpack.c.b16 %v7298, %v7290
    %v7835 = vpack.c.b16 %v7299, %v7291
    %v7836 = vpack.c.b16 %v7300, %v7292
    %v7837 = vpack.c.b16 %v7301, %v7293
    %v7838 = vpack.c.b16 %v7302, %v7294
    %v7839 = vpack.c.b16 %v7303, %v7295
    %v7840 = vpack.c.b16 %v7304, %v7296
    %v7841 = vpack.c.b16 %v7305, %v7297
    %v7842 = vpack.c.b16 %v7314, %v7306
    %v7843 = vpack.c.b16 %v7315, %v7307
    %v7844 = vpack.c.b16 %v7316, %v7308
    %v7845 = vpack.c.b16 %v7317, %v7309
    %v7846 = vpack.c.b16 %v7318, %v7310
    %v7847 = vpack.c.b16 %v7319, %v7311
    %v7848 = vpack.c.b16 %v7320, %v7312
    %v7849 = vpack.c.b16 %v7321, %v7313
    %v7850 = vpack.c.b16 %v7330, %v7322
    %v7851 = vpack.c.b16 %v7331, %v7323
    %v7852 = vpack.c.b16 %v7332, %v7324
    %v7853 = vpack.c.b16 %v7333, %v7325
    %v7854 = vpack.c.b16 %v7334, %v7326
    %v7855 = vpack.c.b16 %v7335, %v7327
    %v7856 = vpack.c.b16 %v7336, %v7328
    %v7857 = vpack.c.b16 %v7337, %v7329
    %v7858 = vpack.c.b16 %v7346, %v7338
    %v7859 = vpack.c.b16 %v7347, %v7339
    %v7860 = vpack.c.b16 %v7348, %v7340
    %v7861 = vpack.c.b16 %v7349, %v7341
    %v7862 = vpack.c.b16 %v7350, %v7342
    %v7863 = vpack.c.b16 %v7351, %v7343
    %v7864 = vpack.c.b16 %v7352, %v7344
    %v7865 = vpack.c.b16 %v7353, %v7345
    %8378 = vmatprep.subr.bf16.mxu0 %v7355
    %8379 = vmatpush1.bf16.msra.mxu0 %v7354
    %8380 = vmatprep.subr.bf16.mxu0 %v7363
    %8381 = vmatpush1.bf16.msra.mxu0 %v7362
    %8382 = vmatprep.subr.bf16.mxu0 %v7371
    %8383 = vmatpush1.bf16.msra.mxu0 %v7370
    %8384 = vmatprep.subr.bf16.mxu0 %v7379
    %8385 = vmatpush1.bf16.msra.mxu0 %v7378
    %8386 = vmatprep.subr.bf16.mxu0 %v7387
    %8387 = vmatpush1.bf16.msra.mxu0 %v7386
    %8388 = vmatprep.subr.bf16.mxu0 %v7395
    %8389 = vmatpush1.bf16.msra.mxu0 %v7394
    %8390 = vmatprep.subr.bf16.mxu0 %v7403
    %8391 = vmatpush1.bf16.msra.mxu0 %v7402
    %8392 = vmatprep.subr.bf16.mxu0 %v7411
    %8393 = vmatpush1.bf16.msra.mxu0 %v7410
    %8394 = vmatprep.subr.bf16.mxu0 %v7419
    %8395 = vmatpush1.bf16.msra.mxu0 %v7418
    %8396 = vmatprep.subr.bf16.mxu0 %v7427
    %8397 = vmatpush1.bf16.msra.mxu0 %v7426
    %8398 = vmatprep.subr.bf16.mxu0 %v7435
    %8399 = vmatpush1.bf16.msra.mxu0 %v7434
    %8400 = vmatprep.subr.bf16.mxu0 %v7443
    %8401 = vmatpush1.bf16.msra.mxu0 %v7442
    %8402 = vmatprep.subr.bf16.mxu0 %v7451
    %8403 = vmatpush1.bf16.msra.mxu0 %v7450
    %8404 = vmatprep.subr.bf16.mxu0 %v7459
    %8405 = vmatpush1.bf16.msra.mxu0 %v7458
    %8406 = vmatprep.subr.bf16.mxu0 %v7467
    %8407 = vmatpush1.bf16.msra.mxu0 %v7466
    %8408 = vmatprep.subr.bf16.mxu0 %v7475
    %8409 = vmatpush1.bf16.msra.mxu0 %v7474
    %8410 = vmatprep.mubr.bf16.mxu0 %v5254
    %8411 = vmatmul.mubr.bf16.gmra.mrb[0].mxu0 %v5253
    %v8412 = vpop.f32.mrb[0].mxu0
    %v8413 = vadd.f32 %v5781, %v8412
    %v8414 = vpop.f32.mrb[0].mxu0
    %v8415 = vadd.f32 %v5785, %v8414
    %v8416 = vpop.f32.mrb[0].mxu0
    %v8417 = vpop.f32.mrb[0].mxu0
    %8418 = vdwg.mxu0
    %8419 = vmatprep.subr.bf16.mxu0 %v7483
    %8420 = vmatpush1.bf16.msra.mxu0 %v7482
    %8421 = vmatprep.subr.bf16.mxu0 %v7491
    %8422 = vmatpush1.bf16.msra.mxu0 %v7490
    %8423 = vmatprep.subr.bf16.mxu0 %v7499
    %8424 = vmatpush1.bf16.msra.mxu0 %v7498
    %8425 = vmatprep.subr.bf16.mxu0 %v7507
    %8426 = vmatpush1.bf16.msra.mxu0 %v7506
    %8427 = vmatprep.subr.bf16.mxu0 %v7515
    %8428 = vmatpush1.bf16.msra.mxu0 %v7514
    %8429 = vmatprep.subr.bf16.mxu0 %v7523
    %8430 = vmatpush1.bf16.msra.mxu0 %v7522
    %8431 = vmatprep.subr.bf16.mxu0 %v7531
    %8432 = vmatpush1.bf16.msra.mxu0 %v7530
    %8433 = vmatprep.subr.bf16.mxu0 %v7539
    %8434 = vmatpush1.bf16.msra.mxu0 %v7538
    %8435 = vmatprep.subr.bf16.mxu0 %v7547
    %8436 = vmatpush1.bf16.msra.mxu0 %v7546
    %8437 = vmatprep.subr.bf16.mxu0 %v7555
    %8438 = vmatpush1.bf16.msra.mxu0 %v7554
    %8439 = vmatprep.subr.bf16.mxu0 %v7563
    %8440 = vmatpush1.bf16.msra.mxu0 %v7562
    %8441 = vmatprep.subr.bf16.mxu0 %v7571
    %8442 = vmatpush1.bf16.msra.mxu0 %v7570
    %8443 = vmatprep.subr.bf16.mxu0 %v7579
    %8444 = vmatpush1.bf16.msra.mxu0 %v7578
    %8445 = vmatprep.subr.bf16.mxu0 %v7587
    %8446 = vmatpush1.bf16.msra.mxu0 %v7586
    %8447 = vmatprep.subr.bf16.mxu0 %v7595
    %8448 = vmatpush1.bf16.msra.mxu0 %v7594
    %8449 = vmatprep.subr.bf16.mxu0 %v7603
    %8450 = vmatpush1.bf16.msra.mxu0 %v7602
    %8451 = vmatprep.mubr.bf16.mxu0 %v5256
    %8452 = vmatmul.mubr.bf16.gmra.mrb[0].mxu0 %v5255
    %v8453 = vpop.f32.mrb[0].mxu0
    %v8454 = vadd.f32 %v8413, %v8453
    %v8455 = vpop.f32.mrb[0].mxu0
    %v8456 = vadd.f32 %v8415, %v8455
    %v8457 = vpop.f32.mrb[0].mxu0
    %v8458 = vpop.f32.mrb[0].mxu0
    %8459 = vdwg.mxu0
    %8460 = vmatprep.subr.bf16.mxu0 %v7611
    %8461 = vmatpush1.bf16.msra.mxu0 %v7610
    %8462 = vmatprep.subr.bf16.mxu0 %v7619
    %8463 = vmatpush1.bf16.msra.mxu0 %v7618
    %8464 = vmatprep.subr.bf16.mxu0 %v7627
    %8465 = vmatpush1.bf16.msra.mxu0 %v7626
    %8466 = vmatprep.subr.bf16.mxu0 %v7635
    %8467 = vmatpush1.bf16.msra.mxu0 %v7634
    %8468 = vmatprep.subr.bf16.mxu0 %v7643
    %8469 = vmatpush1.bf16.msra.mxu0 %v7642
    %8470 = vmatprep.subr.bf16.mxu0 %v7651
    %8471 = vmatpush1.bf16.msra.mxu0 %v7650
    %8472 = vmatprep.subr.bf16.mxu0 %v7659
    %8473 = vmatpush1.bf16.msra.mxu0 %v7658
    %8474 = vmatprep.subr.bf16.mxu0 %v7667
    %8475 = vmatpush1.bf16.msra.mxu0 %v7666
    %8476 = vmatprep.subr.bf16.mxu0 %v7675
    %8477 = vmatpush1.bf16.msra.mxu0 %v7674
    %8478 = vmatprep.subr.bf16.mxu0 %v7683
    %8479 = vmatpush1.bf16.msra.mxu0 %v7682
    %8480 = vmatprep.subr.bf16.mxu0 %v7691
    %8481 = vmatpush1.bf16.msra.mxu0 %v7690
    %8482 = vmatprep.subr.bf16.mxu0 %v7699
    %8483 = vmatpush1.bf16.msra.mxu0 %v7698
    %8484 = vmatprep.subr.bf16.mxu0 %v7707
    %8485 = vmatpush1.bf16.msra.mxu0 %v7706
    %8486 = vmatprep.subr.bf16.mxu0 %v7715
    %8487 = vmatpush1.bf16.msra.mxu0 %v7714
    %8488 = vmatprep.subr.bf16.mxu0 %v7723
    %8489 = vmatpush1.bf16.msra.mxu0 %v7722
    %8490 = vmatprep.subr.bf16.mxu0 %v7731
    %8491 = vmatpush1.bf16.msra.mxu0 %v7730
    %8492 = vmatprep.mubr.bf16.mxu0 %v5258
    %8493 = vmatmul.mubr.bf16.gmra.mrb[0].mxu0 %v5257
    %v8494 = vpop.f32.mrb[0].mxu0
    %v8495 = vadd.f32 %v8454, %v8494
    %v8496 = vpop.f32.mrb[0].mxu0
    %v8497 = vadd.f32 %v8456, %v8496
    %v8498 = vpop.f32.mrb[0].mxu0
    %v8499 = vpop.f32.mrb[0].mxu0
    %8500 = vdwg.mxu0
    %8501 = vmatprep.subr.bf16.mxu0 %v7739
    %8502 = vmatpush1.bf16.msra.mxu0 %v7738
    %8503 = vmatprep.subr.bf16.mxu0 %v7747
    %8504 = vmatpush1.bf16.msra.mxu0 %v7746
    %8505 = vmatprep.subr.bf16.mxu0 %v7755
    %8506 = vmatpush1.bf16.msra.mxu0 %v7754
    %8507 = vmatprep.subr.bf16.mxu0 %v7763
    %8508 = vmatpush1.bf16.msra.mxu0 %v7762
    %8509 = vmatprep.subr.bf16.mxu0 %v7771
    %8510 = vmatpush1.bf16.msra.mxu0 %v7770
    %8511 = vmatprep.subr.bf16.mxu0 %v7779
    %8512 = vmatpush1.bf16.msra.mxu0 %v7778
    %8513 = vmatprep.subr.bf16.mxu0 %v7787
    %8514 = vmatpush1.bf16.msra.mxu0 %v7786
    %8515 = vmatprep.subr.bf16.mxu0 %v7795
    %8516 = vmatpush1.bf16.msra.mxu0 %v7794
    %8517 = vmatprep.subr.bf16.mxu0 %v7803
    %8518 = vmatpush1.bf16.msra.mxu0 %v7802
    %8519 = vmatprep.subr.bf16.mxu0 %v7811
    %8520 = vmatpush1.bf16.msra.mxu0 %v7810
    %8521 = vmatprep.subr.bf16.mxu0 %v7819
    %8522 = vmatpush1.bf16.msra.mxu0 %v7818
    %8523 = vmatprep.subr.bf16.mxu0 %v7827
    %8524 = vmatpush1.bf16.msra.mxu0 %v7826
    %8525 = vmatprep.subr.bf16.mxu0 %v7835
    %8526 = vmatpush1.bf16.msra.mxu0 %v7834
    %8527 = vmatprep.subr.bf16.mxu0 %v7843
    %8528 = vmatpush1.bf16.msra.mxu0 %v7842
    %8529 = vmatprep.subr.bf16.mxu0 %v7851
    %8530 = vmatpush1.bf16.msra.mxu0 %v7850
    %8531 = vmatprep.subr.bf16.mxu0 %v7859
    %8532 = vmatpush1.bf16.msra.mxu0 %v7858
    %8533 = vmatprep.mubr.bf16.mxu0 %v5260
    %8534 = vmatmul.mubr.bf16.gmra.mrb[0].mxu0 %v5259
    %v8535 = vpop.f32.mrb[0].mxu0
    %v8536 = vadd.f32 %v8495, %v8535
    %v8537 = vpop.f32.mrb[0].mxu0
    %v8538 = vadd.f32 %v8497, %v8537
    %v8539 = vpop.f32.mrb[0].mxu0
    %v8540 = vpop.f32.mrb[0].mxu0
    %8541 = vdwg.mxu0
    %8542 = vmatprep.subr.bf16.mxu0 %v7357
    %8543 = vmatpush1.bf16.msra.mxu0 %v7356
    %8544 = vmatprep.subr.bf16.mxu0 %v7365
    %8545 = vmatpush1.bf16.msra.mxu0 %v7364
    %8546 = vmatprep.subr.bf16.mxu0 %v7373
    %8547 = vmatpush1.bf16.msra.mxu0 %v7372
    %8548 = vmatprep.subr.bf16.mxu0 %v7381
    %8549 = vmatpush1.bf16.msra.mxu0 %v7380
    %8550 = vmatprep.subr.bf16.mxu0 %v7389
    %8551 = vmatpush1.bf16.msra.mxu0 %v7388
    %8552 = vmatprep.subr.bf16.mxu0 %v7397
    %8553 = vmatpush1.bf16.msra.mxu0 %v7396
    %8554 = vmatprep.subr.bf16.mxu0 %v7405
    %8555 = vmatpush1.bf16.msra.mxu0 %v7404
    %8556 = vmatprep.subr.bf16.mxu0 %v7413
    %8557 = vmatpush1.bf16.msra.mxu0 %v7412
    %8558 = vmatprep.subr.bf16.mxu0 %v7421
    %8559 = vmatpush1.bf16.msra.mxu0 %v7420
    %8560 = vmatprep.subr.bf16.mxu0 %v7429
    %8561 = vmatpush1.bf16.msra.mxu0 %v7428
    %8562 = vmatprep.subr.bf16.mxu0 %v7437
    %8563 = vmatpush1.bf16.msra.mxu0 %v7436
    %8564 = vmatprep.subr.bf16.mxu0 %v7445
    %8565 = vmatpush1.bf16.msra.mxu0 %v7444
    %8566 = vmatprep.subr.bf16.mxu0 %v7453
    %8567 = vmatpush1.bf16.msra.mxu0 %v7452
    %8568 = vmatprep.subr.bf16.mxu0 %v7461
    %8569 = vmatpush1.bf16.msra.mxu0 %v7460
    %8570 = vmatprep.subr.bf16.mxu0 %v7469
    %8571 = vmatpush1.bf16.msra.mxu0 %v7468
    %8572 = vmatprep.subr.bf16.mxu0 %v7477
    %8573 = vmatpush1.bf16.msra.mxu0 %v7476
    %8574 = vmatprep.mubr.bf16.mxu0 %v5254
    %8575 = vmatmul.mubr.bf16.gmra.mrb[0].mxu0 %v5253
    %v8576 = vpop.f32.mrb[0].mxu0
    %v8577 = vadd.f32 %v5789, %v8576
    %v8578 = vpop.f32.mrb[0].mxu0
    %v8579 = vadd.f32 %v5793, %v8578
    %v8580 = vpop.f32.mrb[0].mxu0
    %v8581 = vpop.f32.mrb[0].mxu0
    %8582 = vdwg.mxu0
    %8583 = vmatprep.subr.bf16.mxu0 %v7485
    %8584 = vmatpush1.bf16.msra.mxu0 %v7484
    %8585 = vmatprep.subr.bf16.mxu0 %v7493
    %8586 = vmatpush1.bf16.msra.mxu0 %v7492
    %8587 = vmatprep.subr.bf16.mxu0 %v7501
    %8588 = vmatpush1.bf16.msra.mxu0 %v7500
    %8589 = vmatprep.subr.bf16.mxu0 %v7509
    %8590 = vmatpush1.bf16.msra.mxu0 %v7508
    %8591 = vmatprep.subr.bf16.mxu0 %v7517
    %8592 = vmatpush1.bf16.msra.mxu0 %v7516
    %8593 = vmatprep.subr.bf16.mxu0 %v7525
    %8594 = vmatpush1.bf16.msra.mxu0 %v7524
    %8595 = vmatprep.subr.bf16.mxu0 %v7533
    %8596 = vmatpush1.bf16.msra.mxu0 %v7532
    %8597 = vmatprep.subr.bf16.mxu0 %v7541
    %8598 = vmatpush1.bf16.msra.mxu0 %v7540
    %8599 = vmatprep.subr.bf16.mxu0 %v7549
    %8600 = vmatpush1.bf16.msra.mxu0 %v7548
    %8601 = vmatprep.subr.bf16.mxu0 %v7557
    %8602 = vmatpush1.bf16.msra.mxu0 %v7556
    %8603 = vmatprep.subr.bf16.mxu0 %v7565
    %8604 = vmatpush1.bf16.msra.mxu0 %v7564
    %8605 = vmatprep.subr.bf16.mxu0 %v7573
    %8606 = vmatpush1.bf16.msra.mxu0 %v7572
    %8607 = vmatprep.subr.bf16.mxu0 %v7581
    %8608 = vmatpush1.bf16.msra.mxu0 %v7580
    %8609 = vmatprep.subr.bf16.mxu0 %v7589
    %8610 = vmatpush1.bf16.msra.mxu0 %v7588
    %8611 = vmatprep.subr.bf16.mxu0 %v7597
    %8612 = vmatpush1.bf16.msra.mxu0 %v7596
    %8613 = vmatprep.subr.bf16.mxu0 %v7605
    %8614 = vmatpush1.bf16.msra.mxu0 %v7604
    %8615 = vmatprep.mubr.bf16.mxu0 %v5256
    %8616 = vmatmul.mubr.bf16.gmra.mrb[0].mxu0 %v5255
    %v8617 = vpop.f32.mrb[0].mxu0
    %v8618 = vadd.f32 %v8577, %v8617
    %v8619 = vpop.f32.mrb[0].mxu0
    %v8620 = vadd.f32 %v8579, %v8619
    %v8621 = vpop.f32.mrb[0].mxu0
    %v8622 = vpop.f32.mrb[0].mxu0
    %8623 = vdwg.mxu0
    %8624 = vmatprep.subr.bf16.mxu0 %v7613
    %8625 = vmatpush1.bf16.msra.mxu0 %v7612
    %8626 = vmatprep.subr.bf16.mxu0 %v7621
    %8627 = vmatpush1.bf16.msra.mxu0 %v7620
    %8628 = vmatprep.subr.bf16.mxu0 %v7629
    %8629 = vmatpush1.bf16.msra.mxu0 %v7628
    %8630 = vmatprep.subr.bf16.mxu0 %v7637
    %8631 = vmatpush1.bf16.msra.mxu0 %v7636
    %8632 = vmatprep.subr.bf16.mxu0 %v7645
    %8633 = vmatpush1.bf16.msra.mxu0 %v7644
    %8634 = vmatprep.subr.bf16.mxu0 %v7653
    %8635 = vmatpush1.bf16.msra.mxu0 %v7652
    %8636 = vmatprep.subr.bf16.mxu0 %v7661
    %8637 = vmatpush1.bf16.msra.mxu0 %v7660
    %8638 = vmatprep.subr.bf16.mxu0 %v7669
    %8639 = vmatpush1.bf16.msra.mxu0 %v7668
    %8640 = vmatprep.subr.bf16.mxu0 %v7677
    %8641 = vmatpush1.bf16.msra.mxu0 %v7676
    %8642 = vmatprep.subr.bf16.mxu0 %v7685
    %8643 = vmatpush1.bf16.msra.mxu0 %v7684
    %8644 = vmatprep.subr.bf16.mxu0 %v7693
    %8645 = vmatpush1.bf16.msra.mxu0 %v7692
    %8646 = vmatprep.subr.bf16.mxu0 %v7701
    %8647 = vmatpush1.bf16.msra.mxu0 %v7700
    %8648 = vmatprep.subr.bf16.mxu0 %v7709
    %8649 = vmatpush1.bf16.msra.mxu0 %v7708
    %8650 = vmatprep.subr.bf16.mxu0 %v7717
    %8651 = vmatpush1.bf16.msra.mxu0 %v7716
    %8652 = vmatprep.subr.bf16.mxu0 %v7725
    %8653 = vmatpush1.bf16.msra.mxu0 %v7724
    %8654 = vmatprep.subr.bf16.mxu0 %v7733
    %8655 = vmatpush1.bf16.msra.mxu0 %v7732
    %8656 = vmatprep.mubr.bf16.mxu0 %v5258
    %8657 = vmatmul.mubr.bf16.gmra.mrb[0].mxu0 %v5257
    %v8658 = vpop.f32.mrb[0].mxu0
    %v8659 = vadd.f32 %v8618, %v8658
    %v8660 = vpop.f32.mrb[0].mxu0
    %v8661 = vadd.f32 %v8620, %v8660
    %v8662 = vpop.f32.mrb[0].mxu0
    %v8663 = vpop.f32.mrb[0].mxu0
    %8664 = vdwg.mxu0
    %8665 = vmatprep.subr.bf16.mxu0 %v7741
    %8666 = vmatpush1.bf16.msra.mxu0 %v7740
    %8667 = vmatprep.subr.bf16.mxu0 %v7749
    %8668 = vmatpush1.bf16.msra.mxu0 %v7748
    %8669 = vmatprep.subr.bf16.mxu0 %v7757
    %8670 = vmatpush1.bf16.msra.mxu0 %v7756
    %8671 = vmatprep.subr.bf16.mxu0 %v7765
    %8672 = vmatpush1.bf16.msra.mxu0 %v7764
    %8673 = vmatprep.subr.bf16.mxu0 %v7773
    %8674 = vmatpush1.bf16.msra.mxu0 %v7772
    %8675 = vmatprep.subr.bf16.mxu0 %v7781
    %8676 = vmatpush1.bf16.msra.mxu0 %v7780
    %8677 = vmatprep.subr.bf16.mxu0 %v7789
    %8678 = vmatpush1.bf16.msra.mxu0 %v7788
    %8679 = vmatprep.subr.bf16.mxu0 %v7797
    %8680 = vmatpush1.bf16.msra.mxu0 %v7796
    %8681 = vmatprep.subr.bf16.mxu0 %v7805
    %8682 = vmatpush1.bf16.msra.mxu0 %v7804
    %8683 = vmatprep.subr.bf16.mxu0 %v7813
    %8684 = vmatpush1.bf16.msra.mxu0 %v7812
    %8685 = vmatprep.subr.bf16.mxu0 %v7821
    %8686 = vmatpush1.bf16.msra.mxu0 %v7820
    %8687 = vmatprep.subr.bf16.mxu0 %v7829
    %8688 = vmatpush1.bf16.msra.mxu0 %v7828
    %8689 = vmatprep.subr.bf16.mxu0 %v7837
    %8690 = vmatpush1.bf16.msra.mxu0 %v7836
    %8691 = vmatprep.subr.bf16.mxu0 %v7845
    %8692 = vmatpush1.bf16.msra.mxu0 %v7844
    %8693 = vmatprep.subr.bf16.mxu0 %v7853
    %8694 = vmatpush1.bf16.msra.mxu0 %v7852
    %8695 = vmatprep.subr.bf16.mxu0 %v7861
    %8696 = vmatpush1.bf16.msra.mxu0 %v7860
    %8697 = vmatprep.mubr.bf16.mxu0 %v5260
    %8698 = vmatmul.mubr.bf16.gmra.mrb[0].mxu0 %v5259
    %v8699 = vpop.f32.mrb[0].mxu0
    %v8700 = vadd.f32 %v8659, %v8699
    %v8701 = vpop.f32.mrb[0].mxu0
    %v8702 = vadd.f32 %v8661, %v8701
    %v8703 = vpop.f32.mrb[0].mxu0
    %v8704 = vpop.f32.mrb[0].mxu0
    %8705 = vdwg.mxu0
    %8706 = vmatprep.subr.bf16.mxu0 %v7359
    %8707 = vmatpush1.bf16.msra.mxu0 %v7358
    %8708 = vmatprep.subr.bf16.mxu0 %v7367
    %8709 = vmatpush1.bf16.msra.mxu0 %v7366
    %8710 = vmatprep.subr.bf16.mxu0 %v7375
    %8711 = vmatpush1.bf16.msra.mxu0 %v7374
    %8712 = vmatprep.subr.bf16.mxu0 %v7383
    %8713 = vmatpush1.bf16.msra.mxu0 %v7382
    %8714 = vmatprep.subr.bf16.mxu0 %v7391
    %8715 = vmatpush1.bf16.msra.mxu0 %v7390
    %8716 = vmatprep.subr.bf16.mxu0 %v7399
    %8717 = vmatpush1.bf16.msra.mxu0 %v7398
    %8718 = vmatprep.subr.bf16.mxu0 %v7407
    %8719 = vmatpush1.bf16.msra.mxu0 %v7406
    %8720 = vmatprep.subr.bf16.mxu0 %v7415
    %8721 = vmatpush1.bf16.msra.mxu0 %v7414
    %8722 = vmatprep.subr.bf16.mxu0 %v7423
    %8723 = vmatpush1.bf16.msra.mxu0 %v7422
    %8724 = vmatprep.subr.bf16.mxu0 %v7431
    %8725 = vmatpush1.bf16.msra.mxu0 %v7430
    %8726 = vmatprep.subr.bf16.mxu0 %v7439
    %8727 = vmatpush1.bf16.msra.mxu0 %v7438
    %8728 = vmatprep.subr.bf16.mxu0 %v7447
    %8729 = vmatpush1.bf16.msra.mxu0 %v7446
    %8730 = vmatprep.subr.bf16.mxu0 %v7455
    %8731 = vmatpush1.bf16.msra.mxu0 %v7454
    %8732 = vmatprep.subr.bf16.mxu0 %v7463
    %8733 = vmatpush1.bf16.msra.mxu0 %v7462
    %8734 = vmatprep.subr.bf16.mxu0 %v7471
    %8735 = vmatpush1.bf16.msra.mxu0 %v7470
    %8736 = vmatprep.subr.bf16.mxu0 %v7479
    %8737 = vmatpush1.bf16.msra.mxu0 %v7478
    %8738 = vmatprep.mubr.bf16.mxu0 %v5254
    %8739 = vmatmul.mubr.bf16.gmra.mrb[0].mxu0 %v5253
    %v8740 = vpop.f32.mrb[0].mxu0
    %v8741 = vadd.f32 %v5797, %v8740
    %v8742 = vpop.f32.mrb[0].mxu0
    %v8743 = vadd.f32 %v5801, %v8742
    %v8744 = vpop.f32.mrb[0].mxu0
    %v8745 = vpop.f32.mrb[0].mxu0
    %8746 = vdwg.mxu0
    %8747 = vmatprep.subr.bf16.mxu0 %v7487
    %8748 = vmatpush1.bf16.msra.mxu0 %v7486
    %8749 = vmatprep.subr.bf16.mxu0 %v7495
    %8750 = vmatpush1.bf16.msra.mxu0 %v7494
    %8751 = vmatprep.subr.bf16.mxu0 %v7503
    %8752 = vmatpush1.bf16.msra.mxu0 %v7502
    %8753 = vmatprep.subr.bf16.mxu0 %v7511
    %8754 = vmatpush1.bf16.msra.mxu0 %v7510
    %8755 = vmatprep.subr.bf16.mxu0 %v7519
    %8756 = vmatpush1.bf16.msra.mxu0 %v7518
    %8757 = vmatprep.subr.bf16.mxu0 %v7527
    %8758 = vmatpush1.bf16.msra.mxu0 %v7526
    %8759 = vmatprep.subr.bf16.mxu0 %v7535
    %8760 = vmatpush1.bf16.msra.mxu0 %v7534
    %8761 = vmatprep.subr.bf16.mxu0 %v7543
    %8762 = vmatpush1.bf16.msra.mxu0 %v7542
    %8763 = vmatprep.subr.bf16.mxu0 %v7551
    %8764 = vmatpush1.bf16.msra.mxu0 %v7550
    %8765 = vmatprep.subr.bf16.mxu0 %v7559
    %8766 = vmatpush1.bf16.msra.mxu0 %v7558
    %8767 = vmatprep.subr.bf16.mxu0 %v7567
    %8768 = vmatpush1.bf16.msra.mxu0 %v7566
    %8769 = vmatprep.subr.bf16.mxu0 %v7575
    %8770 = vmatpush1.bf16.msra.mxu0 %v7574
    %8771 = vmatprep.subr.bf16.mxu0 %v7583
    %8772 = vmatpush1.bf16.msra.mxu0 %v7582
    %8773 = vmatprep.subr.bf16.mxu0 %v7591
    %8774 = vmatpush1.bf16.msra.mxu0 %v7590
    %8775 = vmatprep.subr.bf16.mxu0 %v7599
    %8776 = vmatpush1.bf16.msra.mxu0 %v7598
    %8777 = vmatprep.subr.bf16.mxu0 %v7607
    %8778 = vmatpush1.bf16.msra.mxu0 %v7606
    %8779 = vmatprep.mubr.bf16.mxu0 %v5256
    %8780 = vmatmul.mubr.bf16.gmra.mrb[0].mxu0 %v5255
    %v8781 = vpop.f32.mrb[0].mxu0
    %v8782 = vadd.f32 %v8741, %v8781
    %v8783 = vpop.f32.mrb[0].mxu0
    %v8784 = vadd.f32 %v8743, %v8783
    %v8785 = vpop.f32.mrb[0].mxu0
    %v8786 = vpop.f32.mrb[0].mxu0
    %8787 = vdwg.mxu0
    %8788 = vmatprep.subr.bf16.mxu0 %v7615
    %8789 = vmatpush1.bf16.msra.mxu0 %v7614
    %8790 = vmatprep.subr.bf16.mxu0 %v7623
    %8791 = vmatpush1.bf16.msra.mxu0 %v7622
    %8792 = vmatprep.subr.bf16.mxu0 %v7631
    %8793 = vmatpush1.bf16.msra.mxu0 %v7630
    %8794 = vmatprep.subr.bf16.mxu0 %v7639
    %8795 = vmatpush1.bf16.msra.mxu0 %v7638
    %8796 = vmatprep.subr.bf16.mxu0 %v7647
    %8797 = vmatpush1.bf16.msra.mxu0 %v7646
    %8798 = vmatprep.subr.bf16.mxu0 %v7655
    %8799 = vmatpush1.bf16.msra.mxu0 %v7654
    %8800 = vmatprep.subr.bf16.mxu0 %v7663
    %8801 = vmatpush1.bf16.msra.mxu0 %v7662
    %8802 = vmatprep.subr.bf16.mxu0 %v7671
    %8803 = vmatpush1.bf16.msra.mxu0 %v7670
    %8804 = vmatprep.subr.bf16.mxu0 %v7679
    %8805 = vmatpush1.bf16.msra.mxu0 %v7678
    %8806 = vmatprep.subr.bf16.mxu0 %v7687
    %8807 = vmatpush1.bf16.msra.mxu0 %v7686
    %8808 = vmatprep.subr.bf16.mxu0 %v7695
    %8809 = vmatpush1.bf16.msra.mxu0 %v7694
    %8810 = vmatprep.subr.bf16.mxu0 %v7703
    %8811 = vmatpush1.bf16.msra.mxu0 %v7702
    %8812 = vmatprep.subr.bf16.mxu0 %v7711
    %8813 = vmatpush1.bf16.msra.mxu0 %v7710
    %8814 = vmatprep.subr.bf16.mxu0 %v7719
    %8815 = vmatpush1.bf16.msra.mxu0 %v7718
    %8816 = vmatprep.subr.bf16.mxu0 %v7727
    %8817 = vmatpush1.bf16.msra.mxu0 %v7726
    %8818 = vmatprep.subr.bf16.mxu0 %v7735
    %8819 = vmatpush1.bf16.msra.mxu0 %v7734
    %8820 = vmatprep.mubr.bf16.mxu0 %v5258
    %8821 = vmatmul.mubr.bf16.gmra.mrb[0].mxu0 %v5257
    %v8822 = vpop.f32.mrb[0].mxu0
    %v8823 = vadd.f32 %v8782, %v8822
    %v8824 = vpop.f32.mrb[0].mxu0
    %v8825 = vadd.f32 %v8784, %v8824
    %v8826 = vpop.f32.mrb[0].mxu0
    %v8827 = vpop.f32.mrb[0].mxu0
    %8828 = vdwg.mxu0
    %8829 = vmatprep.subr.bf16.mxu0 %v7743
    %8830 = vmatpush1.bf16.msra.mxu0 %v7742
    %8831 = vmatprep.subr.bf16.mxu0 %v7751
    %8832 = vmatpush1.bf16.msra.mxu0 %v7750
    %8833 = vmatprep.subr.bf16.mxu0 %v7759
    %8834 = vmatpush1.bf16.msra.mxu0 %v7758
    %8835 = vmatprep.subr.bf16.mxu0 %v7767
    %8836 = vmatpush1.bf16.msra.mxu0 %v7766
    %8837 = vmatprep.subr.bf16.mxu0 %v7775
    %8838 = vmatpush1.bf16.msra.mxu0 %v7774
    %8839 = vmatprep.subr.bf16.mxu0 %v7783
    %8840 = vmatpush1.bf16.msra.mxu0 %v7782
    %8841 = vmatprep.subr.bf16.mxu0 %v7791
    %8842 = vmatpush1.bf16.msra.mxu0 %v7790
    %8843 = vmatprep.subr.bf16.mxu0 %v7799
    %8844 = vmatpush1.bf16.msra.mxu0 %v7798
    %8845 = vmatprep.subr.bf16.mxu0 %v7807
    %8846 = vmatpush1.bf16.msra.mxu0 %v7806
    %8847 = vmatprep.subr.bf16.mxu0 %v7815
    %8848 = vmatpush1.bf16.msra.mxu0 %v7814
    %8849 = vmatprep.subr.bf16.mxu0 %v7823
    %8850 = vmatpush1.bf16.msra.mxu0 %v7822
    %8851 = vmatprep.subr.bf16.mxu0 %v7831
    %8852 = vmatpush1.bf16.msra.mxu0 %v7830
    %8853 = vmatprep.subr.bf16.mxu0 %v7839
    %8854 = vmatpush1.bf16.msra.mxu0 %v7838
    %8855 = vmatprep.subr.bf16.mxu0 %v7847
    %8856 = vmatpush1.bf16.msra.mxu0 %v7846
    %8857 = vmatprep.subr.bf16.mxu0 %v7855
    %8858 = vmatpush1.bf16.msra.mxu0 %v7854
    %8859 = vmatprep.subr.bf16.mxu0 %v7863
    %8860 = vmatpush1.bf16.msra.mxu0 %v7862
    %8861 = vmatprep.mubr.bf16.mxu0 %v5260
    %8862 = vmatmul.mubr.bf16.gmra.mrb[0].mxu0 %v5259
    %v8863 = vpop.f32.mrb[0].mxu0
    %v8864 = vadd.f32 %v8823, %v8863
    %v8865 = vpop.f32.mrb[0].mxu0
    %v8866 = vadd.f32 %v8825, %v8865
    %v8867 = vpop.f32.mrb[0].mxu0
    %v8868 = vpop.f32.mrb[0].mxu0
    %8869 = vdwg.mxu0
    %8870 = vmatprep.subr.bf16.mxu0 %v7361
    %8871 = vmatpush1.bf16.msra.mxu0 %v7360
    %8872 = vmatprep.subr.bf16.mxu0 %v7369
    %8873 = vmatpush1.bf16.msra.mxu0 %v7368
    %8874 = vmatprep.subr.bf16.mxu0 %v7377
    %8875 = vmatpush1.bf16.msra.mxu0 %v7376
    %8876 = vmatprep.subr.bf16.mxu0 %v7385
    %8877 = vmatpush1.bf16.msra.mxu0 %v7384
    %8878 = vmatprep.subr.bf16.mxu0 %v7393
    %8879 = vmatpush1.bf16.msra.mxu0 %v7392
    %8880 = vmatprep.subr.bf16.mxu0 %v7401
    %8881 = vmatpush1.bf16.msra.mxu0 %v7400
    %8882 = vmatprep.subr.bf16.mxu0 %v7409
    %8883 = vmatpush1.bf16.msra.mxu0 %v7408
    %8884 = vmatprep.subr.bf16.mxu0 %v7417
    %8885 = vmatpush1.bf16.msra.mxu0 %v7416
    %8886 = vmatprep.subr.bf16.mxu0 %v7425
    %8887 = vmatpush1.bf16.msra.mxu0 %v7424
    %8888 = vmatprep.subr.bf16.mxu0 %v7433
    %8889 = vmatpush1.bf16.msra.mxu0 %v7432
    %8890 = vmatprep.subr.bf16.mxu0 %v7441
    %8891 = vmatpush1.bf16.msra.mxu0 %v7440
    %8892 = vmatprep.subr.bf16.mxu0 %v7449
    %8893 = vmatpush1.bf16.msra.mxu0 %v7448
    %8894 = vmatprep.subr.bf16.mxu0 %v7457
    %8895 = vmatpush1.bf16.msra.mxu0 %v7456
    %8896 = vmatprep.subr.bf16.mxu0 %v7465
    %8897 = vmatpush1.bf16.msra.mxu0 %v7464
    %8898 = vmatprep.subr.bf16.mxu0 %v7473
    %8899 = vmatpush1.bf16.msra.mxu0 %v7472
    %8900 = vmatprep.subr.bf16.mxu0 %v7481
    %8901 = vmatpush1.bf16.msra.mxu0 %v7480
    %8902 = vmatprep.mubr.bf16.mxu0 %v5254
    %8903 = vmatmul.mubr.bf16.gmra.mrb[0].mxu0 %v5253
    %v8904 = vpop.f32.mrb[0].mxu0
    %v8905 = vadd.f32 %v5805, %v8904
    %v8906 = vpop.f32.mrb[0].mxu0
    %v8907 = vadd.f32 %v5809, %v8906
    %v8908 = vpop.f32.mrb[0].mxu0
    %v8909 = vpop.f32.mrb[0].mxu0
    %8910 = vdwg.mxu0
    %8911 = vmatprep.subr.bf16.mxu0 %v7489
    %8912 = vmatpush1.bf16.msra.mxu0 %v7488
    %8913 = vmatprep.subr.bf16.mxu0 %v7497
    %8914 = vmatpush1.bf16.msra.mxu0 %v7496
    %8915 = vmatprep.subr.bf16.mxu0 %v7505
    %8916 = vmatpush1.bf16.msra.mxu0 %v7504
    %8917 = vmatprep.subr.bf16.mxu0 %v7513
    %8918 = vmatpush1.bf16.msra.mxu0 %v7512
    %8919 = vmatprep.subr.bf16.mxu0 %v7521
    %8920 = vmatpush1.bf16.msra.mxu0 %v7520
    %8921 = vmatprep.subr.bf16.mxu0 %v7529
    %8922 = vmatpush1.bf16.msra.mxu0 %v7528
    %8923 = vmatprep.subr.bf16.mxu0 %v7537
    %8924 = vmatpush1.bf16.msra.mxu0 %v7536
    %8925 = vmatprep.subr.bf16.mxu0 %v7545
    %8926 = vmatpush1.bf16.msra.mxu0 %v7544
    %8927 = vmatprep.subr.bf16.mxu0 %v7553
    %8928 = vmatpush1.bf16.msra.mxu0 %v7552
    %8929 = vmatprep.subr.bf16.mxu0 %v7561
    %8930 = vmatpush1.bf16.msra.mxu0 %v7560
    %8931 = vmatprep.subr.bf16.mxu0 %v7569
    %8932 = vmatpush1.bf16.msra.mxu0 %v7568
    %8933 = vmatprep.subr.bf16.mxu0 %v7577
    %8934 = vmatpush1.bf16.msra.mxu0 %v7576
    %8935 = vmatprep.subr.bf16.mxu0 %v7585
    %8936 = vmatpush1.bf16.msra.mxu0 %v7584
    %8937 = vmatprep.subr.bf16.mxu0 %v7593
    %8938 = vmatpush1.bf16.msra.mxu0 %v7592
    %8939 = vmatprep.subr.bf16.mxu0 %v7601
    %8940 = vmatpush1.bf16.msra.mxu0 %v7600
    %8941 = vmatprep.subr.bf16.mxu0 %v7609
    %8942 = vmatpush1.bf16.msra.mxu0 %v7608
    %8943 = vmatprep.mubr.bf16.mxu0 %v5256
    %8944 = vmatmul.mubr.bf16.gmra.mrb[0].mxu0 %v5255
    %v8945 = vpop.f32.mrb[0].mxu0
    %v8946 = vadd.f32 %v8905, %v8945
    %v8947 = vpop.f32.mrb[0].mxu0
    %v8948 = vadd.f32 %v8907, %v8947
    %v8949 = vpop.f32.mrb[0].mxu0
    %v8950 = vpop.f32.mrb[0].mxu0
    %8951 = vdwg.mxu0
    %8952 = vmatprep.subr.bf16.mxu0 %v7617
    %8953 = vmatpush1.bf16.msra.mxu0 %v7616
    %8954 = vmatprep.subr.bf16.mxu0 %v7625
    %8955 = vmatpush1.bf16.msra.mxu0 %v7624
    %8956 = vmatprep.subr.bf16.mxu0 %v7633
    %8957 = vmatpush1.bf16.msra.mxu0 %v7632
    %8958 = vmatprep.subr.bf16.mxu0 %v7641
    %8959 = vmatpush1.bf16.msra.mxu0 %v7640
    %8960 = vmatprep.subr.bf16.mxu0 %v7649
    %8961 = vmatpush1.bf16.msra.mxu0 %v7648
    %8962 = vmatprep.subr.bf16.mxu0 %v7657
    %8963 = vmatpush1.bf16.msra.mxu0 %v7656
    %8964 = vmatprep.subr.bf16.mxu0 %v7665
    %8965 = vmatpush1.bf16.msra.mxu0 %v7664
    %8966 = vmatprep.subr.bf16.mxu0 %v7673
    %8967 = vmatpush1.bf16.msra.mxu0 %v7672
    %8968 = vmatprep.subr.bf16.mxu0 %v7681
    %8969 = vmatpush1.bf16.msra.mxu0 %v7680
    %8970 = vmatprep.subr.bf16.mxu0 %v7689
    %8971 = vmatpush1.bf16.msra.mxu0 %v7688
    %8972 = vmatprep.subr.bf16.mxu0 %v7697
    %8973 = vmatpush1.bf16.msra.mxu0 %v7696
    %8974 = vmatprep.subr.bf16.mxu0 %v7705
    %8975 = vmatpush1.bf16.msra.mxu0 %v7704
    %8976 = vmatprep.subr.bf16.mxu0 %v7713
    %8977 = vmatpush1.bf16.msra.mxu0 %v7712
    %8978 = vmatprep.subr.bf16.mxu0 %v7721
    %8979 = vmatpush1.bf16.msra.mxu0 %v7720
    %8980 = vmatprep.subr.bf16.mxu0 %v7729
    %8981 = vmatpush1.bf16.msra.mxu0 %v7728
    %8982 = vmatprep.subr.bf16.mxu0 %v7737
    %8983 = vmatpush1.bf16.msra.mxu0 %v7736
    %8984 = vmatprep.mubr.bf16.mxu0 %v5258
    %8985 = vmatmul.mubr.bf16.gmra.mrb[0].mxu0 %v5257
    %v8986 = vpop.f32.mrb[0].mxu0
    %v8987 = vadd.f32 %v8946, %v8986
    %v8988 = vpop.f32.mrb[0].mxu0
    %v8989 = vadd.f32 %v8948, %v8988
    %v8990 = vpop.f32.mrb[0].mxu0
    %v8991 = vpop.f32.mrb[0].mxu0
    %8992 = vdwg.mxu0
    %8993 = vmatprep.subr.bf16.mxu0 %v7745
    %8994 = vmatpush1.bf16.msra.mxu0 %v7744
    %8995 = vmatprep.subr.bf16.mxu0 %v7753
    %8996 = vmatpush1.bf16.msra.mxu0 %v7752
    %8997 = vmatprep.subr.bf16.mxu0 %v7761
    %8998 = vmatpush1.bf16.msra.mxu0 %v7760
    %8999 = vmatprep.subr.bf16.mxu0 %v7769
    %9000 = vmatpush1.bf16.msra.mxu0 %v7768
    %9001 = vmatprep.subr.bf16.mxu0 %v7777
    %9002 = vmatpush1.bf16.msra.mxu0 %v7776
    %9003 = vmatprep.subr.bf16.mxu0 %v7785
    %9004 = vmatpush1.bf16.msra.mxu0 %v7784
    %9005 = vmatprep.subr.bf16.mxu0 %v7793
    %9006 = vmatpush1.bf16.msra.mxu0 %v7792
    %9007 = vmatprep.subr.bf16.mxu0 %v7801
    %9008 = vmatpush1.bf16.msra.mxu0 %v7800
    %9009 = vmatprep.subr.bf16.mxu0 %v7809
    %9010 = vmatpush1.bf16.msra.mxu0 %v7808
    %9011 = vmatprep.subr.bf16.mxu0 %v7817
    %9012 = vmatpush1.bf16.msra.mxu0 %v7816
    %9013 = vmatprep.subr.bf16.mxu0 %v7825
    %9014 = vmatpush1.bf16.msra.mxu0 %v7824
    %9015 = vmatprep.subr.bf16.mxu0 %v7833
    %9016 = vmatpush1.bf16.msra.mxu0 %v7832
    %9017 = vmatprep.subr.bf16.mxu0 %v7841
    %9018 = vmatpush1.bf16.msra.mxu0 %v7840
    %9019 = vmatprep.subr.bf16.mxu0 %v7849
    %9020 = vmatpush1.bf16.msra.mxu0 %v7848
    %9021 = vmatprep.subr.bf16.mxu0 %v7857
    %9022 = vmatpush1.bf16.msra.mxu0 %v7856
    %9023 = vmatprep.subr.bf16.mxu0 %v7865
    %9024 = vmatpush1.bf16.msra.mxu0 %v7864
    %9025 = vmatprep.mubr.bf16.mxu0 %v5260
    %9026 = vmatmul.mubr.bf16.gmra.mrb[0].mxu0 %v5259
    %v9027 = vpop.f32.mrb[0].mxu0
    %v9028 = vadd.f32 %v8987, %v9027
    %v9029 = vpop.f32.mrb[0].mxu0
    %v9030 = vadd.f32 %v8989, %v9029
    %v9031 = vpop.f32.mrb[0].mxu0
    %v9032 = vpop.f32.mrb[0].mxu0
    %9033 = vdwg.mxu0
    %v9034 = vld [vmem:[#allocation2 + $0x42] ss:$0 sm:$0xff]
    %v9035 = vpack.c.bf16 %v8536, %v8536
    %v9036 = vpack.c.bf16 %v8538, %v8538
    %v9037 = vpack.c.bf16 %v8700, %v8700
    %v9038 = vpack.c.bf16 %v8702, %v8702
    %v9039 = vpack.c.bf16 %v8864, %v8864
    %v9040 = vpack.c.bf16 %v8866, %v8866
    %v9041 = vpack.c.bf16 %v9028, %v9028
    %v9042 = vpack.c.bf16 %v9030, %v9030
    %v9043 = vld [vmem:[#allocation4 + $0x30] sm:$0xf]
    %v9044 = vld [vmem:[#allocation4 + $0x64] sm:$0xf]
    %v9045 = vld [vmem:[#allocation4 + $0x98] sm:$0xf]
    %v9046 = vld [vmem:[#allocation4 + $0xcc] sm:$0xf]
    %v9047 = vld [vmem:[#allocation4 + $0x100] sm:$0xf]
    %v9048 = vld [vmem:[#allocation4 + $0x134] sm:$0xf]
    %v9049 = vld [vmem:[#allocation4 + $0x168] sm:$0xf]
    %v9050 = vld [vmem:[#allocation4 + $0x19c] sm:$0xf]
    %v9051 = vld [vmem:[#allocation4 + $0x1d0] sm:$0xf]
    %v9052 = vld [vmem:[#allocation4 + $0x204] sm:$0xf]
    %v9053 = vld [vmem:[#allocation4 + $0x238] sm:$0xf]
    %v9054 = vld [vmem:[#allocation4 + $0x26c] sm:$0xf]
    %v9055 = vld [vmem:[#allocation4 + $0x2a0] sm:$0xf]
    %v9056 = vld [vmem:[#allocation4 + $0x2d4] sm:$0xf]
    %v9057 = vld [vmem:[#allocation4 + $0x308] sm:$0xf]
    %v9058 = vld [vmem:[#allocation4 + $0x33c] sm:$0xf]
    %v9059 = vld [vmem:[#allocation4 + $0x370] sm:$0xf]
    %v9060 = vld [vmem:[#allocation4 + $0x3a4] sm:$0xf]
    %v9061 = vld [vmem:[#allocation4 + $0x3d8] sm:$0xf]
    %v9062 = vld [vmem:[#allocation4 + $0x40c] sm:$0xf]
    %v9063 = vld [vmem:[#allocation4 + $0x440] sm:$0xf]
    %v9064 = vld [vmem:[#allocation4 + $0x474] sm:$0xf]
    %v9065 = vld [vmem:[#allocation4 + $0x4a8] sm:$0xf]
    %v9066 = vld [vmem:[#allocation4 + $0x4dc] sm:$0xf]
    %v9067 = vld [vmem:[#allocation4 + $0x510] sm:$0xf]
    %v9068 = vld [vmem:[#allocation4 + $0x544] sm:$0xf]
    %v9069 = vld [vmem:[#allocation4 + $0x578] sm:$0xf]
    %v9070 = vld [vmem:[#allocation4 + $0x5ac] sm:$0xf]
    %v9071 = vld [vmem:[#allocation4 + $0x5e0] sm:$0xf]
    %v9072 = vld [vmem:[#allocation4 + $0x614] sm:$0xf]
    %v9073 = vld [vmem:[#allocation4 + $0x648] sm:$0xf]
    %v9074 = vld [vmem:[#allocation4 + $0x67c] sm:$0xf]
    %v9075 = vld [vmem:[#allocation4 + $0x6b0] sm:$0xf]
    %v9076 = vld [vmem:[#allocation4 + $0x6e4] sm:$0xf]
    %v9077 = vld [vmem:[#allocation4 + $0x718] sm:$0xf]
    %v9078 = vld [vmem:[#allocation4 + $0x74c] sm:$0xf]
    %v9079 = vld [vmem:[#allocation4 + $0x780] sm:$0xf]
    %v9080 = vld [vmem:[#allocation4 + $0x7b4] sm:$0xf]
    %v9081 = vld [vmem:[#allocation4 + $0x7e8] sm:$0xf]
    %v9082 = vld [vmem:[#allocation4 + $0x81c] sm:$0xf]
    %v9083 = vld [vmem:[#allocation4 + $0x850] sm:$0xf]
    %v9084 = vld [vmem:[#allocation4 + $0x884] sm:$0xf]
    %v9085 = vld [vmem:[#allocation4 + $0x8b8] sm:$0xf]
    %v9086 = vld [vmem:[#allocation4 + $0x8ec] sm:$0xf]
    %v9087 = vld [vmem:[#allocation4 + $0x920] sm:$0xf]
    %v9088 = vld [vmem:[#allocation4 + $0x954] sm:$0xf]
    %v9089 = vld [vmem:[#allocation4 + $0x988] sm:$0xf]
    %v9090 = vld [vmem:[#allocation4 + $0x9bc] sm:$0xf]
    %v9091 = vld [vmem:[#allocation4 + $0x9f0] sm:$0xf]
    %v9092 = vld [vmem:[#allocation4 + $0xa24] sm:$0xf]
    %v9093 = vld [vmem:[#allocation4 + $0xa58] sm:$0xf]
    %v9094 = vld [vmem:[#allocation4 + $0xa8c] sm:$0xf]
    %v9095 = vld [vmem:[#allocation4 + $0xac0] sm:$0xf]
    %v9096 = vld [vmem:[#allocation4 + $0xaf4] sm:$0xf]
    %v9097 = vld [vmem:[#allocation4 + $0xb28] sm:$0xf]
    %v9098 = vld [vmem:[#allocation4 + $0xb5c] sm:$0xf]
    %v9099 = vld [vmem:[#allocation4 + $0xb90] sm:$0xf]
    %v9100 = vld [vmem:[#allocation4 + $0xbc4] sm:$0xf]
    %v9101 = vld [vmem:[#allocation4 + $0xbf8] sm:$0xf]
    %v9102 = vld [vmem:[#allocation4 + $0xc2c] sm:$0xf]
    %v9103 = vld [vmem:[#allocation4 + $0xc60] sm:$0xf]
    %v9104 = vld [vmem:[#allocation4 + $0xc94] sm:$0xf]
    %v9105 = vld [vmem:[#allocation4 + $0xcc8] sm:$0xf]
    %v9106 = vld [vmem:[#allocation4 + $0xcfc] sm:$0xf]
    %v9107 = vld [vmem:[#allocation4 + $0xd30] sm:$0xf]
    %v9108 = vld [vmem:[#allocation4 + $0xd64] sm:$0xf]
    %v9109 = vld [vmem:[#allocation4 + $0xd98] sm:$0xf]
    %v9110 = vld [vmem:[#allocation4 + $0xdcc] sm:$0xf]
    %v9111 = vld [vmem:[#allocation4 + $0xe00] sm:$0xf]
    %v9112 = vld [vmem:[#allocation4 + $0xe34] sm:$0xf]
    %v9113 = vld [vmem:[#allocation4 + $0xe68] sm:$0xf]
    %v9114 = vld [vmem:[#allocation4 + $0xe9c] sm:$0xf]
    %v9115 = vld [vmem:[#allocation4 + $0xed0] sm:$0xf]
    %v9116 = vld [vmem:[#allocation4 + $0xf04] sm:$0xf]
    %v9117 = vld [vmem:[#allocation4 + $0xf38] sm:$0xf]
    %v9118 = vld [vmem:[#allocation4 + $0xf6c] sm:$0xf]
    %v9119 = vld [vmem:[#allocation4 + $0xfa0] sm:$0xf]
    %v9120 = vld [vmem:[#allocation4 + $0xfd4] sm:$0xf]
    %v9121 = vld [vmem:[#allocation4 + $0x1008] sm:$0xf]
    %v9122 = vld [vmem:[#allocation4 + $0x103c] sm:$0xf]
    %v9123 = vld [vmem:[#allocation4 + $0x1070] sm:$0xf]
    %v9124 = vld [vmem:[#allocation4 + $0x10a4] sm:$0xf]
    %v9125 = vld [vmem:[#allocation4 + $0x10d8] sm:$0xf]
    %v9126 = vld [vmem:[#allocation4 + $0x110c] sm:$0xf]
    %v9127 = vld [vmem:[#allocation4 + $0x1140] sm:$0xf]
    %v9128 = vld [vmem:[#allocation4 + $0x1174] sm:$0xf]
    %v9129 = vld [vmem:[#allocation4 + $0x11a8] sm:$0xf]
    %v9130 = vld [vmem:[#allocation4 + $0x11dc] sm:$0xf]
    %v9131 = vld [vmem:[#allocation4 + $0x1210] sm:$0xf]
    %v9132 = vld [vmem:[#allocation4 + $0x1244] sm:$0xf]
    %v9133 = vld [vmem:[#allocation4 + $0x1278] sm:$0xf]
    %v9134 = vld [vmem:[#allocation4 + $0x12ac] sm:$0xf]
    %v9135 = vld [vmem:[#allocation4 + $0x12e0] sm:$0xf]
    %v9136 = vld [vmem:[#allocation4 + $0x1314] sm:$0xf]
    %v9137 = vld [vmem:[#allocation4 + $0x1348] sm:$0xf]
    %v9138 = vld [vmem:[#allocation4 + $0x137c] sm:$0xf]
    %v9139 = vld [vmem:[#allocation4 + $0x13b0] sm:$0xf]
    %v9140 = vld [vmem:[#allocation4 + $0x13e4] sm:$0xf]
    %v9141 = vld [vmem:[#allocation4 + $0x1418] sm:$0xf]
    %v9142 = vld [vmem:[#allocation4 + $0x144c] sm:$0xf]
    %v9143 = vld [vmem:[#allocation4 + $0x1480] sm:$0xf]
    %v9144 = vld [vmem:[#allocation4 + $0x14b4] sm:$0xf]
    %v9145 = vld [vmem:[#allocation4 + $0x14e8] sm:$0xf]
    %v9146 = vld [vmem:[#allocation4 + $0x151c] sm:$0xf]
    %v9147 = vld [vmem:[#allocation4 + $0x1550] sm:$0xf]
    %v9148 = vld [vmem:[#allocation4 + $0x1584] sm:$0xf]
    %v9149 = vld [vmem:[#allocation4 + $0x15b8] sm:$0xf]
    %v9150 = vld [vmem:[#allocation4 + $0x15ec] sm:$0xf]
    %v9151 = vld [vmem:[#allocation4 + $0x1620] sm:$0xf]
    %v9152 = vld [vmem:[#allocation4 + $0x1654] sm:$0xf]
    %v9153 = vld [vmem:[#allocation4 + $0x1688] sm:$0xf]
    %v9154 = vld [vmem:[#allocation4 + $0x16bc] sm:$0xf]
    %v9155 = vld [vmem:[#allocation4 + $0x16f0] sm:$0xf]
    %v9156 = vld [vmem:[#allocation4 + $0x1724] sm:$0xf]
    %v9157 = vld [vmem:[#allocation4 + $0x1758] sm:$0xf]
    %v9158 = vld [vmem:[#allocation4 + $0x178c] sm:$0xf]
    %v9159 = vld [vmem:[#allocation4 + $0x17c0] sm:$0xf]
    %v9160 = vld [vmem:[#allocation4 + $0x17f4] sm:$0xf]
    %v9161 = vld [vmem:[#allocation4 + $0x1828] sm:$0xf]
    %v9162 = vld [vmem:[#allocation4 + $0x185c] sm:$0xf]
    %v9163 = vld [vmem:[#allocation4 + $0x1890] sm:$0xf]
    %v9164 = vld [vmem:[#allocation4 + $0x18c4] sm:$0xf]
    %v9165 = vld [vmem:[#allocation4 + $0x18f8] sm:$0xf]
    %v9166 = vld [vmem:[#allocation4 + $0x192c] sm:$0xf]
    %v9167 = vld [vmem:[#allocation4 + $0x1960] sm:$0xf]
    %v9168 = vld [vmem:[#allocation4 + $0x1994] sm:$0xf]
    %v9169 = vld [vmem:[#allocation4 + $0x19c8] sm:$0xf]
    %v9170 = vld [vmem:[#allocation4 + $0x19fc] sm:$0xf]
    %v9299 = vunpack.c.l.b16 %v9043
    %v9300 = vunpack.c.l.b16 %v9044
    %v9301 = vunpack.c.l.b16 %v9045
    %v9302 = vunpack.c.l.b16 %v9046
    %v9303 = vunpack.c.l.b16 %v9047
    %v9304 = vunpack.c.l.b16 %v9048
    %v9305 = vunpack.c.l.b16 %v9049
    %v9306 = vunpack.c.l.b16 %v9050
    %v9307 = vunpack.c.l.b16 %v9051
    %v9308 = vunpack.c.l.b16 %v9052
    %v9309 = vunpack.c.l.b16 %v9053
    %v9310 = vunpack.c.l.b16 %v9054
    %v9311 = vunpack.c.l.b16 %v9055
    %v9312 = vunpack.c.l.b16 %v9056
    %v9313 = vunpack.c.l.b16 %v9057
    %v9314 = vunpack.c.l.b16 %v9058
    %v9315 = vunpack.c.l.b16 %v9059
    %v9316 = vunpack.c.l.b16 %v9060
    %v9317 = vunpack.c.l.b16 %v9061
    %v9318 = vunpack.c.l.b16 %v9062
    %v9319 = vunpack.c.l.b16 %v9063
    %v9320 = vunpack.c.l.b16 %v9064
    %v9321 = vunpack.c.l.b16 %v9065
    %v9322 = vunpack.c.l.b16 %v9066
    %v9323 = vunpack.c.l.b16 %v9067
    %v9324 = vunpack.c.l.b16 %v9068
    %v9325 = vunpack.c.l.b16 %v9069
    %v9326 = vunpack.c.l.b16 %v9070
    %v9327 = vunpack.c.l.b16 %v9071
    %v9328 = vunpack.c.l.b16 %v9072
    %v9329 = vunpack.c.l.b16 %v9073
    %v9330 = vunpack.c.l.b16 %v9074
    %v9331 = vunpack.c.l.b16 %v9075
    %v9332 = vunpack.c.l.b16 %v9076
    %v9333 = vunpack.c.l.b16 %v9077
    %v9334 = vunpack.c.l.b16 %v9078
    %v9335 = vunpack.c.l.b16 %v9079
    %v9336 = vunpack.c.l.b16 %v9080
    %v9337 = vunpack.c.l.b16 %v9081
    %v9338 = vunpack.c.l.b16 %v9082
    %v9339 = vunpack.c.l.b16 %v9083
    %v9340 = vunpack.c.l.b16 %v9084
    %v9341 = vunpack.c.l.b16 %v9085
    %v9342 = vunpack.c.l.b16 %v9086
    %v9343 = vunpack.c.l.b16 %v9087
    %v9344 = vunpack.c.l.b16 %v9088
    %v9345 = vunpack.c.l.b16 %v9089
    %v9346 = vunpack.c.l.b16 %v9090
    %v9347 = vunpack.c.l.b16 %v9091
    %v9348 = vunpack.c.l.b16 %v9092
    %v9349 = vunpack.c.l.b16 %v9093
    %v9350 = vunpack.c.l.b16 %v9094
    %v9351 = vunpack.c.l.b16 %v9095
    %v9352 = vunpack.c.l.b16 %v9096
    %v9353 = vunpack.c.l.b16 %v9097
    %v9354 = vunpack.c.l.b16 %v9098
    %v9355 = vunpack.c.l.b16 %v9099
    %v9356 = vunpack.c.l.b16 %v9100
    %v9357 = vunpack.c.l.b16 %v9101
    %v9358 = vunpack.c.l.b16 %v9102
    %v9359 = vunpack.c.l.b16 %v9103
    %v9360 = vunpack.c.l.b16 %v9104
    %v9361 = vunpack.c.l.b16 %v9105
    %v9362 = vunpack.c.l.b16 %v9106
    %v9363 = vunpack.c.l.b16 %v9107
    %v9364 = vunpack.c.l.b16 %v9108
    %v9365 = vunpack.c.l.b16 %v9109
    %v9366 = vunpack.c.l.b16 %v9110
    %v9367 = vunpack.c.l.b16 %v9111
    %v9368 = vunpack.c.l.b16 %v9112
    %v9369 = vunpack.c.l.b16 %v9113
    %v9370 = vunpack.c.l.b16 %v9114
    %v9371 = vunpack.c.l.b16 %v9115
    %v9372 = vunpack.c.l.b16 %v9116
    %v9373 = vunpack.c.l.b16 %v9117
    %v9374 = vunpack.c.l.b16 %v9118
    %v9375 = vunpack.c.l.b16 %v9119
    %v9376 = vunpack.c.l.b16 %v9120
    %v9377 = vunpack.c.l.b16 %v9121
    %v9378 = vunpack.c.l.b16 %v9122
    %v9379 = vunpack.c.l.b16 %v9123
    %v9380 = vunpack.c.l.b16 %v9124
    %v9381 = vunpack.c.l.b16 %v9125
    %v9382 = vunpack.c.l.b16 %v9126
    %v9383 = vunpack.c.l.b16 %v9127
    %v9384 = vunpack.c.l.b16 %v9128
    %v9385 = vunpack.c.l.b16 %v9129
    %v9386 = vunpack.c.l.b16 %v9130
    %v9387 = vunpack.c.l.b16 %v9131
    %v9388 = vunpack.c.l.b16 %v9132
    %v9389 = vunpack.c.l.b16 %v9133
    %v9390 = vunpack.c.l.b16 %v9134
    %v9391 = vunpack.c.l.b16 %v9135
    %v9392 = vunpack.c.l.b16 %v9136
    %v9393 = vunpack.c.l.b16 %v9137
    %v9394 = vunpack.c.l.b16 %v9138
    %v9395 = vunpack.c.l.b16 %v9139
    %v9396 = vunpack.c.l.b16 %v9140
    %v9397 = vunpack.c.l.b16 %v9141
    %v9398 = vunpack.c.l.b16 %v9142
    %v9399 = vunpack.c.l.b16 %v9143
    %v9400 = vunpack.c.l.b16 %v9144
    %v9401 = vunpack.c.l.b16 %v9145
    %v9402 = vunpack.c.l.b16 %v9146
    %v9403 = vunpack.c.l.b16 %v9147
    %v9404 = vunpack.c.l.b16 %v9148
    %v9405 = vunpack.c.l.b16 %v9149
    %v9406 = vunpack.c.l.b16 %v9150
    %v9407 = vunpack.c.l.b16 %v9151
    %v9408 = vunpack.c.l.b16 %v9152
    %v9409 = vunpack.c.l.b16 %v9153
    %v9410 = vunpack.c.l.b16 %v9154
    %v9411 = vunpack.c.l.b16 %v9155
    %v9412 = vunpack.c.l.b16 %v9156
    %v9413 = vunpack.c.l.b16 %v9157
    %v9414 = vunpack.c.l.b16 %v9158
    %v9415 = vunpack.c.l.b16 %v9159
    %v9416 = vunpack.c.l.b16 %v9160
    %v9417 = vunpack.c.l.b16 %v9161
    %v9418 = vunpack.c.l.b16 %v9162
    %v9419 = vunpack.c.l.b16 %v9163
    %v9420 = vunpack.c.l.b16 %v9164
    %v9421 = vunpack.c.l.b16 %v9165
    %v9422 = vunpack.c.l.b16 %v9166
    %v9423 = vunpack.c.l.b16 %v9167
    %v9424 = vunpack.c.l.b16 %v9168
    %v9425 = vunpack.c.l.b16 %v9169
    %v9426 = vunpack.c.l.b16 %v9170
    %v9427 = vpack.c.b16 %v9300, %v9299
    %v9428 = vpack.c.b16 %v9302, %v9301
    %v9429 = vpack.c.b16 %v9304, %v9303
    %v9430 = vpack.c.b16 %v9306, %v9305
    %v9431 = vpack.c.b16 %v9308, %v9307
    %v9432 = vpack.c.b16 %v9310, %v9309
    %v9433 = vpack.c.b16 %v9312, %v9311
    %v9434 = vpack.c.b16 %v9314, %v9313
    %v9435 = vpack.c.b16 %v9316, %v9315
    %v9436 = vpack.c.b16 %v9318, %v9317
    %v9437 = vpack.c.b16 %v9320, %v9319
    %v9438 = vpack.c.b16 %v9322, %v9321
    %v9439 = vpack.c.b16 %v9324, %v9323
    %v9440 = vpack.c.b16 %v9326, %v9325
    %v9441 = vpack.c.b16 %v9328, %v9327
    %v9442 = vpack.c.b16 %v9330, %v9329
    %v9443 = vpack.c.b16 %v9332, %v9331
    %v9444 = vpack.c.b16 %v9334, %v9333
    %v9445 = vpack.c.b16 %v9336, %v9335
    %v9446 = vpack.c.b16 %v9338, %v9337
    %v9447 = vpack.c.b16 %v9340, %v9339
    %v9448 = vpack.c.b16 %v9342, %v9341
    %v9449 = vpack.c.b16 %v9344, %v9343
    %v9450 = vpack.c.b16 %v9346, %v9345
    %v9451 = vpack.c.b16 %v9348, %v9347
    %v9452 = vpack.c.b16 %v9350, %v9349
    %v9453 = vpack.c.b16 %v9352, %v9351
    %v9454 = vpack.c.b16 %v9354, %v9353
    %v9455 = vpack.c.b16 %v9356, %v9355
    %v9456 = vpack.c.b16 %v9358, %v9357
    %v9457 = vpack.c.b16 %v9360, %v9359
    %v9458 = vpack.c.b16 %v9362, %v9361
    %v9459 = vpack.c.b16 %v9364, %v9363
    %v9460 = vpack.c.b16 %v9366, %v9365
    %v9461 = vpack.c.b16 %v9368, %v9367
    %v9462 = vpack.c.b16 %v9370, %v9369
    %v9463 = vpack.c.b16 %v9372, %v9371
    %v9464 = vpack.c.b16 %v9374, %v9373
    %v9465 = vpack.c.b16 %v9376, %v9375
    %v9466 = vpack.c.b16 %v9378, %v9377
    %v9467 = vpack.c.b16 %v9380, %v9379
    %v9468 = vpack.c.b16 %v9382, %v9381
    %v9469 = vpack.c.b16 %v9384, %v9383
    %v9470 = vpack.c.b16 %v9386, %v9385
    %v9471 = vpack.c.b16 %v9388, %v9387
    %v9472 = vpack.c.b16 %v9390, %v9389
    %v9473 = vpack.c.b16 %v9392, %v9391
    %v9474 = vpack.c.b16 %v9394, %v9393
    %v9475 = vpack.c.b16 %v9396, %v9395
    %v9476 = vpack.c.b16 %v9398, %v9397
    %v9477 = vpack.c.b16 %v9400, %v9399
    %v9478 = vpack.c.b16 %v9402, %v9401
    %v9479 = vpack.c.b16 %v9404, %v9403
    %v9480 = vpack.c.b16 %v9406, %v9405
    %v9481 = vpack.c.b16 %v9408, %v9407
    %v9482 = vpack.c.b16 %v9410, %v9409
    %v9483 = vpack.c.b16 %v9412, %v9411
    %v9484 = vpack.c.b16 %v9414, %v9413
    %v9485 = vpack.c.b16 %v9416, %v9415
    %v9486 = vpack.c.b16 %v9418, %v9417
    %v9487 = vpack.c.b16 %v9420, %v9419
    %v9488 = vpack.c.b16 %v9422, %v9421
    %v9489 = vpack.c.b16 %v9424, %v9423
    %v9490 = vpack.c.b16 %v9426, %v9425
    %9555 = vmatprep.subr.bf16.mxu0 0
    %9556 = vmatpush1.bf16.msra.mxu0 %v9427
    %9557 = vmatprep.subr.bf16.mxu0 0
    %9558 = vmatpush1.bf16.msra.mxu0 %v9428
    %9559 = vmatprep.subr.bf16.mxu0 0
    %9560 = vmatpush1.bf16.msra.mxu0 %v9429
    %9561 = vmatprep.subr.bf16.mxu0 0
    %9562 = vmatpush1.bf16.msra.mxu0 %v9430
    %9563 = vmatprep.subr.bf16.mxu0 0
    %9564 = vmatpush1.bf16.msra.mxu0 %v9431
    %9565 = vmatprep.subr.bf16.mxu0 0
    %9566 = vmatpush1.bf16.msra.mxu0 %v9432
    %9567 = vmatprep.subr.bf16.mxu0 0
    %9568 = vmatpush1.bf16.msra.mxu0 %v9433
    %9569 = vmatprep.subr.bf16.mxu0 0
    %9570 = vmatpush1.bf16.msra.mxu0 %v9434
    %9571 = vmatprep.subr.bf16.mxu0 0
    %9572 = vmatpush1.bf16.msra.mxu0 %v9435
    %9573 = vmatprep.subr.bf16.mxu0 0
    %9574 = vmatpush1.bf16.msra.mxu0 %v9436
    %9575 = vmatprep.subr.bf16.mxu0 0
    %9576 = vmatpush1.bf16.msra.mxu0 %v9437
    %9577 = vmatprep.subr.bf16.mxu0 0
    %9578 = vmatpush1.bf16.msra.mxu0 %v9438
    %9579 = vmatprep.subr.bf16.mxu0 0
    %9580 = vmatpush1.bf16.msra.mxu0 %v9439
    %9581 = vmatprep.subr.bf16.mxu0 0
    %9582 = vmatpush1.bf16.msra.mxu0 %v9440
    %9583 = vmatprep.subr.bf16.mxu0 0
    %9584 = vmatpush1.bf16.msra.mxu0 %v9441
    %9585 = vmatprep.subr.bf16.mxu0 0
    %9586 = vmatpush1.bf16.msra.mxu0 %v9442
    %9587 = vmatprep.mubr.bf16.mxu0 %v9036
    %9588 = vmatmul.mubr.bf16.gmra.mrb[0].mxu0 %v9035
    %v9589 = vpop.f32.mrb[0].mxu0
    %v9590 = vadd.f32 0.0, %v9589
    %v9591 = vpop.f32.mrb[0].mxu0
    %v9592 = vpop.f32.mrb[0].mxu0
    %v9593 = vpop.f32.mrb[0].mxu0
    %9594 = vdwg.mxu0
    %9595 = vmatprep.subr.bf16.mxu0 0
    %9596 = vmatpush1.bf16.msra.mxu0 %v9443
    %9597 = vmatprep.subr.bf16.mxu0 0
    %9598 = vmatpush1.bf16.msra.mxu0 %v9444
    %9599 = vmatprep.subr.bf16.mxu0 0
    %9600 = vmatpush1.bf16.msra.mxu0 %v9445
    %9601 = vmatprep.subr.bf16.mxu0 0
    %9602 = vmatpush1.bf16.msra.mxu0 %v9446
    %9603 = vmatprep.subr.bf16.mxu0 0
    %9604 = vmatpush1.bf16.msra.mxu0 %v9447
    %9605 = vmatprep.subr.bf16.mxu0 0
    %9606 = vmatpush1.bf16.msra.mxu0 %v9448
    %9607 = vmatprep.subr.bf16.mxu0 0
    %9608 = vmatpush1.bf16.msra.mxu0 %v9449
    %9609 = vmatprep.subr.bf16.mxu0 0
    %9610 = vmatpush1.bf16.msra.mxu0 %v9450
    %9611 = vmatprep.subr.bf16.mxu0 0
    %9612 = vmatpush1.bf16.msra.mxu0 %v9451
    %9613 = vmatprep.subr.bf16.mxu0 0
    %9614 = vmatpush1.bf16.msra.mxu0 %v9452
    %9615 = vmatprep.subr.bf16.mxu0 0
    %9616 = vmatpush1.bf16.msra.mxu0 %v9453
    %9617 = vmatprep.subr.bf16.mxu0 0
    %9618 = vmatpush1.bf16.msra.mxu0 %v9454
    %9619 = vmatprep.subr.bf16.mxu0 0
    %9620 = vmatpush1.bf16.msra.mxu0 %v9455
    %9621 = vmatprep.subr.bf16.mxu0 0
    %9622 = vmatpush1.bf16.msra.mxu0 %v9456
    %9623 = vmatprep.subr.bf16.mxu0 0
    %9624 = vmatpush1.bf16.msra.mxu0 %v9457
    %9625 = vmatprep.subr.bf16.mxu0 0
    %9626 = vmatpush1.bf16.msra.mxu0 %v9458
    %9627 = vmatprep.mubr.bf16.mxu0 %v9038
    %9628 = vmatmul.mubr.bf16.gmra.mrb[0].mxu0 %v9037
    %v9629 = vpop.f32.mrb[0].mxu0
    %v9630 = vadd.f32 %v9590, %v9629
    %v9631 = vpop.f32.mrb[0].mxu0
    %v9632 = vpop.f32.mrb[0].mxu0
    %v9633 = vpop.f32.mrb[0].mxu0
    %9634 = vdwg.mxu0
    %9635 = vmatprep.subr.bf16.mxu0 0
    %9636 = vmatpush1.bf16.msra.mxu0 %v9459
    %9637 = vmatprep.subr.bf16.mxu0 0
    %9638 = vmatpush1.bf16.msra.mxu0 %v9460
    %9639 = vmatprep.subr.bf16.mxu0 0
    %9640 = vmatpush1.bf16.msra.mxu0 %v9461
    %9641 = vmatprep.subr.bf16.mxu0 0
    %9642 = vmatpush1.bf16.msra.mxu0 %v9462
    %9643 = vmatprep.subr.bf16.mxu0 0
    %9644 = vmatpush1.bf16.msra.mxu0 %v9463
    %9645 = vmatprep.subr.bf16.mxu0 0
    %9646 = vmatpush1.bf16.msra.mxu0 %v9464
    %9647 = vmatprep.subr.bf16.mxu0 0
    %9648 = vmatpush1.bf16.msra.mxu0 %v9465
    %9649 = vmatprep.subr.bf16.mxu0 0
    %9650 = vmatpush1.bf16.msra.mxu0 %v9466
    %9651 = vmatprep.subr.bf16.mxu0 0
    %9652 = vmatpush1.bf16.msra.mxu0 %v9467
    %9653 = vmatprep.subr.bf16.mxu0 0
    %9654 = vmatpush1.bf16.msra.mxu0 %v9468
    %9655 = vmatprep.subr.bf16.mxu0 0
    %9656 = vmatpush1.bf16.msra.mxu0 %v9469
    %9657 = vmatprep.subr.bf16.mxu0 0
    %9658 = vmatpush1.bf16.msra.mxu0 %v9470
    %9659 = vmatprep.subr.bf16.mxu0 0
    %9660 = vmatpush1.bf16.msra.mxu0 %v9471
    %9661 = vmatprep.subr.bf16.mxu0 0
    %9662 = vmatpush1.bf16.msra.mxu0 %v9472
    %9663 = vmatprep.subr.bf16.mxu0 0
    %9664 = vmatpush1.bf16.msra.mxu0 %v9473
    %9665 = vmatprep.subr.bf16.mxu0 0
    %9666 = vmatpush1.bf16.msra.mxu0 %v9474
    %9667 = vmatprep.mubr.bf16.mxu0 %v9040
    %9668 = vmatmul.mubr.bf16.gmra.mrb[0].mxu0 %v9039
    %v9669 = vpop.f32.mrb[0].mxu0
    %v9670 = vadd.f32 %v9630, %v9669
    %v9671 = vpop.f32.mrb[0].mxu0
    %v9672 = vpop.f32.mrb[0].mxu0
    %v9673 = vpop.f32.mrb[0].mxu0
    %9674 = vdwg.mxu0
    %9675 = vmatprep.subr.bf16.mxu0 0
    %9676 = vmatpush1.bf16.msra.mxu0 %v9475
    %9677 = vmatprep.subr.bf16.mxu0 0
    %9678 = vmatpush1.bf16.msra.mxu0 %v9476
    %9679 = vmatprep.subr.bf16.mxu0 0
    %9680 = vmatpush1.bf16.msra.mxu0 %v9477
    %9681 = vmatprep.subr.bf16.mxu0 0
    %9682 = vmatpush1.bf16.msra.mxu0 %v9478
    %9683 = vmatprep.subr.bf16.mxu0 0
    %9684 = vmatpush1.bf16.msra.mxu0 %v9479
    %9685 = vmatprep.subr.bf16.mxu0 0
    %9686 = vmatpush1.bf16.msra.mxu0 %v9480
    %9687 = vmatprep.subr.bf16.mxu0 0
    %9688 = vmatpush1.bf16.msra.mxu0 %v9481
    %9689 = vmatprep.subr.bf16.mxu0 0
    %9690 = vmatpush1.bf16.msra.mxu0 %v9482
    %9691 = vmatprep.subr.bf16.mxu0 0
    %9692 = vmatpush1.bf16.msra.mxu0 %v9483
    %9693 = vmatprep.subr.bf16.mxu0 0
    %9694 = vmatpush1.bf16.msra.mxu0 %v9484
    %9695 = vmatprep.subr.bf16.mxu0 0
    %9696 = vmatpush1.bf16.msra.mxu0 %v9485
    %9697 = vmatprep.subr.bf16.mxu0 0
    %9698 = vmatpush1.bf16.msra.mxu0 %v9486
    %9699 = vmatprep.subr.bf16.mxu0 0
    %9700 = vmatpush1.bf16.msra.mxu0 %v9487
    %9701 = vmatprep.subr.bf16.mxu0 0
    %9702 = vmatpush1.bf16.msra.mxu0 %v9488
    %9703 = vmatprep.subr.bf16.mxu0 0
    %9704 = vmatpush1.bf16.msra.mxu0 %v9489
    %9705 = vmatprep.subr.bf16.mxu0 0
    %9706 = vmatpush1.bf16.msra.mxu0 %v9490
    %9707 = vmatprep.mubr.bf16.mxu0 %v9042
    %9708 = vmatmul.mubr.bf16.gmra.mrb[0].mxu0 %v9041
    %v9709 = vpop.f32.mrb[0].mxu0
    %v9710 = vadd.f32 %v9670, %v9709
    %v9711 = vpop.f32.mrb[0].mxu0
    %v9712 = vpop.f32.mrb[0].mxu0
    %v9713 = vpop.f32.mrb[0].mxu0
    %9714 = vdwg.mxu0
    %v9715 = vadd.f32 %v9034, %v9710
    %9716 = vst [vmem:[%s6] sm:$0xf] %v9715
    // Predicated region
    $region38: #{forward.1} parent=1 // pred_check
      _
    $region39: #{forward.1} parent=1 // pred_check_branch
      %9718 = sbr.rel (0) target = $region41
    $region40: #{forward.1} parent=1 // pred_region
      _
    $region41: #{forward.1} parent=1 // pred_fallthru
      _
    // Predicated region
    $region42: #{forward.1} parent=1 // pred_check
      _
    $region43: #{forward.1} parent=1 // pred_check_branch
      %9720 = sbr.rel (0) target = $region45
    $region44: #{forward.1} parent=1 // pred_region
      _
    $region45: #{forward.1} parent=1 // pred_fallthru
      _
    // Predicated region
    $region46: #{forward.1} parent=1 // pred_check
      _
    $region47: #{forward.1} parent=1 // pred_check_branch
      %9722 = sbr.rel (0) target = $region49
    $region48: #{forward.1} parent=1 // pred_region
      _
    $region49: #{forward.1} parent=1 // pred_fallthru
      _
    // Predicated region
    $region50: #{forward.1} parent=1 // pred_check
      _
    $region51: #{forward.1} parent=1 // pred_check_branch
      %9724 = sbr.rel (0) target = $region53
    $region52: #{forward.1} parent=1 // pred_region
      _
    $region53: #{forward.1} parent=1 // pred_fallthru
      _
    %9725 = vsyncpa [#allocation3], 1
    %9726 = vsyncpa [#allocation5], 1
    %9727 = vsyncpa [#allocation8], 1

</llo_original>
